<compile_context>
chip_gen: v7x
topology: tpu7x:2x2x1
jax: 0.10.0
libtpu: 0.0.40
codegen_flags: <defaults>
</compile_context>

<pallas_src>
import functools

import jax
import jax.numpy as jnp
from jax.experimental import pallas as pl
from jax.experimental.pallas import tpu as pltpu


# ----------------------------- Pallas kernel ------------------------------- #

def fused_model_kernel(x_ref, cw_ref, cb_ref, fw_ref, fb_ref, o_ref,
                       *, n_crops, H, W):
    """Fused conv3x3 + bias + ReLU -> (GAP over pixels AND crops) -> FC,
    one batch element per grid step.

    x_ref : (1, n_crops, H+2, W+2, C)  f32   zero-padded NHWC input
    cw_ref: (9, C, Cout)               bf16  per-tap conv weights
    cb_ref: (1, Cout)                  f32   conv bias
    fw_ref: (Cout, NC)                 f32   FC weight, pre-scaled by 1/(n_crops*H*W)
    fb_ref: (1, NC)                    f32   FC bias
    o_ref : (1, 1, NC)                 f32   per-batch-element logits
    """
    C = x_ref.shape[-1]
    Cout = cw_ref.shape[-1]
    M = H * W

    # Conv bias folded into the accumulator init (hoisted once, reused per crop).
    bias_tile = jnp.broadcast_to(cb_ref[...], (M, Cout))

    pooled = jnp.zeros((1, Cout), dtype=jnp.float32)
    for c in range(n_crops):                      # static unroll (n_crops small)
        acc = bias_tile
        for t in range(9):                        # 3x3 taps, static unroll
            dh, dw = t // 3, t % 3
            # In-kernel im2col tap: static window of the padded image.
            lhs = x_ref[0, c, dh:dh + H, dw:dw + W, :]          # (H, W, C) f32
            lhs = lhs.reshape(M, C).astype(jnp.bfloat16)        # (H*W, C) bf16
            acc = acc + jnp.dot(lhs, cw_ref[t],                 # bf16 x bf16 MXU
                                preferred_element_type=jnp.float32)
        feat = jnp.maximum(acc, 0.0)                            # ReLU (f32)
        # GAP over pixels and the crop-mean are linear and commute with the
        # affine FC head -> a plain running sum; the 1/(n_crops*H*W) scale is
        # already folded into fw_ref.
        pooled = pooled + jnp.sum(feat, axis=0, keepdims=True)  # (1, Cout)

    logits = jnp.dot(pooled, fw_ref[...],
                     preferred_element_type=jnp.float32) + fb_ref[...]
    o_ref[0] = logits.astype(o_ref.dtype)


# ------------------------------ JAX wrapper -------------------------------- #

def model_forward(x, conv_w, conv_b, fc_w, fc_b):
    """x: (b, n_crops, C, H, W) float32 (PyTorch NCHW per crop)."""
    b, n_crops, C, H, W = x.shape
    Cout = conv_w.shape[-1]
    NC = fc_w.shape[-1]

    # Model.forward: x = x.view(-1, c, h, w); keep the (b, n_crops) split so the
    # crop-mean can be fused into the kernel's pooling.  NCHW -> NHWC + zero pad
    # for the 3x3 'same' conv (tiny; stays a fused XLA op, ~20 KiB per element).
    x_nhwc = jnp.transpose(x, (0, 1, 3, 4, 2))
    x_pad = jnp.pad(x_nhwc, ((0, 0), (0, 0), (1, 1), (1, 1), (0, 0)))

    # Per-tap conv weights (t = kh*3 + kw ordering), bf16 for the MXU.
    cw = conv_w.reshape(9, C, Cout).astype(jnp.bfloat16)
    cb = conv_b.reshape(1, Cout).astype(jnp.float32)
    # Fold GAP + crop-mean (both linear, commute with the affine FC) into fc_w.
    # n_crops*H*W = 4096 is a power of two -> exact scaling.
    fw = (fc_w * (1.0 / (n_crops * H * W))).astype(jnp.float32)
    fb = fc_b.reshape(1, NC).astype(jnp.float32)

    out = pl.pallas_call(
        functools.partial(fused_model_kernel, n_crops=n_crops, H=H, W=W),
        out_shape=jax.ShapeDtypeStruct((b, 1, NC), jnp.float32),
        grid_spec=pltpu.PrefetchScalarGridSpec(
            num_scalar_prefetch=0,
            grid=(b,),
            in_specs=[
                pl.BlockSpec((1, n_crops, H + 2, W + 2, C),
                             lambda i: (i, 0, 0, 0, 0)),
                pl.BlockSpec((9, C, Cout), lambda i: (0, 0, 0)),
                pl.BlockSpec((1, Cout), lambda i: (0, 0)),
                pl.BlockSpec((Cout, NC), lambda i: (0, 0)),
                pl.BlockSpec((1, NC), lambda i: (0, 0)),
            ],
            out_specs=pl.BlockSpec((1, 1, NC), lambda i: (i, 0, 0)),
        ),
        compiler_params=pltpu.CompilerParams(
            dimension_semantics=("parallel",)),
    )(x_pad, cw, cb, fw, fb)

    # Model.forward: x = x.view(b, n_crops, -1).mean(1)  (folded into the kernel).
    return out[:, 0, :]


# ------------------------- plain-JAX reference ------------------------------ #

def reference_forward(x, conv_w, conv_b, fc_w, fc_b):
    b, n_crops, C, H, W = x.shape
    xf = x.reshape(-1, C, H, W)
    y = jax.lax.conv_general_dilated(
        xf, jnp.transpose(conv_w, (3, 2, 0, 1)),  # HWIO -> OIHW
        window_strides=(1, 1), padding=((1, 1), (1, 1)),
        dimension_numbers=('NCHW', 'OIHW', 'NCHW'))
    y = jax.nn.relu(y + conv_b[None, :, None, None])
    pooled = y.mean(axis=(2, 3))
    logits = pooled @ fc_w + fc_b
    return logits.reshape(b, n_crops, -1).mean(axis=1)


# ---------------------------------- main ------------------------------------ #

if __name__ == "__main__":
    # Small shapes consistent with the forward: batch=2, crops=4 (crop > 1),
    # channels=4, spatial=16x16, hidden conv channels=32, 10 classes.
    B, N_CROPS, C, H, W = 2, 4, 4, 16, 16
    C_HID, N_CLASSES = 32, 10

    key = jax.random.PRNGKey(0)
    k_x, k_cw, k_cb, k_fw, k_fb = jax.random.split(key, 5)

    x = jax.random.normal(k_x, (B, N_CROPS, C, H, W), jnp.float32)
    conv_w = jax.random.normal(k_cw, (3, 3, C, C_HID), jnp.float32) * 0.1
    conv_b = jax.random.normal(k_cb, (C_HID,), jnp.float32) * 0.1
    fc_w = jax.random.normal(k_fw, (C_HID, N_CLASSES), jnp.float32) * 0.1
    fc_b = jax.random.normal(k_fb, (N_CLASSES,), jnp.float32) * 0.1

    out = jax.jit(model_forward)(x, conv_w, conv_b, fc_w, fc_b)
    out = jax.block_until_ready(out)

    ref = reference_forward(x, conv_w, conv_b, fc_w, fc_b)
    assert out.shape == (B, N_CLASSES), out.shape
    # Conv matmul runs with bf16 inputs (f32 accumulation), so compare against
    # the f32 reference with a bf16-appropriate tolerance.
    assert jnp.allclose(out, ref, rtol=1e-2, atol=1e-2), (out, ref)

    # TODO(synk): model save/load, DataParallel, the half-precision flag and the
    # summarize()/flops-hook bookkeeping are host-side utilities with no
    # kernel-level equivalent and are intentionally not reproduced.
    print("KERNEL_OK")
</pallas_src>

<mosaic_0001>
module attributes {stable_mosaic.version = 11 : i64} {
  func.func @fused_model_kernel(%arg0: i32, %arg1: memref<1x4x18x18x4xf32, #tpu.memory_space<vmem>>, %arg2: memref<9x4x32xbf16, #tpu.memory_space<vmem>>, %arg3: memref<1x32xf32, #tpu.memory_space<vmem>>, %arg4: memref<32x10xf32, #tpu.memory_space<vmem>>, %arg5: memref<1x10xf32, #tpu.memory_space<vmem>>, %arg6: memref<1x1x10xf32, #tpu.memory_space<vmem>>) attributes {dimension_semantics = [#tpu.dimension_semantics<parallel>], iteration_bounds = array<i64: 2>, scalar_prefetch = 0 : i64, scratch_operands = 0 : i64, tpu.core_type = #tpu.core_type<tc>, window_params = [{transform_indices = @transform_0, window_bounds = array<i64: 1, 4, 18, 18, 4>}, {pipeline_mode = #tpu.pipeline_mode<synchronous>, transform_indices = @transform_1, window_bounds = array<i64: 9, 4, 32>}, {pipeline_mode = #tpu.pipeline_mode<synchronous>, transform_indices = @transform_2, window_bounds = array<i64: 1, 32>}, {pipeline_mode = #tpu.pipeline_mode<synchronous>, transform_indices = @transform_3, window_bounds = array<i64: 32, 10>}, {pipeline_mode = #tpu.pipeline_mode<synchronous>, transform_indices = @transform_4, window_bounds = array<i64: 1, 10>}, {transform_indices = @transform_5, window_bounds = array<i64: 1, 1, 10>}]} {
    %c0 = arith.constant 0 : index
    %c0_0 = arith.constant 0 : index
    %0 = vector.load %arg3[%c0, %c0_0] : memref<1x32xf32, #tpu.memory_space<vmem>>, vector<1x32xf32>
    %1 = vector.shape_cast %0 : vector<1x32xf32> to vector<1x32xf32>
    %2 = vector.broadcast %1 : vector<1x32xf32> to vector<256x32xf32>
    %cst = arith.constant 0.000000e+00 : f32
    %3 = vector.broadcast %cst : f32 to vector<1x32xf32>
    %c0_1 = arith.constant 0 : index
    %c0_2 = arith.constant 0 : index
    %c0_3 = arith.constant 0 : index
    %c0_4 = arith.constant 0 : index
    %c0_5 = arith.constant 0 : index
    %4 = vector.load %arg1[%c0_1, %c0_2, %c0_3, %c0_4, %c0_5] : memref<1x4x18x18x4xf32, #tpu.memory_space<vmem>>, vector<1x1x16x16x4xf32>
    %5 = vector.shape_cast %4 : vector<1x1x16x16x4xf32> to vector<16x16x4xf32>
    %6 = vector.shape_cast %5 : vector<16x16x4xf32> to vector<256x4xf32>
    %7 = arith.truncf %6 : vector<256x4xf32> to vector<256x4xbf16>
    %c0_6 = arith.constant 0 : index
    %c0_7 = arith.constant 0 : index
    %c0_8 = arith.constant 0 : index
    %8 = vector.load %arg2[%c0_6, %c0_7, %c0_8] : memref<9x4x32xbf16, #tpu.memory_space<vmem>>, vector<1x4x32xbf16>
    %9 = vector.shape_cast %8 : vector<1x4x32xbf16> to vector<4x32xbf16>
    %cst_9 = arith.constant dense<0.000000e+00> : vector<256x32xf32>
    %10 = tpu.matmul %7, %9, %cst_9 {dimension_numbers = #tpu.dot_dimension_numbers<[1], [0], [0], [1], [0, 0, 1, 1], [], []>} : vector<256x4xbf16>, vector<4x32xbf16>, vector<256x32xf32> -> vector<256x32xf32>
    %11 = arith.addf %2, %10 : vector<256x32xf32>
    %c0_10 = arith.constant 0 : index
    %c0_11 = arith.constant 0 : index
    %c0_12 = arith.constant 0 : index
    %c1 = arith.constant 1 : index
    %c0_13 = arith.constant 0 : index
    %12 = vector.load %arg1[%c0_10, %c0_11, %c0_12, %c1, %c0_13] : memref<1x4x18x18x4xf32, #tpu.memory_space<vmem>>, vector<1x1x16x16x4xf32>
    %13 = vector.shape_cast %12 : vector<1x1x16x16x4xf32> to vector<16x16x4xf32>
    %14 = vector.shape_cast %13 : vector<16x16x4xf32> to vector<256x4xf32>
    %15 = arith.truncf %14 : vector<256x4xf32> to vector<256x4xbf16>
    %c1_14 = arith.constant 1 : index
    %c0_15 = arith.constant 0 : index
    %c0_16 = arith.constant 0 : index
    %16 = vector.load %arg2[%c1_14, %c0_15, %c0_16] : memref<9x4x32xbf16, #tpu.memory_space<vmem>>, vector<1x4x32xbf16>
    %17 = vector.shape_cast %16 : vector<1x4x32xbf16> to vector<4x32xbf16>
    %cst_17 = arith.constant dense<0.000000e+00> : vector<256x32xf32>
    %18 = tpu.matmul %15, %17, %cst_17 {dimension_numbers = #tpu.dot_dimension_numbers<[1], [0], [0], [1], [0, 0, 1, 1], [], []>} : vector<256x4xbf16>, vector<4x32xbf16>, vector<256x32xf32> -> vector<256x32xf32>
    %19 = arith.addf %11, %18 : vector<256x32xf32>
    %c0_18 = arith.constant 0 : index
    %c0_19 = arith.constant 0 : index
    %c0_20 = arith.constant 0 : index
    %c2 = arith.constant 2 : index
    %c0_21 = arith.constant 0 : index
    %20 = vector.load %arg1[%c0_18, %c0_19, %c0_20, %c2, %c0_21] : memref<1x4x18x18x4xf32, #tpu.memory_space<vmem>>, vector<1x1x16x16x4xf32>
    %21 = vector.shape_cast %20 : vector<1x1x16x16x4xf32> to vector<16x16x4xf32>
    %22 = vector.shape_cast %21 : vector<16x16x4xf32> to vector<256x4xf32>
    %23 = arith.truncf %22 : vector<256x4xf32> to vector<256x4xbf16>
    %c2_22 = arith.constant 2 : index
    %c0_23 = arith.constant 0 : index
    %c0_24 = arith.constant 0 : index
    %24 = vector.load %arg2[%c2_22, %c0_23, %c0_24] : memref<9x4x32xbf16, #tpu.memory_space<vmem>>, vector<1x4x32xbf16>
    %25 = vector.shape_cast %24 : vector<1x4x32xbf16> to vector<4x32xbf16>
    %cst_25 = arith.constant dense<0.000000e+00> : vector<256x32xf32>
    %26 = tpu.matmul %23, %25, %cst_25 {dimension_numbers = #tpu.dot_dimension_numbers<[1], [0], [0], [1], [0, 0, 1, 1], [], []>} : vector<256x4xbf16>, vector<4x32xbf16>, vector<256x32xf32> -> vector<256x32xf32>
    %27 = arith.addf %19, %26 : vector<256x32xf32>
    %c0_26 = arith.constant 0 : index
    %c0_27 = arith.constant 0 : index
    %c1_28 = arith.constant 1 : index
    %c0_29 = arith.constant 0 : index
    %c0_30 = arith.constant 0 : index
    %28 = vector.load %arg1[%c0_26, %c0_27, %c1_28, %c0_29, %c0_30] : memref<1x4x18x18x4xf32, #tpu.memory_space<vmem>>, vector<1x1x16x16x4xf32>
    %29 = vector.shape_cast %28 : vector<1x1x16x16x4xf32> to vector<16x16x4xf32>
    %30 = vector.shape_cast %29 : vector<16x16x4xf32> to vector<256x4xf32>
    %31 = arith.truncf %30 : vector<256x4xf32> to vector<256x4xbf16>
    %c3 = arith.constant 3 : index
    %c0_31 = arith.constant 0 : index
    %c0_32 = arith.constant 0 : index
    %32 = vector.load %arg2[%c3, %c0_31, %c0_32] : memref<9x4x32xbf16, #tpu.memory_space<vmem>>, vector<1x4x32xbf16>
    %33 = vector.shape_cast %32 : vector<1x4x32xbf16> to vector<4x32xbf16>
    %cst_33 = arith.constant dense<0.000000e+00> : vector<256x32xf32>
    %34 = tpu.matmul %31, %33, %cst_33 {dimension_numbers = #tpu.dot_dimension_numbers<[1], [0], [0], [1], [0, 0, 1, 1], [], []>} : vector<256x4xbf16>, vector<4x32xbf16>, vector<256x32xf32> -> vector<256x32xf32>
    %35 = arith.addf %27, %34 : vector<256x32xf32>
    %c0_34 = arith.constant 0 : index
    %c0_35 = arith.constant 0 : index
    %c1_36 = arith.constant 1 : index
    %c1_37 = arith.constant 1 : index
    %c0_38 = arith.constant 0 : index
    %36 = vector.load %arg1[%c0_34, %c0_35, %c1_36, %c1_37, %c0_38] : memref<1x4x18x18x4xf32, #tpu.memory_space<vmem>>, vector<1x1x16x16x4xf32>
    %37 = vector.shape_cast %36 : vector<1x1x16x16x4xf32> to vector<16x16x4xf32>
    %38 = vector.shape_cast %37 : vector<16x16x4xf32> to vector<256x4xf32>
    %39 = arith.truncf %38 : vector<256x4xf32> to vector<256x4xbf16>
    %c4 = arith.constant 4 : index
    %c0_39 = arith.constant 0 : index
    %c0_40 = arith.constant 0 : index
    %40 = vector.load %arg2[%c4, %c0_39, %c0_40] : memref<9x4x32xbf16, #tpu.memory_space<vmem>>, vector<1x4x32xbf16>
    %41 = vector.shape_cast %40 : vector<1x4x32xbf16> to vector<4x32xbf16>
    %cst_41 = arith.constant dense<0.000000e+00> : vector<256x32xf32>
    %42 = tpu.matmul %39, %41, %cst_41 {dimension_numbers = #tpu.dot_dimension_numbers<[1], [0], [0], [1], [0, 0, 1, 1], [], []>} : vector<256x4xbf16>, vector<4x32xbf16>, vector<256x32xf32> -> vector<256x32xf32>
    %43 = arith.addf %35, %42 : vector<256x32xf32>
    %c0_42 = arith.constant 0 : index
    %c0_43 = arith.constant 0 : index
    %c1_44 = arith.constant 1 : index
    %c2_45 = arith.constant 2 : index
    %c0_46 = arith.constant 0 : index
    %44 = vector.load %arg1[%c0_42, %c0_43, %c1_44, %c2_45, %c0_46] : memref<1x4x18x18x4xf32, #tpu.memory_space<vmem>>, vector<1x1x16x16x4xf32>
    %45 = vector.shape_cast %44 : vector<1x1x16x16x4xf32> to vector<16x16x4xf32>
    %46 = vector.shape_cast %45 : vector<16x16x4xf32> to vector<256x4xf32>
    %47 = arith.truncf %46 : vector<256x4xf32> to vector<256x4xbf16>
    %c5 = arith.constant 5 : index
    %c0_47 = arith.constant 0 : index
    %c0_48 = arith.constant 0 : index
    %48 = vector.load %arg2[%c5, %c0_47, %c0_48] : memref<9x4x32xbf16, #tpu.memory_space<vmem>>, vector<1x4x32xbf16>
    %49 = vector.shape_cast %48 : vector<1x4x32xbf16> to vector<4x32xbf16>
    %cst_49 = arith.constant dense<0.000000e+00> : vector<256x32xf32>
    %50 = tpu.matmul %47, %49, %cst_49 {dimension_numbers = #tpu.dot_dimension_numbers<[1], [0], [0], [1], [0, 0, 1, 1], [], []>} : vector<256x4xbf16>, vector<4x32xbf16>, vector<256x32xf32> -> vector<256x32xf32>
    %51 = arith.addf %43, %50 : vector<256x32xf32>
    %c0_50 = arith.constant 0 : index
    %c0_51 = arith.constant 0 : index
    %c2_52 = arith.constant 2 : index
    %c0_53 = arith.constant 0 : index
    %c0_54 = arith.constant 0 : index
    %52 = vector.load %arg1[%c0_50, %c0_51, %c2_52, %c0_53, %c0_54] : memref<1x4x18x18x4xf32, #tpu.memory_space<vmem>>, vector<1x1x16x16x4xf32>
    %53 = vector.shape_cast %52 : vector<1x1x16x16x4xf32> to vector<16x16x4xf32>
    %54 = vector.shape_cast %53 : vector<16x16x4xf32> to vector<256x4xf32>
    %55 = arith.truncf %54 : vector<256x4xf32> to vector<256x4xbf16>
    %c6 = arith.constant 6 : index
    %c0_55 = arith.constant 0 : index
    %c0_56 = arith.constant 0 : index
    %56 = vector.load %arg2[%c6, %c0_55, %c0_56] : memref<9x4x32xbf16, #tpu.memory_space<vmem>>, vector<1x4x32xbf16>
    %57 = vector.shape_cast %56 : vector<1x4x32xbf16> to vector<4x32xbf16>
    %cst_57 = arith.constant dense<0.000000e+00> : vector<256x32xf32>
    %58 = tpu.matmul %55, %57, %cst_57 {dimension_numbers = #tpu.dot_dimension_numbers<[1], [0], [0], [1], [0, 0, 1, 1], [], []>} : vector<256x4xbf16>, vector<4x32xbf16>, vector<256x32xf32> -> vector<256x32xf32>
    %59 = arith.addf %51, %58 : vector<256x32xf32>
    %c0_58 = arith.constant 0 : index
    %c0_59 = arith.constant 0 : index
    %c2_60 = arith.constant 2 : index
    %c1_61 = arith.constant 1 : index
    %c0_62 = arith.constant 0 : index
    %60 = vector.load %arg1[%c0_58, %c0_59, %c2_60, %c1_61, %c0_62] : memref<1x4x18x18x4xf32, #tpu.memory_space<vmem>>, vector<1x1x16x16x4xf32>
    %61 = vector.shape_cast %60 : vector<1x1x16x16x4xf32> to vector<16x16x4xf32>
    %62 = vector.shape_cast %61 : vector<16x16x4xf32> to vector<256x4xf32>
    %63 = arith.truncf %62 : vector<256x4xf32> to vector<256x4xbf16>
    %c7 = arith.constant 7 : index
    %c0_63 = arith.constant 0 : index
    %c0_64 = arith.constant 0 : index
    %64 = vector.load %arg2[%c7, %c0_63, %c0_64] : memref<9x4x32xbf16, #tpu.memory_space<vmem>>, vector<1x4x32xbf16>
    %65 = vector.shape_cast %64 : vector<1x4x32xbf16> to vector<4x32xbf16>
    %cst_65 = arith.constant dense<0.000000e+00> : vector<256x32xf32>
    %66 = tpu.matmul %63, %65, %cst_65 {dimension_numbers = #tpu.dot_dimension_numbers<[1], [0], [0], [1], [0, 0, 1, 1], [], []>} : vector<256x4xbf16>, vector<4x32xbf16>, vector<256x32xf32> -> vector<256x32xf32>
    %67 = arith.addf %59, %66 : vector<256x32xf32>
    %c0_66 = arith.constant 0 : index
    %c0_67 = arith.constant 0 : index
    %c2_68 = arith.constant 2 : index
    %c2_69 = arith.constant 2 : index
    %c0_70 = arith.constant 0 : index
    %68 = vector.load %arg1[%c0_66, %c0_67, %c2_68, %c2_69, %c0_70] : memref<1x4x18x18x4xf32, #tpu.memory_space<vmem>>, vector<1x1x16x16x4xf32>
    %69 = vector.shape_cast %68 : vector<1x1x16x16x4xf32> to vector<16x16x4xf32>
    %70 = vector.shape_cast %69 : vector<16x16x4xf32> to vector<256x4xf32>
    %71 = arith.truncf %70 : vector<256x4xf32> to vector<256x4xbf16>
    %c8 = arith.constant 8 : index
    %c0_71 = arith.constant 0 : index
    %c0_72 = arith.constant 0 : index
    %72 = vector.load %arg2[%c8, %c0_71, %c0_72] : memref<9x4x32xbf16, #tpu.memory_space<vmem>>, vector<1x4x32xbf16>
    %73 = vector.shape_cast %72 : vector<1x4x32xbf16> to vector<4x32xbf16>
    %cst_73 = arith.constant dense<0.000000e+00> : vector<256x32xf32>
    %74 = tpu.matmul %71, %73, %cst_73 {dimension_numbers = #tpu.dot_dimension_numbers<[1], [0], [0], [1], [0, 0, 1, 1], [], []>} : vector<256x4xbf16>, vector<4x32xbf16>, vector<256x32xf32> -> vector<256x32xf32>
    %75 = arith.addf %67, %74 : vector<256x32xf32>
    %cst_74 = arith.constant 0.000000e+00 : f32
    %76 = vector.broadcast %cst_74 : f32 to vector<256x32xf32>
    %77 = arith.maximumf %75, %76 : vector<256x32xf32>
    %cst_75 = arith.constant dense<0.000000e+00> : vector<32xf32>
    %78 = vector.multi_reduction <add>, %77, %cst_75 [0] : vector<256x32xf32> to vector<32xf32>
    %79 = vector.shape_cast %78 : vector<32xf32> to vector<1x32xf32>
    %80 = arith.addf %3, %79 : vector<1x32xf32>
    %c0_76 = arith.constant 0 : index
    %c1_77 = arith.constant 1 : index
    %c0_78 = arith.constant 0 : index
    %c0_79 = arith.constant 0 : index
    %c0_80 = arith.constant 0 : index
    %81 = vector.load %arg1[%c0_76, %c1_77, %c0_78, %c0_79, %c0_80] : memref<1x4x18x18x4xf32, #tpu.memory_space<vmem>>, vector<1x1x16x16x4xf32>
    %82 = vector.shape_cast %81 : vector<1x1x16x16x4xf32> to vector<16x16x4xf32>
    %83 = vector.shape_cast %82 : vector<16x16x4xf32> to vector<256x4xf32>
    %84 = arith.truncf %83 : vector<256x4xf32> to vector<256x4xbf16>
    %c0_81 = arith.constant 0 : index
    %c0_82 = arith.constant 0 : index
    %c0_83 = arith.constant 0 : index
    %85 = vector.load %arg2[%c0_81, %c0_82, %c0_83] : memref<9x4x32xbf16, #tpu.memory_space<vmem>>, vector<1x4x32xbf16>
    %86 = vector.shape_cast %85 : vector<1x4x32xbf16> to vector<4x32xbf16>
    %cst_84 = arith.constant dense<0.000000e+00> : vector<256x32xf32>
    %87 = tpu.matmul %84, %86, %cst_84 {dimension_numbers = #tpu.dot_dimension_numbers<[1], [0], [0], [1], [0, 0, 1, 1], [], []>} : vector<256x4xbf16>, vector<4x32xbf16>, vector<256x32xf32> -> vector<256x32xf32>
    %88 = arith.addf %2, %87 : vector<256x32xf32>
    %c0_85 = arith.constant 0 : index
    %c1_86 = arith.constant 1 : index
    %c0_87 = arith.constant 0 : index
    %c1_88 = arith.constant 1 : index
    %c0_89 = arith.constant 0 : index
    %89 = vector.load %arg1[%c0_85, %c1_86, %c0_87, %c1_88, %c0_89] : memref<1x4x18x18x4xf32, #tpu.memory_space<vmem>>, vector<1x1x16x16x4xf32>
    %90 = vector.shape_cast %89 : vector<1x1x16x16x4xf32> to vector<16x16x4xf32>
    %91 = vector.shape_cast %90 : vector<16x16x4xf32> to vector<256x4xf32>
    %92 = arith.truncf %91 : vector<256x4xf32> to vector<256x4xbf16>
    %c1_90 = arith.constant 1 : index
    %c0_91 = arith.constant 0 : index
    %c0_92 = arith.constant 0 : index
    %93 = vector.load %arg2[%c1_90, %c0_91, %c0_92] : memref<9x4x32xbf16, #tpu.memory_space<vmem>>, vector<1x4x32xbf16>
    %94 = vector.shape_cast %93 : vector<1x4x32xbf16> to vector<4x32xbf16>
    %cst_93 = arith.constant dense<0.000000e+00> : vector<256x32xf32>
    %95 = tpu.matmul %92, %94, %cst_93 {dimension_numbers = #tpu.dot_dimension_numbers<[1], [0], [0], [1], [0, 0, 1, 1], [], []>} : vector<256x4xbf16>, vector<4x32xbf16>, vector<256x32xf32> -> vector<256x32xf32>
    %96 = arith.addf %88, %95 : vector<256x32xf32>
    %c0_94 = arith.constant 0 : index
    %c1_95 = arith.constant 1 : index
    %c0_96 = arith.constant 0 : index
    %c2_97 = arith.constant 2 : index
    %c0_98 = arith.constant 0 : index
    %97 = vector.load %arg1[%c0_94, %c1_95, %c0_96, %c2_97, %c0_98] : memref<1x4x18x18x4xf32, #tpu.memory_space<vmem>>, vector<1x1x16x16x4xf32>
    %98 = vector.shape_cast %97 : vector<1x1x16x16x4xf32> to vector<16x16x4xf32>
    %99 = vector.shape_cast %98 : vector<16x16x4xf32> to vector<256x4xf32>
    %100 = arith.truncf %99 : vector<256x4xf32> to vector<256x4xbf16>
    %c2_99 = arith.constant 2 : index
    %c0_100 = arith.constant 0 : index
    %c0_101 = arith.constant 0 : index
    %101 = vector.load %arg2[%c2_99, %c0_100, %c0_101] : memref<9x4x32xbf16, #tpu.memory_space<vmem>>, vector<1x4x32xbf16>
    %102 = vector.shape_cast %101 : vector<1x4x32xbf16> to vector<4x32xbf16>
    %cst_102 = arith.constant dense<0.000000e+00> : vector<256x32xf32>
    %103 = tpu.matmul %100, %102, %cst_102 {dimension_numbers = #tpu.dot_dimension_numbers<[1], [0], [0], [1], [0, 0, 1, 1], [], []>} : vector<256x4xbf16>, vector<4x32xbf16>, vector<256x32xf32> -> vector<256x32xf32>
    %104 = arith.addf %96, %103 : vector<256x32xf32>
    %c0_103 = arith.constant 0 : index
    %c1_104 = arith.constant 1 : index
    %c1_105 = arith.constant 1 : index
    %c0_106 = arith.constant 0 : index
    %c0_107 = arith.constant 0 : index
    %105 = vector.load %arg1[%c0_103, %c1_104, %c1_105, %c0_106, %c0_107] : memref<1x4x18x18x4xf32, #tpu.memory_space<vmem>>, vector<1x1x16x16x4xf32>
    %106 = vector.shape_cast %105 : vector<1x1x16x16x4xf32> to vector<16x16x4xf32>
    %107 = vector.shape_cast %106 : vector<16x16x4xf32> to vector<256x4xf32>
    %108 = arith.truncf %107 : vector<256x4xf32> to vector<256x4xbf16>
    %c3_108 = arith.constant 3 : index
    %c0_109 = arith.constant 0 : index
    %c0_110 = arith.constant 0 : index
    %109 = vector.load %arg2[%c3_108, %c0_109, %c0_110] : memref<9x4x32xbf16, #tpu.memory_space<vmem>>, vector<1x4x32xbf16>
    %110 = vector.shape_cast %109 : vector<1x4x32xbf16> to vector<4x32xbf16>
    %cst_111 = arith.constant dense<0.000000e+00> : vector<256x32xf32>
    %111 = tpu.matmul %108, %110, %cst_111 {dimension_numbers = #tpu.dot_dimension_numbers<[1], [0], [0], [1], [0, 0, 1, 1], [], []>} : vector<256x4xbf16>, vector<4x32xbf16>, vector<256x32xf32> -> vector<256x32xf32>
    %112 = arith.addf %104, %111 : vector<256x32xf32>
    %c0_112 = arith.constant 0 : index
    %c1_113 = arith.constant 1 : index
    %c1_114 = arith.constant 1 : index
    %c1_115 = arith.constant 1 : index
    %c0_116 = arith.constant 0 : index
    %113 = vector.load %arg1[%c0_112, %c1_113, %c1_114, %c1_115, %c0_116] : memref<1x4x18x18x4xf32, #tpu.memory_space<vmem>>, vector<1x1x16x16x4xf32>
    %114 = vector.shape_cast %113 : vector<1x1x16x16x4xf32> to vector<16x16x4xf32>
    %115 = vector.shape_cast %114 : vector<16x16x4xf32> to vector<256x4xf32>
    %116 = arith.truncf %115 : vector<256x4xf32> to vector<256x4xbf16>
    %c4_117 = arith.constant 4 : index
    %c0_118 = arith.constant 0 : index
    %c0_119 = arith.constant 0 : index
    %117 = vector.load %arg2[%c4_117, %c0_118, %c0_119] : memref<9x4x32xbf16, #tpu.memory_space<vmem>>, vector<1x4x32xbf16>
    %118 = vector.shape_cast %117 : vector<1x4x32xbf16> to vector<4x32xbf16>
    %cst_120 = arith.constant dense<0.000000e+00> : vector<256x32xf32>
    %119 = tpu.matmul %116, %118, %cst_120 {dimension_numbers = #tpu.dot_dimension_numbers<[1], [0], [0], [1], [0, 0, 1, 1], [], []>} : vector<256x4xbf16>, vector<4x32xbf16>, vector<256x32xf32> -> vector<256x32xf32>
    %120 = arith.addf %112, %119 : vector<256x32xf32>
    %c0_121 = arith.constant 0 : index
    %c1_122 = arith.constant 1 : index
    %c1_123 = arith.constant 1 : index
    %c2_124 = arith.constant 2 : index
    %c0_125 = arith.constant 0 : index
    %121 = vector.load %arg1[%c0_121, %c1_122, %c1_123, %c2_124, %c0_125] : memref<1x4x18x18x4xf32, #tpu.memory_space<vmem>>, vector<1x1x16x16x4xf32>
    %122 = vector.shape_cast %121 : vector<1x1x16x16x4xf32> to vector<16x16x4xf32>
    %123 = vector.shape_cast %122 : vector<16x16x4xf32> to vector<256x4xf32>
    %124 = arith.truncf %123 : vector<256x4xf32> to vector<256x4xbf16>
    %c5_126 = arith.constant 5 : index
    %c0_127 = arith.constant 0 : index
    %c0_128 = arith.constant 0 : index
    %125 = vector.load %arg2[%c5_126, %c0_127, %c0_128] : memref<9x4x32xbf16, #tpu.memory_space<vmem>>, vector<1x4x32xbf16>
    %126 = vector.shape_cast %125 : vector<1x4x32xbf16> to vector<4x32xbf16>
    %cst_129 = arith.constant dense<0.000000e+00> : vector<256x32xf32>
    %127 = tpu.matmul %124, %126, %cst_129 {dimension_numbers = #tpu.dot_dimension_numbers<[1], [0], [0], [1], [0, 0, 1, 1], [], []>} : vector<256x4xbf16>, vector<4x32xbf16>, vector<256x32xf32> -> vector<256x32xf32>
    %128 = arith.addf %120, %127 : vector<256x32xf32>
    %c0_130 = arith.constant 0 : index
    %c1_131 = arith.constant 1 : index
    %c2_132 = arith.constant 2 : index
    %c0_133 = arith.constant 0 : index
    %c0_134 = arith.constant 0 : index
    %129 = vector.load %arg1[%c0_130, %c1_131, %c2_132, %c0_133, %c0_134] : memref<1x4x18x18x4xf32, #tpu.memory_space<vmem>>, vector<1x1x16x16x4xf32>
    %130 = vector.shape_cast %129 : vector<1x1x16x16x4xf32> to vector<16x16x4xf32>
    %131 = vector.shape_cast %130 : vector<16x16x4xf32> to vector<256x4xf32>
    %132 = arith.truncf %131 : vector<256x4xf32> to vector<256x4xbf16>
    %c6_135 = arith.constant 6 : index
    %c0_136 = arith.constant 0 : index
    %c0_137 = arith.constant 0 : index
    %133 = vector.load %arg2[%c6_135, %c0_136, %c0_137] : memref<9x4x32xbf16, #tpu.memory_space<vmem>>, vector<1x4x32xbf16>
    %134 = vector.shape_cast %133 : vector<1x4x32xbf16> to vector<4x32xbf16>
    %cst_138 = arith.constant dense<0.000000e+00> : vector<256x32xf32>
    %135 = tpu.matmul %132, %134, %cst_138 {dimension_numbers = #tpu.dot_dimension_numbers<[1], [0], [0], [1], [0, 0, 1, 1], [], []>} : vector<256x4xbf16>, vector<4x32xbf16>, vector<256x32xf32> -> vector<256x32xf32>
    %136 = arith.addf %128, %135 : vector<256x32xf32>
    %c0_139 = arith.constant 0 : index
    %c1_140 = arith.constant 1 : index
    %c2_141 = arith.constant 2 : index
    %c1_142 = arith.constant 1 : index
    %c0_143 = arith.constant 0 : index
    %137 = vector.load %arg1[%c0_139, %c1_140, %c2_141, %c1_142, %c0_143] : memref<1x4x18x18x4xf32, #tpu.memory_space<vmem>>, vector<1x1x16x16x4xf32>
    %138 = vector.shape_cast %137 : vector<1x1x16x16x4xf32> to vector<16x16x4xf32>
    %139 = vector.shape_cast %138 : vector<16x16x4xf32> to vector<256x4xf32>
    %140 = arith.truncf %139 : vector<256x4xf32> to vector<256x4xbf16>
    %c7_144 = arith.constant 7 : index
    %c0_145 = arith.constant 0 : index
    %c0_146 = arith.constant 0 : index
    %141 = vector.load %arg2[%c7_144, %c0_145, %c0_146] : memref<9x4x32xbf16, #tpu.memory_space<vmem>>, vector<1x4x32xbf16>
    %142 = vector.shape_cast %141 : vector<1x4x32xbf16> to vector<4x32xbf16>
    %cst_147 = arith.constant dense<0.000000e+00> : vector<256x32xf32>
    %143 = tpu.matmul %140, %142, %cst_147 {dimension_numbers = #tpu.dot_dimension_numbers<[1], [0], [0], [1], [0, 0, 1, 1], [], []>} : vector<256x4xbf16>, vector<4x32xbf16>, vector<256x32xf32> -> vector<256x32xf32>
    %144 = arith.addf %136, %143 : vector<256x32xf32>
    %c0_148 = arith.constant 0 : index
    %c1_149 = arith.constant 1 : index
    %c2_150 = arith.constant 2 : index
    %c2_151 = arith.constant 2 : index
    %c0_152 = arith.constant 0 : index
    %145 = vector.load %arg1[%c0_148, %c1_149, %c2_150, %c2_151, %c0_152] : memref<1x4x18x18x4xf32, #tpu.memory_space<vmem>>, vector<1x1x16x16x4xf32>
    %146 = vector.shape_cast %145 : vector<1x1x16x16x4xf32> to vector<16x16x4xf32>
    %147 = vector.shape_cast %146 : vector<16x16x4xf32> to vector<256x4xf32>
    %148 = arith.truncf %147 : vector<256x4xf32> to vector<256x4xbf16>
    %c8_153 = arith.constant 8 : index
    %c0_154 = arith.constant 0 : index
    %c0_155 = arith.constant 0 : index
    %149 = vector.load %arg2[%c8_153, %c0_154, %c0_155] : memref<9x4x32xbf16, #tpu.memory_space<vmem>>, vector<1x4x32xbf16>
    %150 = vector.shape_cast %149 : vector<1x4x32xbf16> to vector<4x32xbf16>
    %cst_156 = arith.constant dense<0.000000e+00> : vector<256x32xf32>
    %151 = tpu.matmul %148, %150, %cst_156 {dimension_numbers = #tpu.dot_dimension_numbers<[1], [0], [0], [1], [0, 0, 1, 1], [], []>} : vector<256x4xbf16>, vector<4x32xbf16>, vector<256x32xf32> -> vector<256x32xf32>
    %152 = arith.addf %144, %151 : vector<256x32xf32>
    %cst_157 = arith.constant 0.000000e+00 : f32
    %153 = vector.broadcast %cst_157 : f32 to vector<256x32xf32>
    %154 = arith.maximumf %152, %153 : vector<256x32xf32>
    %cst_158 = arith.constant dense<0.000000e+00> : vector<32xf32>
    %155 = vector.multi_reduction <add>, %154, %cst_158 [0] : vector<256x32xf32> to vector<32xf32>
    %156 = vector.shape_cast %155 : vector<32xf32> to vector<1x32xf32>
    %157 = arith.addf %80, %156 : vector<1x32xf32>
    %c0_159 = arith.constant 0 : index
    %c2_160 = arith.constant 2 : index
    %c0_161 = arith.constant 0 : index
    %c0_162 = arith.constant 0 : index
    %c0_163 = arith.constant 0 : index
    %158 = vector.load %arg1[%c0_159, %c2_160, %c0_161, %c0_162, %c0_163] : memref<1x4x18x18x4xf32, #tpu.memory_space<vmem>>, vector<1x1x16x16x4xf32>
    %159 = vector.shape_cast %158 : vector<1x1x16x16x4xf32> to vector<16x16x4xf32>
    %160 = vector.shape_cast %159 : vector<16x16x4xf32> to vector<256x4xf32>
    %161 = arith.truncf %160 : vector<256x4xf32> to vector<256x4xbf16>
    %c0_164 = arith.constant 0 : index
    %c0_165 = arith.constant 0 : index
    %c0_166 = arith.constant 0 : index
    %162 = vector.load %arg2[%c0_164, %c0_165, %c0_166] : memref<9x4x32xbf16, #tpu.memory_space<vmem>>, vector<1x4x32xbf16>
    %163 = vector.shape_cast %162 : vector<1x4x32xbf16> to vector<4x32xbf16>
    %cst_167 = arith.constant dense<0.000000e+00> : vector<256x32xf32>
    %164 = tpu.matmul %161, %163, %cst_167 {dimension_numbers = #tpu.dot_dimension_numbers<[1], [0], [0], [1], [0, 0, 1, 1], [], []>} : vector<256x4xbf16>, vector<4x32xbf16>, vector<256x32xf32> -> vector<256x32xf32>
    %165 = arith.addf %2, %164 : vector<256x32xf32>
    %c0_168 = arith.constant 0 : index
    %c2_169 = arith.constant 2 : index
    %c0_170 = arith.constant 0 : index
    %c1_171 = arith.constant 1 : index
    %c0_172 = arith.constant 0 : index
    %166 = vector.load %arg1[%c0_168, %c2_169, %c0_170, %c1_171, %c0_172] : memref<1x4x18x18x4xf32, #tpu.memory_space<vmem>>, vector<1x1x16x16x4xf32>
    %167 = vector.shape_cast %166 : vector<1x1x16x16x4xf32> to vector<16x16x4xf32>
    %168 = vector.shape_cast %167 : vector<16x16x4xf32> to vector<256x4xf32>
    %169 = arith.truncf %168 : vector<256x4xf32> to vector<256x4xbf16>
    %c1_173 = arith.constant 1 : index
    %c0_174 = arith.constant 0 : index
    %c0_175 = arith.constant 0 : index
    %170 = vector.load %arg2[%c1_173, %c0_174, %c0_175] : memref<9x4x32xbf16, #tpu.memory_space<vmem>>, vector<1x4x32xbf16>
    %171 = vector.shape_cast %170 : vector<1x4x32xbf16> to vector<4x32xbf16>
    %cst_176 = arith.constant dense<0.000000e+00> : vector<256x32xf32>
    %172 = tpu.matmul %169, %171, %cst_176 {dimension_numbers = #tpu.dot_dimension_numbers<[1], [0], [0], [1], [0, 0, 1, 1], [], []>} : vector<256x4xbf16>, vector<4x32xbf16>, vector<256x32xf32> -> vector<256x32xf32>
    %173 = arith.addf %165, %172 : vector<256x32xf32>
    %c0_177 = arith.constant 0 : index
    %c2_178 = arith.constant 2 : index
    %c0_179 = arith.constant 0 : index
    %c2_180 = arith.constant 2 : index
    %c0_181 = arith.constant 0 : index
    %174 = vector.load %arg1[%c0_177, %c2_178, %c0_179, %c2_180, %c0_181] : memref<1x4x18x18x4xf32, #tpu.memory_space<vmem>>, vector<1x1x16x16x4xf32>
    %175 = vector.shape_cast %174 : vector<1x1x16x16x4xf32> to vector<16x16x4xf32>
    %176 = vector.shape_cast %175 : vector<16x16x4xf32> to vector<256x4xf32>
    %177 = arith.truncf %176 : vector<256x4xf32> to vector<256x4xbf16>
    %c2_182 = arith.constant 2 : index
    %c0_183 = arith.constant 0 : index
    %c0_184 = arith.constant 0 : index
    %178 = vector.load %arg2[%c2_182, %c0_183, %c0_184] : memref<9x4x32xbf16, #tpu.memory_space<vmem>>, vector<1x4x32xbf16>
    %179 = vector.shape_cast %178 : vector<1x4x32xbf16> to vector<4x32xbf16>
    %cst_185 = arith.constant dense<0.000000e+00> : vector<256x32xf32>
    %180 = tpu.matmul %177, %179, %cst_185 {dimension_numbers = #tpu.dot_dimension_numbers<[1], [0], [0], [1], [0, 0, 1, 1], [], []>} : vector<256x4xbf16>, vector<4x32xbf16>, vector<256x32xf32> -> vector<256x32xf32>
    %181 = arith.addf %173, %180 : vector<256x32xf32>
    %c0_186 = arith.constant 0 : index
    %c2_187 = arith.constant 2 : index
    %c1_188 = arith.constant 1 : index
    %c0_189 = arith.constant 0 : index
    %c0_190 = arith.constant 0 : index
    %182 = vector.load %arg1[%c0_186, %c2_187, %c1_188, %c0_189, %c0_190] : memref<1x4x18x18x4xf32, #tpu.memory_space<vmem>>, vector<1x1x16x16x4xf32>
    %183 = vector.shape_cast %182 : vector<1x1x16x16x4xf32> to vector<16x16x4xf32>
    %184 = vector.shape_cast %183 : vector<16x16x4xf32> to vector<256x4xf32>
    %185 = arith.truncf %184 : vector<256x4xf32> to vector<256x4xbf16>
    %c3_191 = arith.constant 3 : index
    %c0_192 = arith.constant 0 : index
    %c0_193 = arith.constant 0 : index
    %186 = vector.load %arg2[%c3_191, %c0_192, %c0_193] : memref<9x4x32xbf16, #tpu.memory_space<vmem>>, vector<1x4x32xbf16>
    %187 = vector.shape_cast %186 : vector<1x4x32xbf16> to vector<4x32xbf16>
    %cst_194 = arith.constant dense<0.000000e+00> : vector<256x32xf32>
    %188 = tpu.matmul %185, %187, %cst_194 {dimension_numbers = #tpu.dot_dimension_numbers<[1], [0], [0], [1], [0, 0, 1, 1], [], []>} : vector<256x4xbf16>, vector<4x32xbf16>, vector<256x32xf32> -> vector<256x32xf32>
    %189 = arith.addf %181, %188 : vector<256x32xf32>
    %c0_195 = arith.constant 0 : index
    %c2_196 = arith.constant 2 : index
    %c1_197 = arith.constant 1 : index
    %c1_198 = arith.constant 1 : index
    %c0_199 = arith.constant 0 : index
    %190 = vector.load %arg1[%c0_195, %c2_196, %c1_197, %c1_198, %c0_199] : memref<1x4x18x18x4xf32, #tpu.memory_space<vmem>>, vector<1x1x16x16x4xf32>
    %191 = vector.shape_cast %190 : vector<1x1x16x16x4xf32> to vector<16x16x4xf32>
    %192 = vector.shape_cast %191 : vector<16x16x4xf32> to vector<256x4xf32>
    %193 = arith.truncf %192 : vector<256x4xf32> to vector<256x4xbf16>
    %c4_200 = arith.constant 4 : index
    %c0_201 = arith.constant 0 : index
    %c0_202 = arith.constant 0 : index
    %194 = vector.load %arg2[%c4_200, %c0_201, %c0_202] : memref<9x4x32xbf16, #tpu.memory_space<vmem>>, vector<1x4x32xbf16>
    %195 = vector.shape_cast %194 : vector<1x4x32xbf16> to vector<4x32xbf16>
    %cst_203 = arith.constant dense<0.000000e+00> : vector<256x32xf32>
    %196 = tpu.matmul %193, %195, %cst_203 {dimension_numbers = #tpu.dot_dimension_numbers<[1], [0], [0], [1], [0, 0, 1, 1], [], []>} : vector<256x4xbf16>, vector<4x32xbf16>, vector<256x32xf32> -> vector<256x32xf32>
    %197 = arith.addf %189, %196 : vector<256x32xf32>
    %c0_204 = arith.constant 0 : index
    %c2_205 = arith.constant 2 : index
    %c1_206 = arith.constant 1 : index
    %c2_207 = arith.constant 2 : index
    %c0_208 = arith.constant 0 : index
    %198 = vector.load %arg1[%c0_204, %c2_205, %c1_206, %c2_207, %c0_208] : memref<1x4x18x18x4xf32, #tpu.memory_space<vmem>>, vector<1x1x16x16x4xf32>
    %199 = vector.shape_cast %198 : vector<1x1x16x16x4xf32> to vector<16x16x4xf32>
    %200 = vector.shape_cast %199 : vector<16x16x4xf32> to vector<256x4xf32>
    %201 = arith.truncf %200 : vector<256x4xf32> to vector<256x4xbf16>
    %c5_209 = arith.constant 5 : index
    %c0_210 = arith.constant 0 : index
    %c0_211 = arith.constant 0 : index
    %202 = vector.load %arg2[%c5_209, %c0_210, %c0_211] : memref<9x4x32xbf16, #tpu.memory_space<vmem>>, vector<1x4x32xbf16>
    %203 = vector.shape_cast %202 : vector<1x4x32xbf16> to vector<4x32xbf16>
    %cst_212 = arith.constant dense<0.000000e+00> : vector<256x32xf32>
    %204 = tpu.matmul %201, %203, %cst_212 {dimension_numbers = #tpu.dot_dimension_numbers<[1], [0], [0], [1], [0, 0, 1, 1], [], []>} : vector<256x4xbf16>, vector<4x32xbf16>, vector<256x32xf32> -> vector<256x32xf32>
    %205 = arith.addf %197, %204 : vector<256x32xf32>
    %c0_213 = arith.constant 0 : index
    %c2_214 = arith.constant 2 : index
    %c2_215 = arith.constant 2 : index
    %c0_216 = arith.constant 0 : index
    %c0_217 = arith.constant 0 : index
    %206 = vector.load %arg1[%c0_213, %c2_214, %c2_215, %c0_216, %c0_217] : memref<1x4x18x18x4xf32, #tpu.memory_space<vmem>>, vector<1x1x16x16x4xf32>
    %207 = vector.shape_cast %206 : vector<1x1x16x16x4xf32> to vector<16x16x4xf32>
    %208 = vector.shape_cast %207 : vector<16x16x4xf32> to vector<256x4xf32>
    %209 = arith.truncf %208 : vector<256x4xf32> to vector<256x4xbf16>
    %c6_218 = arith.constant 6 : index
    %c0_219 = arith.constant 0 : index
    %c0_220 = arith.constant 0 : index
    %210 = vector.load %arg2[%c6_218, %c0_219, %c0_220] : memref<9x4x32xbf16, #tpu.memory_space<vmem>>, vector<1x4x32xbf16>
    %211 = vector.shape_cast %210 : vector<1x4x32xbf16> to vector<4x32xbf16>
    %cst_221 = arith.constant dense<0.000000e+00> : vector<256x32xf32>
    %212 = tpu.matmul %209, %211, %cst_221 {dimension_numbers = #tpu.dot_dimension_numbers<[1], [0], [0], [1], [0, 0, 1, 1], [], []>} : vector<256x4xbf16>, vector<4x32xbf16>, vector<256x32xf32> -> vector<256x32xf32>
    %213 = arith.addf %205, %212 : vector<256x32xf32>
    %c0_222 = arith.constant 0 : index
    %c2_223 = arith.constant 2 : index
    %c2_224 = arith.constant 2 : index
    %c1_225 = arith.constant 1 : index
    %c0_226 = arith.constant 0 : index
    %214 = vector.load %arg1[%c0_222, %c2_223, %c2_224, %c1_225, %c0_226] : memref<1x4x18x18x4xf32, #tpu.memory_space<vmem>>, vector<1x1x16x16x4xf32>
    %215 = vector.shape_cast %214 : vector<1x1x16x16x4xf32> to vector<16x16x4xf32>
    %216 = vector.shape_cast %215 : vector<16x16x4xf32> to vector<256x4xf32>
    %217 = arith.truncf %216 : vector<256x4xf32> to vector<256x4xbf16>
    %c7_227 = arith.constant 7 : index
    %c0_228 = arith.constant 0 : index
    %c0_229 = arith.constant 0 : index
    %218 = vector.load %arg2[%c7_227, %c0_228, %c0_229] : memref<9x4x32xbf16, #tpu.memory_space<vmem>>, vector<1x4x32xbf16>
    %219 = vector.shape_cast %218 : vector<1x4x32xbf16> to vector<4x32xbf16>
    %cst_230 = arith.constant dense<0.000000e+00> : vector<256x32xf32>
    %220 = tpu.matmul %217, %219, %cst_230 {dimension_numbers = #tpu.dot_dimension_numbers<[1], [0], [0], [1], [0, 0, 1, 1], [], []>} : vector<256x4xbf16>, vector<4x32xbf16>, vector<256x32xf32> -> vector<256x32xf32>
    %221 = arith.addf %213, %220 : vector<256x32xf32>
    %c0_231 = arith.constant 0 : index
    %c2_232 = arith.constant 2 : index
    %c2_233 = arith.constant 2 : index
    %c2_234 = arith.constant 2 : index
    %c0_235 = arith.constant 0 : index
    %222 = vector.load %arg1[%c0_231, %c2_232, %c2_233, %c2_234, %c0_235] : memref<1x4x18x18x4xf32, #tpu.memory_space<vmem>>, vector<1x1x16x16x4xf32>
    %223 = vector.shape_cast %222 : vector<1x1x16x16x4xf32> to vector<16x16x4xf32>
    %224 = vector.shape_cast %223 : vector<16x16x4xf32> to vector<256x4xf32>
    %225 = arith.truncf %224 : vector<256x4xf32> to vector<256x4xbf16>
    %c8_236 = arith.constant 8 : index
    %c0_237 = arith.constant 0 : index
    %c0_238 = arith.constant 0 : index
    %226 = vector.load %arg2[%c8_236, %c0_237, %c0_238] : memref<9x4x32xbf16, #tpu.memory_space<vmem>>, vector<1x4x32xbf16>
    %227 = vector.shape_cast %226 : vector<1x4x32xbf16> to vector<4x32xbf16>
    %cst_239 = arith.constant dense<0.000000e+00> : vector<256x32xf32>
    %228 = tpu.matmul %225, %227, %cst_239 {dimension_numbers = #tpu.dot_dimension_numbers<[1], [0], [0], [1], [0, 0, 1, 1], [], []>} : vector<256x4xbf16>, vector<4x32xbf16>, vector<256x32xf32> -> vector<256x32xf32>
    %229 = arith.addf %221, %228 : vector<256x32xf32>
    %cst_240 = arith.constant 0.000000e+00 : f32
    %230 = vector.broadcast %cst_240 : f32 to vector<256x32xf32>
    %231 = arith.maximumf %229, %230 : vector<256x32xf32>
    %cst_241 = arith.constant dense<0.000000e+00> : vector<32xf32>
    %232 = vector.multi_reduction <add>, %231, %cst_241 [0] : vector<256x32xf32> to vector<32xf32>
    %233 = vector.shape_cast %232 : vector<32xf32> to vector<1x32xf32>
    %234 = arith.addf %157, %233 : vector<1x32xf32>
    %c0_242 = arith.constant 0 : index
    %c3_243 = arith.constant 3 : index
    %c0_244 = arith.constant 0 : index
    %c0_245 = arith.constant 0 : index
    %c0_246 = arith.constant 0 : index
    %235 = vector.load %arg1[%c0_242, %c3_243, %c0_244, %c0_245, %c0_246] : memref<1x4x18x18x4xf32, #tpu.memory_space<vmem>>, vector<1x1x16x16x4xf32>
    %236 = vector.shape_cast %235 : vector<1x1x16x16x4xf32> to vector<16x16x4xf32>
    %237 = vector.shape_cast %236 : vector<16x16x4xf32> to vector<256x4xf32>
    %238 = arith.truncf %237 : vector<256x4xf32> to vector<256x4xbf16>
    %c0_247 = arith.constant 0 : index
    %c0_248 = arith.constant 0 : index
    %c0_249 = arith.constant 0 : index
    %239 = vector.load %arg2[%c0_247, %c0_248, %c0_249] : memref<9x4x32xbf16, #tpu.memory_space<vmem>>, vector<1x4x32xbf16>
    %240 = vector.shape_cast %239 : vector<1x4x32xbf16> to vector<4x32xbf16>
    %cst_250 = arith.constant dense<0.000000e+00> : vector<256x32xf32>
    %241 = tpu.matmul %238, %240, %cst_250 {dimension_numbers = #tpu.dot_dimension_numbers<[1], [0], [0], [1], [0, 0, 1, 1], [], []>} : vector<256x4xbf16>, vector<4x32xbf16>, vector<256x32xf32> -> vector<256x32xf32>
    %242 = arith.addf %2, %241 : vector<256x32xf32>
    %c0_251 = arith.constant 0 : index
    %c3_252 = arith.constant 3 : index
    %c0_253 = arith.constant 0 : index
    %c1_254 = arith.constant 1 : index
    %c0_255 = arith.constant 0 : index
    %243 = vector.load %arg1[%c0_251, %c3_252, %c0_253, %c1_254, %c0_255] : memref<1x4x18x18x4xf32, #tpu.memory_space<vmem>>, vector<1x1x16x16x4xf32>
    %244 = vector.shape_cast %243 : vector<1x1x16x16x4xf32> to vector<16x16x4xf32>
    %245 = vector.shape_cast %244 : vector<16x16x4xf32> to vector<256x4xf32>
    %246 = arith.truncf %245 : vector<256x4xf32> to vector<256x4xbf16>
    %c1_256 = arith.constant 1 : index
    %c0_257 = arith.constant 0 : index
    %c0_258 = arith.constant 0 : index
    %247 = vector.load %arg2[%c1_256, %c0_257, %c0_258] : memref<9x4x32xbf16, #tpu.memory_space<vmem>>, vector<1x4x32xbf16>
    %248 = vector.shape_cast %247 : vector<1x4x32xbf16> to vector<4x32xbf16>
    %cst_259 = arith.constant dense<0.000000e+00> : vector<256x32xf32>
    %249 = tpu.matmul %246, %248, %cst_259 {dimension_numbers = #tpu.dot_dimension_numbers<[1], [0], [0], [1], [0, 0, 1, 1], [], []>} : vector<256x4xbf16>, vector<4x32xbf16>, vector<256x32xf32> -> vector<256x32xf32>
    %250 = arith.addf %242, %249 : vector<256x32xf32>
    %c0_260 = arith.constant 0 : index
    %c3_261 = arith.constant 3 : index
    %c0_262 = arith.constant 0 : index
    %c2_263 = arith.constant 2 : index
    %c0_264 = arith.constant 0 : index
    %251 = vector.load %arg1[%c0_260, %c3_261, %c0_262, %c2_263, %c0_264] : memref<1x4x18x18x4xf32, #tpu.memory_space<vmem>>, vector<1x1x16x16x4xf32>
    %252 = vector.shape_cast %251 : vector<1x1x16x16x4xf32> to vector<16x16x4xf32>
    %253 = vector.shape_cast %252 : vector<16x16x4xf32> to vector<256x4xf32>
    %254 = arith.truncf %253 : vector<256x4xf32> to vector<256x4xbf16>
    %c2_265 = arith.constant 2 : index
    %c0_266 = arith.constant 0 : index
    %c0_267 = arith.constant 0 : index
    %255 = vector.load %arg2[%c2_265, %c0_266, %c0_267] : memref<9x4x32xbf16, #tpu.memory_space<vmem>>, vector<1x4x32xbf16>
    %256 = vector.shape_cast %255 : vector<1x4x32xbf16> to vector<4x32xbf16>
    %cst_268 = arith.constant dense<0.000000e+00> : vector<256x32xf32>
    %257 = tpu.matmul %254, %256, %cst_268 {dimension_numbers = #tpu.dot_dimension_numbers<[1], [0], [0], [1], [0, 0, 1, 1], [], []>} : vector<256x4xbf16>, vector<4x32xbf16>, vector<256x32xf32> -> vector<256x32xf32>
    %258 = arith.addf %250, %257 : vector<256x32xf32>
    %c0_269 = arith.constant 0 : index
    %c3_270 = arith.constant 3 : index
    %c1_271 = arith.constant 1 : index
    %c0_272 = arith.constant 0 : index
    %c0_273 = arith.constant 0 : index
    %259 = vector.load %arg1[%c0_269, %c3_270, %c1_271, %c0_272, %c0_273] : memref<1x4x18x18x4xf32, #tpu.memory_space<vmem>>, vector<1x1x16x16x4xf32>
    %260 = vector.shape_cast %259 : vector<1x1x16x16x4xf32> to vector<16x16x4xf32>
    %261 = vector.shape_cast %260 : vector<16x16x4xf32> to vector<256x4xf32>
    %262 = arith.truncf %261 : vector<256x4xf32> to vector<256x4xbf16>
    %c3_274 = arith.constant 3 : index
    %c0_275 = arith.constant 0 : index
    %c0_276 = arith.constant 0 : index
    %263 = vector.load %arg2[%c3_274, %c0_275, %c0_276] : memref<9x4x32xbf16, #tpu.memory_space<vmem>>, vector<1x4x32xbf16>
    %264 = vector.shape_cast %263 : vector<1x4x32xbf16> to vector<4x32xbf16>
    %cst_277 = arith.constant dense<0.000000e+00> : vector<256x32xf32>
    %265 = tpu.matmul %262, %264, %cst_277 {dimension_numbers = #tpu.dot_dimension_numbers<[1], [0], [0], [1], [0, 0, 1, 1], [], []>} : vector<256x4xbf16>, vector<4x32xbf16>, vector<256x32xf32> -> vector<256x32xf32>
    %266 = arith.addf %258, %265 : vector<256x32xf32>
    %c0_278 = arith.constant 0 : index
    %c3_279 = arith.constant 3 : index
    %c1_280 = arith.constant 1 : index
    %c1_281 = arith.constant 1 : index
    %c0_282 = arith.constant 0 : index
    %267 = vector.load %arg1[%c0_278, %c3_279, %c1_280, %c1_281, %c0_282] : memref<1x4x18x18x4xf32, #tpu.memory_space<vmem>>, vector<1x1x16x16x4xf32>
    %268 = vector.shape_cast %267 : vector<1x1x16x16x4xf32> to vector<16x16x4xf32>
    %269 = vector.shape_cast %268 : vector<16x16x4xf32> to vector<256x4xf32>
    %270 = arith.truncf %269 : vector<256x4xf32> to vector<256x4xbf16>
    %c4_283 = arith.constant 4 : index
    %c0_284 = arith.constant 0 : index
    %c0_285 = arith.constant 0 : index
    %271 = vector.load %arg2[%c4_283, %c0_284, %c0_285] : memref<9x4x32xbf16, #tpu.memory_space<vmem>>, vector<1x4x32xbf16>
    %272 = vector.shape_cast %271 : vector<1x4x32xbf16> to vector<4x32xbf16>
    %cst_286 = arith.constant dense<0.000000e+00> : vector<256x32xf32>
    %273 = tpu.matmul %270, %272, %cst_286 {dimension_numbers = #tpu.dot_dimension_numbers<[1], [0], [0], [1], [0, 0, 1, 1], [], []>} : vector<256x4xbf16>, vector<4x32xbf16>, vector<256x32xf32> -> vector<256x32xf32>
    %274 = arith.addf %266, %273 : vector<256x32xf32>
    %c0_287 = arith.constant 0 : index
    %c3_288 = arith.constant 3 : index
    %c1_289 = arith.constant 1 : index
    %c2_290 = arith.constant 2 : index
    %c0_291 = arith.constant 0 : index
    %275 = vector.load %arg1[%c0_287, %c3_288, %c1_289, %c2_290, %c0_291] : memref<1x4x18x18x4xf32, #tpu.memory_space<vmem>>, vector<1x1x16x16x4xf32>
    %276 = vector.shape_cast %275 : vector<1x1x16x16x4xf32> to vector<16x16x4xf32>
    %277 = vector.shape_cast %276 : vector<16x16x4xf32> to vector<256x4xf32>
    %278 = arith.truncf %277 : vector<256x4xf32> to vector<256x4xbf16>
    %c5_292 = arith.constant 5 : index
    %c0_293 = arith.constant 0 : index
    %c0_294 = arith.constant 0 : index
    %279 = vector.load %arg2[%c5_292, %c0_293, %c0_294] : memref<9x4x32xbf16, #tpu.memory_space<vmem>>, vector<1x4x32xbf16>
    %280 = vector.shape_cast %279 : vector<1x4x32xbf16> to vector<4x32xbf16>
    %cst_295 = arith.constant dense<0.000000e+00> : vector<256x32xf32>
    %281 = tpu.matmul %278, %280, %cst_295 {dimension_numbers = #tpu.dot_dimension_numbers<[1], [0], [0], [1], [0, 0, 1, 1], [], []>} : vector<256x4xbf16>, vector<4x32xbf16>, vector<256x32xf32> -> vector<256x32xf32>
    %282 = arith.addf %274, %281 : vector<256x32xf32>
    %c0_296 = arith.constant 0 : index
    %c3_297 = arith.constant 3 : index
    %c2_298 = arith.constant 2 : index
    %c0_299 = arith.constant 0 : index
    %c0_300 = arith.constant 0 : index
    %283 = vector.load %arg1[%c0_296, %c3_297, %c2_298, %c0_299, %c0_300] : memref<1x4x18x18x4xf32, #tpu.memory_space<vmem>>, vector<1x1x16x16x4xf32>
    %284 = vector.shape_cast %283 : vector<1x1x16x16x4xf32> to vector<16x16x4xf32>
    %285 = vector.shape_cast %284 : vector<16x16x4xf32> to vector<256x4xf32>
    %286 = arith.truncf %285 : vector<256x4xf32> to vector<256x4xbf16>
    %c6_301 = arith.constant 6 : index
    %c0_302 = arith.constant 0 : index
    %c0_303 = arith.constant 0 : index
    %287 = vector.load %arg2[%c6_301, %c0_302, %c0_303] : memref<9x4x32xbf16, #tpu.memory_space<vmem>>, vector<1x4x32xbf16>
    %288 = vector.shape_cast %287 : vector<1x4x32xbf16> to vector<4x32xbf16>
    %cst_304 = arith.constant dense<0.000000e+00> : vector<256x32xf32>
    %289 = tpu.matmul %286, %288, %cst_304 {dimension_numbers = #tpu.dot_dimension_numbers<[1], [0], [0], [1], [0, 0, 1, 1], [], []>} : vector<256x4xbf16>, vector<4x32xbf16>, vector<256x32xf32> -> vector<256x32xf32>
    %290 = arith.addf %282, %289 : vector<256x32xf32>
    %c0_305 = arith.constant 0 : index
    %c3_306 = arith.constant 3 : index
    %c2_307 = arith.constant 2 : index
    %c1_308 = arith.constant 1 : index
    %c0_309 = arith.constant 0 : index
    %291 = vector.load %arg1[%c0_305, %c3_306, %c2_307, %c1_308, %c0_309] : memref<1x4x18x18x4xf32, #tpu.memory_space<vmem>>, vector<1x1x16x16x4xf32>
    %292 = vector.shape_cast %291 : vector<1x1x16x16x4xf32> to vector<16x16x4xf32>
    %293 = vector.shape_cast %292 : vector<16x16x4xf32> to vector<256x4xf32>
    %294 = arith.truncf %293 : vector<256x4xf32> to vector<256x4xbf16>
    %c7_310 = arith.constant 7 : index
    %c0_311 = arith.constant 0 : index
    %c0_312 = arith.constant 0 : index
    %295 = vector.load %arg2[%c7_310, %c0_311, %c0_312] : memref<9x4x32xbf16, #tpu.memory_space<vmem>>, vector<1x4x32xbf16>
    %296 = vector.shape_cast %295 : vector<1x4x32xbf16> to vector<4x32xbf16>
    %cst_313 = arith.constant dense<0.000000e+00> : vector<256x32xf32>
    %297 = tpu.matmul %294, %296, %cst_313 {dimension_numbers = #tpu.dot_dimension_numbers<[1], [0], [0], [1], [0, 0, 1, 1], [], []>} : vector<256x4xbf16>, vector<4x32xbf16>, vector<256x32xf32> -> vector<256x32xf32>
    %298 = arith.addf %290, %297 : vector<256x32xf32>
    %c0_314 = arith.constant 0 : index
    %c3_315 = arith.constant 3 : index
    %c2_316 = arith.constant 2 : index
    %c2_317 = arith.constant 2 : index
    %c0_318 = arith.constant 0 : index
    %299 = vector.load %arg1[%c0_314, %c3_315, %c2_316, %c2_317, %c0_318] : memref<1x4x18x18x4xf32, #tpu.memory_space<vmem>>, vector<1x1x16x16x4xf32>
    %300 = vector.shape_cast %299 : vector<1x1x16x16x4xf32> to vector<16x16x4xf32>
    %301 = vector.shape_cast %300 : vector<16x16x4xf32> to vector<256x4xf32>
    %302 = arith.truncf %301 : vector<256x4xf32> to vector<256x4xbf16>
    %c8_319 = arith.constant 8 : index
    %c0_320 = arith.constant 0 : index
    %c0_321 = arith.constant 0 : index
    %303 = vector.load %arg2[%c8_319, %c0_320, %c0_321] : memref<9x4x32xbf16, #tpu.memory_space<vmem>>, vector<1x4x32xbf16>
    %304 = vector.shape_cast %303 : vector<1x4x32xbf16> to vector<4x32xbf16>
    %cst_322 = arith.constant dense<0.000000e+00> : vector<256x32xf32>
    %305 = tpu.matmul %302, %304, %cst_322 {dimension_numbers = #tpu.dot_dimension_numbers<[1], [0], [0], [1], [0, 0, 1, 1], [], []>} : vector<256x4xbf16>, vector<4x32xbf16>, vector<256x32xf32> -> vector<256x32xf32>
    %306 = arith.addf %298, %305 : vector<256x32xf32>
    %cst_323 = arith.constant 0.000000e+00 : f32
    %307 = vector.broadcast %cst_323 : f32 to vector<256x32xf32>
    %308 = arith.maximumf %306, %307 : vector<256x32xf32>
    %cst_324 = arith.constant dense<0.000000e+00> : vector<32xf32>
    %309 = vector.multi_reduction <add>, %308, %cst_324 [0] : vector<256x32xf32> to vector<32xf32>
    %310 = vector.shape_cast %309 : vector<32xf32> to vector<1x32xf32>
    %311 = arith.addf %234, %310 : vector<1x32xf32>
    %c0_325 = arith.constant 0 : index
    %c0_326 = arith.constant 0 : index
    %312 = vector.load %arg4[%c0_325, %c0_326] : memref<32x10xf32, #tpu.memory_space<vmem>>, vector<32x10xf32>
    %cst_327 = arith.constant dense<0.000000e+00> : vector<1x10xf32>
    %313 = tpu.matmul %311, %312, %cst_327 {dimension_numbers = #tpu.dot_dimension_numbers<[1], [0], [0], [1], [0, 0, 1, 1], [], []>} : vector<1x32xf32>, vector<32x10xf32>, vector<1x10xf32> -> vector<1x10xf32>
    %c0_328 = arith.constant 0 : index
    %c0_329 = arith.constant 0 : index
    %314 = vector.load %arg5[%c0_328, %c0_329] : memref<1x10xf32, #tpu.memory_space<vmem>>, vector<1x10xf32>
    %315 = arith.addf %313, %314 : vector<1x10xf32>
    %c0_330 = arith.constant 0 : index
    %c0_331 = arith.constant 0 : index
    %c0_332 = arith.constant 0 : index
    %316 = vector.load %arg6[%c0_330, %c0_331, %c0_332] : memref<1x1x10xf32, #tpu.memory_space<vmem>>, vector<1x1x10xf32>
    %317 = vector.shape_cast %316 : vector<1x1x10xf32> to vector<1x10xf32>
    %318 = vector.shape_cast %315 : vector<1x10xf32> to vector<1x1x10xf32>
    tpu.vector_store %arg6[%c0_330, %c0_331, %c0_332], %318 {strides = array<i32>} : memref<1x1x10xf32, #tpu.memory_space<vmem>>, vector<1x1x10xf32>,
    return
  }
  func.func @transform_0(%arg0: i32) -> (i32, i32, i32, i32, i32) {
    %c0_i32 = arith.constant 0 : i32
    %c0_i32_0 = arith.constant 0 : i32
    %c0_i32_1 = arith.constant 0 : i32
    %c0_i32_2 = arith.constant 0 : i32
    %c0_i32_3 = arith.constant 0 : i32
    return %arg0, %c0_i32, %c0_i32_0, %c0_i32_1, %c0_i32_2 : i32, i32, i32, i32, i32
  }
  func.func @transform_1(%arg0: i32) -> (i32, i32, i32) {
    %c0_i32 = arith.constant 0 : i32
    %c0_i32_0 = arith.constant 0 : i32
    %c0_i32_1 = arith.constant 0 : i32
    %c0_i32_2 = arith.constant 0 : i32
    return %c0_i32, %c0_i32_0, %c0_i32_1 : i32, i32, i32
  }
  func.func @transform_2(%arg0: i32) -> (i32, i32) {
    %c0_i32 = arith.constant 0 : i32
    %c0_i32_0 = arith.constant 0 : i32
    %c0_i32_1 = arith.constant 0 : i32
    return %c0_i32, %c0_i32_0 : i32, i32
  }
  func.func @transform_3(%arg0: i32) -> (i32, i32) {
    %c0_i32 = arith.constant 0 : i32
    %c0_i32_0 = arith.constant 0 : i32
    %c0_i32_1 = arith.constant 0 : i32
    return %c0_i32, %c0_i32_0 : i32, i32
  }
  func.func @transform_4(%arg0: i32) -> (i32, i32) {
    %c0_i32 = arith.constant 0 : i32
    %c0_i32_0 = arith.constant 0 : i32
    %c0_i32_1 = arith.constant 0 : i32
    return %c0_i32, %c0_i32_0 : i32, i32
  }
  func.func @transform_5(%arg0: i32) -> (i32, i32, i32) {
    %c0_i32 = arith.constant 0 : i32
    %c0_i32_0 = arith.constant 0 : i32
    %c0_i32_1 = arith.constant 0 : i32
    return %arg0, %c0_i32, %c0_i32_0 : i32, i32, i32
  }
}

</mosaic_0001>

<llo_original>
// kernel: model_forward.1
$region0: #{model_forward.1}
  #allocation0 [shape = 'u32[]', space=smem, size = 0x4, offset = 0x4, fixed_abs, tag = 'smem constant byte address 0x4 - core index']
  #allocation1 [shape = 'u32[144,128]{1,0:T(1,128)}', space=vmem, size = 0x12000, scoped, tag = 'internal scratch']
  %s0 = inlined_call_operand.vmem [shape: f32[2,4,18,18,4], index: 0, kind: input, shape index: {}]
  %s1 = inlined_call_operand.vmem [shape: bf16[9,4,32], index: 1, kind: input, shape index: {}]
  %s2 = inlined_call_operand.vmem [shape: f32[1,32], index: 2, kind: input, shape index: {}]
  %s3 = inlined_call_operand.vmem [shape: f32[32,10], index: 3, kind: input, shape index: {}]
  %s4 = inlined_call_operand.vmem [shape: f32[1,10], index: 4, kind: input, shape index: {}]
  %s5 = inlined_call_operand.hbm [shape: f32[2,1,10], index: 5, kind: output, shape index: {}]
  %s6 = sld [smem:[#allocation0]]
  $region53: #{model_forward.1} parent=0
    _
  %s8 = ssub.s32 1, %s6
  %s9 = scalar_select 0, %s8, %s6
  $region1: #{model_forward.1} parent=0
    #allocation2 [shape = 'u8[1024]{0}', space=vmem, size = 0x400, scoped, tag = 'output window, operand 0']
    #allocation3 [shape = 's32[2]{0}', space=sflag, size = 0x8, scoped, tag = 'scoped memory for model_forward.1']
    %10 = vsyncpa [#allocation3], 0
    %s11 = scalar_lea.sflag [#allocation3], 1
    %12 = vsyncpa %s11, 0
    loop: start=0, step=1, limit=4
    $region2: #{model_forward.1} parent=1 // loop_pre_header
      _
    $region3: #{model_forward.1} parent=1 // loop_header
      %s14 = sphi 0, %s18
      %p15 = scmp.ge.s32.totalorder %s14, 4
      %s24 = sphi 0, %s26
      %s27 = sphi 0, %s24
      %s28 = sphi 0, %s27
      %s44 = sphi 0, %s28
      %s48 = sphi 0, %s48
      %s50 = sphi 0, %s48
      %s51 = sphi 0, %s50
      %s65 = sphi 0, %s51
      %s69 = sphi 0, %s69
      %s71 = sphi 0, %s69
      %s72 = sphi 0, %s71
      %s86 = sphi 0, %s72
      %s90 = sphi 0, %s90
      %s92 = sphi 0, %s90
      %s93 = sphi 0, %s92
      %s107 = sphi 0, %s93
      %s111 = sphi 0, %s111
      %s113 = sphi 0, %s111
      %s114 = sphi 0, %s113
      %s128 = sphi 0, %s114
      %s134 = sphi 0, %s136
      %s137 = sphi 0, %s134
      %s138 = sphi 0, %s137
      %s154 = sphi 0, %s138
    $region4: #{model_forward.1} parent=1 // loop_header_branch
      %17 = sbr.rel (%p15) target = $region8
    $region5: #{model_forward.1} parent=1 // loop_body
      %s19 = ssub.s32 %s14, 1
      %s20 = ssub.s32 %s14, 2
      %s21 = sadd.s32 %s14, 1
      %s22 = ssub.s32 %s14, %s21
      %p23 = scmp.eq.s32.totalorder %s22, 0
      %s25 = sadd.s32 %s24, 1
      %s26 = scalar_select %p23, %s24, %s25
      %p29 = pneg %p23
      %p30 = scmp.eq.s32.totalorder %s14, 1
      %p31 = por %p29, %p30
      %p32 = scmp.ne.s32.totalorder %s24, %s27
      %p33 = scmp.eq.s32.totalorder %s14, 0
      %p34 = por %p32, %p33
      %p35 = scmp.ne.s32.totalorder %s24, %s27
      %p36 = scmp.eq.s32.totalorder %s19, 1
      %p37 = por %p35, %p36
      %p38 = scmp.ne.s32.totalorder %s27, %s28
      %p39 = scmp.eq.s32.totalorder %s19, 0
      %p40 = por %p38, %p39
      %p41 = scmp.ne.s32.totalorder %s27, %s28
      %p42 = scmp.eq.s32.totalorder %s20, 1
      %p43 = por %p41, %p42
      %p45 = scmp.ne.s32.totalorder %s28, %s44
      %p46 = scmp.eq.s32.totalorder %s20, 0
      %p47 = por %p45, %p46
      %s49 = sadd.s32 %s48, 1
      %p52 = scmp.eq.s32.totalorder %s14, 1
      %p53 = scmp.ne.s32.totalorder %s48, %s50
      %p54 = scmp.eq.s32.totalorder %s14, 0
      %p55 = por %p53, %p54
      %p56 = scmp.ne.s32.totalorder %s48, %s50
      %p57 = scmp.eq.s32.totalorder %s19, 1
      %p58 = por %p56, %p57
      %p59 = scmp.ne.s32.totalorder %s50, %s51
      %p60 = scmp.eq.s32.totalorder %s19, 0
      %p61 = por %p59, %p60
      %p62 = scmp.ne.s32.totalorder %s50, %s51
      %p63 = scmp.eq.s32.totalorder %s20, 1
      %p64 = por %p62, %p63
      %p66 = scmp.ne.s32.totalorder %s51, %s65
      %p67 = scmp.eq.s32.totalorder %s20, 0
      %p68 = por %p66, %p67
      %s70 = sadd.s32 %s69, 1
      %p73 = scmp.eq.s32.totalorder %s14, 1
      %p74 = scmp.ne.s32.totalorder %s69, %s71
      %p75 = scmp.eq.s32.totalorder %s14, 0
      %p76 = por %p74, %p75
      %p77 = scmp.ne.s32.totalorder %s69, %s71
      %p78 = scmp.eq.s32.totalorder %s19, 1
      %p79 = por %p77, %p78
      %p80 = scmp.ne.s32.totalorder %s71, %s72
      %p81 = scmp.eq.s32.totalorder %s19, 0
      %p82 = por %p80, %p81
      %p83 = scmp.ne.s32.totalorder %s71, %s72
      %p84 = scmp.eq.s32.totalorder %s20, 1
      %p85 = por %p83, %p84
      %p87 = scmp.ne.s32.totalorder %s72, %s86
      %p88 = scmp.eq.s32.totalorder %s20, 0
      %p89 = por %p87, %p88
      %s91 = sadd.s32 %s90, 1
      %p94 = scmp.eq.s32.totalorder %s14, 1
      %p95 = scmp.ne.s32.totalorder %s90, %s92
      %p96 = scmp.eq.s32.totalorder %s14, 0
      %p97 = por %p95, %p96
      %p98 = scmp.ne.s32.totalorder %s90, %s92
      %p99 = scmp.eq.s32.totalorder %s19, 1
      %p100 = por %p98, %p99
      %p101 = scmp.ne.s32.totalorder %s92, %s93
      %p102 = scmp.eq.s32.totalorder %s19, 0
      %p103 = por %p101, %p102
      %p104 = scmp.ne.s32.totalorder %s92, %s93
      %p105 = scmp.eq.s32.totalorder %s20, 1
      %p106 = por %p104, %p105
      %p108 = scmp.ne.s32.totalorder %s93, %s107
      %p109 = scmp.eq.s32.totalorder %s20, 0
      %p110 = por %p108, %p109
      %s112 = sadd.s32 %s111, 1
      %p115 = scmp.eq.s32.totalorder %s14, 1
      %p116 = scmp.ne.s32.totalorder %s111, %s113
      %p117 = scmp.eq.s32.totalorder %s14, 0
      %p118 = por %p116, %p117
      %p119 = scmp.ne.s32.totalorder %s111, %s113
      %p120 = scmp.eq.s32.totalorder %s19, 1
      %p121 = por %p119, %p120
      %p122 = scmp.ne.s32.totalorder %s113, %s114
      %p123 = scmp.eq.s32.totalorder %s19, 0
      %p124 = por %p122, %p123
      %p125 = scmp.ne.s32.totalorder %s113, %s114
      %p126 = scmp.eq.s32.totalorder %s20, 1
      %p127 = por %p125, %p126
      %p129 = scmp.ne.s32.totalorder %s114, %s128
      %p130 = scmp.eq.s32.totalorder %s20, 0
      %p131 = por %p129, %p130
      %s132 = ssub.s32 %s14, %s21
      %p133 = scmp.eq.s32.totalorder %s132, 0
      %s135 = sadd.s32 %s134, 1
      %s136 = scalar_select %p133, %s134, %s135
      %p139 = pneg %p133
      %p140 = scmp.eq.s32.totalorder %s14, 1
      %p141 = por %p139, %p140
      %p142 = scmp.ne.s32.totalorder %s134, %s137
      %p143 = scmp.eq.s32.totalorder %s14, 0
      %p144 = por %p142, %p143
      %p145 = scmp.ne.s32.totalorder %s134, %s137
      %p146 = scmp.eq.s32.totalorder %s19, 1
      %p147 = por %p145, %p146
      %p148 = scmp.ne.s32.totalorder %s137, %s138
      %p149 = scmp.eq.s32.totalorder %s19, 0
      %p150 = por %p148, %p149
      %p151 = scmp.ne.s32.totalorder %s137, %s138
      %p152 = scmp.eq.s32.totalorder %s20, 1
      %p153 = por %p151, %p152
      %p155 = scmp.ne.s32.totalorder %s138, %s154
      %p156 = scmp.eq.s32.totalorder %s20, 0
      %p157 = por %p155, %p156
      %p158 = scmp.le.s32.totalorder 1, %s14
      %p159 = scmp.lt.s32.totalorder %s14, 3
      %p160 = pnand %p158, %p159
      %p161 = pneg %p160
      // Predicated region
      $region9: #{model_forward.1} parent=5 // pred_check
        _
      $region10: #{model_forward.1} parent=5 // pred_check_branch
        %163 = sbr.rel (%p160) target = $region12
      $region11: #{model_forward.1} parent=5 // pred_region
        %s164 = ssub.s32 %s14, 1
        // Predicated region
        $region13: #{model_forward.1} parent=11 // pred_check
          %p165 = pneg %p61
        $region14: #{model_forward.1} parent=11 // pred_check_branch
          %167 = sbr.rel (%p165) target = $region16
        $region15: #{model_forward.1} parent=11 // pred_region
          _
        $region16: #{model_forward.1} parent=11 // pred_fallthru
          _
        // Predicated region
        $region17: #{model_forward.1} parent=11 // pred_check
          %p168 = pneg %p82
        $region18: #{model_forward.1} parent=11 // pred_check_branch
          %170 = sbr.rel (%p168) target = $region20
        $region19: #{model_forward.1} parent=11 // pred_region
          _
        $region20: #{model_forward.1} parent=11 // pred_fallthru
          _
        // Predicated region
        $region21: #{model_forward.1} parent=11 // pred_check
          %p171 = pneg %p103
        $region22: #{model_forward.1} parent=11 // pred_check_branch
          %173 = sbr.rel (%p171) target = $region24
        $region23: #{model_forward.1} parent=11 // pred_region
          _
        $region24: #{model_forward.1} parent=11 // pred_fallthru
          _
        // Predicated region
        $region25: #{model_forward.1} parent=11 // pred_check
          %p174 = pneg %p124
        $region26: #{model_forward.1} parent=11 // pred_check_branch
          %176 = sbr.rel (%p174) target = $region28
        $region27: #{model_forward.1} parent=11 // pred_region
          _
        $region28: #{model_forward.1} parent=11 // pred_fallthru
          _
      $region12: #{model_forward.1} parent=5 // pred_fallthru
        _
      %p177 = scmp.lt.s32.totalorder %s14, 2
      // Predicated region
      $region29: #{model_forward.1} parent=5 // pred_check
        %p178 = pneg %p177
      $region30: #{model_forward.1} parent=5 // pred_check_branch
        %180 = sbr.rel (%p178) target = $region32
      $region31: #{model_forward.1} parent=5 // pred_region
        // Predicated region
        $region33: #{model_forward.1} parent=31 // pred_check
          %p181 = pneg %p34
        $region34: #{model_forward.1} parent=31 // pred_check_branch
          %183 = sbr.rel (%p181) target = $region36
        $region35: #{model_forward.1} parent=31 // pred_region
          %p184 = scmp.lt.s32.totalorder %s14, 1
          %s185 = scalar_select %p184, %s14, 1
          %s186 = smul.addr %s185, 216
          %s187 = smul.addr %s186, 8
          %s188 = scalar_lea.vmem %s0, %s187
        $region36: #{model_forward.1} parent=31 // pred_fallthru
          _
      $region32: #{model_forward.1} parent=5 // pred_fallthru
        _
      %p189 = scmp.le.s32.totalorder 1, %s14
      %p190 = scmp.lt.s32.totalorder %s14, 3
      %p191 = pnand %p189, %p190
      %p192 = pneg %p191
      // Predicated region
      $region37: #{model_forward.1} parent=5 // pred_check
        _
      $region38: #{model_forward.1} parent=5 // pred_check_branch
        %194 = sbr.rel (%p191) target = $region40
      $region39: #{model_forward.1} parent=5 // pred_region
        %s195 = ssub.s32 %s14, 1
        %p196 = scmp.lt.s32.totalorder %s19, 1
        %s197 = scalar_select %p196, %s19, 1
        %s198 = smul.addr %s197, 216
        %s199 = smul.addr %s198, 8
        %s200 = scalar_lea.vmem %s0, %s199
        %p201 = pneg %p40
        %p202 = pneg %p37
        %p203 = pneg %p61
        %p204 = pneg %p58
        %p205 = pneg %p82
        %p206 = pneg %p79
        %p207 = pneg %p103
        %p208 = pneg %p100
        %p209 = pneg %p124
        %p210 = pneg %p121
        %p211 = pneg %p150
        %p212 = pneg %p147
        %s213 = sand.u32 %s137, 1
        %s214 = scalar_lea.sflag [#allocation3], %s213
        %s215 = sand.u32 %s137, 1
        %s216 = scalar_lea.vmem [#allocation2], %s215
        %p217 = scmp.lt.s32.totalorder %s19, 1
        %s218 = scalar_select %p217, %s19, 1
        %s219 = smul.addr %s218, 216
        %s220 = smul.addr %s219, 8
        %s221 = scalar_lea.vmem %s0, %s220
        %v223 = vld [vmem:[%s2] sm:$0x1]
        %v225 = vlaneseq
        %v226 = vshrl.u32 %v225, 7
        %v227 = vsub.s32 0, %v226
        %v228 = vrot.slane %v223, %v227
        %v230 = vld [vmem:[%s221] sm:$0xff]
        %v231 = vld [vmem:[%s221 + $0x8] sm:$0xff]
        %v232 = vld [vmem:[%s221 + $0x18] sm:$0xff]
        %v233 = vld [vmem:[%s221 + $0x20] sm:$0xff]
        %v234 = vld [vmem:[%s221 + $0x30] sm:$0xff]
        %v235 = vld [vmem:[%s221 + $0x38] sm:$0xff]
        %v236 = vld [vmem:[%s221 + $0x48] sm:$0xff]
        %v237 = vld [vmem:[%s221 + $0x50] sm:$0xff]
        %v238 = vld [vmem:[%s221 + $0x60] sm:$0xff]
        %v239 = vld [vmem:[%s221 + $0x68] sm:$0xff]
        %v240 = vld [vmem:[%s221 + $0x78] sm:$0xff]
        %v241 = vld [vmem:[%s221 + $0x80] sm:$0xff]
        %v242 = vld [vmem:[%s221 + $0x90] sm:$0xff]
        %v243 = vld [vmem:[%s221 + $0x98] sm:$0xff]
        %v244 = vld [vmem:[%s221 + $0xa8] sm:$0xff]
        %v245 = vld [vmem:[%s221 + $0xb0] sm:$0xff]
        %v246 = vld [vmem:[%s221 + $0xc0] sm:$0xff]
        %v247 = vld [vmem:[%s221 + $0xc8] sm:$0xff]
        %v248 = vld [vmem:[%s221 + $0xd8] sm:$0xff]
        %v249 = vld [vmem:[%s221 + $0xe0] sm:$0xff]
        %v250 = vld [vmem:[%s221 + $0xf0] sm:$0xff]
        %v251 = vld [vmem:[%s221 + $0xf8] sm:$0xff]
        %v252 = vld [vmem:[%s221 + $0x108] sm:$0xff]
        %v253 = vld [vmem:[%s221 + $0x110] sm:$0xff]
        %v254 = vld [vmem:[%s221 + $0x120] sm:$0xff]
        %v255 = vld [vmem:[%s221 + $0x128] sm:$0xff]
        %v256 = vld [vmem:[%s221 + $0x138] sm:$0xff]
        %v257 = vld [vmem:[%s221 + $0x140] sm:$0xff]
        %v258 = vld [vmem:[%s221 + $0x150] sm:$0xff]
        %v259 = vld [vmem:[%s221 + $0x158] sm:$0xff]
        %v260 = vld [vmem:[%s221 + $0x168] sm:$0xff]
        %v261 = vld [vmem:[%s221 + $0x170] sm:$0xff]
        %v262 = vpack.c.bf16 %v231, %v230
        %v263 = vpack.c.bf16 %v233, %v232
        %v264 = vpack.c.bf16 %v235, %v234
        %v265 = vpack.c.bf16 %v237, %v236
        %v266 = vpack.c.bf16 %v239, %v238
        %v267 = vpack.c.bf16 %v241, %v240
        %v268 = vpack.c.bf16 %v243, %v242
        %v269 = vpack.c.bf16 %v245, %v244
        %v270 = vpack.c.bf16 %v247, %v246
        %v271 = vpack.c.bf16 %v249, %v248
        %v272 = vpack.c.bf16 %v251, %v250
        %v273 = vpack.c.bf16 %v253, %v252
        %v274 = vpack.c.bf16 %v255, %v254
        %v275 = vpack.c.bf16 %v257, %v256
        %v276 = vpack.c.bf16 %v259, %v258
        %v277 = vpack.c.bf16 %v261, %v260
        %v278 = vld [vmem:[%s1] sm:$0x3]
        %vm279 = vcmask 31744
        %v281 = vsel %vm279, %v262, 0
        %v284 = vsel %vm279, %v263, 0
        %v287 = vsel %vm279, %v264, 0
        %v290 = vsel %vm279, %v265, 0
        %v293 = vsel %vm279, %v266, 0
        %v296 = vsel %vm279, %v267, 0
        %v299 = vsel %vm279, %v268, 0
        %v302 = vsel %vm279, %v269, 0
        %v305 = vsel %vm279, %v270, 0
        %v308 = vsel %vm279, %v271, 0
        %v311 = vsel %vm279, %v272, 0
        %v314 = vsel %vm279, %v273, 0
        %v317 = vsel %vm279, %v274, 0
        %v320 = vsel %vm279, %v275, 0
        %v323 = vsel %vm279, %v276, 0
        %v326 = vsel %vm279, %v277, 0
        %vm328 = vcmask 1041408
        %v330 = vsel %vm328, %v278, 0
        %332 = vmatprep.subr.bf16.mxu0 0
        %333 = vmatpush1.bf16.msra.mxu0 %v330
        %334 = vmatprep.subr.bf16.mxu0 0
        %335 = vmatpush1.bf16.msra.mxu0 0
        %336 = vmatprep.subr.bf16.mxu0 0
        %337 = vmatpush1.bf16.msra.mxu0 0
        %338 = vmatprep.subr.bf16.mxu0 0
        %339 = vmatpush1.bf16.msra.mxu0 0
        %340 = vmatprep.subr.bf16.mxu0 0
        %341 = vmatpush1.bf16.msra.mxu0 0
        %342 = vmatprep.subr.bf16.mxu0 0
        %343 = vmatpush1.bf16.msra.mxu0 0
        %344 = vmatprep.subr.bf16.mxu0 0
        %345 = vmatpush1.bf16.msra.mxu0 0
        %346 = vmatprep.subr.bf16.mxu0 0
        %347 = vmatpush1.bf16.msra.mxu0 0
        %348 = vmatprep.subr.bf16.mxu0 0
        %349 = vmatpush1.bf16.msra.mxu0 0
        %350 = vmatprep.subr.bf16.mxu0 0
        %351 = vmatpush1.bf16.msra.mxu0 0
        %352 = vmatprep.subr.bf16.mxu0 0
        %353 = vmatpush1.bf16.msra.mxu0 0
        %354 = vmatprep.subr.bf16.mxu0 0
        %355 = vmatpush1.bf16.msra.mxu0 0
        %356 = vmatprep.subr.bf16.mxu0 0
        %357 = vmatpush1.bf16.msra.mxu0 0
        %358 = vmatprep.subr.bf16.mxu0 0
        %359 = vmatpush1.bf16.msra.mxu0 0
        %360 = vmatprep.subr.bf16.mxu0 0
        %361 = vmatpush1.bf16.msra.mxu0 0
        %362 = vmatprep.subr.bf16.mxu0 0
        %363 = vmatpush1.bf16.msra.mxu0 0
        %364 = vmatprep.mubr.bf16.mxu0 0
        %365 = vmatmul.mubr.bf16.gmra.mrb[0].mxu0 %v281
        %v366 = vpop.f32.mrb[0].mxu0
        %v367 = vadd.f32 0.0, %v366
        %v368 = vpop.f32.mrb[0].mxu0
        %v369 = vpop.f32.mrb[0].mxu0
        %v370 = vadd.f32 0.0, %v369
        %v371 = vpop.f32.mrb[0].mxu0
        %372 = vmatprep.mubr.bf16.mxu0 0
        %373 = vmatmul.mubr.bf16.gmra.mrb[0].mxu0 %v284
        %v374 = vpop.f32.mrb[0].mxu0
        %v375 = vadd.f32 0.0, %v374
        %v376 = vpop.f32.mrb[0].mxu0
        %v377 = vpop.f32.mrb[0].mxu0
        %v378 = vadd.f32 0.0, %v377
        %v379 = vpop.f32.mrb[0].mxu0
        %380 = vmatprep.mubr.bf16.mxu0 0
        %381 = vmatmul.mubr.bf16.gmra.mrb[0].mxu0 %v287
        %v382 = vpop.f32.mrb[0].mxu0
        %v383 = vadd.f32 0.0, %v382
        %v384 = vpop.f32.mrb[0].mxu0
        %v385 = vpop.f32.mrb[0].mxu0
        %v386 = vadd.f32 0.0, %v385
        %v387 = vpop.f32.mrb[0].mxu0
        %388 = vmatprep.mubr.bf16.mxu0 0
        %389 = vmatmul.mubr.bf16.gmra.mrb[0].mxu0 %v290
        %v390 = vpop.f32.mrb[0].mxu0
        %v391 = vadd.f32 0.0, %v390
        %v392 = vpop.f32.mrb[0].mxu0
        %v393 = vpop.f32.mrb[0].mxu0
        %v394 = vadd.f32 0.0, %v393
        %v395 = vpop.f32.mrb[0].mxu0
        %396 = vmatprep.mubr.bf16.mxu0 0
        %397 = vmatmul.mubr.bf16.gmra.mrb[0].mxu0 %v293
        %v398 = vpop.f32.mrb[0].mxu0
        %v399 = vadd.f32 0.0, %v398
        %v400 = vpop.f32.mrb[0].mxu0
        %v401 = vpop.f32.mrb[0].mxu0
        %v402 = vadd.f32 0.0, %v401
        %v403 = vpop.f32.mrb[0].mxu0
        %404 = vmatprep.mubr.bf16.mxu0 0
        %405 = vmatmul.mubr.bf16.gmra.mrb[0].mxu0 %v296
        %v406 = vpop.f32.mrb[0].mxu0
        %v407 = vadd.f32 0.0, %v406
        %v408 = vpop.f32.mrb[0].mxu0
        %v409 = vpop.f32.mrb[0].mxu0
        %v410 = vadd.f32 0.0, %v409
        %v411 = vpop.f32.mrb[0].mxu0
        %412 = vmatprep.mubr.bf16.mxu0 0
        %413 = vmatmul.mubr.bf16.gmra.mrb[0].mxu0 %v299
        %v414 = vpop.f32.mrb[0].mxu0
        %v415 = vadd.f32 0.0, %v414
        %v416 = vpop.f32.mrb[0].mxu0
        %v417 = vpop.f32.mrb[0].mxu0
        %v418 = vadd.f32 0.0, %v417
        %v419 = vpop.f32.mrb[0].mxu0
        %420 = vmatprep.mubr.bf16.mxu0 0
        %421 = vmatmul.mubr.bf16.gmra.mrb[0].mxu0 %v302
        %v422 = vpop.f32.mrb[0].mxu0
        %v423 = vadd.f32 0.0, %v422
        %v424 = vpop.f32.mrb[0].mxu0
        %v425 = vpop.f32.mrb[0].mxu0
        %v426 = vadd.f32 0.0, %v425
        %v427 = vpop.f32.mrb[0].mxu0
        %428 = vmatprep.mubr.bf16.mxu0 0
        %429 = vmatmul.mubr.bf16.gmra.mrb[0].mxu0 %v305
        %v430 = vpop.f32.mrb[0].mxu0
        %v431 = vadd.f32 0.0, %v430
        %v432 = vpop.f32.mrb[0].mxu0
        %v433 = vpop.f32.mrb[0].mxu0
        %v434 = vadd.f32 0.0, %v433
        %v435 = vpop.f32.mrb[0].mxu0
        %436 = vmatprep.mubr.bf16.mxu0 0
        %437 = vmatmul.mubr.bf16.gmra.mrb[0].mxu0 %v308
        %v438 = vpop.f32.mrb[0].mxu0
        %v439 = vadd.f32 0.0, %v438
        %v440 = vpop.f32.mrb[0].mxu0
        %v441 = vpop.f32.mrb[0].mxu0
        %v442 = vadd.f32 0.0, %v441
        %v443 = vpop.f32.mrb[0].mxu0
        %444 = vmatprep.mubr.bf16.mxu0 0
        %445 = vmatmul.mubr.bf16.gmra.mrb[0].mxu0 %v311
        %v446 = vpop.f32.mrb[0].mxu0
        %v447 = vadd.f32 0.0, %v446
        %v448 = vpop.f32.mrb[0].mxu0
        %v449 = vpop.f32.mrb[0].mxu0
        %v450 = vadd.f32 0.0, %v449
        %v451 = vpop.f32.mrb[0].mxu0
        %452 = vmatprep.mubr.bf16.mxu0 0
        %453 = vmatmul.mubr.bf16.gmra.mrb[0].mxu0 %v314
        %v454 = vpop.f32.mrb[0].mxu0
        %v455 = vadd.f32 0.0, %v454
        %v456 = vpop.f32.mrb[0].mxu0
        %v457 = vpop.f32.mrb[0].mxu0
        %v458 = vadd.f32 0.0, %v457
        %v459 = vpop.f32.mrb[0].mxu0
        %460 = vmatprep.mubr.bf16.mxu0 0
        %461 = vmatmul.mubr.bf16.gmra.mrb[0].mxu0 %v317
        %v462 = vpop.f32.mrb[0].mxu0
        %v463 = vadd.f32 0.0, %v462
        %v464 = vpop.f32.mrb[0].mxu0
        %v465 = vpop.f32.mrb[0].mxu0
        %v466 = vadd.f32 0.0, %v465
        %v467 = vpop.f32.mrb[0].mxu0
        %468 = vmatprep.mubr.bf16.mxu0 0
        %469 = vmatmul.mubr.bf16.gmra.mrb[0].mxu0 %v320
        %v470 = vpop.f32.mrb[0].mxu0
        %v471 = vadd.f32 0.0, %v470
        %v472 = vpop.f32.mrb[0].mxu0
        %v473 = vpop.f32.mrb[0].mxu0
        %v474 = vadd.f32 0.0, %v473
        %v475 = vpop.f32.mrb[0].mxu0
        %476 = vmatprep.mubr.bf16.mxu0 0
        %477 = vmatmul.mubr.bf16.gmra.mrb[0].mxu0 %v323
        %v478 = vpop.f32.mrb[0].mxu0
        %v479 = vadd.f32 0.0, %v478
        %v480 = vpop.f32.mrb[0].mxu0
        %v481 = vpop.f32.mrb[0].mxu0
        %v482 = vadd.f32 0.0, %v481
        %v483 = vpop.f32.mrb[0].mxu0
        %484 = vmatprep.mubr.bf16.mxu0 0
        %485 = vmatmul.mubr.bf16.gmra.mrb[0].mxu0 %v326
        %v486 = vpop.f32.mrb[0].mxu0
        %v487 = vadd.f32 0.0, %v486
        %v488 = vpop.f32.mrb[0].mxu0
        %v489 = vpop.f32.mrb[0].mxu0
        %v490 = vadd.f32 0.0, %v489
        %v491 = vpop.f32.mrb[0].mxu0
        %492 = vdwg.mxu0
        %v493 = vadd.f32 %v228, %v367
        %v494 = vadd.f32 %v228, %v370
        %v495 = vadd.f32 %v228, %v375
        %v496 = vadd.f32 %v228, %v378
        %v497 = vadd.f32 %v228, %v383
        %v498 = vadd.f32 %v228, %v386
        %v499 = vadd.f32 %v228, %v391
        %v500 = vadd.f32 %v228, %v394
        %v501 = vadd.f32 %v228, %v399
        %v502 = vadd.f32 %v228, %v402
        %v503 = vadd.f32 %v228, %v407
        %v504 = vadd.f32 %v228, %v410
        %v505 = vadd.f32 %v228, %v415
        %v506 = vadd.f32 %v228, %v418
        %v507 = vadd.f32 %v228, %v423
        %v508 = vadd.f32 %v228, %v426
        %v509 = vadd.f32 %v228, %v431
        %v510 = vadd.f32 %v228, %v434
        %v511 = vadd.f32 %v228, %v439
        %v512 = vadd.f32 %v228, %v442
        %v513 = vadd.f32 %v228, %v447
        %v514 = vadd.f32 %v228, %v450
        %v515 = vadd.f32 %v228, %v455
        %v516 = vadd.f32 %v228, %v458
        %v517 = vadd.f32 %v228, %v463
        %v518 = vadd.f32 %v228, %v466
        %v519 = vadd.f32 %v228, %v471
        %v520 = vadd.f32 %v228, %v474
        %v521 = vadd.f32 %v228, %v479
        %v522 = vadd.f32 %v228, %v482
        %v523 = vadd.f32 %v228, %v487
        %v524 = vadd.f32 %v228, %v490
        %v525 = vld [vmem:[%s221 + $0x1] sm:$0xff]
        %v526 = vld [vmem:[%s221 + $0x9] sm:$0xff]
        %v527 = vld [vmem:[%s221 + $0x19] sm:$0xff]
        %v528 = vld [vmem:[%s221 + $0x21] sm:$0xff]
        %v529 = vld [vmem:[%s221 + $0x31] sm:$0xff]
        %v530 = vld [vmem:[%s221 + $0x39] sm:$0xff]
        %v531 = vld [vmem:[%s221 + $0x49] sm:$0xff]
        %v532 = vld [vmem:[%s221 + $0x51] sm:$0xff]
        %v533 = vld [vmem:[%s221 + $0x61] sm:$0xff]
        %v534 = vld [vmem:[%s221 + $0x69] sm:$0xff]
        %v535 = vld [vmem:[%s221 + $0x79] sm:$0xff]
        %v536 = vld [vmem:[%s221 + $0x81] sm:$0xff]
        %v537 = vld [vmem:[%s221 + $0x91] sm:$0xff]
        %v538 = vld [vmem:[%s221 + $0x99] sm:$0xff]
        %v539 = vld [vmem:[%s221 + $0xa9] sm:$0xff]
        %v540 = vld [vmem:[%s221 + $0xb1] sm:$0xff]
        %v541 = vld [vmem:[%s221 + $0xc1] sm:$0xff]
        %v542 = vld [vmem:[%s221 + $0xc9] sm:$0xff]
        %v543 = vld [vmem:[%s221 + $0xd9] sm:$0xff]
        %v544 = vld [vmem:[%s221 + $0xe1] sm:$0xff]
        %v545 = vld [vmem:[%s221 + $0xf1] sm:$0xff]
        %v546 = vld [vmem:[%s221 + $0xf9] sm:$0xff]
        %v547 = vld [vmem:[%s221 + $0x109] sm:$0xff]
        %v548 = vld [vmem:[%s221 + $0x111] sm:$0xff]
        %v549 = vld [vmem:[%s221 + $0x121] sm:$0xff]
        %v550 = vld [vmem:[%s221 + $0x129] sm:$0xff]
        %v551 = vld [vmem:[%s221 + $0x139] sm:$0xff]
        %v552 = vld [vmem:[%s221 + $0x141] sm:$0xff]
        %v553 = vld [vmem:[%s221 + $0x151] sm:$0xff]
        %v554 = vld [vmem:[%s221 + $0x159] sm:$0xff]
        %v555 = vld [vmem:[%s221 + $0x169] sm:$0xff]
        %v556 = vld [vmem:[%s221 + $0x171] sm:$0xff]
        %v557 = vpack.c.bf16 %v526, %v525
        %v558 = vpack.c.bf16 %v528, %v527
        %v559 = vpack.c.bf16 %v530, %v529
        %v560 = vpack.c.bf16 %v532, %v531
        %v561 = vpack.c.bf16 %v534, %v533
        %v562 = vpack.c.bf16 %v536, %v535
        %v563 = vpack.c.bf16 %v538, %v537
        %v564 = vpack.c.bf16 %v540, %v539
        %v565 = vpack.c.bf16 %v542, %v541
        %v566 = vpack.c.bf16 %v544, %v543
        %v567 = vpack.c.bf16 %v546, %v545
        %v568 = vpack.c.bf16 %v548, %v547
        %v569 = vpack.c.bf16 %v550, %v549
        %v570 = vpack.c.bf16 %v552, %v551
        %v571 = vpack.c.bf16 %v554, %v553
        %v572 = vpack.c.bf16 %v556, %v555
        %s573 = scalar_lea.vmem %s1, 2
        %v574 = vld [vmem:[%s573] sm:$0x3]
        %v576 = vsel %vm279, %v557, 0
        %v579 = vsel %vm279, %v558, 0
        %v582 = vsel %vm279, %v559, 0
        %v585 = vsel %vm279, %v560, 0
        %v588 = vsel %vm279, %v561, 0
        %v591 = vsel %vm279, %v562, 0
        %v594 = vsel %vm279, %v563, 0
        %v597 = vsel %vm279, %v564, 0
        %v600 = vsel %vm279, %v565, 0
        %v603 = vsel %vm279, %v566, 0
        %v606 = vsel %vm279, %v567, 0
        %v609 = vsel %vm279, %v568, 0
        %v612 = vsel %vm279, %v569, 0
        %v615 = vsel %vm279, %v570, 0
        %v618 = vsel %vm279, %v571, 0
        %v621 = vsel %vm279, %v572, 0
        %v624 = vsel %vm328, %v574, 0
        %626 = vmatprep.subr.bf16.mxu0 0
        %627 = vmatpush1.bf16.msra.mxu0 %v624
        %628 = vmatprep.subr.bf16.mxu0 0
        %629 = vmatpush1.bf16.msra.mxu0 0
        %630 = vmatprep.subr.bf16.mxu0 0
        %631 = vmatpush1.bf16.msra.mxu0 0
        %632 = vmatprep.subr.bf16.mxu0 0
        %633 = vmatpush1.bf16.msra.mxu0 0
        %634 = vmatprep.subr.bf16.mxu0 0
        %635 = vmatpush1.bf16.msra.mxu0 0
        %636 = vmatprep.subr.bf16.mxu0 0
        %637 = vmatpush1.bf16.msra.mxu0 0
        %638 = vmatprep.subr.bf16.mxu0 0
        %639 = vmatpush1.bf16.msra.mxu0 0
        %640 = vmatprep.subr.bf16.mxu0 0
        %641 = vmatpush1.bf16.msra.mxu0 0
        %642 = vmatprep.subr.bf16.mxu0 0
        %643 = vmatpush1.bf16.msra.mxu0 0
        %644 = vmatprep.subr.bf16.mxu0 0
        %645 = vmatpush1.bf16.msra.mxu0 0
        %646 = vmatprep.subr.bf16.mxu0 0
        %647 = vmatpush1.bf16.msra.mxu0 0
        %648 = vmatprep.subr.bf16.mxu0 0
        %649 = vmatpush1.bf16.msra.mxu0 0
        %650 = vmatprep.subr.bf16.mxu0 0
        %651 = vmatpush1.bf16.msra.mxu0 0
        %652 = vmatprep.subr.bf16.mxu0 0
        %653 = vmatpush1.bf16.msra.mxu0 0
        %654 = vmatprep.subr.bf16.mxu0 0
        %655 = vmatpush1.bf16.msra.mxu0 0
        %656 = vmatprep.subr.bf16.mxu0 0
        %657 = vmatpush1.bf16.msra.mxu0 0
        %658 = vmatprep.mubr.bf16.mxu0 0
        %659 = vmatmul.mubr.bf16.gmra.mrb[0].mxu0 %v576
        %v660 = vpop.f32.mrb[0].mxu0
        %v661 = vadd.f32 0.0, %v660
        %v662 = vpop.f32.mrb[0].mxu0
        %v663 = vpop.f32.mrb[0].mxu0
        %v664 = vadd.f32 0.0, %v663
        %v665 = vpop.f32.mrb[0].mxu0
        %666 = vmatprep.mubr.bf16.mxu0 0
        %667 = vmatmul.mubr.bf16.gmra.mrb[0].mxu0 %v579
        %v668 = vpop.f32.mrb[0].mxu0
        %v669 = vadd.f32 0.0, %v668
        %v670 = vpop.f32.mrb[0].mxu0
        %v671 = vpop.f32.mrb[0].mxu0
        %v672 = vadd.f32 0.0, %v671
        %v673 = vpop.f32.mrb[0].mxu0
        %674 = vmatprep.mubr.bf16.mxu0 0
        %675 = vmatmul.mubr.bf16.gmra.mrb[0].mxu0 %v582
        %v676 = vpop.f32.mrb[0].mxu0
        %v677 = vadd.f32 0.0, %v676
        %v678 = vpop.f32.mrb[0].mxu0
        %v679 = vpop.f32.mrb[0].mxu0
        %v680 = vadd.f32 0.0, %v679
        %v681 = vpop.f32.mrb[0].mxu0
        %682 = vmatprep.mubr.bf16.mxu0 0
        %683 = vmatmul.mubr.bf16.gmra.mrb[0].mxu0 %v585
        %v684 = vpop.f32.mrb[0].mxu0
        %v685 = vadd.f32 0.0, %v684
        %v686 = vpop.f32.mrb[0].mxu0
        %v687 = vpop.f32.mrb[0].mxu0
        %v688 = vadd.f32 0.0, %v687
        %v689 = vpop.f32.mrb[0].mxu0
        %690 = vmatprep.mubr.bf16.mxu0 0
        %691 = vmatmul.mubr.bf16.gmra.mrb[0].mxu0 %v588
        %v692 = vpop.f32.mrb[0].mxu0
        %v693 = vadd.f32 0.0, %v692
        %v694 = vpop.f32.mrb[0].mxu0
        %v695 = vpop.f32.mrb[0].mxu0
        %v696 = vadd.f32 0.0, %v695
        %v697 = vpop.f32.mrb[0].mxu0
        %698 = vmatprep.mubr.bf16.mxu0 0
        %699 = vmatmul.mubr.bf16.gmra.mrb[0].mxu0 %v591
        %v700 = vpop.f32.mrb[0].mxu0
        %v701 = vadd.f32 0.0, %v700
        %v702 = vpop.f32.mrb[0].mxu0
        %v703 = vpop.f32.mrb[0].mxu0
        %v704 = vadd.f32 0.0, %v703
        %v705 = vpop.f32.mrb[0].mxu0
        %706 = vmatprep.mubr.bf16.mxu0 0
        %707 = vmatmul.mubr.bf16.gmra.mrb[0].mxu0 %v594
        %v708 = vpop.f32.mrb[0].mxu0
        %v709 = vadd.f32 0.0, %v708
        %v710 = vpop.f32.mrb[0].mxu0
        %v711 = vpop.f32.mrb[0].mxu0
        %v712 = vadd.f32 0.0, %v711
        %v713 = vpop.f32.mrb[0].mxu0
        %714 = vmatprep.mubr.bf16.mxu0 0
        %715 = vmatmul.mubr.bf16.gmra.mrb[0].mxu0 %v597
        %v716 = vpop.f32.mrb[0].mxu0
        %v717 = vadd.f32 0.0, %v716
        %v718 = vpop.f32.mrb[0].mxu0
        %v719 = vpop.f32.mrb[0].mxu0
        %v720 = vadd.f32 0.0, %v719
        %v721 = vpop.f32.mrb[0].mxu0
        %722 = vmatprep.mubr.bf16.mxu0 0
        %723 = vmatmul.mubr.bf16.gmra.mrb[0].mxu0 %v600
        %v724 = vpop.f32.mrb[0].mxu0
        %v725 = vadd.f32 0.0, %v724
        %v726 = vpop.f32.mrb[0].mxu0
        %v727 = vpop.f32.mrb[0].mxu0
        %v728 = vadd.f32 0.0, %v727
        %v729 = vpop.f32.mrb[0].mxu0
        %730 = vmatprep.mubr.bf16.mxu0 0
        %731 = vmatmul.mubr.bf16.gmra.mrb[0].mxu0 %v603
        %v732 = vpop.f32.mrb[0].mxu0
        %v733 = vadd.f32 0.0, %v732
        %v734 = vpop.f32.mrb[0].mxu0
        %v735 = vpop.f32.mrb[0].mxu0
        %v736 = vadd.f32 0.0, %v735
        %v737 = vpop.f32.mrb[0].mxu0
        %738 = vmatprep.mubr.bf16.mxu0 0
        %739 = vmatmul.mubr.bf16.gmra.mrb[0].mxu0 %v606
        %v740 = vpop.f32.mrb[0].mxu0
        %v741 = vadd.f32 0.0, %v740
        %v742 = vpop.f32.mrb[0].mxu0
        %v743 = vpop.f32.mrb[0].mxu0
        %v744 = vadd.f32 0.0, %v743
        %v745 = vpop.f32.mrb[0].mxu0
        %746 = vmatprep.mubr.bf16.mxu0 0
        %747 = vmatmul.mubr.bf16.gmra.mrb[0].mxu0 %v609
        %v748 = vpop.f32.mrb[0].mxu0
        %v749 = vadd.f32 0.0, %v748
        %v750 = vpop.f32.mrb[0].mxu0
        %v751 = vpop.f32.mrb[0].mxu0
        %v752 = vadd.f32 0.0, %v751
        %v753 = vpop.f32.mrb[0].mxu0
        %754 = vmatprep.mubr.bf16.mxu0 0
        %755 = vmatmul.mubr.bf16.gmra.mrb[0].mxu0 %v612
        %v756 = vpop.f32.mrb[0].mxu0
        %v757 = vadd.f32 0.0, %v756
        %v758 = vpop.f32.mrb[0].mxu0
        %v759 = vpop.f32.mrb[0].mxu0
        %v760 = vadd.f32 0.0, %v759
        %v761 = vpop.f32.mrb[0].mxu0
        %762 = vmatprep.mubr.bf16.mxu0 0
        %763 = vmatmul.mubr.bf16.gmra.mrb[0].mxu0 %v615
        %v764 = vpop.f32.mrb[0].mxu0
        %v765 = vadd.f32 0.0, %v764
        %v766 = vpop.f32.mrb[0].mxu0
        %v767 = vpop.f32.mrb[0].mxu0
        %v768 = vadd.f32 0.0, %v767
        %v769 = vpop.f32.mrb[0].mxu0
        %770 = vmatprep.mubr.bf16.mxu0 0
        %771 = vmatmul.mubr.bf16.gmra.mrb[0].mxu0 %v618
        %v772 = vpop.f32.mrb[0].mxu0
        %v773 = vadd.f32 0.0, %v772
        %v774 = vpop.f32.mrb[0].mxu0
        %v775 = vpop.f32.mrb[0].mxu0
        %v776 = vadd.f32 0.0, %v775
        %v777 = vpop.f32.mrb[0].mxu0
        %778 = vmatprep.mubr.bf16.mxu0 0
        %779 = vmatmul.mubr.bf16.gmra.mrb[0].mxu0 %v621
        %v780 = vpop.f32.mrb[0].mxu0
        %v781 = vadd.f32 0.0, %v780
        %v782 = vpop.f32.mrb[0].mxu0
        %v783 = vpop.f32.mrb[0].mxu0
        %v784 = vadd.f32 0.0, %v783
        %v785 = vpop.f32.mrb[0].mxu0
        %786 = vdwg.mxu0
        %v787 = vadd.f32 %v493, %v661
        %v788 = vadd.f32 %v494, %v664
        %v789 = vadd.f32 %v495, %v669
        %v790 = vadd.f32 %v496, %v672
        %v791 = vadd.f32 %v497, %v677
        %v792 = vadd.f32 %v498, %v680
        %v793 = vadd.f32 %v499, %v685
        %v794 = vadd.f32 %v500, %v688
        %v795 = vadd.f32 %v501, %v693
        %v796 = vadd.f32 %v502, %v696
        %v797 = vadd.f32 %v503, %v701
        %v798 = vadd.f32 %v504, %v704
        %v799 = vadd.f32 %v505, %v709
        %v800 = vadd.f32 %v506, %v712
        %v801 = vadd.f32 %v507, %v717
        %v802 = vadd.f32 %v508, %v720
        %v803 = vadd.f32 %v509, %v725
        %v804 = vadd.f32 %v510, %v728
        %v805 = vadd.f32 %v511, %v733
        %v806 = vadd.f32 %v512, %v736
        %v807 = vadd.f32 %v513, %v741
        %v808 = vadd.f32 %v514, %v744
        %v809 = vadd.f32 %v515, %v749
        %v810 = vadd.f32 %v516, %v752
        %v811 = vadd.f32 %v517, %v757
        %v812 = vadd.f32 %v518, %v760
        %v813 = vadd.f32 %v519, %v765
        %v814 = vadd.f32 %v520, %v768
        %v815 = vadd.f32 %v521, %v773
        %v816 = vadd.f32 %v522, %v776
        %v817 = vadd.f32 %v523, %v781
        %v818 = vadd.f32 %v524, %v784
        %v819 = vld [vmem:[%s221 + $0x2] sm:$0xff]
        %v820 = vld [vmem:[%s221 + $0xa] sm:$0xff]
        %v821 = vld [vmem:[%s221 + $0x1a] sm:$0xff]
        %v822 = vld [vmem:[%s221 + $0x22] sm:$0xff]
        %v823 = vld [vmem:[%s221 + $0x32] sm:$0xff]
        %v824 = vld [vmem:[%s221 + $0x3a] sm:$0xff]
        %v825 = vld [vmem:[%s221 + $0x4a] sm:$0xff]
        %v826 = vld [vmem:[%s221 + $0x52] sm:$0xff]
        %v827 = vld [vmem:[%s221 + $0x62] sm:$0xff]
        %v828 = vld [vmem:[%s221 + $0x6a] sm:$0xff]
        %v829 = vld [vmem:[%s221 + $0x7a] sm:$0xff]
        %v830 = vld [vmem:[%s221 + $0x82] sm:$0xff]
        %v831 = vld [vmem:[%s221 + $0x92] sm:$0xff]
        %v832 = vld [vmem:[%s221 + $0x9a] sm:$0xff]
        %v833 = vld [vmem:[%s221 + $0xaa] sm:$0xff]
        %v834 = vld [vmem:[%s221 + $0xb2] sm:$0xff]
        %v835 = vld [vmem:[%s221 + $0xc2] sm:$0xff]
        %v836 = vld [vmem:[%s221 + $0xca] sm:$0xff]
        %v837 = vld [vmem:[%s221 + $0xda] sm:$0xff]
        %v838 = vld [vmem:[%s221 + $0xe2] sm:$0xff]
        %v839 = vld [vmem:[%s221 + $0xf2] sm:$0xff]
        %v840 = vld [vmem:[%s221 + $0xfa] sm:$0xff]
        %v841 = vld [vmem:[%s221 + $0x10a] sm:$0xff]
        %v842 = vld [vmem:[%s221 + $0x112] sm:$0xff]
        %v843 = vld [vmem:[%s221 + $0x122] sm:$0xff]
        %v844 = vld [vmem:[%s221 + $0x12a] sm:$0xff]
        %v845 = vld [vmem:[%s221 + $0x13a] sm:$0xff]
        %v846 = vld [vmem:[%s221 + $0x142] sm:$0xff]
        %v847 = vld [vmem:[%s221 + $0x152] sm:$0xff]
        %v848 = vld [vmem:[%s221 + $0x15a] sm:$0xff]
        %v849 = vld [vmem:[%s221 + $0x16a] sm:$0xff]
        %v850 = vld [vmem:[%s221 + $0x172] sm:$0xff]
        %v851 = vpack.c.bf16 %v820, %v819
        %v852 = vpack.c.bf16 %v822, %v821
        %v853 = vpack.c.bf16 %v824, %v823
        %v854 = vpack.c.bf16 %v826, %v825
        %v855 = vpack.c.bf16 %v828, %v827
        %v856 = vpack.c.bf16 %v830, %v829
        %v857 = vpack.c.bf16 %v832, %v831
        %v858 = vpack.c.bf16 %v834, %v833
        %v859 = vpack.c.bf16 %v836, %v835
        %v860 = vpack.c.bf16 %v838, %v837
        %v861 = vpack.c.bf16 %v840, %v839
        %v862 = vpack.c.bf16 %v842, %v841
        %v863 = vpack.c.bf16 %v844, %v843
        %v864 = vpack.c.bf16 %v846, %v845
        %v865 = vpack.c.bf16 %v848, %v847
        %v866 = vpack.c.bf16 %v850, %v849
        %s867 = scalar_lea.vmem %s1, 4
        %v868 = vld [vmem:[%s867] sm:$0x3]
        %v870 = vsel %vm279, %v851, 0
        %v873 = vsel %vm279, %v852, 0
        %v876 = vsel %vm279, %v853, 0
        %v879 = vsel %vm279, %v854, 0
        %v882 = vsel %vm279, %v855, 0
        %v885 = vsel %vm279, %v856, 0
        %v888 = vsel %vm279, %v857, 0
        %v891 = vsel %vm279, %v858, 0
        %v894 = vsel %vm279, %v859, 0
        %v897 = vsel %vm279, %v860, 0
        %v900 = vsel %vm279, %v861, 0
        %v903 = vsel %vm279, %v862, 0
        %v906 = vsel %vm279, %v863, 0
        %v909 = vsel %vm279, %v864, 0
        %v912 = vsel %vm279, %v865, 0
        %v915 = vsel %vm279, %v866, 0
        %v918 = vsel %vm328, %v868, 0
        %920 = vmatprep.subr.bf16.mxu0 0
        %921 = vmatpush1.bf16.msra.mxu0 %v918
        %922 = vmatprep.subr.bf16.mxu0 0
        %923 = vmatpush1.bf16.msra.mxu0 0
        %924 = vmatprep.subr.bf16.mxu0 0
        %925 = vmatpush1.bf16.msra.mxu0 0
        %926 = vmatprep.subr.bf16.mxu0 0
        %927 = vmatpush1.bf16.msra.mxu0 0
        %928 = vmatprep.subr.bf16.mxu0 0
        %929 = vmatpush1.bf16.msra.mxu0 0
        %930 = vmatprep.subr.bf16.mxu0 0
        %931 = vmatpush1.bf16.msra.mxu0 0
        %932 = vmatprep.subr.bf16.mxu0 0
        %933 = vmatpush1.bf16.msra.mxu0 0
        %934 = vmatprep.subr.bf16.mxu0 0
        %935 = vmatpush1.bf16.msra.mxu0 0
        %936 = vmatprep.subr.bf16.mxu0 0
        %937 = vmatpush1.bf16.msra.mxu0 0
        %938 = vmatprep.subr.bf16.mxu0 0
        %939 = vmatpush1.bf16.msra.mxu0 0
        %940 = vmatprep.subr.bf16.mxu0 0
        %941 = vmatpush1.bf16.msra.mxu0 0
        %942 = vmatprep.subr.bf16.mxu0 0
        %943 = vmatpush1.bf16.msra.mxu0 0
        %944 = vmatprep.subr.bf16.mxu0 0
        %945 = vmatpush1.bf16.msra.mxu0 0
        %946 = vmatprep.subr.bf16.mxu0 0
        %947 = vmatpush1.bf16.msra.mxu0 0
        %948 = vmatprep.subr.bf16.mxu0 0
        %949 = vmatpush1.bf16.msra.mxu0 0
        %950 = vmatprep.subr.bf16.mxu0 0
        %951 = vmatpush1.bf16.msra.mxu0 0
        %952 = vmatprep.mubr.bf16.mxu0 0
        %953 = vmatmul.mubr.bf16.gmra.mrb[0].mxu0 %v870
        %v954 = vpop.f32.mrb[0].mxu0
        %v955 = vadd.f32 0.0, %v954
        %v956 = vpop.f32.mrb[0].mxu0
        %v957 = vpop.f32.mrb[0].mxu0
        %v958 = vadd.f32 0.0, %v957
        %v959 = vpop.f32.mrb[0].mxu0
        %960 = vmatprep.mubr.bf16.mxu0 0
        %961 = vmatmul.mubr.bf16.gmra.mrb[0].mxu0 %v873
        %v962 = vpop.f32.mrb[0].mxu0
        %v963 = vadd.f32 0.0, %v962
        %v964 = vpop.f32.mrb[0].mxu0
        %v965 = vpop.f32.mrb[0].mxu0
        %v966 = vadd.f32 0.0, %v965
        %v967 = vpop.f32.mrb[0].mxu0
        %968 = vmatprep.mubr.bf16.mxu0 0
        %969 = vmatmul.mubr.bf16.gmra.mrb[0].mxu0 %v876
        %v970 = vpop.f32.mrb[0].mxu0
        %v971 = vadd.f32 0.0, %v970
        %v972 = vpop.f32.mrb[0].mxu0
        %v973 = vpop.f32.mrb[0].mxu0
        %v974 = vadd.f32 0.0, %v973
        %v975 = vpop.f32.mrb[0].mxu0
        %976 = vmatprep.mubr.bf16.mxu0 0
        %977 = vmatmul.mubr.bf16.gmra.mrb[0].mxu0 %v879
        %v978 = vpop.f32.mrb[0].mxu0
        %v979 = vadd.f32 0.0, %v978
        %v980 = vpop.f32.mrb[0].mxu0
        %v981 = vpop.f32.mrb[0].mxu0
        %v982 = vadd.f32 0.0, %v981
        %v983 = vpop.f32.mrb[0].mxu0
        %984 = vmatprep.mubr.bf16.mxu0 0
        %985 = vmatmul.mubr.bf16.gmra.mrb[0].mxu0 %v882
        %v986 = vpop.f32.mrb[0].mxu0
        %v987 = vadd.f32 0.0, %v986
        %v988 = vpop.f32.mrb[0].mxu0
        %v989 = vpop.f32.mrb[0].mxu0
        %v990 = vadd.f32 0.0, %v989
        %v991 = vpop.f32.mrb[0].mxu0
        %992 = vmatprep.mubr.bf16.mxu0 0
        %993 = vmatmul.mubr.bf16.gmra.mrb[0].mxu0 %v885
        %v994 = vpop.f32.mrb[0].mxu0
        %v995 = vadd.f32 0.0, %v994
        %v996 = vpop.f32.mrb[0].mxu0
        %v997 = vpop.f32.mrb[0].mxu0
        %v998 = vadd.f32 0.0, %v997
        %v999 = vpop.f32.mrb[0].mxu0
        %1000 = vmatprep.mubr.bf16.mxu0 0
        %1001 = vmatmul.mubr.bf16.gmra.mrb[0].mxu0 %v888
        %v1002 = vpop.f32.mrb[0].mxu0
        %v1003 = vadd.f32 0.0, %v1002
        %v1004 = vpop.f32.mrb[0].mxu0
        %v1005 = vpop.f32.mrb[0].mxu0
        %v1006 = vadd.f32 0.0, %v1005
        %v1007 = vpop.f32.mrb[0].mxu0
        %1008 = vmatprep.mubr.bf16.mxu0 0
        %1009 = vmatmul.mubr.bf16.gmra.mrb[0].mxu0 %v891
        %v1010 = vpop.f32.mrb[0].mxu0
        %v1011 = vadd.f32 0.0, %v1010
        %v1012 = vpop.f32.mrb[0].mxu0
        %v1013 = vpop.f32.mrb[0].mxu0
        %v1014 = vadd.f32 0.0, %v1013
        %v1015 = vpop.f32.mrb[0].mxu0
        %1016 = vmatprep.mubr.bf16.mxu0 0
        %1017 = vmatmul.mubr.bf16.gmra.mrb[0].mxu0 %v894
        %v1018 = vpop.f32.mrb[0].mxu0
        %v1019 = vadd.f32 0.0, %v1018
        %v1020 = vpop.f32.mrb[0].mxu0
        %v1021 = vpop.f32.mrb[0].mxu0
        %v1022 = vadd.f32 0.0, %v1021
        %v1023 = vpop.f32.mrb[0].mxu0
        %1024 = vmatprep.mubr.bf16.mxu0 0
        %1025 = vmatmul.mubr.bf16.gmra.mrb[0].mxu0 %v897
        %v1026 = vpop.f32.mrb[0].mxu0
        %v1027 = vadd.f32 0.0, %v1026
        %v1028 = vpop.f32.mrb[0].mxu0
        %v1029 = vpop.f32.mrb[0].mxu0
        %v1030 = vadd.f32 0.0, %v1029
        %v1031 = vpop.f32.mrb[0].mxu0
        %1032 = vmatprep.mubr.bf16.mxu0 0
        %1033 = vmatmul.mubr.bf16.gmra.mrb[0].mxu0 %v900
        %v1034 = vpop.f32.mrb[0].mxu0
        %v1035 = vadd.f32 0.0, %v1034
        %v1036 = vpop.f32.mrb[0].mxu0
        %v1037 = vpop.f32.mrb[0].mxu0
        %v1038 = vadd.f32 0.0, %v1037
        %v1039 = vpop.f32.mrb[0].mxu0
        %1040 = vmatprep.mubr.bf16.mxu0 0
        %1041 = vmatmul.mubr.bf16.gmra.mrb[0].mxu0 %v903
        %v1042 = vpop.f32.mrb[0].mxu0
        %v1043 = vadd.f32 0.0, %v1042
        %v1044 = vpop.f32.mrb[0].mxu0
        %v1045 = vpop.f32.mrb[0].mxu0
        %v1046 = vadd.f32 0.0, %v1045
        %v1047 = vpop.f32.mrb[0].mxu0
        %1048 = vmatprep.mubr.bf16.mxu0 0
        %1049 = vmatmul.mubr.bf16.gmra.mrb[0].mxu0 %v906
        %v1050 = vpop.f32.mrb[0].mxu0
        %v1051 = vadd.f32 0.0, %v1050
        %v1052 = vpop.f32.mrb[0].mxu0
        %v1053 = vpop.f32.mrb[0].mxu0
        %v1054 = vadd.f32 0.0, %v1053
        %v1055 = vpop.f32.mrb[0].mxu0
        %1056 = vmatprep.mubr.bf16.mxu0 0
        %1057 = vmatmul.mubr.bf16.gmra.mrb[0].mxu0 %v909
        %v1058 = vpop.f32.mrb[0].mxu0
        %v1059 = vadd.f32 0.0, %v1058
        %v1060 = vpop.f32.mrb[0].mxu0
        %v1061 = vpop.f32.mrb[0].mxu0
        %v1062 = vadd.f32 0.0, %v1061
        %v1063 = vpop.f32.mrb[0].mxu0
        %1064 = vmatprep.mubr.bf16.mxu0 0
        %1065 = vmatmul.mubr.bf16.gmra.mrb[0].mxu0 %v912
        %v1066 = vpop.f32.mrb[0].mxu0
        %v1067 = vadd.f32 0.0, %v1066
        %v1068 = vpop.f32.mrb[0].mxu0
        %v1069 = vpop.f32.mrb[0].mxu0
        %v1070 = vadd.f32 0.0, %v1069
        %v1071 = vpop.f32.mrb[0].mxu0
        %1072 = vmatprep.mubr.bf16.mxu0 0
        %1073 = vmatmul.mubr.bf16.gmra.mrb[0].mxu0 %v915
        %v1074 = vpop.f32.mrb[0].mxu0
        %v1075 = vadd.f32 0.0, %v1074
        %v1076 = vpop.f32.mrb[0].mxu0
        %v1077 = vpop.f32.mrb[0].mxu0
        %v1078 = vadd.f32 0.0, %v1077
        %v1079 = vpop.f32.mrb[0].mxu0
        %1080 = vdwg.mxu0
        %v1081 = vadd.f32 %v787, %v955
        %v1082 = vadd.f32 %v788, %v958
        %v1083 = vadd.f32 %v789, %v963
        %v1084 = vadd.f32 %v790, %v966
        %v1085 = vadd.f32 %v791, %v971
        %v1086 = vadd.f32 %v792, %v974
        %v1087 = vadd.f32 %v793, %v979
        %v1088 = vadd.f32 %v794, %v982
        %v1089 = vadd.f32 %v795, %v987
        %v1090 = vadd.f32 %v796, %v990
        %v1091 = vadd.f32 %v797, %v995
        %v1092 = vadd.f32 %v798, %v998
        %v1093 = vadd.f32 %v799, %v1003
        %v1094 = vadd.f32 %v800, %v1006
        %v1095 = vadd.f32 %v801, %v1011
        %v1096 = vadd.f32 %v802, %v1014
        %v1097 = vadd.f32 %v803, %v1019
        %v1098 = vadd.f32 %v804, %v1022
        %v1099 = vadd.f32 %v805, %v1027
        %v1100 = vadd.f32 %v806, %v1030
        %v1101 = vadd.f32 %v807, %v1035
        %v1102 = vadd.f32 %v808, %v1038
        %v1103 = vadd.f32 %v809, %v1043
        %v1104 = vadd.f32 %v810, %v1046
        %v1105 = vadd.f32 %v811, %v1051
        %v1106 = vadd.f32 %v812, %v1054
        %v1107 = vadd.f32 %v813, %v1059
        %v1108 = vadd.f32 %v814, %v1062
        %v1109 = vadd.f32 %v815, %v1067
        %v1110 = vadd.f32 %v816, %v1070
        %v1111 = vadd.f32 %v817, %v1075
        %v1112 = vadd.f32 %v818, %v1078
        %s1113 = scalar_lea.vmem %s221, 24
        %v1114 = vld [vmem:[%s1113] sm:$0xff]
        %v1115 = vld [vmem:[%s1113 + $0x8] sm:$0xff]
        %v1116 = vld [vmem:[%s1113 + $0x18] sm:$0xff]
        %v1117 = vld [vmem:[%s1113 + $0x20] sm:$0xff]
        %v1118 = vld [vmem:[%s1113 + $0x30] sm:$0xff]
        %v1119 = vld [vmem:[%s1113 + $0x38] sm:$0xff]
        %v1120 = vld [vmem:[%s1113 + $0x48] sm:$0xff]
        %v1121 = vld [vmem:[%s1113 + $0x50] sm:$0xff]
        %v1122 = vld [vmem:[%s1113 + $0x60] sm:$0xff]
        %v1123 = vld [vmem:[%s1113 + $0x68] sm:$0xff]
        %v1124 = vld [vmem:[%s1113 + $0x78] sm:$0xff]
        %v1125 = vld [vmem:[%s1113 + $0x80] sm:$0xff]
        %v1126 = vld [vmem:[%s1113 + $0x90] sm:$0xff]
        %v1127 = vld [vmem:[%s1113 + $0x98] sm:$0xff]
        %v1128 = vld [vmem:[%s1113 + $0xa8] sm:$0xff]
        %v1129 = vld [vmem:[%s1113 + $0xb0] sm:$0xff]
        %v1130 = vld [vmem:[%s1113 + $0xc0] sm:$0xff]
        %v1131 = vld [vmem:[%s1113 + $0xc8] sm:$0xff]
        %v1132 = vld [vmem:[%s1113 + $0xd8] sm:$0xff]
        %v1133 = vld [vmem:[%s1113 + $0xe0] sm:$0xff]
        %v1134 = vld [vmem:[%s1113 + $0xf0] sm:$0xff]
        %v1135 = vld [vmem:[%s1113 + $0xf8] sm:$0xff]
        %v1136 = vld [vmem:[%s1113 + $0x108] sm:$0xff]
        %v1137 = vld [vmem:[%s1113 + $0x110] sm:$0xff]
        %v1138 = vld [vmem:[%s1113 + $0x120] sm:$0xff]
        %v1139 = vld [vmem:[%s1113 + $0x128] sm:$0xff]
        %v1140 = vld [vmem:[%s1113 + $0x138] sm:$0xff]
        %v1141 = vld [vmem:[%s1113 + $0x140] sm:$0xff]
        %v1142 = vld [vmem:[%s1113 + $0x150] sm:$0xff]
        %v1143 = vld [vmem:[%s1113 + $0x158] sm:$0xff]
        %v1144 = vld [vmem:[%s1113 + $0x168] sm:$0xff]
        %v1145 = vld [vmem:[%s1113 + $0x170] sm:$0xff]
        %v1146 = vpack.c.bf16 %v1115, %v1114
        %v1147 = vpack.c.bf16 %v1117, %v1116
        %v1148 = vpack.c.bf16 %v1119, %v1118
        %v1149 = vpack.c.bf16 %v1121, %v1120
        %v1150 = vpack.c.bf16 %v1123, %v1122
        %v1151 = vpack.c.bf16 %v1125, %v1124
        %v1152 = vpack.c.bf16 %v1127, %v1126
        %v1153 = vpack.c.bf16 %v1129, %v1128
        %v1154 = vpack.c.bf16 %v1131, %v1130
        %v1155 = vpack.c.bf16 %v1133, %v1132
        %v1156 = vpack.c.bf16 %v1135, %v1134
        %v1157 = vpack.c.bf16 %v1137, %v1136
        %v1158 = vpack.c.bf16 %v1139, %v1138
        %v1159 = vpack.c.bf16 %v1141, %v1140
        %v1160 = vpack.c.bf16 %v1143, %v1142
        %v1161 = vpack.c.bf16 %v1145, %v1144
        %s1162 = scalar_lea.vmem %s1, 6
        %v1163 = vld [vmem:[%s1162] sm:$0x3]
        %v1165 = vsel %vm279, %v1146, 0
        %v1168 = vsel %vm279, %v1147, 0
        %v1171 = vsel %vm279, %v1148, 0
        %v1174 = vsel %vm279, %v1149, 0
        %v1177 = vsel %vm279, %v1150, 0
        %v1180 = vsel %vm279, %v1151, 0
        %v1183 = vsel %vm279, %v1152, 0
        %v1186 = vsel %vm279, %v1153, 0
        %v1189 = vsel %vm279, %v1154, 0
        %v1192 = vsel %vm279, %v1155, 0
        %v1195 = vsel %vm279, %v1156, 0
        %v1198 = vsel %vm279, %v1157, 0
        %v1201 = vsel %vm279, %v1158, 0
        %v1204 = vsel %vm279, %v1159, 0
        %v1207 = vsel %vm279, %v1160, 0
        %v1210 = vsel %vm279, %v1161, 0
        %v1213 = vsel %vm328, %v1163, 0
        %1215 = vmatprep.subr.bf16.mxu0 0
        %1216 = vmatpush1.bf16.msra.mxu0 %v1213
        %1217 = vmatprep.subr.bf16.mxu0 0
        %1218 = vmatpush1.bf16.msra.mxu0 0
        %1219 = vmatprep.subr.bf16.mxu0 0
        %1220 = vmatpush1.bf16.msra.mxu0 0
        %1221 = vmatprep.subr.bf16.mxu0 0
        %1222 = vmatpush1.bf16.msra.mxu0 0
        %1223 = vmatprep.subr.bf16.mxu0 0
        %1224 = vmatpush1.bf16.msra.mxu0 0
        %1225 = vmatprep.subr.bf16.mxu0 0
        %1226 = vmatpush1.bf16.msra.mxu0 0
        %1227 = vmatprep.subr.bf16.mxu0 0
        %1228 = vmatpush1.bf16.msra.mxu0 0
        %1229 = vmatprep.subr.bf16.mxu0 0
        %1230 = vmatpush1.bf16.msra.mxu0 0
        %1231 = vmatprep.subr.bf16.mxu0 0
        %1232 = vmatpush1.bf16.msra.mxu0 0
        %1233 = vmatprep.subr.bf16.mxu0 0
        %1234 = vmatpush1.bf16.msra.mxu0 0
        %1235 = vmatprep.subr.bf16.mxu0 0
        %1236 = vmatpush1.bf16.msra.mxu0 0
        %1237 = vmatprep.subr.bf16.mxu0 0
        %1238 = vmatpush1.bf16.msra.mxu0 0
        %1239 = vmatprep.subr.bf16.mxu0 0
        %1240 = vmatpush1.bf16.msra.mxu0 0
        %1241 = vmatprep.subr.bf16.mxu0 0
        %1242 = vmatpush1.bf16.msra.mxu0 0
        %1243 = vmatprep.subr.bf16.mxu0 0
        %1244 = vmatpush1.bf16.msra.mxu0 0
        %1245 = vmatprep.subr.bf16.mxu0 0
        %1246 = vmatpush1.bf16.msra.mxu0 0
        %1247 = vmatprep.mubr.bf16.mxu0 0
        %1248 = vmatmul.mubr.bf16.gmra.mrb[0].mxu0 %v1165
        %v1249 = vpop.f32.mrb[0].mxu0
        %v1250 = vadd.f32 0.0, %v1249
        %v1251 = vpop.f32.mrb[0].mxu0
        %v1252 = vpop.f32.mrb[0].mxu0
        %v1253 = vadd.f32 0.0, %v1252
        %v1254 = vpop.f32.mrb[0].mxu0
        %1255 = vmatprep.mubr.bf16.mxu0 0
        %1256 = vmatmul.mubr.bf16.gmra.mrb[0].mxu0 %v1168
        %v1257 = vpop.f32.mrb[0].mxu0
        %v1258 = vadd.f32 0.0, %v1257
        %v1259 = vpop.f32.mrb[0].mxu0
        %v1260 = vpop.f32.mrb[0].mxu0
        %v1261 = vadd.f32 0.0, %v1260
        %v1262 = vpop.f32.mrb[0].mxu0
        %1263 = vmatprep.mubr.bf16.mxu0 0
        %1264 = vmatmul.mubr.bf16.gmra.mrb[0].mxu0 %v1171
        %v1265 = vpop.f32.mrb[0].mxu0
        %v1266 = vadd.f32 0.0, %v1265
        %v1267 = vpop.f32.mrb[0].mxu0
        %v1268 = vpop.f32.mrb[0].mxu0
        %v1269 = vadd.f32 0.0, %v1268
        %v1270 = vpop.f32.mrb[0].mxu0
        %1271 = vmatprep.mubr.bf16.mxu0 0
        %1272 = vmatmul.mubr.bf16.gmra.mrb[0].mxu0 %v1174
        %v1273 = vpop.f32.mrb[0].mxu0
        %v1274 = vadd.f32 0.0, %v1273
        %v1275 = vpop.f32.mrb[0].mxu0
        %v1276 = vpop.f32.mrb[0].mxu0
        %v1277 = vadd.f32 0.0, %v1276
        %v1278 = vpop.f32.mrb[0].mxu0
        %1279 = vmatprep.mubr.bf16.mxu0 0
        %1280 = vmatmul.mubr.bf16.gmra.mrb[0].mxu0 %v1177
        %v1281 = vpop.f32.mrb[0].mxu0
        %v1282 = vadd.f32 0.0, %v1281
        %v1283 = vpop.f32.mrb[0].mxu0
        %v1284 = vpop.f32.mrb[0].mxu0
        %v1285 = vadd.f32 0.0, %v1284
        %v1286 = vpop.f32.mrb[0].mxu0
        %1287 = vmatprep.mubr.bf16.mxu0 0
        %1288 = vmatmul.mubr.bf16.gmra.mrb[0].mxu0 %v1180
        %v1289 = vpop.f32.mrb[0].mxu0
        %v1290 = vadd.f32 0.0, %v1289
        %v1291 = vpop.f32.mrb[0].mxu0
        %v1292 = vpop.f32.mrb[0].mxu0
        %v1293 = vadd.f32 0.0, %v1292
        %v1294 = vpop.f32.mrb[0].mxu0
        %1295 = vmatprep.mubr.bf16.mxu0 0
        %1296 = vmatmul.mubr.bf16.gmra.mrb[0].mxu0 %v1183
        %v1297 = vpop.f32.mrb[0].mxu0
        %v1298 = vadd.f32 0.0, %v1297
        %v1299 = vpop.f32.mrb[0].mxu0
        %v1300 = vpop.f32.mrb[0].mxu0
        %v1301 = vadd.f32 0.0, %v1300
        %v1302 = vpop.f32.mrb[0].mxu0
        %1303 = vmatprep.mubr.bf16.mxu0 0
        %1304 = vmatmul.mubr.bf16.gmra.mrb[0].mxu0 %v1186
        %v1305 = vpop.f32.mrb[0].mxu0
        %v1306 = vadd.f32 0.0, %v1305
        %v1307 = vpop.f32.mrb[0].mxu0
        %v1308 = vpop.f32.mrb[0].mxu0
        %v1309 = vadd.f32 0.0, %v1308
        %v1310 = vpop.f32.mrb[0].mxu0
        %1311 = vmatprep.mubr.bf16.mxu0 0
        %1312 = vmatmul.mubr.bf16.gmra.mrb[0].mxu0 %v1189
        %v1313 = vpop.f32.mrb[0].mxu0
        %v1314 = vadd.f32 0.0, %v1313
        %v1315 = vpop.f32.mrb[0].mxu0
        %v1316 = vpop.f32.mrb[0].mxu0
        %v1317 = vadd.f32 0.0, %v1316
        %v1318 = vpop.f32.mrb[0].mxu0
        %1319 = vmatprep.mubr.bf16.mxu0 0
        %1320 = vmatmul.mubr.bf16.gmra.mrb[0].mxu0 %v1192
        %v1321 = vpop.f32.mrb[0].mxu0
        %v1322 = vadd.f32 0.0, %v1321
        %v1323 = vpop.f32.mrb[0].mxu0
        %v1324 = vpop.f32.mrb[0].mxu0
        %v1325 = vadd.f32 0.0, %v1324
        %v1326 = vpop.f32.mrb[0].mxu0
        %1327 = vmatprep.mubr.bf16.mxu0 0
        %1328 = vmatmul.mubr.bf16.gmra.mrb[0].mxu0 %v1195
        %v1329 = vpop.f32.mrb[0].mxu0
        %v1330 = vadd.f32 0.0, %v1329
        %v1331 = vpop.f32.mrb[0].mxu0
        %v1332 = vpop.f32.mrb[0].mxu0
        %v1333 = vadd.f32 0.0, %v1332
        %v1334 = vpop.f32.mrb[0].mxu0
        %1335 = vmatprep.mubr.bf16.mxu0 0
        %1336 = vmatmul.mubr.bf16.gmra.mrb[0].mxu0 %v1198
        %v1337 = vpop.f32.mrb[0].mxu0
        %v1338 = vadd.f32 0.0, %v1337
        %v1339 = vpop.f32.mrb[0].mxu0
        %v1340 = vpop.f32.mrb[0].mxu0
        %v1341 = vadd.f32 0.0, %v1340
        %v1342 = vpop.f32.mrb[0].mxu0
        %1343 = vmatprep.mubr.bf16.mxu0 0
        %1344 = vmatmul.mubr.bf16.gmra.mrb[0].mxu0 %v1201
        %v1345 = vpop.f32.mrb[0].mxu0
        %v1346 = vadd.f32 0.0, %v1345
        %v1347 = vpop.f32.mrb[0].mxu0
        %v1348 = vpop.f32.mrb[0].mxu0
        %v1349 = vadd.f32 0.0, %v1348
        %v1350 = vpop.f32.mrb[0].mxu0
        %1351 = vmatprep.mubr.bf16.mxu0 0
        %1352 = vmatmul.mubr.bf16.gmra.mrb[0].mxu0 %v1204
        %v1353 = vpop.f32.mrb[0].mxu0
        %v1354 = vadd.f32 0.0, %v1353
        %v1355 = vpop.f32.mrb[0].mxu0
        %v1356 = vpop.f32.mrb[0].mxu0
        %v1357 = vadd.f32 0.0, %v1356
        %v1358 = vpop.f32.mrb[0].mxu0
        %1359 = vmatprep.mubr.bf16.mxu0 0
        %1360 = vmatmul.mubr.bf16.gmra.mrb[0].mxu0 %v1207
        %v1361 = vpop.f32.mrb[0].mxu0
        %v1362 = vadd.f32 0.0, %v1361
        %v1363 = vpop.f32.mrb[0].mxu0
        %v1364 = vpop.f32.mrb[0].mxu0
        %v1365 = vadd.f32 0.0, %v1364
        %v1366 = vpop.f32.mrb[0].mxu0
        %1367 = vmatprep.mubr.bf16.mxu0 0
        %1368 = vmatmul.mubr.bf16.gmra.mrb[0].mxu0 %v1210
        %v1369 = vpop.f32.mrb[0].mxu0
        %v1370 = vadd.f32 0.0, %v1369
        %v1371 = vpop.f32.mrb[0].mxu0
        %v1372 = vpop.f32.mrb[0].mxu0
        %v1373 = vadd.f32 0.0, %v1372
        %v1374 = vpop.f32.mrb[0].mxu0
        %1375 = vdwg.mxu0
        %v1376 = vadd.f32 %v1081, %v1250
        %v1377 = vadd.f32 %v1082, %v1253
        %v1378 = vadd.f32 %v1083, %v1258
        %v1379 = vadd.f32 %v1084, %v1261
        %v1380 = vadd.f32 %v1085, %v1266
        %v1381 = vadd.f32 %v1086, %v1269
        %v1382 = vadd.f32 %v1087, %v1274
        %v1383 = vadd.f32 %v1088, %v1277
        %v1384 = vadd.f32 %v1089, %v1282
        %v1385 = vadd.f32 %v1090, %v1285
        %v1386 = vadd.f32 %v1091, %v1290
        %v1387 = vadd.f32 %v1092, %v1293
        %v1388 = vadd.f32 %v1093, %v1298
        %v1389 = vadd.f32 %v1094, %v1301
        %v1390 = vadd.f32 %v1095, %v1306
        %v1391 = vadd.f32 %v1096, %v1309
        %v1392 = vadd.f32 %v1097, %v1314
        %v1393 = vadd.f32 %v1098, %v1317
        %v1394 = vadd.f32 %v1099, %v1322
        %v1395 = vadd.f32 %v1100, %v1325
        %v1396 = vadd.f32 %v1101, %v1330
        %v1397 = vadd.f32 %v1102, %v1333
        %v1398 = vadd.f32 %v1103, %v1338
        %v1399 = vadd.f32 %v1104, %v1341
        %v1400 = vadd.f32 %v1105, %v1346
        %v1401 = vadd.f32 %v1106, %v1349
        %v1402 = vadd.f32 %v1107, %v1354
        %v1403 = vadd.f32 %v1108, %v1357
        %v1404 = vadd.f32 %v1109, %v1362
        %v1405 = vadd.f32 %v1110, %v1365
        %v1406 = vadd.f32 %v1111, %v1370
        %v1407 = vadd.f32 %v1112, %v1373
        %v1408 = vld [vmem:[%s1113 + $0x1] sm:$0xff]
        %v1409 = vld [vmem:[%s1113 + $0x9] sm:$0xff]
        %v1410 = vld [vmem:[%s1113 + $0x19] sm:$0xff]
        %v1411 = vld [vmem:[%s1113 + $0x21] sm:$0xff]
        %v1412 = vld [vmem:[%s1113 + $0x31] sm:$0xff]
        %v1413 = vld [vmem:[%s1113 + $0x39] sm:$0xff]
        %v1414 = vld [vmem:[%s1113 + $0x49] sm:$0xff]
        %v1415 = vld [vmem:[%s1113 + $0x51] sm:$0xff]
        %v1416 = vld [vmem:[%s1113 + $0x61] sm:$0xff]
        %v1417 = vld [vmem:[%s1113 + $0x69] sm:$0xff]
        %v1418 = vld [vmem:[%s1113 + $0x79] sm:$0xff]
        %v1419 = vld [vmem:[%s1113 + $0x81] sm:$0xff]
        %v1420 = vld [vmem:[%s1113 + $0x91] sm:$0xff]
        %v1421 = vld [vmem:[%s1113 + $0x99] sm:$0xff]
        %v1422 = vld [vmem:[%s1113 + $0xa9] sm:$0xff]
        %v1423 = vld [vmem:[%s1113 + $0xb1] sm:$0xff]
        %v1424 = vld [vmem:[%s1113 + $0xc1] sm:$0xff]
        %v1425 = vld [vmem:[%s1113 + $0xc9] sm:$0xff]
        %v1426 = vld [vmem:[%s1113 + $0xd9] sm:$0xff]
        %v1427 = vld [vmem:[%s1113 + $0xe1] sm:$0xff]
        %v1428 = vld [vmem:[%s1113 + $0xf1] sm:$0xff]
        %v1429 = vld [vmem:[%s1113 + $0xf9] sm:$0xff]
        %v1430 = vld [vmem:[%s1113 + $0x109] sm:$0xff]
        %v1431 = vld [vmem:[%s1113 + $0x111] sm:$0xff]
        %v1432 = vld [vmem:[%s1113 + $0x121] sm:$0xff]
        %v1433 = vld [vmem:[%s1113 + $0x129] sm:$0xff]
        %v1434 = vld [vmem:[%s1113 + $0x139] sm:$0xff]
        %v1435 = vld [vmem:[%s1113 + $0x141] sm:$0xff]
        %v1436 = vld [vmem:[%s1113 + $0x151] sm:$0xff]
        %v1437 = vld [vmem:[%s1113 + $0x159] sm:$0xff]
        %v1438 = vld [vmem:[%s1113 + $0x169] sm:$0xff]
        %v1439 = vld [vmem:[%s1113 + $0x171] sm:$0xff]
        %v1440 = vpack.c.bf16 %v1409, %v1408
        %v1441 = vpack.c.bf16 %v1411, %v1410
        %v1442 = vpack.c.bf16 %v1413, %v1412
        %v1443 = vpack.c.bf16 %v1415, %v1414
        %v1444 = vpack.c.bf16 %v1417, %v1416
        %v1445 = vpack.c.bf16 %v1419, %v1418
        %v1446 = vpack.c.bf16 %v1421, %v1420
        %v1447 = vpack.c.bf16 %v1423, %v1422
        %v1448 = vpack.c.bf16 %v1425, %v1424
        %v1449 = vpack.c.bf16 %v1427, %v1426
        %v1450 = vpack.c.bf16 %v1429, %v1428
        %v1451 = vpack.c.bf16 %v1431, %v1430
        %v1452 = vpack.c.bf16 %v1433, %v1432
        %v1453 = vpack.c.bf16 %v1435, %v1434
        %v1454 = vpack.c.bf16 %v1437, %v1436
        %v1455 = vpack.c.bf16 %v1439, %v1438
        %s1456 = scalar_lea.vmem %s1, 8
        %v1457 = vld [vmem:[%s1456] sm:$0x3]
        %v1459 = vsel %vm279, %v1440, 0
        %v1462 = vsel %vm279, %v1441, 0
        %v1465 = vsel %vm279, %v1442, 0
        %v1468 = vsel %vm279, %v1443, 0
        %v1471 = vsel %vm279, %v1444, 0
        %v1474 = vsel %vm279, %v1445, 0
        %v1477 = vsel %vm279, %v1446, 0
        %v1480 = vsel %vm279, %v1447, 0
        %v1483 = vsel %vm279, %v1448, 0
        %v1486 = vsel %vm279, %v1449, 0
        %v1489 = vsel %vm279, %v1450, 0
        %v1492 = vsel %vm279, %v1451, 0
        %v1495 = vsel %vm279, %v1452, 0
        %v1498 = vsel %vm279, %v1453, 0
        %v1501 = vsel %vm279, %v1454, 0
        %v1504 = vsel %vm279, %v1455, 0
        %v1507 = vsel %vm328, %v1457, 0
        %1509 = vmatprep.subr.bf16.mxu0 0
        %1510 = vmatpush1.bf16.msra.mxu0 %v1507
        %1511 = vmatprep.subr.bf16.mxu0 0
        %1512 = vmatpush1.bf16.msra.mxu0 0
        %1513 = vmatprep.subr.bf16.mxu0 0
        %1514 = vmatpush1.bf16.msra.mxu0 0
        %1515 = vmatprep.subr.bf16.mxu0 0
        %1516 = vmatpush1.bf16.msra.mxu0 0
        %1517 = vmatprep.subr.bf16.mxu0 0
        %1518 = vmatpush1.bf16.msra.mxu0 0
        %1519 = vmatprep.subr.bf16.mxu0 0
        %1520 = vmatpush1.bf16.msra.mxu0 0
        %1521 = vmatprep.subr.bf16.mxu0 0
        %1522 = vmatpush1.bf16.msra.mxu0 0
        %1523 = vmatprep.subr.bf16.mxu0 0
        %1524 = vmatpush1.bf16.msra.mxu0 0
        %1525 = vmatprep.subr.bf16.mxu0 0
        %1526 = vmatpush1.bf16.msra.mxu0 0
        %1527 = vmatprep.subr.bf16.mxu0 0
        %1528 = vmatpush1.bf16.msra.mxu0 0
        %1529 = vmatprep.subr.bf16.mxu0 0
        %1530 = vmatpush1.bf16.msra.mxu0 0
        %1531 = vmatprep.subr.bf16.mxu0 0
        %1532 = vmatpush1.bf16.msra.mxu0 0
        %1533 = vmatprep.subr.bf16.mxu0 0
        %1534 = vmatpush1.bf16.msra.mxu0 0
        %1535 = vmatprep.subr.bf16.mxu0 0
        %1536 = vmatpush1.bf16.msra.mxu0 0
        %1537 = vmatprep.subr.bf16.mxu0 0
        %1538 = vmatpush1.bf16.msra.mxu0 0
        %1539 = vmatprep.subr.bf16.mxu0 0
        %1540 = vmatpush1.bf16.msra.mxu0 0
        %1541 = vmatprep.mubr.bf16.mxu0 0
        %1542 = vmatmul.mubr.bf16.gmra.mrb[0].mxu0 %v1459
        %v1543 = vpop.f32.mrb[0].mxu0
        %v1544 = vadd.f32 0.0, %v1543
        %v1545 = vpop.f32.mrb[0].mxu0
        %v1546 = vpop.f32.mrb[0].mxu0
        %v1547 = vadd.f32 0.0, %v1546
        %v1548 = vpop.f32.mrb[0].mxu0
        %1549 = vmatprep.mubr.bf16.mxu0 0
        %1550 = vmatmul.mubr.bf16.gmra.mrb[0].mxu0 %v1462
        %v1551 = vpop.f32.mrb[0].mxu0
        %v1552 = vadd.f32 0.0, %v1551
        %v1553 = vpop.f32.mrb[0].mxu0
        %v1554 = vpop.f32.mrb[0].mxu0
        %v1555 = vadd.f32 0.0, %v1554
        %v1556 = vpop.f32.mrb[0].mxu0
        %1557 = vmatprep.mubr.bf16.mxu0 0
        %1558 = vmatmul.mubr.bf16.gmra.mrb[0].mxu0 %v1465
        %v1559 = vpop.f32.mrb[0].mxu0
        %v1560 = vadd.f32 0.0, %v1559
        %v1561 = vpop.f32.mrb[0].mxu0
        %v1562 = vpop.f32.mrb[0].mxu0
        %v1563 = vadd.f32 0.0, %v1562
        %v1564 = vpop.f32.mrb[0].mxu0
        %1565 = vmatprep.mubr.bf16.mxu0 0
        %1566 = vmatmul.mubr.bf16.gmra.mrb[0].mxu0 %v1468
        %v1567 = vpop.f32.mrb[0].mxu0
        %v1568 = vadd.f32 0.0, %v1567
        %v1569 = vpop.f32.mrb[0].mxu0
        %v1570 = vpop.f32.mrb[0].mxu0
        %v1571 = vadd.f32 0.0, %v1570
        %v1572 = vpop.f32.mrb[0].mxu0
        %1573 = vmatprep.mubr.bf16.mxu0 0
        %1574 = vmatmul.mubr.bf16.gmra.mrb[0].mxu0 %v1471
        %v1575 = vpop.f32.mrb[0].mxu0
        %v1576 = vadd.f32 0.0, %v1575
        %v1577 = vpop.f32.mrb[0].mxu0
        %v1578 = vpop.f32.mrb[0].mxu0
        %v1579 = vadd.f32 0.0, %v1578
        %v1580 = vpop.f32.mrb[0].mxu0
        %1581 = vmatprep.mubr.bf16.mxu0 0
        %1582 = vmatmul.mubr.bf16.gmra.mrb[0].mxu0 %v1474
        %v1583 = vpop.f32.mrb[0].mxu0
        %v1584 = vadd.f32 0.0, %v1583
        %v1585 = vpop.f32.mrb[0].mxu0
        %v1586 = vpop.f32.mrb[0].mxu0
        %v1587 = vadd.f32 0.0, %v1586
        %v1588 = vpop.f32.mrb[0].mxu0
        %1589 = vmatprep.mubr.bf16.mxu0 0
        %1590 = vmatmul.mubr.bf16.gmra.mrb[0].mxu0 %v1477
        %v1591 = vpop.f32.mrb[0].mxu0
        %v1592 = vadd.f32 0.0, %v1591
        %v1593 = vpop.f32.mrb[0].mxu0
        %v1594 = vpop.f32.mrb[0].mxu0
        %v1595 = vadd.f32 0.0, %v1594
        %v1596 = vpop.f32.mrb[0].mxu0
        %1597 = vmatprep.mubr.bf16.mxu0 0
        %1598 = vmatmul.mubr.bf16.gmra.mrb[0].mxu0 %v1480
        %v1599 = vpop.f32.mrb[0].mxu0
        %v1600 = vadd.f32 0.0, %v1599
        %v1601 = vpop.f32.mrb[0].mxu0
        %v1602 = vpop.f32.mrb[0].mxu0
        %v1603 = vadd.f32 0.0, %v1602
        %v1604 = vpop.f32.mrb[0].mxu0
        %1605 = vmatprep.mubr.bf16.mxu0 0
        %1606 = vmatmul.mubr.bf16.gmra.mrb[0].mxu0 %v1483
        %v1607 = vpop.f32.mrb[0].mxu0
        %v1608 = vadd.f32 0.0, %v1607
        %v1609 = vpop.f32.mrb[0].mxu0
        %v1610 = vpop.f32.mrb[0].mxu0
        %v1611 = vadd.f32 0.0, %v1610
        %v1612 = vpop.f32.mrb[0].mxu0
        %1613 = vmatprep.mubr.bf16.mxu0 0
        %1614 = vmatmul.mubr.bf16.gmra.mrb[0].mxu0 %v1486
        %v1615 = vpop.f32.mrb[0].mxu0
        %v1616 = vadd.f32 0.0, %v1615
        %v1617 = vpop.f32.mrb[0].mxu0
        %v1618 = vpop.f32.mrb[0].mxu0
        %v1619 = vadd.f32 0.0, %v1618
        %v1620 = vpop.f32.mrb[0].mxu0
        %1621 = vmatprep.mubr.bf16.mxu0 0
        %1622 = vmatmul.mubr.bf16.gmra.mrb[0].mxu0 %v1489
        %v1623 = vpop.f32.mrb[0].mxu0
        %v1624 = vadd.f32 0.0, %v1623
        %v1625 = vpop.f32.mrb[0].mxu0
        %v1626 = vpop.f32.mrb[0].mxu0
        %v1627 = vadd.f32 0.0, %v1626
        %v1628 = vpop.f32.mrb[0].mxu0
        %1629 = vmatprep.mubr.bf16.mxu0 0
        %1630 = vmatmul.mubr.bf16.gmra.mrb[0].mxu0 %v1492
        %v1631 = vpop.f32.mrb[0].mxu0
        %v1632 = vadd.f32 0.0, %v1631
        %v1633 = vpop.f32.mrb[0].mxu0
        %v1634 = vpop.f32.mrb[0].mxu0
        %v1635 = vadd.f32 0.0, %v1634
        %v1636 = vpop.f32.mrb[0].mxu0
        %1637 = vmatprep.mubr.bf16.mxu0 0
        %1638 = vmatmul.mubr.bf16.gmra.mrb[0].mxu0 %v1495
        %v1639 = vpop.f32.mrb[0].mxu0
        %v1640 = vadd.f32 0.0, %v1639
        %v1641 = vpop.f32.mrb[0].mxu0
        %v1642 = vpop.f32.mrb[0].mxu0
        %v1643 = vadd.f32 0.0, %v1642
        %v1644 = vpop.f32.mrb[0].mxu0
        %1645 = vmatprep.mubr.bf16.mxu0 0
        %1646 = vmatmul.mubr.bf16.gmra.mrb[0].mxu0 %v1498
        %v1647 = vpop.f32.mrb[0].mxu0
        %v1648 = vadd.f32 0.0, %v1647
        %v1649 = vpop.f32.mrb[0].mxu0
        %v1650 = vpop.f32.mrb[0].mxu0
        %v1651 = vadd.f32 0.0, %v1650
        %v1652 = vpop.f32.mrb[0].mxu0
        %1653 = vmatprep.mubr.bf16.mxu0 0
        %1654 = vmatmul.mubr.bf16.gmra.mrb[0].mxu0 %v1501
        %v1655 = vpop.f32.mrb[0].mxu0
        %v1656 = vadd.f32 0.0, %v1655
        %v1657 = vpop.f32.mrb[0].mxu0
        %v1658 = vpop.f32.mrb[0].mxu0
        %v1659 = vadd.f32 0.0, %v1658
        %v1660 = vpop.f32.mrb[0].mxu0
        %1661 = vmatprep.mubr.bf16.mxu0 0
        %1662 = vmatmul.mubr.bf16.gmra.mrb[0].mxu0 %v1504
        %v1663 = vpop.f32.mrb[0].mxu0
        %v1664 = vadd.f32 0.0, %v1663
        %v1665 = vpop.f32.mrb[0].mxu0
        %v1666 = vpop.f32.mrb[0].mxu0
        %v1667 = vadd.f32 0.0, %v1666
        %v1668 = vpop.f32.mrb[0].mxu0
        %1669 = vdwg.mxu0
        %v1670 = vadd.f32 %v1376, %v1544
        %v1671 = vadd.f32 %v1377, %v1547
        %v1672 = vadd.f32 %v1378, %v1552
        %v1673 = vadd.f32 %v1379, %v1555
        %v1674 = vadd.f32 %v1380, %v1560
        %v1675 = vadd.f32 %v1381, %v1563
        %v1676 = vadd.f32 %v1382, %v1568
        %v1677 = vadd.f32 %v1383, %v1571
        %v1678 = vadd.f32 %v1384, %v1576
        %v1679 = vadd.f32 %v1385, %v1579
        %v1680 = vadd.f32 %v1386, %v1584
        %v1681 = vadd.f32 %v1387, %v1587
        %v1682 = vadd.f32 %v1388, %v1592
        %v1683 = vadd.f32 %v1389, %v1595
        %v1684 = vadd.f32 %v1390, %v1600
        %v1685 = vadd.f32 %v1391, %v1603
        %v1686 = vadd.f32 %v1392, %v1608
        %v1687 = vadd.f32 %v1393, %v1611
        %v1688 = vadd.f32 %v1394, %v1616
        %v1689 = vadd.f32 %v1395, %v1619
        %v1690 = vadd.f32 %v1396, %v1624
        %v1691 = vadd.f32 %v1397, %v1627
        %v1692 = vadd.f32 %v1398, %v1632
        %v1693 = vadd.f32 %v1399, %v1635
        %v1694 = vadd.f32 %v1400, %v1640
        %v1695 = vadd.f32 %v1401, %v1643
        %v1696 = vadd.f32 %v1402, %v1648
        %v1697 = vadd.f32 %v1403, %v1651
        %v1698 = vadd.f32 %v1404, %v1656
        %v1699 = vadd.f32 %v1405, %v1659
        %v1700 = vadd.f32 %v1406, %v1664
        %v1701 = vadd.f32 %v1407, %v1667
        %v1702 = vld [vmem:[%s1113 + $0x2] sm:$0xff]
        %v1703 = vld [vmem:[%s1113 + $0xa] sm:$0xff]
        %v1704 = vld [vmem:[%s1113 + $0x1a] sm:$0xff]
        %v1705 = vld [vmem:[%s1113 + $0x22] sm:$0xff]
        %v1706 = vld [vmem:[%s1113 + $0x32] sm:$0xff]
        %v1707 = vld [vmem:[%s1113 + $0x3a] sm:$0xff]
        %v1708 = vld [vmem:[%s1113 + $0x4a] sm:$0xff]
        %v1709 = vld [vmem:[%s1113 + $0x52] sm:$0xff]
        %v1710 = vld [vmem:[%s1113 + $0x62] sm:$0xff]
        %v1711 = vld [vmem:[%s1113 + $0x6a] sm:$0xff]
        %v1712 = vld [vmem:[%s1113 + $0x7a] sm:$0xff]
        %v1713 = vld [vmem:[%s1113 + $0x82] sm:$0xff]
        %v1714 = vld [vmem:[%s1113 + $0x92] sm:$0xff]
        %v1715 = vld [vmem:[%s1113 + $0x9a] sm:$0xff]
        %v1716 = vld [vmem:[%s1113 + $0xaa] sm:$0xff]
        %v1717 = vld [vmem:[%s1113 + $0xb2] sm:$0xff]
        %v1718 = vld [vmem:[%s1113 + $0xc2] sm:$0xff]
        %v1719 = vld [vmem:[%s1113 + $0xca] sm:$0xff]
        %v1720 = vld [vmem:[%s1113 + $0xda] sm:$0xff]
        %v1721 = vld [vmem:[%s1113 + $0xe2] sm:$0xff]
        %v1722 = vld [vmem:[%s1113 + $0xf2] sm:$0xff]
        %v1723 = vld [vmem:[%s1113 + $0xfa] sm:$0xff]
        %v1724 = vld [vmem:[%s1113 + $0x10a] sm:$0xff]
        %v1725 = vld [vmem:[%s1113 + $0x112] sm:$0xff]
        %v1726 = vld [vmem:[%s1113 + $0x122] sm:$0xff]
        %v1727 = vld [vmem:[%s1113 + $0x12a] sm:$0xff]
        %v1728 = vld [vmem:[%s1113 + $0x13a] sm:$0xff]
        %v1729 = vld [vmem:[%s1113 + $0x142] sm:$0xff]
        %v1730 = vld [vmem:[%s1113 + $0x152] sm:$0xff]
        %v1731 = vld [vmem:[%s1113 + $0x15a] sm:$0xff]
        %v1732 = vld [vmem:[%s1113 + $0x16a] sm:$0xff]
        %v1733 = vld [vmem:[%s1113 + $0x172] sm:$0xff]
        %v1734 = vpack.c.bf16 %v1703, %v1702
        %v1735 = vpack.c.bf16 %v1705, %v1704
        %v1736 = vpack.c.bf16 %v1707, %v1706
        %v1737 = vpack.c.bf16 %v1709, %v1708
        %v1738 = vpack.c.bf16 %v1711, %v1710
        %v1739 = vpack.c.bf16 %v1713, %v1712
        %v1740 = vpack.c.bf16 %v1715, %v1714
        %v1741 = vpack.c.bf16 %v1717, %v1716
        %v1742 = vpack.c.bf16 %v1719, %v1718
        %v1743 = vpack.c.bf16 %v1721, %v1720
        %v1744 = vpack.c.bf16 %v1723, %v1722
        %v1745 = vpack.c.bf16 %v1725, %v1724
        %v1746 = vpack.c.bf16 %v1727, %v1726
        %v1747 = vpack.c.bf16 %v1729, %v1728
        %v1748 = vpack.c.bf16 %v1731, %v1730
        %v1749 = vpack.c.bf16 %v1733, %v1732
        %s1750 = scalar_lea.vmem %s1, 10
        %v1751 = vld [vmem:[%s1750] sm:$0x3]
        %v1753 = vsel %vm279, %v1734, 0
        %v1756 = vsel %vm279, %v1735, 0
        %v1759 = vsel %vm279, %v1736, 0
        %v1762 = vsel %vm279, %v1737, 0
        %v1765 = vsel %vm279, %v1738, 0
        %v1768 = vsel %vm279, %v1739, 0
        %v1771 = vsel %vm279, %v1740, 0
        %v1774 = vsel %vm279, %v1741, 0
        %v1777 = vsel %vm279, %v1742, 0
        %v1780 = vsel %vm279, %v1743, 0
        %v1783 = vsel %vm279, %v1744, 0
        %v1786 = vsel %vm279, %v1745, 0
        %v1789 = vsel %vm279, %v1746, 0
        %v1792 = vsel %vm279, %v1747, 0
        %v1795 = vsel %vm279, %v1748, 0
        %v1798 = vsel %vm279, %v1749, 0
        %v1801 = vsel %vm328, %v1751, 0
        %1803 = vmatprep.subr.bf16.mxu0 0
        %1804 = vmatpush1.bf16.msra.mxu0 %v1801
        %1805 = vmatprep.subr.bf16.mxu0 0
        %1806 = vmatpush1.bf16.msra.mxu0 0
        %1807 = vmatprep.subr.bf16.mxu0 0
        %1808 = vmatpush1.bf16.msra.mxu0 0
        %1809 = vmatprep.subr.bf16.mxu0 0
        %1810 = vmatpush1.bf16.msra.mxu0 0
        %1811 = vmatprep.subr.bf16.mxu0 0
        %1812 = vmatpush1.bf16.msra.mxu0 0
        %1813 = vmatprep.subr.bf16.mxu0 0
        %1814 = vmatpush1.bf16.msra.mxu0 0
        %1815 = vmatprep.subr.bf16.mxu0 0
        %1816 = vmatpush1.bf16.msra.mxu0 0
        %1817 = vmatprep.subr.bf16.mxu0 0
        %1818 = vmatpush1.bf16.msra.mxu0 0
        %1819 = vmatprep.subr.bf16.mxu0 0
        %1820 = vmatpush1.bf16.msra.mxu0 0
        %1821 = vmatprep.subr.bf16.mxu0 0
        %1822 = vmatpush1.bf16.msra.mxu0 0
        %1823 = vmatprep.subr.bf16.mxu0 0
        %1824 = vmatpush1.bf16.msra.mxu0 0
        %1825 = vmatprep.subr.bf16.mxu0 0
        %1826 = vmatpush1.bf16.msra.mxu0 0
        %1827 = vmatprep.subr.bf16.mxu0 0
        %1828 = vmatpush1.bf16.msra.mxu0 0
        %1829 = vmatprep.subr.bf16.mxu0 0
        %1830 = vmatpush1.bf16.msra.mxu0 0
        %1831 = vmatprep.subr.bf16.mxu0 0
        %1832 = vmatpush1.bf16.msra.mxu0 0
        %1833 = vmatprep.subr.bf16.mxu0 0
        %1834 = vmatpush1.bf16.msra.mxu0 0
        %1835 = vmatprep.mubr.bf16.mxu0 0
        %1836 = vmatmul.mubr.bf16.gmra.mrb[0].mxu0 %v1753
        %v1837 = vpop.f32.mrb[0].mxu0
        %v1838 = vadd.f32 0.0, %v1837
        %v1839 = vpop.f32.mrb[0].mxu0
        %v1840 = vpop.f32.mrb[0].mxu0
        %v1841 = vadd.f32 0.0, %v1840
        %v1842 = vpop.f32.mrb[0].mxu0
        %1843 = vmatprep.mubr.bf16.mxu0 0
        %1844 = vmatmul.mubr.bf16.gmra.mrb[0].mxu0 %v1756
        %v1845 = vpop.f32.mrb[0].mxu0
        %v1846 = vadd.f32 0.0, %v1845
        %v1847 = vpop.f32.mrb[0].mxu0
        %v1848 = vpop.f32.mrb[0].mxu0
        %v1849 = vadd.f32 0.0, %v1848
        %v1850 = vpop.f32.mrb[0].mxu0
        %1851 = vmatprep.mubr.bf16.mxu0 0
        %1852 = vmatmul.mubr.bf16.gmra.mrb[0].mxu0 %v1759
        %v1853 = vpop.f32.mrb[0].mxu0
        %v1854 = vadd.f32 0.0, %v1853
        %v1855 = vpop.f32.mrb[0].mxu0
        %v1856 = vpop.f32.mrb[0].mxu0
        %v1857 = vadd.f32 0.0, %v1856
        %v1858 = vpop.f32.mrb[0].mxu0
        %1859 = vmatprep.mubr.bf16.mxu0 0
        %1860 = vmatmul.mubr.bf16.gmra.mrb[0].mxu0 %v1762
        %v1861 = vpop.f32.mrb[0].mxu0
        %v1862 = vadd.f32 0.0, %v1861
        %v1863 = vpop.f32.mrb[0].mxu0
        %v1864 = vpop.f32.mrb[0].mxu0
        %v1865 = vadd.f32 0.0, %v1864
        %v1866 = vpop.f32.mrb[0].mxu0
        %1867 = vmatprep.mubr.bf16.mxu0 0
        %1868 = vmatmul.mubr.bf16.gmra.mrb[0].mxu0 %v1765
        %v1869 = vpop.f32.mrb[0].mxu0
        %v1870 = vadd.f32 0.0, %v1869
        %v1871 = vpop.f32.mrb[0].mxu0
        %v1872 = vpop.f32.mrb[0].mxu0
        %v1873 = vadd.f32 0.0, %v1872
        %v1874 = vpop.f32.mrb[0].mxu0
        %1875 = vmatprep.mubr.bf16.mxu0 0
        %1876 = vmatmul.mubr.bf16.gmra.mrb[0].mxu0 %v1768
        %v1877 = vpop.f32.mrb[0].mxu0
        %v1878 = vadd.f32 0.0, %v1877
        %v1879 = vpop.f32.mrb[0].mxu0
        %v1880 = vpop.f32.mrb[0].mxu0
        %v1881 = vadd.f32 0.0, %v1880
        %v1882 = vpop.f32.mrb[0].mxu0
        %1883 = vmatprep.mubr.bf16.mxu0 0
        %1884 = vmatmul.mubr.bf16.gmra.mrb[0].mxu0 %v1771
        %v1885 = vpop.f32.mrb[0].mxu0
        %v1886 = vadd.f32 0.0, %v1885
        %v1887 = vpop.f32.mrb[0].mxu0
        %v1888 = vpop.f32.mrb[0].mxu0
        %v1889 = vadd.f32 0.0, %v1888
        %v1890 = vpop.f32.mrb[0].mxu0
        %1891 = vmatprep.mubr.bf16.mxu0 0
        %1892 = vmatmul.mubr.bf16.gmra.mrb[0].mxu0 %v1774
        %v1893 = vpop.f32.mrb[0].mxu0
        %v1894 = vadd.f32 0.0, %v1893
        %v1895 = vpop.f32.mrb[0].mxu0
        %v1896 = vpop.f32.mrb[0].mxu0
        %v1897 = vadd.f32 0.0, %v1896
        %v1898 = vpop.f32.mrb[0].mxu0
        %1899 = vmatprep.mubr.bf16.mxu0 0
        %1900 = vmatmul.mubr.bf16.gmra.mrb[0].mxu0 %v1777
        %v1901 = vpop.f32.mrb[0].mxu0
        %v1902 = vadd.f32 0.0, %v1901
        %v1903 = vpop.f32.mrb[0].mxu0
        %v1904 = vpop.f32.mrb[0].mxu0
        %v1905 = vadd.f32 0.0, %v1904
        %v1906 = vpop.f32.mrb[0].mxu0
        %1907 = vmatprep.mubr.bf16.mxu0 0
        %1908 = vmatmul.mubr.bf16.gmra.mrb[0].mxu0 %v1780
        %v1909 = vpop.f32.mrb[0].mxu0
        %v1910 = vadd.f32 0.0, %v1909
        %v1911 = vpop.f32.mrb[0].mxu0
        %v1912 = vpop.f32.mrb[0].mxu0
        %v1913 = vadd.f32 0.0, %v1912
        %v1914 = vpop.f32.mrb[0].mxu0
        %1915 = vmatprep.mubr.bf16.mxu0 0
        %1916 = vmatmul.mubr.bf16.gmra.mrb[0].mxu0 %v1783
        %v1917 = vpop.f32.mrb[0].mxu0
        %v1918 = vadd.f32 0.0, %v1917
        %v1919 = vpop.f32.mrb[0].mxu0
        %v1920 = vpop.f32.mrb[0].mxu0
        %v1921 = vadd.f32 0.0, %v1920
        %v1922 = vpop.f32.mrb[0].mxu0
        %1923 = vmatprep.mubr.bf16.mxu0 0
        %1924 = vmatmul.mubr.bf16.gmra.mrb[0].mxu0 %v1786
        %v1925 = vpop.f32.mrb[0].mxu0
        %v1926 = vadd.f32 0.0, %v1925
        %v1927 = vpop.f32.mrb[0].mxu0
        %v1928 = vpop.f32.mrb[0].mxu0
        %v1929 = vadd.f32 0.0, %v1928
        %v1930 = vpop.f32.mrb[0].mxu0
        %1931 = vmatprep.mubr.bf16.mxu0 0
        %1932 = vmatmul.mubr.bf16.gmra.mrb[0].mxu0 %v1789
        %v1933 = vpop.f32.mrb[0].mxu0
        %v1934 = vadd.f32 0.0, %v1933
        %v1935 = vpop.f32.mrb[0].mxu0
        %v1936 = vpop.f32.mrb[0].mxu0
        %v1937 = vadd.f32 0.0, %v1936
        %v1938 = vpop.f32.mrb[0].mxu0
        %1939 = vmatprep.mubr.bf16.mxu0 0
        %1940 = vmatmul.mubr.bf16.gmra.mrb[0].mxu0 %v1792
        %v1941 = vpop.f32.mrb[0].mxu0
        %v1942 = vadd.f32 0.0, %v1941
        %v1943 = vpop.f32.mrb[0].mxu0
        %v1944 = vpop.f32.mrb[0].mxu0
        %v1945 = vadd.f32 0.0, %v1944
        %v1946 = vpop.f32.mrb[0].mxu0
        %1947 = vmatprep.mubr.bf16.mxu0 0
        %1948 = vmatmul.mubr.bf16.gmra.mrb[0].mxu0 %v1795
        %v1949 = vpop.f32.mrb[0].mxu0
        %v1950 = vadd.f32 0.0, %v1949
        %v1951 = vpop.f32.mrb[0].mxu0
        %v1952 = vpop.f32.mrb[0].mxu0
        %v1953 = vadd.f32 0.0, %v1952
        %v1954 = vpop.f32.mrb[0].mxu0
        %1955 = vmatprep.mubr.bf16.mxu0 0
        %1956 = vmatmul.mubr.bf16.gmra.mrb[0].mxu0 %v1798
        %v1957 = vpop.f32.mrb[0].mxu0
        %v1958 = vadd.f32 0.0, %v1957
        %v1959 = vpop.f32.mrb[0].mxu0
        %v1960 = vpop.f32.mrb[0].mxu0
        %v1961 = vadd.f32 0.0, %v1960
        %v1962 = vpop.f32.mrb[0].mxu0
        %1963 = vdwg.mxu0
        %v1964 = vadd.f32 %v1670, %v1838
        %v1965 = vadd.f32 %v1671, %v1841
        %v1966 = vadd.f32 %v1672, %v1846
        %v1967 = vadd.f32 %v1673, %v1849
        %v1968 = vadd.f32 %v1674, %v1854
        %v1969 = vadd.f32 %v1675, %v1857
        %v1970 = vadd.f32 %v1676, %v1862
        %v1971 = vadd.f32 %v1677, %v1865
        %v1972 = vadd.f32 %v1678, %v1870
        %v1973 = vadd.f32 %v1679, %v1873
        %v1974 = vadd.f32 %v1680, %v1878
        %v1975 = vadd.f32 %v1681, %v1881
        %v1976 = vadd.f32 %v1682, %v1886
        %v1977 = vadd.f32 %v1683, %v1889
        %v1978 = vadd.f32 %v1684, %v1894
        %v1979 = vadd.f32 %v1685, %v1897
        %v1980 = vadd.f32 %v1686, %v1902
        %v1981 = vadd.f32 %v1687, %v1905
        %v1982 = vadd.f32 %v1688, %v1910
        %v1983 = vadd.f32 %v1689, %v1913
        %v1984 = vadd.f32 %v1690, %v1918
        %v1985 = vadd.f32 %v1691, %v1921
        %v1986 = vadd.f32 %v1692, %v1926
        %v1987 = vadd.f32 %v1693, %v1929
        %v1988 = vadd.f32 %v1694, %v1934
        %v1989 = vadd.f32 %v1695, %v1937
        %v1990 = vadd.f32 %v1696, %v1942
        %v1991 = vadd.f32 %v1697, %v1945
        %v1992 = vadd.f32 %v1698, %v1950
        %v1993 = vadd.f32 %v1699, %v1953
        %v1994 = vadd.f32 %v1700, %v1958
        %v1995 = vadd.f32 %v1701, %v1961
        %s1996 = scalar_lea.vmem %s221, 48
        %v1997 = vld [vmem:[%s1996] sm:$0xff]
        %v1998 = vld [vmem:[%s1996 + $0x8] sm:$0xff]
        %v1999 = vld [vmem:[%s1996 + $0x18] sm:$0xff]
        %v2000 = vld [vmem:[%s1996 + $0x20] sm:$0xff]
        %v2001 = vld [vmem:[%s1996 + $0x30] sm:$0xff]
        %v2002 = vld [vmem:[%s1996 + $0x38] sm:$0xff]
        %v2003 = vld [vmem:[%s1996 + $0x48] sm:$0xff]
        %v2004 = vld [vmem:[%s1996 + $0x50] sm:$0xff]
        %v2005 = vld [vmem:[%s1996 + $0x60] sm:$0xff]
        %v2006 = vld [vmem:[%s1996 + $0x68] sm:$0xff]
        %v2007 = vld [vmem:[%s1996 + $0x78] sm:$0xff]
        %v2008 = vld [vmem:[%s1996 + $0x80] sm:$0xff]
        %v2009 = vld [vmem:[%s1996 + $0x90] sm:$0xff]
        %v2010 = vld [vmem:[%s1996 + $0x98] sm:$0xff]
        %v2011 = vld [vmem:[%s1996 + $0xa8] sm:$0xff]
        %v2012 = vld [vmem:[%s1996 + $0xb0] sm:$0xff]
        %v2013 = vld [vmem:[%s1996 + $0xc0] sm:$0xff]
        %v2014 = vld [vmem:[%s1996 + $0xc8] sm:$0xff]
        %v2015 = vld [vmem:[%s1996 + $0xd8] sm:$0xff]
        %v2016 = vld [vmem:[%s1996 + $0xe0] sm:$0xff]
        %v2017 = vld [vmem:[%s1996 + $0xf0] sm:$0xff]
        %v2018 = vld [vmem:[%s1996 + $0xf8] sm:$0xff]
        %v2019 = vld [vmem:[%s1996 + $0x108] sm:$0xff]
        %v2020 = vld [vmem:[%s1996 + $0x110] sm:$0xff]
        %v2021 = vld [vmem:[%s1996 + $0x120] sm:$0xff]
        %v2022 = vld [vmem:[%s1996 + $0x128] sm:$0xff]
        %v2023 = vld [vmem:[%s1996 + $0x138] sm:$0xff]
        %v2024 = vld [vmem:[%s1996 + $0x140] sm:$0xff]
        %v2025 = vld [vmem:[%s1996 + $0x150] sm:$0xff]
        %v2026 = vld [vmem:[%s1996 + $0x158] sm:$0xff]
        %v2027 = vld [vmem:[%s1996 + $0x168] sm:$0xff]
        %v2028 = vld [vmem:[%s1996 + $0x170] sm:$0xff]
        %v2029 = vpack.c.bf16 %v1998, %v1997
        %v2030 = vpack.c.bf16 %v2000, %v1999
        %v2031 = vpack.c.bf16 %v2002, %v2001
        %v2032 = vpack.c.bf16 %v2004, %v2003
        %v2033 = vpack.c.bf16 %v2006, %v2005
        %v2034 = vpack.c.bf16 %v2008, %v2007
        %v2035 = vpack.c.bf16 %v2010, %v2009
        %v2036 = vpack.c.bf16 %v2012, %v2011
        %v2037 = vpack.c.bf16 %v2014, %v2013
        %v2038 = vpack.c.bf16 %v2016, %v2015
        %v2039 = vpack.c.bf16 %v2018, %v2017
        %v2040 = vpack.c.bf16 %v2020, %v2019
        %v2041 = vpack.c.bf16 %v2022, %v2021
        %v2042 = vpack.c.bf16 %v2024, %v2023
        %v2043 = vpack.c.bf16 %v2026, %v2025
        %v2044 = vpack.c.bf16 %v2028, %v2027
        %s2045 = scalar_lea.vmem %s1, 12
        %v2046 = vld [vmem:[%s2045] sm:$0x3]
        %v2048 = vsel %vm279, %v2029, 0
        %v2051 = vsel %vm279, %v2030, 0
        %v2054 = vsel %vm279, %v2031, 0
        %v2057 = vsel %vm279, %v2032, 0
        %v2060 = vsel %vm279, %v2033, 0
        %v2063 = vsel %vm279, %v2034, 0
        %v2066 = vsel %vm279, %v2035, 0
        %v2069 = vsel %vm279, %v2036, 0
        %v2072 = vsel %vm279, %v2037, 0
        %v2075 = vsel %vm279, %v2038, 0
        %v2078 = vsel %vm279, %v2039, 0
        %v2081 = vsel %vm279, %v2040, 0
        %v2084 = vsel %vm279, %v2041, 0
        %v2087 = vsel %vm279, %v2042, 0
        %v2090 = vsel %vm279, %v2043, 0
        %v2093 = vsel %vm279, %v2044, 0
        %v2096 = vsel %vm328, %v2046, 0
        %2098 = vmatprep.subr.bf16.mxu0 0
        %2099 = vmatpush1.bf16.msra.mxu0 %v2096
        %2100 = vmatprep.subr.bf16.mxu0 0
        %2101 = vmatpush1.bf16.msra.mxu0 0
        %2102 = vmatprep.subr.bf16.mxu0 0
        %2103 = vmatpush1.bf16.msra.mxu0 0
        %2104 = vmatprep.subr.bf16.mxu0 0
        %2105 = vmatpush1.bf16.msra.mxu0 0
        %2106 = vmatprep.subr.bf16.mxu0 0
        %2107 = vmatpush1.bf16.msra.mxu0 0
        %2108 = vmatprep.subr.bf16.mxu0 0
        %2109 = vmatpush1.bf16.msra.mxu0 0
        %2110 = vmatprep.subr.bf16.mxu0 0
        %2111 = vmatpush1.bf16.msra.mxu0 0
        %2112 = vmatprep.subr.bf16.mxu0 0
        %2113 = vmatpush1.bf16.msra.mxu0 0
        %2114 = vmatprep.subr.bf16.mxu0 0
        %2115 = vmatpush1.bf16.msra.mxu0 0
        %2116 = vmatprep.subr.bf16.mxu0 0
        %2117 = vmatpush1.bf16.msra.mxu0 0
        %2118 = vmatprep.subr.bf16.mxu0 0
        %2119 = vmatpush1.bf16.msra.mxu0 0
        %2120 = vmatprep.subr.bf16.mxu0 0
        %2121 = vmatpush1.bf16.msra.mxu0 0
        %2122 = vmatprep.subr.bf16.mxu0 0
        %2123 = vmatpush1.bf16.msra.mxu0 0
        %2124 = vmatprep.subr.bf16.mxu0 0
        %2125 = vmatpush1.bf16.msra.mxu0 0
        %2126 = vmatprep.subr.bf16.mxu0 0
        %2127 = vmatpush1.bf16.msra.mxu0 0
        %2128 = vmatprep.subr.bf16.mxu0 0
        %2129 = vmatpush1.bf16.msra.mxu0 0
        %2130 = vmatprep.mubr.bf16.mxu0 0
        %2131 = vmatmul.mubr.bf16.gmra.mrb[0].mxu0 %v2048
        %v2132 = vpop.f32.mrb[0].mxu0
        %v2133 = vadd.f32 0.0, %v2132
        %v2134 = vpop.f32.mrb[0].mxu0
        %v2135 = vpop.f32.mrb[0].mxu0
        %v2136 = vadd.f32 0.0, %v2135
        %v2137 = vpop.f32.mrb[0].mxu0
        %2138 = vmatprep.mubr.bf16.mxu0 0
        %2139 = vmatmul.mubr.bf16.gmra.mrb[0].mxu0 %v2051
        %v2140 = vpop.f32.mrb[0].mxu0
        %v2141 = vadd.f32 0.0, %v2140
        %v2142 = vpop.f32.mrb[0].mxu0
        %v2143 = vpop.f32.mrb[0].mxu0
        %v2144 = vadd.f32 0.0, %v2143
        %v2145 = vpop.f32.mrb[0].mxu0
        %2146 = vmatprep.mubr.bf16.mxu0 0
        %2147 = vmatmul.mubr.bf16.gmra.mrb[0].mxu0 %v2054
        %v2148 = vpop.f32.mrb[0].mxu0
        %v2149 = vadd.f32 0.0, %v2148
        %v2150 = vpop.f32.mrb[0].mxu0
        %v2151 = vpop.f32.mrb[0].mxu0
        %v2152 = vadd.f32 0.0, %v2151
        %v2153 = vpop.f32.mrb[0].mxu0
        %2154 = vmatprep.mubr.bf16.mxu0 0
        %2155 = vmatmul.mubr.bf16.gmra.mrb[0].mxu0 %v2057
        %v2156 = vpop.f32.mrb[0].mxu0
        %v2157 = vadd.f32 0.0, %v2156
        %v2158 = vpop.f32.mrb[0].mxu0
        %v2159 = vpop.f32.mrb[0].mxu0
        %v2160 = vadd.f32 0.0, %v2159
        %v2161 = vpop.f32.mrb[0].mxu0
        %2162 = vmatprep.mubr.bf16.mxu0 0
        %2163 = vmatmul.mubr.bf16.gmra.mrb[0].mxu0 %v2060
        %v2164 = vpop.f32.mrb[0].mxu0
        %v2165 = vadd.f32 0.0, %v2164
        %v2166 = vpop.f32.mrb[0].mxu0
        %v2167 = vpop.f32.mrb[0].mxu0
        %v2168 = vadd.f32 0.0, %v2167
        %v2169 = vpop.f32.mrb[0].mxu0
        %2170 = vmatprep.mubr.bf16.mxu0 0
        %2171 = vmatmul.mubr.bf16.gmra.mrb[0].mxu0 %v2063
        %v2172 = vpop.f32.mrb[0].mxu0
        %v2173 = vadd.f32 0.0, %v2172
        %v2174 = vpop.f32.mrb[0].mxu0
        %v2175 = vpop.f32.mrb[0].mxu0
        %v2176 = vadd.f32 0.0, %v2175
        %v2177 = vpop.f32.mrb[0].mxu0
        %2178 = vmatprep.mubr.bf16.mxu0 0
        %2179 = vmatmul.mubr.bf16.gmra.mrb[0].mxu0 %v2066
        %v2180 = vpop.f32.mrb[0].mxu0
        %v2181 = vadd.f32 0.0, %v2180
        %v2182 = vpop.f32.mrb[0].mxu0
        %v2183 = vpop.f32.mrb[0].mxu0
        %v2184 = vadd.f32 0.0, %v2183
        %v2185 = vpop.f32.mrb[0].mxu0
        %2186 = vmatprep.mubr.bf16.mxu0 0
        %2187 = vmatmul.mubr.bf16.gmra.mrb[0].mxu0 %v2069
        %v2188 = vpop.f32.mrb[0].mxu0
        %v2189 = vadd.f32 0.0, %v2188
        %v2190 = vpop.f32.mrb[0].mxu0
        %v2191 = vpop.f32.mrb[0].mxu0
        %v2192 = vadd.f32 0.0, %v2191
        %v2193 = vpop.f32.mrb[0].mxu0
        %2194 = vmatprep.mubr.bf16.mxu0 0
        %2195 = vmatmul.mubr.bf16.gmra.mrb[0].mxu0 %v2072
        %v2196 = vpop.f32.mrb[0].mxu0
        %v2197 = vadd.f32 0.0, %v2196
        %v2198 = vpop.f32.mrb[0].mxu0
        %v2199 = vpop.f32.mrb[0].mxu0
        %v2200 = vadd.f32 0.0, %v2199
        %v2201 = vpop.f32.mrb[0].mxu0
        %2202 = vmatprep.mubr.bf16.mxu0 0
        %2203 = vmatmul.mubr.bf16.gmra.mrb[0].mxu0 %v2075
        %v2204 = vpop.f32.mrb[0].mxu0
        %v2205 = vadd.f32 0.0, %v2204
        %v2206 = vpop.f32.mrb[0].mxu0
        %v2207 = vpop.f32.mrb[0].mxu0
        %v2208 = vadd.f32 0.0, %v2207
        %v2209 = vpop.f32.mrb[0].mxu0
        %2210 = vmatprep.mubr.bf16.mxu0 0
        %2211 = vmatmul.mubr.bf16.gmra.mrb[0].mxu0 %v2078
        %v2212 = vpop.f32.mrb[0].mxu0
        %v2213 = vadd.f32 0.0, %v2212
        %v2214 = vpop.f32.mrb[0].mxu0
        %v2215 = vpop.f32.mrb[0].mxu0
        %v2216 = vadd.f32 0.0, %v2215
        %v2217 = vpop.f32.mrb[0].mxu0
        %2218 = vmatprep.mubr.bf16.mxu0 0
        %2219 = vmatmul.mubr.bf16.gmra.mrb[0].mxu0 %v2081
        %v2220 = vpop.f32.mrb[0].mxu0
        %v2221 = vadd.f32 0.0, %v2220
        %v2222 = vpop.f32.mrb[0].mxu0
        %v2223 = vpop.f32.mrb[0].mxu0
        %v2224 = vadd.f32 0.0, %v2223
        %v2225 = vpop.f32.mrb[0].mxu0
        %2226 = vmatprep.mubr.bf16.mxu0 0
        %2227 = vmatmul.mubr.bf16.gmra.mrb[0].mxu0 %v2084
        %v2228 = vpop.f32.mrb[0].mxu0
        %v2229 = vadd.f32 0.0, %v2228
        %v2230 = vpop.f32.mrb[0].mxu0
        %v2231 = vpop.f32.mrb[0].mxu0
        %v2232 = vadd.f32 0.0, %v2231
        %v2233 = vpop.f32.mrb[0].mxu0
        %2234 = vmatprep.mubr.bf16.mxu0 0
        %2235 = vmatmul.mubr.bf16.gmra.mrb[0].mxu0 %v2087
        %v2236 = vpop.f32.mrb[0].mxu0
        %v2237 = vadd.f32 0.0, %v2236
        %v2238 = vpop.f32.mrb[0].mxu0
        %v2239 = vpop.f32.mrb[0].mxu0
        %v2240 = vadd.f32 0.0, %v2239
        %v2241 = vpop.f32.mrb[0].mxu0
        %2242 = vmatprep.mubr.bf16.mxu0 0
        %2243 = vmatmul.mubr.bf16.gmra.mrb[0].mxu0 %v2090
        %v2244 = vpop.f32.mrb[0].mxu0
        %v2245 = vadd.f32 0.0, %v2244
        %v2246 = vpop.f32.mrb[0].mxu0
        %v2247 = vpop.f32.mrb[0].mxu0
        %v2248 = vadd.f32 0.0, %v2247
        %v2249 = vpop.f32.mrb[0].mxu0
        %2250 = vmatprep.mubr.bf16.mxu0 0
        %2251 = vmatmul.mubr.bf16.gmra.mrb[0].mxu0 %v2093
        %v2252 = vpop.f32.mrb[0].mxu0
        %v2253 = vadd.f32 0.0, %v2252
        %v2254 = vpop.f32.mrb[0].mxu0
        %v2255 = vpop.f32.mrb[0].mxu0
        %v2256 = vadd.f32 0.0, %v2255
        %v2257 = vpop.f32.mrb[0].mxu0
        %2258 = vdwg.mxu0
        %v2259 = vadd.f32 %v1964, %v2133
        %v2260 = vadd.f32 %v1965, %v2136
        %v2261 = vadd.f32 %v1966, %v2141
        %v2262 = vadd.f32 %v1967, %v2144
        %v2263 = vadd.f32 %v1968, %v2149
        %v2264 = vadd.f32 %v1969, %v2152
        %v2265 = vadd.f32 %v1970, %v2157
        %v2266 = vadd.f32 %v1971, %v2160
        %v2267 = vadd.f32 %v1972, %v2165
        %v2268 = vadd.f32 %v1973, %v2168
        %v2269 = vadd.f32 %v1974, %v2173
        %v2270 = vadd.f32 %v1975, %v2176
        %v2271 = vadd.f32 %v1976, %v2181
        %v2272 = vadd.f32 %v1977, %v2184
        %v2273 = vadd.f32 %v1978, %v2189
        %v2274 = vadd.f32 %v1979, %v2192
        %v2275 = vadd.f32 %v1980, %v2197
        %v2276 = vadd.f32 %v1981, %v2200
        %v2277 = vadd.f32 %v1982, %v2205
        %v2278 = vadd.f32 %v1983, %v2208
        %v2279 = vadd.f32 %v1984, %v2213
        %v2280 = vadd.f32 %v1985, %v2216
        %v2281 = vadd.f32 %v1986, %v2221
        %v2282 = vadd.f32 %v1987, %v2224
        %v2283 = vadd.f32 %v1988, %v2229
        %v2284 = vadd.f32 %v1989, %v2232
        %v2285 = vadd.f32 %v1990, %v2237
        %v2286 = vadd.f32 %v1991, %v2240
        %v2287 = vadd.f32 %v1992, %v2245
        %v2288 = vadd.f32 %v1993, %v2248
        %v2289 = vadd.f32 %v1994, %v2253
        %v2290 = vadd.f32 %v1995, %v2256
        %v2291 = vld [vmem:[%s1996 + $0x1] sm:$0xff]
        %v2292 = vld [vmem:[%s1996 + $0x9] sm:$0xff]
        %v2293 = vld [vmem:[%s1996 + $0x19] sm:$0xff]
        %v2294 = vld [vmem:[%s1996 + $0x21] sm:$0xff]
        %v2295 = vld [vmem:[%s1996 + $0x31] sm:$0xff]
        %v2296 = vld [vmem:[%s1996 + $0x39] sm:$0xff]
        %v2297 = vld [vmem:[%s1996 + $0x49] sm:$0xff]
        %v2298 = vld [vmem:[%s1996 + $0x51] sm:$0xff]
        %v2299 = vld [vmem:[%s1996 + $0x61] sm:$0xff]
        %v2300 = vld [vmem:[%s1996 + $0x69] sm:$0xff]
        %v2301 = vld [vmem:[%s1996 + $0x79] sm:$0xff]
        %v2302 = vld [vmem:[%s1996 + $0x81] sm:$0xff]
        %v2303 = vld [vmem:[%s1996 + $0x91] sm:$0xff]
        %v2304 = vld [vmem:[%s1996 + $0x99] sm:$0xff]
        %v2305 = vld [vmem:[%s1996 + $0xa9] sm:$0xff]
        %v2306 = vld [vmem:[%s1996 + $0xb1] sm:$0xff]
        %v2307 = vld [vmem:[%s1996 + $0xc1] sm:$0xff]
        %v2308 = vld [vmem:[%s1996 + $0xc9] sm:$0xff]
        %v2309 = vld [vmem:[%s1996 + $0xd9] sm:$0xff]
        %v2310 = vld [vmem:[%s1996 + $0xe1] sm:$0xff]
        %v2311 = vld [vmem:[%s1996 + $0xf1] sm:$0xff]
        %v2312 = vld [vmem:[%s1996 + $0xf9] sm:$0xff]
        %v2313 = vld [vmem:[%s1996 + $0x109] sm:$0xff]
        %v2314 = vld [vmem:[%s1996 + $0x111] sm:$0xff]
        %v2315 = vld [vmem:[%s1996 + $0x121] sm:$0xff]
        %v2316 = vld [vmem:[%s1996 + $0x129] sm:$0xff]
        %v2317 = vld [vmem:[%s1996 + $0x139] sm:$0xff]
        %v2318 = vld [vmem:[%s1996 + $0x141] sm:$0xff]
        %v2319 = vld [vmem:[%s1996 + $0x151] sm:$0xff]
        %v2320 = vld [vmem:[%s1996 + $0x159] sm:$0xff]
        %v2321 = vld [vmem:[%s1996 + $0x169] sm:$0xff]
        %v2322 = vld [vmem:[%s1996 + $0x171] sm:$0xff]
        %v2323 = vpack.c.bf16 %v2292, %v2291
        %v2324 = vpack.c.bf16 %v2294, %v2293
        %v2325 = vpack.c.bf16 %v2296, %v2295
        %v2326 = vpack.c.bf16 %v2298, %v2297
        %v2327 = vpack.c.bf16 %v2300, %v2299
        %v2328 = vpack.c.bf16 %v2302, %v2301
        %v2329 = vpack.c.bf16 %v2304, %v2303
        %v2330 = vpack.c.bf16 %v2306, %v2305
        %v2331 = vpack.c.bf16 %v2308, %v2307
        %v2332 = vpack.c.bf16 %v2310, %v2309
        %v2333 = vpack.c.bf16 %v2312, %v2311
        %v2334 = vpack.c.bf16 %v2314, %v2313
        %v2335 = vpack.c.bf16 %v2316, %v2315
        %v2336 = vpack.c.bf16 %v2318, %v2317
        %v2337 = vpack.c.bf16 %v2320, %v2319
        %v2338 = vpack.c.bf16 %v2322, %v2321
        %s2339 = scalar_lea.vmem %s1, 14
        %v2340 = vld [vmem:[%s2339] sm:$0x3]
        %v2342 = vsel %vm279, %v2323, 0
        %v2345 = vsel %vm279, %v2324, 0
        %v2348 = vsel %vm279, %v2325, 0
        %v2351 = vsel %vm279, %v2326, 0
        %v2354 = vsel %vm279, %v2327, 0
        %v2357 = vsel %vm279, %v2328, 0
        %v2360 = vsel %vm279, %v2329, 0
        %v2363 = vsel %vm279, %v2330, 0
        %v2366 = vsel %vm279, %v2331, 0
        %v2369 = vsel %vm279, %v2332, 0
        %v2372 = vsel %vm279, %v2333, 0
        %v2375 = vsel %vm279, %v2334, 0
        %v2378 = vsel %vm279, %v2335, 0
        %v2381 = vsel %vm279, %v2336, 0
        %v2384 = vsel %vm279, %v2337, 0
        %v2387 = vsel %vm279, %v2338, 0
        %v2390 = vsel %vm328, %v2340, 0
        %2392 = vmatprep.subr.bf16.mxu0 0
        %2393 = vmatpush1.bf16.msra.mxu0 %v2390
        %2394 = vmatprep.subr.bf16.mxu0 0
        %2395 = vmatpush1.bf16.msra.mxu0 0
        %2396 = vmatprep.subr.bf16.mxu0 0
        %2397 = vmatpush1.bf16.msra.mxu0 0
        %2398 = vmatprep.subr.bf16.mxu0 0
        %2399 = vmatpush1.bf16.msra.mxu0 0
        %2400 = vmatprep.subr.bf16.mxu0 0
        %2401 = vmatpush1.bf16.msra.mxu0 0
        %2402 = vmatprep.subr.bf16.mxu0 0
        %2403 = vmatpush1.bf16.msra.mxu0 0
        %2404 = vmatprep.subr.bf16.mxu0 0
        %2405 = vmatpush1.bf16.msra.mxu0 0
        %2406 = vmatprep.subr.bf16.mxu0 0
        %2407 = vmatpush1.bf16.msra.mxu0 0
        %2408 = vmatprep.subr.bf16.mxu0 0
        %2409 = vmatpush1.bf16.msra.mxu0 0
        %2410 = vmatprep.subr.bf16.mxu0 0
        %2411 = vmatpush1.bf16.msra.mxu0 0
        %2412 = vmatprep.subr.bf16.mxu0 0
        %2413 = vmatpush1.bf16.msra.mxu0 0
        %2414 = vmatprep.subr.bf16.mxu0 0
        %2415 = vmatpush1.bf16.msra.mxu0 0
        %2416 = vmatprep.subr.bf16.mxu0 0
        %2417 = vmatpush1.bf16.msra.mxu0 0
        %2418 = vmatprep.subr.bf16.mxu0 0
        %2419 = vmatpush1.bf16.msra.mxu0 0
        %2420 = vmatprep.subr.bf16.mxu0 0
        %2421 = vmatpush1.bf16.msra.mxu0 0
        %2422 = vmatprep.subr.bf16.mxu0 0
        %2423 = vmatpush1.bf16.msra.mxu0 0
        %2424 = vmatprep.mubr.bf16.mxu0 0
        %2425 = vmatmul.mubr.bf16.gmra.mrb[0].mxu0 %v2342
        %v2426 = vpop.f32.mrb[0].mxu0
        %v2427 = vadd.f32 0.0, %v2426
        %v2428 = vpop.f32.mrb[0].mxu0
        %v2429 = vpop.f32.mrb[0].mxu0
        %v2430 = vadd.f32 0.0, %v2429
        %v2431 = vpop.f32.mrb[0].mxu0
        %2432 = vmatprep.mubr.bf16.mxu0 0
        %2433 = vmatmul.mubr.bf16.gmra.mrb[0].mxu0 %v2345
        %v2434 = vpop.f32.mrb[0].mxu0
        %v2435 = vadd.f32 0.0, %v2434
        %v2436 = vpop.f32.mrb[0].mxu0
        %v2437 = vpop.f32.mrb[0].mxu0
        %v2438 = vadd.f32 0.0, %v2437
        %v2439 = vpop.f32.mrb[0].mxu0
        %2440 = vmatprep.mubr.bf16.mxu0 0
        %2441 = vmatmul.mubr.bf16.gmra.mrb[0].mxu0 %v2348
        %v2442 = vpop.f32.mrb[0].mxu0
        %v2443 = vadd.f32 0.0, %v2442
        %v2444 = vpop.f32.mrb[0].mxu0
        %v2445 = vpop.f32.mrb[0].mxu0
        %v2446 = vadd.f32 0.0, %v2445
        %v2447 = vpop.f32.mrb[0].mxu0
        %2448 = vmatprep.mubr.bf16.mxu0 0
        %2449 = vmatmul.mubr.bf16.gmra.mrb[0].mxu0 %v2351
        %v2450 = vpop.f32.mrb[0].mxu0
        %v2451 = vadd.f32 0.0, %v2450
        %v2452 = vpop.f32.mrb[0].mxu0
        %v2453 = vpop.f32.mrb[0].mxu0
        %v2454 = vadd.f32 0.0, %v2453
        %v2455 = vpop.f32.mrb[0].mxu0
        %2456 = vmatprep.mubr.bf16.mxu0 0
        %2457 = vmatmul.mubr.bf16.gmra.mrb[0].mxu0 %v2354
        %v2458 = vpop.f32.mrb[0].mxu0
        %v2459 = vadd.f32 0.0, %v2458
        %v2460 = vpop.f32.mrb[0].mxu0
        %v2461 = vpop.f32.mrb[0].mxu0
        %v2462 = vadd.f32 0.0, %v2461
        %v2463 = vpop.f32.mrb[0].mxu0
        %2464 = vmatprep.mubr.bf16.mxu0 0
        %2465 = vmatmul.mubr.bf16.gmra.mrb[0].mxu0 %v2357
        %v2466 = vpop.f32.mrb[0].mxu0
        %v2467 = vadd.f32 0.0, %v2466
        %v2468 = vpop.f32.mrb[0].mxu0
        %v2469 = vpop.f32.mrb[0].mxu0
        %v2470 = vadd.f32 0.0, %v2469
        %v2471 = vpop.f32.mrb[0].mxu0
        %2472 = vmatprep.mubr.bf16.mxu0 0
        %2473 = vmatmul.mubr.bf16.gmra.mrb[0].mxu0 %v2360
        %v2474 = vpop.f32.mrb[0].mxu0
        %v2475 = vadd.f32 0.0, %v2474
        %v2476 = vpop.f32.mrb[0].mxu0
        %v2477 = vpop.f32.mrb[0].mxu0
        %v2478 = vadd.f32 0.0, %v2477
        %v2479 = vpop.f32.mrb[0].mxu0
        %2480 = vmatprep.mubr.bf16.mxu0 0
        %2481 = vmatmul.mubr.bf16.gmra.mrb[0].mxu0 %v2363
        %v2482 = vpop.f32.mrb[0].mxu0
        %v2483 = vadd.f32 0.0, %v2482
        %v2484 = vpop.f32.mrb[0].mxu0
        %v2485 = vpop.f32.mrb[0].mxu0
        %v2486 = vadd.f32 0.0, %v2485
        %v2487 = vpop.f32.mrb[0].mxu0
        %2488 = vmatprep.mubr.bf16.mxu0 0
        %2489 = vmatmul.mubr.bf16.gmra.mrb[0].mxu0 %v2366
        %v2490 = vpop.f32.mrb[0].mxu0
        %v2491 = vadd.f32 0.0, %v2490
        %v2492 = vpop.f32.mrb[0].mxu0
        %v2493 = vpop.f32.mrb[0].mxu0
        %v2494 = vadd.f32 0.0, %v2493
        %v2495 = vpop.f32.mrb[0].mxu0
        %2496 = vmatprep.mubr.bf16.mxu0 0
        %2497 = vmatmul.mubr.bf16.gmra.mrb[0].mxu0 %v2369
        %v2498 = vpop.f32.mrb[0].mxu0
        %v2499 = vadd.f32 0.0, %v2498
        %v2500 = vpop.f32.mrb[0].mxu0
        %v2501 = vpop.f32.mrb[0].mxu0
        %v2502 = vadd.f32 0.0, %v2501
        %v2503 = vpop.f32.mrb[0].mxu0
        %2504 = vmatprep.mubr.bf16.mxu0 0
        %2505 = vmatmul.mubr.bf16.gmra.mrb[0].mxu0 %v2372
        %v2506 = vpop.f32.mrb[0].mxu0
        %v2507 = vadd.f32 0.0, %v2506
        %v2508 = vpop.f32.mrb[0].mxu0
        %v2509 = vpop.f32.mrb[0].mxu0
        %v2510 = vadd.f32 0.0, %v2509
        %v2511 = vpop.f32.mrb[0].mxu0
        %2512 = vmatprep.mubr.bf16.mxu0 0
        %2513 = vmatmul.mubr.bf16.gmra.mrb[0].mxu0 %v2375
        %v2514 = vpop.f32.mrb[0].mxu0
        %v2515 = vadd.f32 0.0, %v2514
        %v2516 = vpop.f32.mrb[0].mxu0
        %v2517 = vpop.f32.mrb[0].mxu0
        %v2518 = vadd.f32 0.0, %v2517
        %v2519 = vpop.f32.mrb[0].mxu0
        %2520 = vmatprep.mubr.bf16.mxu0 0
        %2521 = vmatmul.mubr.bf16.gmra.mrb[0].mxu0 %v2378
        %v2522 = vpop.f32.mrb[0].mxu0
        %v2523 = vadd.f32 0.0, %v2522
        %v2524 = vpop.f32.mrb[0].mxu0
        %v2525 = vpop.f32.mrb[0].mxu0
        %v2526 = vadd.f32 0.0, %v2525
        %v2527 = vpop.f32.mrb[0].mxu0
        %2528 = vmatprep.mubr.bf16.mxu0 0
        %2529 = vmatmul.mubr.bf16.gmra.mrb[0].mxu0 %v2381
        %v2530 = vpop.f32.mrb[0].mxu0
        %v2531 = vadd.f32 0.0, %v2530
        %v2532 = vpop.f32.mrb[0].mxu0
        %v2533 = vpop.f32.mrb[0].mxu0
        %v2534 = vadd.f32 0.0, %v2533
        %v2535 = vpop.f32.mrb[0].mxu0
        %2536 = vmatprep.mubr.bf16.mxu0 0
        %2537 = vmatmul.mubr.bf16.gmra.mrb[0].mxu0 %v2384
        %v2538 = vpop.f32.mrb[0].mxu0
        %v2539 = vadd.f32 0.0, %v2538
        %v2540 = vpop.f32.mrb[0].mxu0
        %v2541 = vpop.f32.mrb[0].mxu0
        %v2542 = vadd.f32 0.0, %v2541
        %v2543 = vpop.f32.mrb[0].mxu0
        %2544 = vmatprep.mubr.bf16.mxu0 0
        %2545 = vmatmul.mubr.bf16.gmra.mrb[0].mxu0 %v2387
        %v2546 = vpop.f32.mrb[0].mxu0
        %v2547 = vadd.f32 0.0, %v2546
        %v2548 = vpop.f32.mrb[0].mxu0
        %v2549 = vpop.f32.mrb[0].mxu0
        %v2550 = vadd.f32 0.0, %v2549
        %v2551 = vpop.f32.mrb[0].mxu0
        %2552 = vdwg.mxu0
        %v2553 = vadd.f32 %v2259, %v2427
        %v2554 = vadd.f32 %v2260, %v2430
        %v2555 = vadd.f32 %v2261, %v2435
        %v2556 = vadd.f32 %v2262, %v2438
        %v2557 = vadd.f32 %v2263, %v2443
        %v2558 = vadd.f32 %v2264, %v2446
        %v2559 = vadd.f32 %v2265, %v2451
        %v2560 = vadd.f32 %v2266, %v2454
        %v2561 = vadd.f32 %v2267, %v2459
        %v2562 = vadd.f32 %v2268, %v2462
        %v2563 = vadd.f32 %v2269, %v2467
        %v2564 = vadd.f32 %v2270, %v2470
        %v2565 = vadd.f32 %v2271, %v2475
        %v2566 = vadd.f32 %v2272, %v2478
        %v2567 = vadd.f32 %v2273, %v2483
        %v2568 = vadd.f32 %v2274, %v2486
        %v2569 = vadd.f32 %v2275, %v2491
        %v2570 = vadd.f32 %v2276, %v2494
        %v2571 = vadd.f32 %v2277, %v2499
        %v2572 = vadd.f32 %v2278, %v2502
        %v2573 = vadd.f32 %v2279, %v2507
        %v2574 = vadd.f32 %v2280, %v2510
        %v2575 = vadd.f32 %v2281, %v2515
        %v2576 = vadd.f32 %v2282, %v2518
        %v2577 = vadd.f32 %v2283, %v2523
        %v2578 = vadd.f32 %v2284, %v2526
        %v2579 = vadd.f32 %v2285, %v2531
        %v2580 = vadd.f32 %v2286, %v2534
        %v2581 = vadd.f32 %v2287, %v2539
        %v2582 = vadd.f32 %v2288, %v2542
        %v2583 = vadd.f32 %v2289, %v2547
        %v2584 = vadd.f32 %v2290, %v2550
        %v2585 = vld [vmem:[%s1996 + $0x2] sm:$0xff]
        %v2586 = vld [vmem:[%s1996 + $0xa] sm:$0xff]
        %v2587 = vld [vmem:[%s1996 + $0x1a] sm:$0xff]
        %v2588 = vld [vmem:[%s1996 + $0x22] sm:$0xff]
        %v2589 = vld [vmem:[%s1996 + $0x32] sm:$0xff]
        %v2590 = vld [vmem:[%s1996 + $0x3a] sm:$0xff]
        %v2591 = vld [vmem:[%s1996 + $0x4a] sm:$0xff]
        %v2592 = vld [vmem:[%s1996 + $0x52] sm:$0xff]
        %v2593 = vld [vmem:[%s1996 + $0x62] sm:$0xff]
        %v2594 = vld [vmem:[%s1996 + $0x6a] sm:$0xff]
        %v2595 = vld [vmem:[%s1996 + $0x7a] sm:$0xff]
        %v2596 = vld [vmem:[%s1996 + $0x82] sm:$0xff]
        %v2597 = vld [vmem:[%s1996 + $0x92] sm:$0xff]
        %v2598 = vld [vmem:[%s1996 + $0x9a] sm:$0xff]
        %v2599 = vld [vmem:[%s1996 + $0xaa] sm:$0xff]
        %v2600 = vld [vmem:[%s1996 + $0xb2] sm:$0xff]
        %v2601 = vld [vmem:[%s1996 + $0xc2] sm:$0xff]
        %v2602 = vld [vmem:[%s1996 + $0xca] sm:$0xff]
        %v2603 = vld [vmem:[%s1996 + $0xda] sm:$0xff]
        %v2604 = vld [vmem:[%s1996 + $0xe2] sm:$0xff]
        %v2605 = vld [vmem:[%s1996 + $0xf2] sm:$0xff]
        %v2606 = vld [vmem:[%s1996 + $0xfa] sm:$0xff]
        %v2607 = vld [vmem:[%s1996 + $0x10a] sm:$0xff]
        %v2608 = vld [vmem:[%s1996 + $0x112] sm:$0xff]
        %v2609 = vld [vmem:[%s1996 + $0x122] sm:$0xff]
        %v2610 = vld [vmem:[%s1996 + $0x12a] sm:$0xff]
        %v2611 = vld [vmem:[%s1996 + $0x13a] sm:$0xff]
        %v2612 = vld [vmem:[%s1996 + $0x142] sm:$0xff]
        %v2613 = vld [vmem:[%s1996 + $0x152] sm:$0xff]
        %v2614 = vld [vmem:[%s1996 + $0x15a] sm:$0xff]
        %v2615 = vld [vmem:[%s1996 + $0x16a] sm:$0xff]
        %v2616 = vld [vmem:[%s1996 + $0x172] sm:$0xff]
        %v2617 = vpack.c.bf16 %v2586, %v2585
        %v2618 = vpack.c.bf16 %v2588, %v2587
        %v2619 = vpack.c.bf16 %v2590, %v2589
        %v2620 = vpack.c.bf16 %v2592, %v2591
        %v2621 = vpack.c.bf16 %v2594, %v2593
        %v2622 = vpack.c.bf16 %v2596, %v2595
        %v2623 = vpack.c.bf16 %v2598, %v2597
        %v2624 = vpack.c.bf16 %v2600, %v2599
        %v2625 = vpack.c.bf16 %v2602, %v2601
        %v2626 = vpack.c.bf16 %v2604, %v2603
        %v2627 = vpack.c.bf16 %v2606, %v2605
        %v2628 = vpack.c.bf16 %v2608, %v2607
        %v2629 = vpack.c.bf16 %v2610, %v2609
        %v2630 = vpack.c.bf16 %v2612, %v2611
        %v2631 = vpack.c.bf16 %v2614, %v2613
        %v2632 = vpack.c.bf16 %v2616, %v2615
        %s2633 = scalar_lea.vmem %s1, 16
        %v2634 = vld [vmem:[%s2633] sm:$0x3]
        %v2636 = vsel %vm279, %v2617, 0
        %v2639 = vsel %vm279, %v2618, 0
        %v2642 = vsel %vm279, %v2619, 0
        %v2645 = vsel %vm279, %v2620, 0
        %v2648 = vsel %vm279, %v2621, 0
        %v2651 = vsel %vm279, %v2622, 0
        %v2654 = vsel %vm279, %v2623, 0
        %v2657 = vsel %vm279, %v2624, 0
        %v2660 = vsel %vm279, %v2625, 0
        %v2663 = vsel %vm279, %v2626, 0
        %v2666 = vsel %vm279, %v2627, 0
        %v2669 = vsel %vm279, %v2628, 0
        %v2672 = vsel %vm279, %v2629, 0
        %v2675 = vsel %vm279, %v2630, 0
        %v2678 = vsel %vm279, %v2631, 0
        %v2681 = vsel %vm279, %v2632, 0
        %v2684 = vsel %vm328, %v2634, 0
        %2686 = vmatprep.subr.bf16.mxu0 0
        %2687 = vmatpush1.bf16.msra.mxu0 %v2684
        %2688 = vmatprep.subr.bf16.mxu0 0
        %2689 = vmatpush1.bf16.msra.mxu0 0
        %2690 = vmatprep.subr.bf16.mxu0 0
        %2691 = vmatpush1.bf16.msra.mxu0 0
        %2692 = vmatprep.subr.bf16.mxu0 0
        %2693 = vmatpush1.bf16.msra.mxu0 0
        %2694 = vmatprep.subr.bf16.mxu0 0
        %2695 = vmatpush1.bf16.msra.mxu0 0
        %2696 = vmatprep.subr.bf16.mxu0 0
        %2697 = vmatpush1.bf16.msra.mxu0 0
        %2698 = vmatprep.subr.bf16.mxu0 0
        %2699 = vmatpush1.bf16.msra.mxu0 0
        %2700 = vmatprep.subr.bf16.mxu0 0
        %2701 = vmatpush1.bf16.msra.mxu0 0
        %2702 = vmatprep.subr.bf16.mxu0 0
        %2703 = vmatpush1.bf16.msra.mxu0 0
        %2704 = vmatprep.subr.bf16.mxu0 0
        %2705 = vmatpush1.bf16.msra.mxu0 0
        %2706 = vmatprep.subr.bf16.mxu0 0
        %2707 = vmatpush1.bf16.msra.mxu0 0
        %2708 = vmatprep.subr.bf16.mxu0 0
        %2709 = vmatpush1.bf16.msra.mxu0 0
        %2710 = vmatprep.subr.bf16.mxu0 0
        %2711 = vmatpush1.bf16.msra.mxu0 0
        %2712 = vmatprep.subr.bf16.mxu0 0
        %2713 = vmatpush1.bf16.msra.mxu0 0
        %2714 = vmatprep.subr.bf16.mxu0 0
        %2715 = vmatpush1.bf16.msra.mxu0 0
        %2716 = vmatprep.subr.bf16.mxu0 0
        %2717 = vmatpush1.bf16.msra.mxu0 0
        %2718 = vmatprep.mubr.bf16.mxu0 0
        %2719 = vmatmul.mubr.bf16.gmra.mrb[0].mxu0 %v2636
        %v2720 = vpop.f32.mrb[0].mxu0
        %v2721 = vadd.f32 0.0, %v2720
        %v2722 = vpop.f32.mrb[0].mxu0
        %v2723 = vpop.f32.mrb[0].mxu0
        %v2724 = vadd.f32 0.0, %v2723
        %v2725 = vpop.f32.mrb[0].mxu0
        %2726 = vmatprep.mubr.bf16.mxu0 0
        %2727 = vmatmul.mubr.bf16.gmra.mrb[0].mxu0 %v2639
        %v2728 = vpop.f32.mrb[0].mxu0
        %v2729 = vadd.f32 0.0, %v2728
        %v2730 = vpop.f32.mrb[0].mxu0
        %v2731 = vpop.f32.mrb[0].mxu0
        %v2732 = vadd.f32 0.0, %v2731
        %v2733 = vpop.f32.mrb[0].mxu0
        %2734 = vmatprep.mubr.bf16.mxu0 0
        %2735 = vmatmul.mubr.bf16.gmra.mrb[0].mxu0 %v2642
        %v2736 = vpop.f32.mrb[0].mxu0
        %v2737 = vadd.f32 0.0, %v2736
        %v2738 = vpop.f32.mrb[0].mxu0
        %v2739 = vpop.f32.mrb[0].mxu0
        %v2740 = vadd.f32 0.0, %v2739
        %v2741 = vpop.f32.mrb[0].mxu0
        %2742 = vmatprep.mubr.bf16.mxu0 0
        %2743 = vmatmul.mubr.bf16.gmra.mrb[0].mxu0 %v2645
        %v2744 = vpop.f32.mrb[0].mxu0
        %v2745 = vadd.f32 0.0, %v2744
        %v2746 = vpop.f32.mrb[0].mxu0
        %v2747 = vpop.f32.mrb[0].mxu0
        %v2748 = vadd.f32 0.0, %v2747
        %v2749 = vpop.f32.mrb[0].mxu0
        %2750 = vmatprep.mubr.bf16.mxu0 0
        %2751 = vmatmul.mubr.bf16.gmra.mrb[0].mxu0 %v2648
        %v2752 = vpop.f32.mrb[0].mxu0
        %v2753 = vadd.f32 0.0, %v2752
        %v2754 = vpop.f32.mrb[0].mxu0
        %v2755 = vpop.f32.mrb[0].mxu0
        %v2756 = vadd.f32 0.0, %v2755
        %v2757 = vpop.f32.mrb[0].mxu0
        %2758 = vmatprep.mubr.bf16.mxu0 0
        %2759 = vmatmul.mubr.bf16.gmra.mrb[0].mxu0 %v2651
        %v2760 = vpop.f32.mrb[0].mxu0
        %v2761 = vadd.f32 0.0, %v2760
        %v2762 = vpop.f32.mrb[0].mxu0
        %v2763 = vpop.f32.mrb[0].mxu0
        %v2764 = vadd.f32 0.0, %v2763
        %v2765 = vpop.f32.mrb[0].mxu0
        %2766 = vmatprep.mubr.bf16.mxu0 0
        %2767 = vmatmul.mubr.bf16.gmra.mrb[0].mxu0 %v2654
        %v2768 = vpop.f32.mrb[0].mxu0
        %v2769 = vadd.f32 0.0, %v2768
        %v2770 = vpop.f32.mrb[0].mxu0
        %v2771 = vpop.f32.mrb[0].mxu0
        %v2772 = vadd.f32 0.0, %v2771
        %v2773 = vpop.f32.mrb[0].mxu0
        %2774 = vmatprep.mubr.bf16.mxu0 0
        %2775 = vmatmul.mubr.bf16.gmra.mrb[0].mxu0 %v2657
        %v2776 = vpop.f32.mrb[0].mxu0
        %v2777 = vadd.f32 0.0, %v2776
        %v2778 = vpop.f32.mrb[0].mxu0
        %v2779 = vpop.f32.mrb[0].mxu0
        %v2780 = vadd.f32 0.0, %v2779
        %v2781 = vpop.f32.mrb[0].mxu0
        %2782 = vmatprep.mubr.bf16.mxu0 0
        %2783 = vmatmul.mubr.bf16.gmra.mrb[0].mxu0 %v2660
        %v2784 = vpop.f32.mrb[0].mxu0
        %v2785 = vadd.f32 0.0, %v2784
        %v2786 = vpop.f32.mrb[0].mxu0
        %v2787 = vpop.f32.mrb[0].mxu0
        %v2788 = vadd.f32 0.0, %v2787
        %v2789 = vpop.f32.mrb[0].mxu0
        %2790 = vmatprep.mubr.bf16.mxu0 0
        %2791 = vmatmul.mubr.bf16.gmra.mrb[0].mxu0 %v2663
        %v2792 = vpop.f32.mrb[0].mxu0
        %v2793 = vadd.f32 0.0, %v2792
        %v2794 = vpop.f32.mrb[0].mxu0
        %v2795 = vpop.f32.mrb[0].mxu0
        %v2796 = vadd.f32 0.0, %v2795
        %v2797 = vpop.f32.mrb[0].mxu0
        %2798 = vmatprep.mubr.bf16.mxu0 0
        %2799 = vmatmul.mubr.bf16.gmra.mrb[0].mxu0 %v2666
        %v2800 = vpop.f32.mrb[0].mxu0
        %v2801 = vadd.f32 0.0, %v2800
        %v2802 = vpop.f32.mrb[0].mxu0
        %v2803 = vpop.f32.mrb[0].mxu0
        %v2804 = vadd.f32 0.0, %v2803
        %v2805 = vpop.f32.mrb[0].mxu0
        %2806 = vmatprep.mubr.bf16.mxu0 0
        %2807 = vmatmul.mubr.bf16.gmra.mrb[0].mxu0 %v2669
        %v2808 = vpop.f32.mrb[0].mxu0
        %v2809 = vadd.f32 0.0, %v2808
        %v2810 = vpop.f32.mrb[0].mxu0
        %v2811 = vpop.f32.mrb[0].mxu0
        %v2812 = vadd.f32 0.0, %v2811
        %v2813 = vpop.f32.mrb[0].mxu0
        %2814 = vmatprep.mubr.bf16.mxu0 0
        %2815 = vmatmul.mubr.bf16.gmra.mrb[0].mxu0 %v2672
        %v2816 = vpop.f32.mrb[0].mxu0
        %v2817 = vadd.f32 0.0, %v2816
        %v2818 = vpop.f32.mrb[0].mxu0
        %v2819 = vpop.f32.mrb[0].mxu0
        %v2820 = vadd.f32 0.0, %v2819
        %v2821 = vpop.f32.mrb[0].mxu0
        %2822 = vmatprep.mubr.bf16.mxu0 0
        %2823 = vmatmul.mubr.bf16.gmra.mrb[0].mxu0 %v2675
        %v2824 = vpop.f32.mrb[0].mxu0
        %v2825 = vadd.f32 0.0, %v2824
        %v2826 = vpop.f32.mrb[0].mxu0
        %v2827 = vpop.f32.mrb[0].mxu0
        %v2828 = vadd.f32 0.0, %v2827
        %v2829 = vpop.f32.mrb[0].mxu0
        %2830 = vmatprep.mubr.bf16.mxu0 0
        %2831 = vmatmul.mubr.bf16.gmra.mrb[0].mxu0 %v2678
        %v2832 = vpop.f32.mrb[0].mxu0
        %v2833 = vadd.f32 0.0, %v2832
        %v2834 = vpop.f32.mrb[0].mxu0
        %v2835 = vpop.f32.mrb[0].mxu0
        %v2836 = vadd.f32 0.0, %v2835
        %v2837 = vpop.f32.mrb[0].mxu0
        %2838 = vmatprep.mubr.bf16.mxu0 0
        %2839 = vmatmul.mubr.bf16.gmra.mrb[0].mxu0 %v2681
        %v2840 = vpop.f32.mrb[0].mxu0
        %v2841 = vadd.f32 0.0, %v2840
        %v2842 = vpop.f32.mrb[0].mxu0
        %v2843 = vpop.f32.mrb[0].mxu0
        %v2844 = vadd.f32 0.0, %v2843
        %v2845 = vpop.f32.mrb[0].mxu0
        %2846 = vdwg.mxu0
        %v2847 = vadd.f32 %v2553, %v2721
        %v2848 = vadd.f32 %v2554, %v2724
        %v2849 = vadd.f32 %v2555, %v2729
        %v2850 = vadd.f32 %v2556, %v2732
        %v2851 = vadd.f32 %v2557, %v2737
        %v2852 = vadd.f32 %v2558, %v2740
        %v2853 = vadd.f32 %v2559, %v2745
        %v2854 = vadd.f32 %v2560, %v2748
        %v2855 = vadd.f32 %v2561, %v2753
        %v2856 = vadd.f32 %v2562, %v2756
        %v2857 = vadd.f32 %v2563, %v2761
        %v2858 = vadd.f32 %v2564, %v2764
        %v2859 = vadd.f32 %v2565, %v2769
        %v2860 = vadd.f32 %v2566, %v2772
        %v2861 = vadd.f32 %v2567, %v2777
        %v2862 = vadd.f32 %v2568, %v2780
        %v2863 = vadd.f32 %v2569, %v2785
        %v2864 = vadd.f32 %v2570, %v2788
        %v2865 = vadd.f32 %v2571, %v2793
        %v2866 = vadd.f32 %v2572, %v2796
        %v2867 = vadd.f32 %v2573, %v2801
        %v2868 = vadd.f32 %v2574, %v2804
        %v2869 = vadd.f32 %v2575, %v2809
        %v2870 = vadd.f32 %v2576, %v2812
        %v2871 = vadd.f32 %v2577, %v2817
        %v2872 = vadd.f32 %v2578, %v2820
        %v2873 = vadd.f32 %v2579, %v2825
        %v2874 = vadd.f32 %v2580, %v2828
        %v2875 = vadd.f32 %v2581, %v2833
        %v2876 = vadd.f32 %v2582, %v2836
        %v2877 = vadd.f32 %v2583, %v2841
        %v2878 = vadd.f32 %v2584, %v2844
        %v2879 = vmax.f32 %v2847, 0.0
        %v2880 = vmax.f32 %v2848, 0.0
        %v2881 = vmax.f32 %v2849, 0.0
        %v2882 = vmax.f32 %v2850, 0.0
        %v2883 = vmax.f32 %v2851, 0.0
        %v2884 = vmax.f32 %v2852, 0.0
        %v2885 = vmax.f32 %v2853, 0.0
        %v2886 = vmax.f32 %v2854, 0.0
        %v2887 = vmax.f32 %v2855, 0.0
        %v2888 = vmax.f32 %v2856, 0.0
        %v2889 = vmax.f32 %v2857, 0.0
        %v2890 = vmax.f32 %v2858, 0.0
        %v2891 = vmax.f32 %v2859, 0.0
        %v2892 = vmax.f32 %v2860, 0.0
        %v2893 = vmax.f32 %v2861, 0.0
        %v2894 = vmax.f32 %v2862, 0.0
        %v2895 = vmax.f32 %v2863, 0.0
        %v2896 = vmax.f32 %v2864, 0.0
        %v2897 = vmax.f32 %v2865, 0.0
        %v2898 = vmax.f32 %v2866, 0.0
        %v2899 = vmax.f32 %v2867, 0.0
        %v2900 = vmax.f32 %v2868, 0.0
        %v2901 = vmax.f32 %v2869, 0.0
        %v2902 = vmax.f32 %v2870, 0.0
        %v2903 = vmax.f32 %v2871, 0.0
        %v2904 = vmax.f32 %v2872, 0.0
        %v2905 = vmax.f32 %v2873, 0.0
        %v2906 = vmax.f32 %v2874, 0.0
        %v2907 = vmax.f32 %v2875, 0.0
        %v2908 = vmax.f32 %v2876, 0.0
        %v2909 = vmax.f32 %v2877, 0.0
        %v2910 = vmax.f32 %v2878, 0.0
        %vm2911 = vcmask 261120
        %v2912 = vsel %vm2911, %v2879, 0.0
        %v2913 = vsel %vm2911, %v2880, 0.0
        %v2914 = vadd.f32 %v2912, %v2913
        %v2915 = vsel %vm2911, %v2881, 0.0
        %v2916 = vadd.f32 %v2914, %v2915
        %v2917 = vsel %vm2911, %v2882, 0.0
        %v2918 = vadd.f32 %v2916, %v2917
        %v2919 = vsel %vm2911, %v2883, 0.0
        %v2920 = vadd.f32 %v2918, %v2919
        %v2921 = vsel %vm2911, %v2884, 0.0
        %v2922 = vadd.f32 %v2920, %v2921
        %v2923 = vsel %vm2911, %v2885, 0.0
        %v2924 = vadd.f32 %v2922, %v2923
        %v2925 = vsel %vm2911, %v2886, 0.0
        %v2926 = vadd.f32 %v2924, %v2925
        %v2927 = vsel %vm2911, %v2887, 0.0
        %v2928 = vadd.f32 %v2926, %v2927
        %v2929 = vsel %vm2911, %v2888, 0.0
        %v2930 = vadd.f32 %v2928, %v2929
        %v2931 = vsel %vm2911, %v2889, 0.0
        %v2932 = vadd.f32 %v2930, %v2931
        %v2933 = vsel %vm2911, %v2890, 0.0
        %v2934 = vadd.f32 %v2932, %v2933
        %v2935 = vsel %vm2911, %v2891, 0.0
        %v2936 = vadd.f32 %v2934, %v2935
        %v2937 = vsel %vm2911, %v2892, 0.0
        %v2938 = vadd.f32 %v2936, %v2937
        %v2939 = vsel %vm2911, %v2893, 0.0
        %v2940 = vadd.f32 %v2938, %v2939
        %v2941 = vsel %vm2911, %v2894, 0.0
        %v2942 = vadd.f32 %v2940, %v2941
        %v2943 = vsel %vm2911, %v2895, 0.0
        %v2944 = vadd.f32 %v2942, %v2943
        %v2945 = vsel %vm2911, %v2896, 0.0
        %v2946 = vadd.f32 %v2944, %v2945
        %v2947 = vsel %vm2911, %v2897, 0.0
        %v2948 = vadd.f32 %v2946, %v2947
        %v2949 = vsel %vm2911, %v2898, 0.0
        %v2950 = vadd.f32 %v2948, %v2949
        %v2951 = vsel %vm2911, %v2899, 0.0
        %v2952 = vadd.f32 %v2950, %v2951
        %v2953 = vsel %vm2911, %v2900, 0.0
        %v2954 = vadd.f32 %v2952, %v2953
        %v2955 = vsel %vm2911, %v2901, 0.0
        %v2956 = vadd.f32 %v2954, %v2955
        %v2957 = vsel %vm2911, %v2902, 0.0
        %v2958 = vadd.f32 %v2956, %v2957
        %v2959 = vsel %vm2911, %v2903, 0.0
        %v2960 = vadd.f32 %v2958, %v2959
        %v2961 = vsel %vm2911, %v2904, 0.0
        %v2962 = vadd.f32 %v2960, %v2961
        %v2963 = vsel %vm2911, %v2905, 0.0
        %v2964 = vadd.f32 %v2962, %v2963
        %v2965 = vsel %vm2911, %v2906, 0.0
        %v2966 = vadd.f32 %v2964, %v2965
        %v2967 = vsel %vm2911, %v2907, 0.0
        %v2968 = vadd.f32 %v2966, %v2967
        %v2969 = vsel %vm2911, %v2908, 0.0
        %v2970 = vadd.f32 %v2968, %v2969
        %v2971 = vsel %vm2911, %v2909, 0.0
        %v2972 = vadd.f32 %v2970, %v2971
        %v2973 = vsel %vm2911, %v2910, 0.0
        %v2974 = vadd.f32 %v2972, %v2973
        %v2975 = vrot.slane %v2974, 4
        %v2976 = vadd.f32 %v2974, %v2975
        %v2977 = vrot.slane %v2976, 2
        %v2978 = vadd.f32 %v2976, %v2977
        %v2979 = vrot.slane %v2978, 1
        %v2980 = vadd.f32 %v2978, %v2979
        %v2981 = vadd.f32 %v2980, 0.0
        %s2982 = scalar_lea.vmem %s221, 432
        %v2983 = vld [vmem:[%s2982] sm:$0xff]
        %v2984 = vld [vmem:[%s2982 + $0x8] sm:$0xff]
        %v2985 = vld [vmem:[%s2982 + $0x18] sm:$0xff]
        %v2986 = vld [vmem:[%s2982 + $0x20] sm:$0xff]
        %v2987 = vld [vmem:[%s2982 + $0x30] sm:$0xff]
        %v2988 = vld [vmem:[%s2982 + $0x38] sm:$0xff]
        %v2989 = vld [vmem:[%s2982 + $0x48] sm:$0xff]
        %v2990 = vld [vmem:[%s2982 + $0x50] sm:$0xff]
        %v2991 = vld [vmem:[%s2982 + $0x60] sm:$0xff]
        %v2992 = vld [vmem:[%s2982 + $0x68] sm:$0xff]
        %v2993 = vld [vmem:[%s2982 + $0x78] sm:$0xff]
        %v2994 = vld [vmem:[%s2982 + $0x80] sm:$0xff]
        %v2995 = vld [vmem:[%s2982 + $0x90] sm:$0xff]
        %v2996 = vld [vmem:[%s2982 + $0x98] sm:$0xff]
        %v2997 = vld [vmem:[%s2982 + $0xa8] sm:$0xff]
        %v2998 = vld [vmem:[%s2982 + $0xb0] sm:$0xff]
        %v2999 = vld [vmem:[%s2982 + $0xc0] sm:$0xff]
        %v3000 = vld [vmem:[%s2982 + $0xc8] sm:$0xff]
        %v3001 = vld [vmem:[%s2982 + $0xd8] sm:$0xff]
        %v3002 = vld [vmem:[%s2982 + $0xe0] sm:$0xff]
        %v3003 = vld [vmem:[%s2982 + $0xf0] sm:$0xff]
        %v3004 = vld [vmem:[%s2982 + $0xf8] sm:$0xff]
        %v3005 = vld [vmem:[%s2982 + $0x108] sm:$0xff]
        %v3006 = vld [vmem:[%s2982 + $0x110] sm:$0xff]
        %v3007 = vld [vmem:[%s2982 + $0x120] sm:$0xff]
        %v3008 = vld [vmem:[%s2982 + $0x128] sm:$0xff]
        %v3009 = vld [vmem:[%s2982 + $0x138] sm:$0xff]
        %v3010 = vld [vmem:[%s2982 + $0x140] sm:$0xff]
        %v3011 = vld [vmem:[%s2982 + $0x150] sm:$0xff]
        %v3012 = vld [vmem:[%s2982 + $0x158] sm:$0xff]
        %v3013 = vld [vmem:[%s2982 + $0x168] sm:$0xff]
        %v3014 = vld [vmem:[%s2982 + $0x170] sm:$0xff]
        %v3015 = vpack.c.bf16 %v2984, %v2983
        %v3016 = vpack.c.bf16 %v2986, %v2985
        %v3017 = vpack.c.bf16 %v2988, %v2987
        %v3018 = vpack.c.bf16 %v2990, %v2989
        %v3019 = vpack.c.bf16 %v2992, %v2991
        %v3020 = vpack.c.bf16 %v2994, %v2993
        %v3021 = vpack.c.bf16 %v2996, %v2995
        %v3022 = vpack.c.bf16 %v2998, %v2997
        %v3023 = vpack.c.bf16 %v3000, %v2999
        %v3024 = vpack.c.bf16 %v3002, %v3001
        %v3025 = vpack.c.bf16 %v3004, %v3003
        %v3026 = vpack.c.bf16 %v3006, %v3005
        %v3027 = vpack.c.bf16 %v3008, %v3007
        %v3028 = vpack.c.bf16 %v3010, %v3009
        %v3029 = vpack.c.bf16 %v3012, %v3011
        %v3030 = vpack.c.bf16 %v3014, %v3013
        %v3032 = vsel %vm279, %v3015, 0
        %v3035 = vsel %vm279, %v3016, 0
        %v3038 = vsel %vm279, %v3017, 0
        %v3041 = vsel %vm279, %v3018, 0
        %v3044 = vsel %vm279, %v3019, 0
        %v3047 = vsel %vm279, %v3020, 0
        %v3050 = vsel %vm279, %v3021, 0
        %v3053 = vsel %vm279, %v3022, 0
        %v3056 = vsel %vm279, %v3023, 0
        %v3059 = vsel %vm279, %v3024, 0
        %v3062 = vsel %vm279, %v3025, 0
        %v3065 = vsel %vm279, %v3026, 0
        %v3068 = vsel %vm279, %v3027, 0
        %v3071 = vsel %vm279, %v3028, 0
        %v3074 = vsel %vm279, %v3029, 0
        %v3077 = vsel %vm279, %v3030, 0
        %3079 = vmatprep.subr.bf16.mxu0 0
        %3080 = vmatpush1.bf16.msra.mxu0 %v330
        %3081 = vmatprep.subr.bf16.mxu0 0
        %3082 = vmatpush1.bf16.msra.mxu0 0
        %3083 = vmatprep.subr.bf16.mxu0 0
        %3084 = vmatpush1.bf16.msra.mxu0 0
        %3085 = vmatprep.subr.bf16.mxu0 0
        %3086 = vmatpush1.bf16.msra.mxu0 0
        %3087 = vmatprep.subr.bf16.mxu0 0
        %3088 = vmatpush1.bf16.msra.mxu0 0
        %3089 = vmatprep.subr.bf16.mxu0 0
        %3090 = vmatpush1.bf16.msra.mxu0 0
        %3091 = vmatprep.subr.bf16.mxu0 0
        %3092 = vmatpush1.bf16.msra.mxu0 0
        %3093 = vmatprep.subr.bf16.mxu0 0
        %3094 = vmatpush1.bf16.msra.mxu0 0
        %3095 = vmatprep.subr.bf16.mxu0 0
        %3096 = vmatpush1.bf16.msra.mxu0 0
        %3097 = vmatprep.subr.bf16.mxu0 0
        %3098 = vmatpush1.bf16.msra.mxu0 0
        %3099 = vmatprep.subr.bf16.mxu0 0
        %3100 = vmatpush1.bf16.msra.mxu0 0
        %3101 = vmatprep.subr.bf16.mxu0 0
        %3102 = vmatpush1.bf16.msra.mxu0 0
        %3103 = vmatprep.subr.bf16.mxu0 0
        %3104 = vmatpush1.bf16.msra.mxu0 0
        %3105 = vmatprep.subr.bf16.mxu0 0
        %3106 = vmatpush1.bf16.msra.mxu0 0
        %3107 = vmatprep.subr.bf16.mxu0 0
        %3108 = vmatpush1.bf16.msra.mxu0 0
        %3109 = vmatprep.subr.bf16.mxu0 0
        %3110 = vmatpush1.bf16.msra.mxu0 0
        %3111 = vmatprep.mubr.bf16.mxu0 0
        %3112 = vmatmul.mubr.bf16.gmra.mrb[0].mxu0 %v3032
        %v3113 = vpop.f32.mrb[0].mxu0
        %v3114 = vadd.f32 0.0, %v3113
        %v3115 = vpop.f32.mrb[0].mxu0
        %v3116 = vpop.f32.mrb[0].mxu0
        %v3117 = vadd.f32 0.0, %v3116
        %v3118 = vpop.f32.mrb[0].mxu0
        %3119 = vmatprep.mubr.bf16.mxu0 0
        %3120 = vmatmul.mubr.bf16.gmra.mrb[0].mxu0 %v3035
        %v3121 = vpop.f32.mrb[0].mxu0
        %v3122 = vadd.f32 0.0, %v3121
        %v3123 = vpop.f32.mrb[0].mxu0
        %v3124 = vpop.f32.mrb[0].mxu0
        %v3125 = vadd.f32 0.0, %v3124
        %v3126 = vpop.f32.mrb[0].mxu0
        %3127 = vmatprep.mubr.bf16.mxu0 0
        %3128 = vmatmul.mubr.bf16.gmra.mrb[0].mxu0 %v3038
        %v3129 = vpop.f32.mrb[0].mxu0
        %v3130 = vadd.f32 0.0, %v3129
        %v3131 = vpop.f32.mrb[0].mxu0
        %v3132 = vpop.f32.mrb[0].mxu0
        %v3133 = vadd.f32 0.0, %v3132
        %v3134 = vpop.f32.mrb[0].mxu0
        %3135 = vmatprep.mubr.bf16.mxu0 0
        %3136 = vmatmul.mubr.bf16.gmra.mrb[0].mxu0 %v3041
        %v3137 = vpop.f32.mrb[0].mxu0
        %v3138 = vadd.f32 0.0, %v3137
        %v3139 = vpop.f32.mrb[0].mxu0
        %v3140 = vpop.f32.mrb[0].mxu0
        %v3141 = vadd.f32 0.0, %v3140
        %v3142 = vpop.f32.mrb[0].mxu0
        %3143 = vmatprep.mubr.bf16.mxu0 0
        %3144 = vmatmul.mubr.bf16.gmra.mrb[0].mxu0 %v3044
        %v3145 = vpop.f32.mrb[0].mxu0
        %v3146 = vadd.f32 0.0, %v3145
        %v3147 = vpop.f32.mrb[0].mxu0
        %v3148 = vpop.f32.mrb[0].mxu0
        %v3149 = vadd.f32 0.0, %v3148
        %v3150 = vpop.f32.mrb[0].mxu0
        %3151 = vmatprep.mubr.bf16.mxu0 0
        %3152 = vmatmul.mubr.bf16.gmra.mrb[0].mxu0 %v3047
        %v3153 = vpop.f32.mrb[0].mxu0
        %v3154 = vadd.f32 0.0, %v3153
        %v3155 = vpop.f32.mrb[0].mxu0
        %v3156 = vpop.f32.mrb[0].mxu0
        %v3157 = vadd.f32 0.0, %v3156
        %v3158 = vpop.f32.mrb[0].mxu0
        %3159 = vmatprep.mubr.bf16.mxu0 0
        %3160 = vmatmul.mubr.bf16.gmra.mrb[0].mxu0 %v3050
        %v3161 = vpop.f32.mrb[0].mxu0
        %v3162 = vadd.f32 0.0, %v3161
        %v3163 = vpop.f32.mrb[0].mxu0
        %v3164 = vpop.f32.mrb[0].mxu0
        %v3165 = vadd.f32 0.0, %v3164
        %v3166 = vpop.f32.mrb[0].mxu0
        %3167 = vmatprep.mubr.bf16.mxu0 0
        %3168 = vmatmul.mubr.bf16.gmra.mrb[0].mxu0 %v3053
        %v3169 = vpop.f32.mrb[0].mxu0
        %v3170 = vadd.f32 0.0, %v3169
        %v3171 = vpop.f32.mrb[0].mxu0
        %v3172 = vpop.f32.mrb[0].mxu0
        %v3173 = vadd.f32 0.0, %v3172
        %v3174 = vpop.f32.mrb[0].mxu0
        %3175 = vmatprep.mubr.bf16.mxu0 0
        %3176 = vmatmul.mubr.bf16.gmra.mrb[0].mxu0 %v3056
        %v3177 = vpop.f32.mrb[0].mxu0
        %v3178 = vadd.f32 0.0, %v3177
        %v3179 = vpop.f32.mrb[0].mxu0
        %v3180 = vpop.f32.mrb[0].mxu0
        %v3181 = vadd.f32 0.0, %v3180
        %v3182 = vpop.f32.mrb[0].mxu0
        %3183 = vmatprep.mubr.bf16.mxu0 0
        %3184 = vmatmul.mubr.bf16.gmra.mrb[0].mxu0 %v3059
        %v3185 = vpop.f32.mrb[0].mxu0
        %v3186 = vadd.f32 0.0, %v3185
        %v3187 = vpop.f32.mrb[0].mxu0
        %v3188 = vpop.f32.mrb[0].mxu0
        %v3189 = vadd.f32 0.0, %v3188
        %v3190 = vpop.f32.mrb[0].mxu0
        %3191 = vmatprep.mubr.bf16.mxu0 0
        %3192 = vmatmul.mubr.bf16.gmra.mrb[0].mxu0 %v3062
        %v3193 = vpop.f32.mrb[0].mxu0
        %v3194 = vadd.f32 0.0, %v3193
        %v3195 = vpop.f32.mrb[0].mxu0
        %v3196 = vpop.f32.mrb[0].mxu0
        %v3197 = vadd.f32 0.0, %v3196
        %v3198 = vpop.f32.mrb[0].mxu0
        %3199 = vmatprep.mubr.bf16.mxu0 0
        %3200 = vmatmul.mubr.bf16.gmra.mrb[0].mxu0 %v3065
        %v3201 = vpop.f32.mrb[0].mxu0
        %v3202 = vadd.f32 0.0, %v3201
        %v3203 = vpop.f32.mrb[0].mxu0
        %v3204 = vpop.f32.mrb[0].mxu0
        %v3205 = vadd.f32 0.0, %v3204
        %v3206 = vpop.f32.mrb[0].mxu0
        %3207 = vmatprep.mubr.bf16.mxu0 0
        %3208 = vmatmul.mubr.bf16.gmra.mrb[0].mxu0 %v3068
        %v3209 = vpop.f32.mrb[0].mxu0
        %v3210 = vadd.f32 0.0, %v3209
        %v3211 = vpop.f32.mrb[0].mxu0
        %v3212 = vpop.f32.mrb[0].mxu0
        %v3213 = vadd.f32 0.0, %v3212
        %v3214 = vpop.f32.mrb[0].mxu0
        %3215 = vmatprep.mubr.bf16.mxu0 0
        %3216 = vmatmul.mubr.bf16.gmra.mrb[0].mxu0 %v3071
        %v3217 = vpop.f32.mrb[0].mxu0
        %v3218 = vadd.f32 0.0, %v3217
        %v3219 = vpop.f32.mrb[0].mxu0
        %v3220 = vpop.f32.mrb[0].mxu0
        %v3221 = vadd.f32 0.0, %v3220
        %v3222 = vpop.f32.mrb[0].mxu0
        %3223 = vmatprep.mubr.bf16.mxu0 0
        %3224 = vmatmul.mubr.bf16.gmra.mrb[0].mxu0 %v3074
        %v3225 = vpop.f32.mrb[0].mxu0
        %v3226 = vadd.f32 0.0, %v3225
        %v3227 = vpop.f32.mrb[0].mxu0
        %v3228 = vpop.f32.mrb[0].mxu0
        %v3229 = vadd.f32 0.0, %v3228
        %v3230 = vpop.f32.mrb[0].mxu0
        %3231 = vmatprep.mubr.bf16.mxu0 0
        %3232 = vmatmul.mubr.bf16.gmra.mrb[0].mxu0 %v3077
        %v3233 = vpop.f32.mrb[0].mxu0
        %v3234 = vadd.f32 0.0, %v3233
        %v3235 = vpop.f32.mrb[0].mxu0
        %v3236 = vpop.f32.mrb[0].mxu0
        %v3237 = vadd.f32 0.0, %v3236
        %v3238 = vpop.f32.mrb[0].mxu0
        %3239 = vdwg.mxu0
        %v3240 = vadd.f32 %v228, %v3114
        %v3241 = vadd.f32 %v228, %v3117
        %v3242 = vadd.f32 %v228, %v3122
        %v3243 = vadd.f32 %v228, %v3125
        %v3244 = vadd.f32 %v228, %v3130
        %v3245 = vadd.f32 %v228, %v3133
        %v3246 = vadd.f32 %v228, %v3138
        %v3247 = vadd.f32 %v228, %v3141
        %v3248 = vadd.f32 %v228, %v3146
        %v3249 = vadd.f32 %v228, %v3149
        %v3250 = vadd.f32 %v228, %v3154
        %v3251 = vadd.f32 %v228, %v3157
        %v3252 = vadd.f32 %v228, %v3162
        %v3253 = vadd.f32 %v228, %v3165
        %v3254 = vadd.f32 %v228, %v3170
        %v3255 = vadd.f32 %v228, %v3173
        %v3256 = vadd.f32 %v228, %v3178
        %v3257 = vadd.f32 %v228, %v3181
        %v3258 = vadd.f32 %v228, %v3186
        %v3259 = vadd.f32 %v228, %v3189
        %v3260 = vadd.f32 %v228, %v3194
        %v3261 = vadd.f32 %v228, %v3197
        %v3262 = vadd.f32 %v228, %v3202
        %v3263 = vadd.f32 %v228, %v3205
        %v3264 = vadd.f32 %v228, %v3210
        %v3265 = vadd.f32 %v228, %v3213
        %v3266 = vadd.f32 %v228, %v3218
        %v3267 = vadd.f32 %v228, %v3221
        %v3268 = vadd.f32 %v228, %v3226
        %v3269 = vadd.f32 %v228, %v3229
        %v3270 = vadd.f32 %v228, %v3234
        %v3271 = vadd.f32 %v228, %v3237
        %v3272 = vld [vmem:[%s2982 + $0x1] sm:$0xff]
        %v3273 = vld [vmem:[%s2982 + $0x9] sm:$0xff]
        %v3274 = vld [vmem:[%s2982 + $0x19] sm:$0xff]
        %v3275 = vld [vmem:[%s2982 + $0x21] sm:$0xff]
        %v3276 = vld [vmem:[%s2982 + $0x31] sm:$0xff]
        %v3277 = vld [vmem:[%s2982 + $0x39] sm:$0xff]
        %v3278 = vld [vmem:[%s2982 + $0x49] sm:$0xff]
        %v3279 = vld [vmem:[%s2982 + $0x51] sm:$0xff]
        %v3280 = vld [vmem:[%s2982 + $0x61] sm:$0xff]
        %v3281 = vld [vmem:[%s2982 + $0x69] sm:$0xff]
        %v3282 = vld [vmem:[%s2982 + $0x79] sm:$0xff]
        %v3283 = vld [vmem:[%s2982 + $0x81] sm:$0xff]
        %v3284 = vld [vmem:[%s2982 + $0x91] sm:$0xff]
        %v3285 = vld [vmem:[%s2982 + $0x99] sm:$0xff]
        %v3286 = vld [vmem:[%s2982 + $0xa9] sm:$0xff]
        %v3287 = vld [vmem:[%s2982 + $0xb1] sm:$0xff]
        %v3288 = vld [vmem:[%s2982 + $0xc1] sm:$0xff]
        %v3289 = vld [vmem:[%s2982 + $0xc9] sm:$0xff]
        %v3290 = vld [vmem:[%s2982 + $0xd9] sm:$0xff]
        %v3291 = vld [vmem:[%s2982 + $0xe1] sm:$0xff]
        %v3292 = vld [vmem:[%s2982 + $0xf1] sm:$0xff]
        %v3293 = vld [vmem:[%s2982 + $0xf9] sm:$0xff]
        %v3294 = vld [vmem:[%s2982 + $0x109] sm:$0xff]
        %v3295 = vld [vmem:[%s2982 + $0x111] sm:$0xff]
        %v3296 = vld [vmem:[%s2982 + $0x121] sm:$0xff]
        %v3297 = vld [vmem:[%s2982 + $0x129] sm:$0xff]
        %v3298 = vld [vmem:[%s2982 + $0x139] sm:$0xff]
        %v3299 = vld [vmem:[%s2982 + $0x141] sm:$0xff]
        %v3300 = vld [vmem:[%s2982 + $0x151] sm:$0xff]
        %v3301 = vld [vmem:[%s2982 + $0x159] sm:$0xff]
        %v3302 = vld [vmem:[%s2982 + $0x169] sm:$0xff]
        %v3303 = vld [vmem:[%s2982 + $0x171] sm:$0xff]
        %v3304 = vpack.c.bf16 %v3273, %v3272
        %v3305 = vpack.c.bf16 %v3275, %v3274
        %v3306 = vpack.c.bf16 %v3277, %v3276
        %v3307 = vpack.c.bf16 %v3279, %v3278
        %v3308 = vpack.c.bf16 %v3281, %v3280
        %v3309 = vpack.c.bf16 %v3283, %v3282
        %v3310 = vpack.c.bf16 %v3285, %v3284
        %v3311 = vpack.c.bf16 %v3287, %v3286
        %v3312 = vpack.c.bf16 %v3289, %v3288
        %v3313 = vpack.c.bf16 %v3291, %v3290
        %v3314 = vpack.c.bf16 %v3293, %v3292
        %v3315 = vpack.c.bf16 %v3295, %v3294
        %v3316 = vpack.c.bf16 %v3297, %v3296
        %v3317 = vpack.c.bf16 %v3299, %v3298
        %v3318 = vpack.c.bf16 %v3301, %v3300
        %v3319 = vpack.c.bf16 %v3303, %v3302
        %v3321 = vsel %vm279, %v3304, 0
        %v3324 = vsel %vm279, %v3305, 0
        %v3327 = vsel %vm279, %v3306, 0
        %v3330 = vsel %vm279, %v3307, 0
        %v3333 = vsel %vm279, %v3308, 0
        %v3336 = vsel %vm279, %v3309, 0
        %v3339 = vsel %vm279, %v3310, 0
        %v3342 = vsel %vm279, %v3311, 0
        %v3345 = vsel %vm279, %v3312, 0
        %v3348 = vsel %vm279, %v3313, 0
        %v3351 = vsel %vm279, %v3314, 0
        %v3354 = vsel %vm279, %v3315, 0
        %v3357 = vsel %vm279, %v3316, 0
        %v3360 = vsel %vm279, %v3317, 0
        %v3363 = vsel %vm279, %v3318, 0
        %v3366 = vsel %vm279, %v3319, 0
        %3368 = vmatprep.subr.bf16.mxu0 0
        %3369 = vmatpush1.bf16.msra.mxu0 %v624
        %3370 = vmatprep.subr.bf16.mxu0 0
        %3371 = vmatpush1.bf16.msra.mxu0 0
        %3372 = vmatprep.subr.bf16.mxu0 0
        %3373 = vmatpush1.bf16.msra.mxu0 0
        %3374 = vmatprep.subr.bf16.mxu0 0
        %3375 = vmatpush1.bf16.msra.mxu0 0
        %3376 = vmatprep.subr.bf16.mxu0 0
        %3377 = vmatpush1.bf16.msra.mxu0 0
        %3378 = vmatprep.subr.bf16.mxu0 0
        %3379 = vmatpush1.bf16.msra.mxu0 0
        %3380 = vmatprep.subr.bf16.mxu0 0
        %3381 = vmatpush1.bf16.msra.mxu0 0
        %3382 = vmatprep.subr.bf16.mxu0 0
        %3383 = vmatpush1.bf16.msra.mxu0 0
        %3384 = vmatprep.subr.bf16.mxu0 0
        %3385 = vmatpush1.bf16.msra.mxu0 0
        %3386 = vmatprep.subr.bf16.mxu0 0
        %3387 = vmatpush1.bf16.msra.mxu0 0
        %3388 = vmatprep.subr.bf16.mxu0 0
        %3389 = vmatpush1.bf16.msra.mxu0 0
        %3390 = vmatprep.subr.bf16.mxu0 0
        %3391 = vmatpush1.bf16.msra.mxu0 0
        %3392 = vmatprep.subr.bf16.mxu0 0
        %3393 = vmatpush1.bf16.msra.mxu0 0
        %3394 = vmatprep.subr.bf16.mxu0 0
        %3395 = vmatpush1.bf16.msra.mxu0 0
        %3396 = vmatprep.subr.bf16.mxu0 0
        %3397 = vmatpush1.bf16.msra.mxu0 0
        %3398 = vmatprep.subr.bf16.mxu0 0
        %3399 = vmatpush1.bf16.msra.mxu0 0
        %3400 = vmatprep.mubr.bf16.mxu0 0
        %3401 = vmatmul.mubr.bf16.gmra.mrb[0].mxu0 %v3321
        %v3402 = vpop.f32.mrb[0].mxu0
        %v3403 = vadd.f32 0.0, %v3402
        %v3404 = vpop.f32.mrb[0].mxu0
        %v3405 = vpop.f32.mrb[0].mxu0
        %v3406 = vadd.f32 0.0, %v3405
        %v3407 = vpop.f32.mrb[0].mxu0
        %3408 = vmatprep.mubr.bf16.mxu0 0
        %3409 = vmatmul.mubr.bf16.gmra.mrb[0].mxu0 %v3324
        %v3410 = vpop.f32.mrb[0].mxu0
        %v3411 = vadd.f32 0.0, %v3410
        %v3412 = vpop.f32.mrb[0].mxu0
        %v3413 = vpop.f32.mrb[0].mxu0
        %v3414 = vadd.f32 0.0, %v3413
        %v3415 = vpop.f32.mrb[0].mxu0
        %3416 = vmatprep.mubr.bf16.mxu0 0
        %3417 = vmatmul.mubr.bf16.gmra.mrb[0].mxu0 %v3327
        %v3418 = vpop.f32.mrb[0].mxu0
        %v3419 = vadd.f32 0.0, %v3418
        %v3420 = vpop.f32.mrb[0].mxu0
        %v3421 = vpop.f32.mrb[0].mxu0
        %v3422 = vadd.f32 0.0, %v3421
        %v3423 = vpop.f32.mrb[0].mxu0
        %3424 = vmatprep.mubr.bf16.mxu0 0
        %3425 = vmatmul.mubr.bf16.gmra.mrb[0].mxu0 %v3330
        %v3426 = vpop.f32.mrb[0].mxu0
        %v3427 = vadd.f32 0.0, %v3426
        %v3428 = vpop.f32.mrb[0].mxu0
        %v3429 = vpop.f32.mrb[0].mxu0
        %v3430 = vadd.f32 0.0, %v3429
        %v3431 = vpop.f32.mrb[0].mxu0
        %3432 = vmatprep.mubr.bf16.mxu0 0
        %3433 = vmatmul.mubr.bf16.gmra.mrb[0].mxu0 %v3333
        %v3434 = vpop.f32.mrb[0].mxu0
        %v3435 = vadd.f32 0.0, %v3434
        %v3436 = vpop.f32.mrb[0].mxu0
        %v3437 = vpop.f32.mrb[0].mxu0
        %v3438 = vadd.f32 0.0, %v3437
        %v3439 = vpop.f32.mrb[0].mxu0
        %3440 = vmatprep.mubr.bf16.mxu0 0
        %3441 = vmatmul.mubr.bf16.gmra.mrb[0].mxu0 %v3336
        %v3442 = vpop.f32.mrb[0].mxu0
        %v3443 = vadd.f32 0.0, %v3442
        %v3444 = vpop.f32.mrb[0].mxu0
        %v3445 = vpop.f32.mrb[0].mxu0
        %v3446 = vadd.f32 0.0, %v3445
        %v3447 = vpop.f32.mrb[0].mxu0
        %3448 = vmatprep.mubr.bf16.mxu0 0
        %3449 = vmatmul.mubr.bf16.gmra.mrb[0].mxu0 %v3339
        %v3450 = vpop.f32.mrb[0].mxu0
        %v3451 = vadd.f32 0.0, %v3450
        %v3452 = vpop.f32.mrb[0].mxu0
        %v3453 = vpop.f32.mrb[0].mxu0
        %v3454 = vadd.f32 0.0, %v3453
        %v3455 = vpop.f32.mrb[0].mxu0
        %3456 = vmatprep.mubr.bf16.mxu0 0
        %3457 = vmatmul.mubr.bf16.gmra.mrb[0].mxu0 %v3342
        %v3458 = vpop.f32.mrb[0].mxu0
        %v3459 = vadd.f32 0.0, %v3458
        %v3460 = vpop.f32.mrb[0].mxu0
        %v3461 = vpop.f32.mrb[0].mxu0
        %v3462 = vadd.f32 0.0, %v3461
        %v3463 = vpop.f32.mrb[0].mxu0
        %3464 = vmatprep.mubr.bf16.mxu0 0
        %3465 = vmatmul.mubr.bf16.gmra.mrb[0].mxu0 %v3345
        %v3466 = vpop.f32.mrb[0].mxu0
        %v3467 = vadd.f32 0.0, %v3466
        %v3468 = vpop.f32.mrb[0].mxu0
        %v3469 = vpop.f32.mrb[0].mxu0
        %v3470 = vadd.f32 0.0, %v3469
        %v3471 = vpop.f32.mrb[0].mxu0
        %3472 = vmatprep.mubr.bf16.mxu0 0
        %3473 = vmatmul.mubr.bf16.gmra.mrb[0].mxu0 %v3348
        %v3474 = vpop.f32.mrb[0].mxu0
        %v3475 = vadd.f32 0.0, %v3474
        %v3476 = vpop.f32.mrb[0].mxu0
        %v3477 = vpop.f32.mrb[0].mxu0
        %v3478 = vadd.f32 0.0, %v3477
        %v3479 = vpop.f32.mrb[0].mxu0
        %3480 = vmatprep.mubr.bf16.mxu0 0
        %3481 = vmatmul.mubr.bf16.gmra.mrb[0].mxu0 %v3351
        %v3482 = vpop.f32.mrb[0].mxu0
        %v3483 = vadd.f32 0.0, %v3482
        %v3484 = vpop.f32.mrb[0].mxu0
        %v3485 = vpop.f32.mrb[0].mxu0
        %v3486 = vadd.f32 0.0, %v3485
        %v3487 = vpop.f32.mrb[0].mxu0
        %3488 = vmatprep.mubr.bf16.mxu0 0
        %3489 = vmatmul.mubr.bf16.gmra.mrb[0].mxu0 %v3354
        %v3490 = vpop.f32.mrb[0].mxu0
        %v3491 = vadd.f32 0.0, %v3490
        %v3492 = vpop.f32.mrb[0].mxu0
        %v3493 = vpop.f32.mrb[0].mxu0
        %v3494 = vadd.f32 0.0, %v3493
        %v3495 = vpop.f32.mrb[0].mxu0
        %3496 = vmatprep.mubr.bf16.mxu0 0
        %3497 = vmatmul.mubr.bf16.gmra.mrb[0].mxu0 %v3357
        %v3498 = vpop.f32.mrb[0].mxu0
        %v3499 = vadd.f32 0.0, %v3498
        %v3500 = vpop.f32.mrb[0].mxu0
        %v3501 = vpop.f32.mrb[0].mxu0
        %v3502 = vadd.f32 0.0, %v3501
        %v3503 = vpop.f32.mrb[0].mxu0
        %3504 = vmatprep.mubr.bf16.mxu0 0
        %3505 = vmatmul.mubr.bf16.gmra.mrb[0].mxu0 %v3360
        %v3506 = vpop.f32.mrb[0].mxu0
        %v3507 = vadd.f32 0.0, %v3506
        %v3508 = vpop.f32.mrb[0].mxu0
        %v3509 = vpop.f32.mrb[0].mxu0
        %v3510 = vadd.f32 0.0, %v3509
        %v3511 = vpop.f32.mrb[0].mxu0
        %3512 = vmatprep.mubr.bf16.mxu0 0
        %3513 = vmatmul.mubr.bf16.gmra.mrb[0].mxu0 %v3363
        %v3514 = vpop.f32.mrb[0].mxu0
        %v3515 = vadd.f32 0.0, %v3514
        %v3516 = vpop.f32.mrb[0].mxu0
        %v3517 = vpop.f32.mrb[0].mxu0
        %v3518 = vadd.f32 0.0, %v3517
        %v3519 = vpop.f32.mrb[0].mxu0
        %3520 = vmatprep.mubr.bf16.mxu0 0
        %3521 = vmatmul.mubr.bf16.gmra.mrb[0].mxu0 %v3366
        %v3522 = vpop.f32.mrb[0].mxu0
        %v3523 = vadd.f32 0.0, %v3522
        %v3524 = vpop.f32.mrb[0].mxu0
        %v3525 = vpop.f32.mrb[0].mxu0
        %v3526 = vadd.f32 0.0, %v3525
        %v3527 = vpop.f32.mrb[0].mxu0
        %3528 = vdwg.mxu0
        %v3529 = vadd.f32 %v3240, %v3403
        %v3530 = vadd.f32 %v3241, %v3406
        %v3531 = vadd.f32 %v3242, %v3411
        %v3532 = vadd.f32 %v3243, %v3414
        %v3533 = vadd.f32 %v3244, %v3419
        %v3534 = vadd.f32 %v3245, %v3422
        %v3535 = vadd.f32 %v3246, %v3427
        %v3536 = vadd.f32 %v3247, %v3430
        %v3537 = vadd.f32 %v3248, %v3435
        %v3538 = vadd.f32 %v3249, %v3438
        %v3539 = vadd.f32 %v3250, %v3443
        %v3540 = vadd.f32 %v3251, %v3446
        %v3541 = vadd.f32 %v3252, %v3451
        %v3542 = vadd.f32 %v3253, %v3454
        %v3543 = vadd.f32 %v3254, %v3459
        %v3544 = vadd.f32 %v3255, %v3462
        %v3545 = vadd.f32 %v3256, %v3467
        %v3546 = vadd.f32 %v3257, %v3470
        %v3547 = vadd.f32 %v3258, %v3475
        %v3548 = vadd.f32 %v3259, %v3478
        %v3549 = vadd.f32 %v3260, %v3483
        %v3550 = vadd.f32 %v3261, %v3486
        %v3551 = vadd.f32 %v3262, %v3491
        %v3552 = vadd.f32 %v3263, %v3494
        %v3553 = vadd.f32 %v3264, %v3499
        %v3554 = vadd.f32 %v3265, %v3502
        %v3555 = vadd.f32 %v3266, %v3507
        %v3556 = vadd.f32 %v3267, %v3510
        %v3557 = vadd.f32 %v3268, %v3515
        %v3558 = vadd.f32 %v3269, %v3518
        %v3559 = vadd.f32 %v3270, %v3523
        %v3560 = vadd.f32 %v3271, %v3526
        %v3561 = vld [vmem:[%s2982 + $0x2] sm:$0xff]
        %v3562 = vld [vmem:[%s2982 + $0xa] sm:$0xff]
        %v3563 = vld [vmem:[%s2982 + $0x1a] sm:$0xff]
        %v3564 = vld [vmem:[%s2982 + $0x22] sm:$0xff]
        %v3565 = vld [vmem:[%s2982 + $0x32] sm:$0xff]
        %v3566 = vld [vmem:[%s2982 + $0x3a] sm:$0xff]
        %v3567 = vld [vmem:[%s2982 + $0x4a] sm:$0xff]
        %v3568 = vld [vmem:[%s2982 + $0x52] sm:$0xff]
        %v3569 = vld [vmem:[%s2982 + $0x62] sm:$0xff]
        %v3570 = vld [vmem:[%s2982 + $0x6a] sm:$0xff]
        %v3571 = vld [vmem:[%s2982 + $0x7a] sm:$0xff]
        %v3572 = vld [vmem:[%s2982 + $0x82] sm:$0xff]
        %v3573 = vld [vmem:[%s2982 + $0x92] sm:$0xff]
        %v3574 = vld [vmem:[%s2982 + $0x9a] sm:$0xff]
        %v3575 = vld [vmem:[%s2982 + $0xaa] sm:$0xff]
        %v3576 = vld [vmem:[%s2982 + $0xb2] sm:$0xff]
        %v3577 = vld [vmem:[%s2982 + $0xc2] sm:$0xff]
        %v3578 = vld [vmem:[%s2982 + $0xca] sm:$0xff]
        %v3579 = vld [vmem:[%s2982 + $0xda] sm:$0xff]
        %v3580 = vld [vmem:[%s2982 + $0xe2] sm:$0xff]
        %v3581 = vld [vmem:[%s2982 + $0xf2] sm:$0xff]
        %v3582 = vld [vmem:[%s2982 + $0xfa] sm:$0xff]
        %v3583 = vld [vmem:[%s2982 + $0x10a] sm:$0xff]
        %v3584 = vld [vmem:[%s2982 + $0x112] sm:$0xff]
        %v3585 = vld [vmem:[%s2982 + $0x122] sm:$0xff]
        %v3586 = vld [vmem:[%s2982 + $0x12a] sm:$0xff]
        %v3587 = vld [vmem:[%s2982 + $0x13a] sm:$0xff]
        %v3588 = vld [vmem:[%s2982 + $0x142] sm:$0xff]
        %v3589 = vld [vmem:[%s2982 + $0x152] sm:$0xff]
        %v3590 = vld [vmem:[%s2982 + $0x15a] sm:$0xff]
        %v3591 = vld [vmem:[%s2982 + $0x16a] sm:$0xff]
        %v3592 = vld [vmem:[%s2982 + $0x172] sm:$0xff]
        %v3593 = vpack.c.bf16 %v3562, %v3561
        %v3594 = vpack.c.bf16 %v3564, %v3563
        %v3595 = vpack.c.bf16 %v3566, %v3565
        %v3596 = vpack.c.bf16 %v3568, %v3567
        %v3597 = vpack.c.bf16 %v3570, %v3569
        %v3598 = vpack.c.bf16 %v3572, %v3571
        %v3599 = vpack.c.bf16 %v3574, %v3573
        %v3600 = vpack.c.bf16 %v3576, %v3575
        %v3601 = vpack.c.bf16 %v3578, %v3577
        %v3602 = vpack.c.bf16 %v3580, %v3579
        %v3603 = vpack.c.bf16 %v3582, %v3581
        %v3604 = vpack.c.bf16 %v3584, %v3583
        %v3605 = vpack.c.bf16 %v3586, %v3585
        %v3606 = vpack.c.bf16 %v3588, %v3587
        %v3607 = vpack.c.bf16 %v3590, %v3589
        %v3608 = vpack.c.bf16 %v3592, %v3591
        %v3610 = vsel %vm279, %v3593, 0
        %v3613 = vsel %vm279, %v3594, 0
        %v3616 = vsel %vm279, %v3595, 0
        %v3619 = vsel %vm279, %v3596, 0
        %v3622 = vsel %vm279, %v3597, 0
        %v3625 = vsel %vm279, %v3598, 0
        %v3628 = vsel %vm279, %v3599, 0
        %v3631 = vsel %vm279, %v3600, 0
        %v3634 = vsel %vm279, %v3601, 0
        %v3637 = vsel %vm279, %v3602, 0
        %v3640 = vsel %vm279, %v3603, 0
        %v3643 = vsel %vm279, %v3604, 0
        %v3646 = vsel %vm279, %v3605, 0
        %v3649 = vsel %vm279, %v3606, 0
        %v3652 = vsel %vm279, %v3607, 0
        %v3655 = vsel %vm279, %v3608, 0
        %3657 = vmatprep.subr.bf16.mxu0 0
        %3658 = vmatpush1.bf16.msra.mxu0 %v918
        %3659 = vmatprep.subr.bf16.mxu0 0
        %3660 = vmatpush1.bf16.msra.mxu0 0
        %3661 = vmatprep.subr.bf16.mxu0 0
        %3662 = vmatpush1.bf16.msra.mxu0 0
        %3663 = vmatprep.subr.bf16.mxu0 0
        %3664 = vmatpush1.bf16.msra.mxu0 0
        %3665 = vmatprep.subr.bf16.mxu0 0
        %3666 = vmatpush1.bf16.msra.mxu0 0
        %3667 = vmatprep.subr.bf16.mxu0 0
        %3668 = vmatpush1.bf16.msra.mxu0 0
        %3669 = vmatprep.subr.bf16.mxu0 0
        %3670 = vmatpush1.bf16.msra.mxu0 0
        %3671 = vmatprep.subr.bf16.mxu0 0
        %3672 = vmatpush1.bf16.msra.mxu0 0
        %3673 = vmatprep.subr.bf16.mxu0 0
        %3674 = vmatpush1.bf16.msra.mxu0 0
        %3675 = vmatprep.subr.bf16.mxu0 0
        %3676 = vmatpush1.bf16.msra.mxu0 0
        %3677 = vmatprep.subr.bf16.mxu0 0
        %3678 = vmatpush1.bf16.msra.mxu0 0
        %3679 = vmatprep.subr.bf16.mxu0 0
        %3680 = vmatpush1.bf16.msra.mxu0 0
        %3681 = vmatprep.subr.bf16.mxu0 0
        %3682 = vmatpush1.bf16.msra.mxu0 0
        %3683 = vmatprep.subr.bf16.mxu0 0
        %3684 = vmatpush1.bf16.msra.mxu0 0
        %3685 = vmatprep.subr.bf16.mxu0 0
        %3686 = vmatpush1.bf16.msra.mxu0 0
        %3687 = vmatprep.subr.bf16.mxu0 0
        %3688 = vmatpush1.bf16.msra.mxu0 0
        %3689 = vmatprep.mubr.bf16.mxu0 0
        %3690 = vmatmul.mubr.bf16.gmra.mrb[0].mxu0 %v3610
        %v3691 = vpop.f32.mrb[0].mxu0
        %v3692 = vadd.f32 0.0, %v3691
        %v3693 = vpop.f32.mrb[0].mxu0
        %v3694 = vpop.f32.mrb[0].mxu0
        %v3695 = vadd.f32 0.0, %v3694
        %v3696 = vpop.f32.mrb[0].mxu0
        %3697 = vmatprep.mubr.bf16.mxu0 0
        %3698 = vmatmul.mubr.bf16.gmra.mrb[0].mxu0 %v3613
        %v3699 = vpop.f32.mrb[0].mxu0
        %v3700 = vadd.f32 0.0, %v3699
        %v3701 = vpop.f32.mrb[0].mxu0
        %v3702 = vpop.f32.mrb[0].mxu0
        %v3703 = vadd.f32 0.0, %v3702
        %v3704 = vpop.f32.mrb[0].mxu0
        %3705 = vmatprep.mubr.bf16.mxu0 0
        %3706 = vmatmul.mubr.bf16.gmra.mrb[0].mxu0 %v3616
        %v3707 = vpop.f32.mrb[0].mxu0
        %v3708 = vadd.f32 0.0, %v3707
        %v3709 = vpop.f32.mrb[0].mxu0
        %v3710 = vpop.f32.mrb[0].mxu0
        %v3711 = vadd.f32 0.0, %v3710
        %v3712 = vpop.f32.mrb[0].mxu0
        %3713 = vmatprep.mubr.bf16.mxu0 0
        %3714 = vmatmul.mubr.bf16.gmra.mrb[0].mxu0 %v3619
        %v3715 = vpop.f32.mrb[0].mxu0
        %v3716 = vadd.f32 0.0, %v3715
        %v3717 = vpop.f32.mrb[0].mxu0
        %v3718 = vpop.f32.mrb[0].mxu0
        %v3719 = vadd.f32 0.0, %v3718
        %v3720 = vpop.f32.mrb[0].mxu0
        %3721 = vmatprep.mubr.bf16.mxu0 0
        %3722 = vmatmul.mubr.bf16.gmra.mrb[0].mxu0 %v3622
        %v3723 = vpop.f32.mrb[0].mxu0
        %v3724 = vadd.f32 0.0, %v3723
        %v3725 = vpop.f32.mrb[0].mxu0
        %v3726 = vpop.f32.mrb[0].mxu0
        %v3727 = vadd.f32 0.0, %v3726
        %v3728 = vpop.f32.mrb[0].mxu0
        %3729 = vmatprep.mubr.bf16.mxu0 0
        %3730 = vmatmul.mubr.bf16.gmra.mrb[0].mxu0 %v3625
        %v3731 = vpop.f32.mrb[0].mxu0
        %v3732 = vadd.f32 0.0, %v3731
        %v3733 = vpop.f32.mrb[0].mxu0
        %v3734 = vpop.f32.mrb[0].mxu0
        %v3735 = vadd.f32 0.0, %v3734
        %v3736 = vpop.f32.mrb[0].mxu0
        %3737 = vmatprep.mubr.bf16.mxu0 0
        %3738 = vmatmul.mubr.bf16.gmra.mrb[0].mxu0 %v3628
        %v3739 = vpop.f32.mrb[0].mxu0
        %v3740 = vadd.f32 0.0, %v3739
        %v3741 = vpop.f32.mrb[0].mxu0
        %v3742 = vpop.f32.mrb[0].mxu0
        %v3743 = vadd.f32 0.0, %v3742
        %v3744 = vpop.f32.mrb[0].mxu0
        %3745 = vmatprep.mubr.bf16.mxu0 0
        %3746 = vmatmul.mubr.bf16.gmra.mrb[0].mxu0 %v3631
        %v3747 = vpop.f32.mrb[0].mxu0
        %v3748 = vadd.f32 0.0, %v3747
        %v3749 = vpop.f32.mrb[0].mxu0
        %v3750 = vpop.f32.mrb[0].mxu0
        %v3751 = vadd.f32 0.0, %v3750
        %v3752 = vpop.f32.mrb[0].mxu0
        %3753 = vmatprep.mubr.bf16.mxu0 0
        %3754 = vmatmul.mubr.bf16.gmra.mrb[0].mxu0 %v3634
        %v3755 = vpop.f32.mrb[0].mxu0
        %v3756 = vadd.f32 0.0, %v3755
        %v3757 = vpop.f32.mrb[0].mxu0
        %v3758 = vpop.f32.mrb[0].mxu0
        %v3759 = vadd.f32 0.0, %v3758
        %v3760 = vpop.f32.mrb[0].mxu0
        %3761 = vmatprep.mubr.bf16.mxu0 0
        %3762 = vmatmul.mubr.bf16.gmra.mrb[0].mxu0 %v3637
        %v3763 = vpop.f32.mrb[0].mxu0
        %v3764 = vadd.f32 0.0, %v3763
        %v3765 = vpop.f32.mrb[0].mxu0
        %v3766 = vpop.f32.mrb[0].mxu0
        %v3767 = vadd.f32 0.0, %v3766
        %v3768 = vpop.f32.mrb[0].mxu0
        %3769 = vmatprep.mubr.bf16.mxu0 0
        %3770 = vmatmul.mubr.bf16.gmra.mrb[0].mxu0 %v3640
        %v3771 = vpop.f32.mrb[0].mxu0
        %v3772 = vadd.f32 0.0, %v3771
        %v3773 = vpop.f32.mrb[0].mxu0
        %v3774 = vpop.f32.mrb[0].mxu0
        %v3775 = vadd.f32 0.0, %v3774
        %v3776 = vpop.f32.mrb[0].mxu0
        %3777 = vmatprep.mubr.bf16.mxu0 0
        %3778 = vmatmul.mubr.bf16.gmra.mrb[0].mxu0 %v3643
        %v3779 = vpop.f32.mrb[0].mxu0
        %v3780 = vadd.f32 0.0, %v3779
        %v3781 = vpop.f32.mrb[0].mxu0
        %v3782 = vpop.f32.mrb[0].mxu0
        %v3783 = vadd.f32 0.0, %v3782
        %v3784 = vpop.f32.mrb[0].mxu0
        %3785 = vmatprep.mubr.bf16.mxu0 0
        %3786 = vmatmul.mubr.bf16.gmra.mrb[0].mxu0 %v3646
        %v3787 = vpop.f32.mrb[0].mxu0
        %v3788 = vadd.f32 0.0, %v3787
        %v3789 = vpop.f32.mrb[0].mxu0
        %v3790 = vpop.f32.mrb[0].mxu0
        %v3791 = vadd.f32 0.0, %v3790
        %v3792 = vpop.f32.mrb[0].mxu0
        %3793 = vmatprep.mubr.bf16.mxu0 0
        %3794 = vmatmul.mubr.bf16.gmra.mrb[0].mxu0 %v3649
        %v3795 = vpop.f32.mrb[0].mxu0
        %v3796 = vadd.f32 0.0, %v3795
        %v3797 = vpop.f32.mrb[0].mxu0
        %v3798 = vpop.f32.mrb[0].mxu0
        %v3799 = vadd.f32 0.0, %v3798
        %v3800 = vpop.f32.mrb[0].mxu0
        %3801 = vmatprep.mubr.bf16.mxu0 0
        %3802 = vmatmul.mubr.bf16.gmra.mrb[0].mxu0 %v3652
        %v3803 = vpop.f32.mrb[0].mxu0
        %v3804 = vadd.f32 0.0, %v3803
        %v3805 = vpop.f32.mrb[0].mxu0
        %v3806 = vpop.f32.mrb[0].mxu0
        %v3807 = vadd.f32 0.0, %v3806
        %v3808 = vpop.f32.mrb[0].mxu0
        %3809 = vmatprep.mubr.bf16.mxu0 0
        %3810 = vmatmul.mubr.bf16.gmra.mrb[0].mxu0 %v3655
        %v3811 = vpop.f32.mrb[0].mxu0
        %v3812 = vadd.f32 0.0, %v3811
        %v3813 = vpop.f32.mrb[0].mxu0
        %v3814 = vpop.f32.mrb[0].mxu0
        %v3815 = vadd.f32 0.0, %v3814
        %v3816 = vpop.f32.mrb[0].mxu0
        %3817 = vdwg.mxu0
        %v3818 = vadd.f32 %v3529, %v3692
        %v3819 = vadd.f32 %v3530, %v3695
        %v3820 = vadd.f32 %v3531, %v3700
        %v3821 = vadd.f32 %v3532, %v3703
        %v3822 = vadd.f32 %v3533, %v3708
        %v3823 = vadd.f32 %v3534, %v3711
        %v3824 = vadd.f32 %v3535, %v3716
        %v3825 = vadd.f32 %v3536, %v3719
        %v3826 = vadd.f32 %v3537, %v3724
        %v3827 = vadd.f32 %v3538, %v3727
        %v3828 = vadd.f32 %v3539, %v3732
        %v3829 = vadd.f32 %v3540, %v3735
        %v3830 = vadd.f32 %v3541, %v3740
        %v3831 = vadd.f32 %v3542, %v3743
        %v3832 = vadd.f32 %v3543, %v3748
        %v3833 = vadd.f32 %v3544, %v3751
        %v3834 = vadd.f32 %v3545, %v3756
        %v3835 = vadd.f32 %v3546, %v3759
        %v3836 = vadd.f32 %v3547, %v3764
        %v3837 = vadd.f32 %v3548, %v3767
        %v3838 = vadd.f32 %v3549, %v3772
        %v3839 = vadd.f32 %v3550, %v3775
        %v3840 = vadd.f32 %v3551, %v3780
        %v3841 = vadd.f32 %v3552, %v3783
        %v3842 = vadd.f32 %v3553, %v3788
        %v3843 = vadd.f32 %v3554, %v3791
        %v3844 = vadd.f32 %v3555, %v3796
        %v3845 = vadd.f32 %v3556, %v3799
        %v3846 = vadd.f32 %v3557, %v3804
        %v3847 = vadd.f32 %v3558, %v3807
        %v3848 = vadd.f32 %v3559, %v3812
        %v3849 = vadd.f32 %v3560, %v3815
        %s3850 = scalar_lea.vmem %s221, 456
        %v3851 = vld [vmem:[%s3850] sm:$0xff]
        %v3852 = vld [vmem:[%s3850 + $0x8] sm:$0xff]
        %v3853 = vld [vmem:[%s3850 + $0x18] sm:$0xff]
        %v3854 = vld [vmem:[%s3850 + $0x20] sm:$0xff]
        %v3855 = vld [vmem:[%s3850 + $0x30] sm:$0xff]
        %v3856 = vld [vmem:[%s3850 + $0x38] sm:$0xff]
        %v3857 = vld [vmem:[%s3850 + $0x48] sm:$0xff]
        %v3858 = vld [vmem:[%s3850 + $0x50] sm:$0xff]
        %v3859 = vld [vmem:[%s3850 + $0x60] sm:$0xff]
        %v3860 = vld [vmem:[%s3850 + $0x68] sm:$0xff]
        %v3861 = vld [vmem:[%s3850 + $0x78] sm:$0xff]
        %v3862 = vld [vmem:[%s3850 + $0x80] sm:$0xff]
        %v3863 = vld [vmem:[%s3850 + $0x90] sm:$0xff]
        %v3864 = vld [vmem:[%s3850 + $0x98] sm:$0xff]
        %v3865 = vld [vmem:[%s3850 + $0xa8] sm:$0xff]
        %v3866 = vld [vmem:[%s3850 + $0xb0] sm:$0xff]
        %v3867 = vld [vmem:[%s3850 + $0xc0] sm:$0xff]
        %v3868 = vld [vmem:[%s3850 + $0xc8] sm:$0xff]
        %v3869 = vld [vmem:[%s3850 + $0xd8] sm:$0xff]
        %v3870 = vld [vmem:[%s3850 + $0xe0] sm:$0xff]
        %v3871 = vld [vmem:[%s3850 + $0xf0] sm:$0xff]
        %v3872 = vld [vmem:[%s3850 + $0xf8] sm:$0xff]
        %v3873 = vld [vmem:[%s3850 + $0x108] sm:$0xff]
        %v3874 = vld [vmem:[%s3850 + $0x110] sm:$0xff]
        %v3875 = vld [vmem:[%s3850 + $0x120] sm:$0xff]
        %v3876 = vld [vmem:[%s3850 + $0x128] sm:$0xff]
        %v3877 = vld [vmem:[%s3850 + $0x138] sm:$0xff]
        %v3878 = vld [vmem:[%s3850 + $0x140] sm:$0xff]
        %v3879 = vld [vmem:[%s3850 + $0x150] sm:$0xff]
        %v3880 = vld [vmem:[%s3850 + $0x158] sm:$0xff]
        %v3881 = vld [vmem:[%s3850 + $0x168] sm:$0xff]
        %v3882 = vld [vmem:[%s3850 + $0x170] sm:$0xff]
        %v3883 = vpack.c.bf16 %v3852, %v3851
        %v3884 = vpack.c.bf16 %v3854, %v3853
        %v3885 = vpack.c.bf16 %v3856, %v3855
        %v3886 = vpack.c.bf16 %v3858, %v3857
        %v3887 = vpack.c.bf16 %v3860, %v3859
        %v3888 = vpack.c.bf16 %v3862, %v3861
        %v3889 = vpack.c.bf16 %v3864, %v3863
        %v3890 = vpack.c.bf16 %v3866, %v3865
        %v3891 = vpack.c.bf16 %v3868, %v3867
        %v3892 = vpack.c.bf16 %v3870, %v3869
        %v3893 = vpack.c.bf16 %v3872, %v3871
        %v3894 = vpack.c.bf16 %v3874, %v3873
        %v3895 = vpack.c.bf16 %v3876, %v3875
        %v3896 = vpack.c.bf16 %v3878, %v3877
        %v3897 = vpack.c.bf16 %v3880, %v3879
        %v3898 = vpack.c.bf16 %v3882, %v3881
        %v3900 = vsel %vm279, %v3883, 0
        %v3903 = vsel %vm279, %v3884, 0
        %v3906 = vsel %vm279, %v3885, 0
        %v3909 = vsel %vm279, %v3886, 0
        %v3912 = vsel %vm279, %v3887, 0
        %v3915 = vsel %vm279, %v3888, 0
        %v3918 = vsel %vm279, %v3889, 0
        %v3921 = vsel %vm279, %v3890, 0
        %v3924 = vsel %vm279, %v3891, 0
        %v3927 = vsel %vm279, %v3892, 0
        %v3930 = vsel %vm279, %v3893, 0
        %v3933 = vsel %vm279, %v3894, 0
        %v3936 = vsel %vm279, %v3895, 0
        %v3939 = vsel %vm279, %v3896, 0
        %v3942 = vsel %vm279, %v3897, 0
        %v3945 = vsel %vm279, %v3898, 0
        %3947 = vmatprep.subr.bf16.mxu0 0
        %3948 = vmatpush1.bf16.msra.mxu0 %v1213
        %3949 = vmatprep.subr.bf16.mxu0 0
        %3950 = vmatpush1.bf16.msra.mxu0 0
        %3951 = vmatprep.subr.bf16.mxu0 0
        %3952 = vmatpush1.bf16.msra.mxu0 0
        %3953 = vmatprep.subr.bf16.mxu0 0
        %3954 = vmatpush1.bf16.msra.mxu0 0
        %3955 = vmatprep.subr.bf16.mxu0 0
        %3956 = vmatpush1.bf16.msra.mxu0 0
        %3957 = vmatprep.subr.bf16.mxu0 0
        %3958 = vmatpush1.bf16.msra.mxu0 0
        %3959 = vmatprep.subr.bf16.mxu0 0
        %3960 = vmatpush1.bf16.msra.mxu0 0
        %3961 = vmatprep.subr.bf16.mxu0 0
        %3962 = vmatpush1.bf16.msra.mxu0 0
        %3963 = vmatprep.subr.bf16.mxu0 0
        %3964 = vmatpush1.bf16.msra.mxu0 0
        %3965 = vmatprep.subr.bf16.mxu0 0
        %3966 = vmatpush1.bf16.msra.mxu0 0
        %3967 = vmatprep.subr.bf16.mxu0 0
        %3968 = vmatpush1.bf16.msra.mxu0 0
        %3969 = vmatprep.subr.bf16.mxu0 0
        %3970 = vmatpush1.bf16.msra.mxu0 0
        %3971 = vmatprep.subr.bf16.mxu0 0
        %3972 = vmatpush1.bf16.msra.mxu0 0
        %3973 = vmatprep.subr.bf16.mxu0 0
        %3974 = vmatpush1.bf16.msra.mxu0 0
        %3975 = vmatprep.subr.bf16.mxu0 0
        %3976 = vmatpush1.bf16.msra.mxu0 0
        %3977 = vmatprep.subr.bf16.mxu0 0
        %3978 = vmatpush1.bf16.msra.mxu0 0
        %3979 = vmatprep.mubr.bf16.mxu0 0
        %3980 = vmatmul.mubr.bf16.gmra.mrb[0].mxu0 %v3900
        %v3981 = vpop.f32.mrb[0].mxu0
        %v3982 = vadd.f32 0.0, %v3981
        %v3983 = vpop.f32.mrb[0].mxu0
        %v3984 = vpop.f32.mrb[0].mxu0
        %v3985 = vadd.f32 0.0, %v3984
        %v3986 = vpop.f32.mrb[0].mxu0
        %3987 = vmatprep.mubr.bf16.mxu0 0
        %3988 = vmatmul.mubr.bf16.gmra.mrb[0].mxu0 %v3903
        %v3989 = vpop.f32.mrb[0].mxu0
        %v3990 = vadd.f32 0.0, %v3989
        %v3991 = vpop.f32.mrb[0].mxu0
        %v3992 = vpop.f32.mrb[0].mxu0
        %v3993 = vadd.f32 0.0, %v3992
        %v3994 = vpop.f32.mrb[0].mxu0
        %3995 = vmatprep.mubr.bf16.mxu0 0
        %3996 = vmatmul.mubr.bf16.gmra.mrb[0].mxu0 %v3906
        %v3997 = vpop.f32.mrb[0].mxu0
        %v3998 = vadd.f32 0.0, %v3997
        %v3999 = vpop.f32.mrb[0].mxu0
        %v4000 = vpop.f32.mrb[0].mxu0
        %v4001 = vadd.f32 0.0, %v4000
        %v4002 = vpop.f32.mrb[0].mxu0
        %4003 = vmatprep.mubr.bf16.mxu0 0
        %4004 = vmatmul.mubr.bf16.gmra.mrb[0].mxu0 %v3909
        %v4005 = vpop.f32.mrb[0].mxu0
        %v4006 = vadd.f32 0.0, %v4005
        %v4007 = vpop.f32.mrb[0].mxu0
        %v4008 = vpop.f32.mrb[0].mxu0
        %v4009 = vadd.f32 0.0, %v4008
        %v4010 = vpop.f32.mrb[0].mxu0
        %4011 = vmatprep.mubr.bf16.mxu0 0
        %4012 = vmatmul.mubr.bf16.gmra.mrb[0].mxu0 %v3912
        %v4013 = vpop.f32.mrb[0].mxu0
        %v4014 = vadd.f32 0.0, %v4013
        %v4015 = vpop.f32.mrb[0].mxu0
        %v4016 = vpop.f32.mrb[0].mxu0
        %v4017 = vadd.f32 0.0, %v4016
        %v4018 = vpop.f32.mrb[0].mxu0
        %4019 = vmatprep.mubr.bf16.mxu0 0
        %4020 = vmatmul.mubr.bf16.gmra.mrb[0].mxu0 %v3915
        %v4021 = vpop.f32.mrb[0].mxu0
        %v4022 = vadd.f32 0.0, %v4021
        %v4023 = vpop.f32.mrb[0].mxu0
        %v4024 = vpop.f32.mrb[0].mxu0
        %v4025 = vadd.f32 0.0, %v4024
        %v4026 = vpop.f32.mrb[0].mxu0
        %4027 = vmatprep.mubr.bf16.mxu0 0
        %4028 = vmatmul.mubr.bf16.gmra.mrb[0].mxu0 %v3918
        %v4029 = vpop.f32.mrb[0].mxu0
        %v4030 = vadd.f32 0.0, %v4029
        %v4031 = vpop.f32.mrb[0].mxu0
        %v4032 = vpop.f32.mrb[0].mxu0
        %v4033 = vadd.f32 0.0, %v4032
        %v4034 = vpop.f32.mrb[0].mxu0
        %4035 = vmatprep.mubr.bf16.mxu0 0
        %4036 = vmatmul.mubr.bf16.gmra.mrb[0].mxu0 %v3921
        %v4037 = vpop.f32.mrb[0].mxu0
        %v4038 = vadd.f32 0.0, %v4037
        %v4039 = vpop.f32.mrb[0].mxu0
        %v4040 = vpop.f32.mrb[0].mxu0
        %v4041 = vadd.f32 0.0, %v4040
        %v4042 = vpop.f32.mrb[0].mxu0
        %4043 = vmatprep.mubr.bf16.mxu0 0
        %4044 = vmatmul.mubr.bf16.gmra.mrb[0].mxu0 %v3924
        %v4045 = vpop.f32.mrb[0].mxu0
        %v4046 = vadd.f32 0.0, %v4045
        %v4047 = vpop.f32.mrb[0].mxu0
        %v4048 = vpop.f32.mrb[0].mxu0
        %v4049 = vadd.f32 0.0, %v4048
        %v4050 = vpop.f32.mrb[0].mxu0
        %4051 = vmatprep.mubr.bf16.mxu0 0
        %4052 = vmatmul.mubr.bf16.gmra.mrb[0].mxu0 %v3927
        %v4053 = vpop.f32.mrb[0].mxu0
        %v4054 = vadd.f32 0.0, %v4053
        %v4055 = vpop.f32.mrb[0].mxu0
        %v4056 = vpop.f32.mrb[0].mxu0
        %v4057 = vadd.f32 0.0, %v4056
        %v4058 = vpop.f32.mrb[0].mxu0
        %4059 = vmatprep.mubr.bf16.mxu0 0
        %4060 = vmatmul.mubr.bf16.gmra.mrb[0].mxu0 %v3930
        %v4061 = vpop.f32.mrb[0].mxu0
        %v4062 = vadd.f32 0.0, %v4061
        %v4063 = vpop.f32.mrb[0].mxu0
        %v4064 = vpop.f32.mrb[0].mxu0
        %v4065 = vadd.f32 0.0, %v4064
        %v4066 = vpop.f32.mrb[0].mxu0
        %4067 = vmatprep.mubr.bf16.mxu0 0
        %4068 = vmatmul.mubr.bf16.gmra.mrb[0].mxu0 %v3933
        %v4069 = vpop.f32.mrb[0].mxu0
        %v4070 = vadd.f32 0.0, %v4069
        %v4071 = vpop.f32.mrb[0].mxu0
        %v4072 = vpop.f32.mrb[0].mxu0
        %v4073 = vadd.f32 0.0, %v4072
        %v4074 = vpop.f32.mrb[0].mxu0
        %4075 = vmatprep.mubr.bf16.mxu0 0
        %4076 = vmatmul.mubr.bf16.gmra.mrb[0].mxu0 %v3936
        %v4077 = vpop.f32.mrb[0].mxu0
        %v4078 = vadd.f32 0.0, %v4077
        %v4079 = vpop.f32.mrb[0].mxu0
        %v4080 = vpop.f32.mrb[0].mxu0
        %v4081 = vadd.f32 0.0, %v4080
        %v4082 = vpop.f32.mrb[0].mxu0
        %4083 = vmatprep.mubr.bf16.mxu0 0
        %4084 = vmatmul.mubr.bf16.gmra.mrb[0].mxu0 %v3939
        %v4085 = vpop.f32.mrb[0].mxu0
        %v4086 = vadd.f32 0.0, %v4085
        %v4087 = vpop.f32.mrb[0].mxu0
        %v4088 = vpop.f32.mrb[0].mxu0
        %v4089 = vadd.f32 0.0, %v4088
        %v4090 = vpop.f32.mrb[0].mxu0
        %4091 = vmatprep.mubr.bf16.mxu0 0
        %4092 = vmatmul.mubr.bf16.gmra.mrb[0].mxu0 %v3942
        %v4093 = vpop.f32.mrb[0].mxu0
        %v4094 = vadd.f32 0.0, %v4093
        %v4095 = vpop.f32.mrb[0].mxu0
        %v4096 = vpop.f32.mrb[0].mxu0
        %v4097 = vadd.f32 0.0, %v4096
        %v4098 = vpop.f32.mrb[0].mxu0
        %4099 = vmatprep.mubr.bf16.mxu0 0
        %4100 = vmatmul.mubr.bf16.gmra.mrb[0].mxu0 %v3945
        %v4101 = vpop.f32.mrb[0].mxu0
        %v4102 = vadd.f32 0.0, %v4101
        %v4103 = vpop.f32.mrb[0].mxu0
        %v4104 = vpop.f32.mrb[0].mxu0
        %v4105 = vadd.f32 0.0, %v4104
        %v4106 = vpop.f32.mrb[0].mxu0
        %4107 = vdwg.mxu0
        %v4108 = vadd.f32 %v3818, %v3982
        %v4109 = vadd.f32 %v3819, %v3985
        %v4110 = vadd.f32 %v3820, %v3990
        %v4111 = vadd.f32 %v3821, %v3993
        %v4112 = vadd.f32 %v3822, %v3998
        %v4113 = vadd.f32 %v3823, %v4001
        %v4114 = vadd.f32 %v3824, %v4006
        %v4115 = vadd.f32 %v3825, %v4009
        %v4116 = vadd.f32 %v3826, %v4014
        %v4117 = vadd.f32 %v3827, %v4017
        %v4118 = vadd.f32 %v3828, %v4022
        %v4119 = vadd.f32 %v3829, %v4025
        %v4120 = vadd.f32 %v3830, %v4030
        %v4121 = vadd.f32 %v3831, %v4033
        %v4122 = vadd.f32 %v3832, %v4038
        %v4123 = vadd.f32 %v3833, %v4041
        %v4124 = vadd.f32 %v3834, %v4046
        %v4125 = vadd.f32 %v3835, %v4049
        %v4126 = vadd.f32 %v3836, %v4054
        %v4127 = vadd.f32 %v3837, %v4057
        %v4128 = vadd.f32 %v3838, %v4062
        %v4129 = vadd.f32 %v3839, %v4065
        %v4130 = vadd.f32 %v3840, %v4070
        %v4131 = vadd.f32 %v3841, %v4073
        %v4132 = vadd.f32 %v3842, %v4078
        %v4133 = vadd.f32 %v3843, %v4081
        %v4134 = vadd.f32 %v3844, %v4086
        %v4135 = vadd.f32 %v3845, %v4089
        %v4136 = vadd.f32 %v3846, %v4094
        %v4137 = vadd.f32 %v3847, %v4097
        %v4138 = vadd.f32 %v3848, %v4102
        %v4139 = vadd.f32 %v3849, %v4105
        %v4140 = vld [vmem:[%s3850 + $0x1] sm:$0xff]
        %v4141 = vld [vmem:[%s3850 + $0x9] sm:$0xff]
        %v4142 = vld [vmem:[%s3850 + $0x19] sm:$0xff]
        %v4143 = vld [vmem:[%s3850 + $0x21] sm:$0xff]
        %v4144 = vld [vmem:[%s3850 + $0x31] sm:$0xff]
        %v4145 = vld [vmem:[%s3850 + $0x39] sm:$0xff]
        %v4146 = vld [vmem:[%s3850 + $0x49] sm:$0xff]
        %v4147 = vld [vmem:[%s3850 + $0x51] sm:$0xff]
        %v4148 = vld [vmem:[%s3850 + $0x61] sm:$0xff]
        %v4149 = vld [vmem:[%s3850 + $0x69] sm:$0xff]
        %v4150 = vld [vmem:[%s3850 + $0x79] sm:$0xff]
        %v4151 = vld [vmem:[%s3850 + $0x81] sm:$0xff]
        %v4152 = vld [vmem:[%s3850 + $0x91] sm:$0xff]
        %v4153 = vld [vmem:[%s3850 + $0x99] sm:$0xff]
        %v4154 = vld [vmem:[%s3850 + $0xa9] sm:$0xff]
        %v4155 = vld [vmem:[%s3850 + $0xb1] sm:$0xff]
        %v4156 = vld [vmem:[%s3850 + $0xc1] sm:$0xff]
        %v4157 = vld [vmem:[%s3850 + $0xc9] sm:$0xff]
        %v4158 = vld [vmem:[%s3850 + $0xd9] sm:$0xff]
        %v4159 = vld [vmem:[%s3850 + $0xe1] sm:$0xff]
        %v4160 = vld [vmem:[%s3850 + $0xf1] sm:$0xff]
        %v4161 = vld [vmem:[%s3850 + $0xf9] sm:$0xff]
        %v4162 = vld [vmem:[%s3850 + $0x109] sm:$0xff]
        %v4163 = vld [vmem:[%s3850 + $0x111] sm:$0xff]
        %v4164 = vld [vmem:[%s3850 + $0x121] sm:$0xff]
        %v4165 = vld [vmem:[%s3850 + $0x129] sm:$0xff]
        %v4166 = vld [vmem:[%s3850 + $0x139] sm:$0xff]
        %v4167 = vld [vmem:[%s3850 + $0x141] sm:$0xff]
        %v4168 = vld [vmem:[%s3850 + $0x151] sm:$0xff]
        %v4169 = vld [vmem:[%s3850 + $0x159] sm:$0xff]
        %v4170 = vld [vmem:[%s3850 + $0x169] sm:$0xff]
        %v4171 = vld [vmem:[%s3850 + $0x171] sm:$0xff]
        %v4172 = vpack.c.bf16 %v4141, %v4140
        %v4173 = vpack.c.bf16 %v4143, %v4142
        %v4174 = vpack.c.bf16 %v4145, %v4144
        %v4175 = vpack.c.bf16 %v4147, %v4146
        %v4176 = vpack.c.bf16 %v4149, %v4148
        %v4177 = vpack.c.bf16 %v4151, %v4150
        %v4178 = vpack.c.bf16 %v4153, %v4152
        %v4179 = vpack.c.bf16 %v4155, %v4154
        %v4180 = vpack.c.bf16 %v4157, %v4156
        %v4181 = vpack.c.bf16 %v4159, %v4158
        %v4182 = vpack.c.bf16 %v4161, %v4160
        %v4183 = vpack.c.bf16 %v4163, %v4162
        %v4184 = vpack.c.bf16 %v4165, %v4164
        %v4185 = vpack.c.bf16 %v4167, %v4166
        %v4186 = vpack.c.bf16 %v4169, %v4168
        %v4187 = vpack.c.bf16 %v4171, %v4170
        %v4189 = vsel %vm279, %v4172, 0
        %v4192 = vsel %vm279, %v4173, 0
        %v4195 = vsel %vm279, %v4174, 0
        %v4198 = vsel %vm279, %v4175, 0
        %v4201 = vsel %vm279, %v4176, 0
        %v4204 = vsel %vm279, %v4177, 0
        %v4207 = vsel %vm279, %v4178, 0
        %v4210 = vsel %vm279, %v4179, 0
        %v4213 = vsel %vm279, %v4180, 0
        %v4216 = vsel %vm279, %v4181, 0
        %v4219 = vsel %vm279, %v4182, 0
        %v4222 = vsel %vm279, %v4183, 0
        %v4225 = vsel %vm279, %v4184, 0
        %v4228 = vsel %vm279, %v4185, 0
        %v4231 = vsel %vm279, %v4186, 0
        %v4234 = vsel %vm279, %v4187, 0
        %4236 = vmatprep.subr.bf16.mxu0 0
        %4237 = vmatpush1.bf16.msra.mxu0 %v1507
        %4238 = vmatprep.subr.bf16.mxu0 0
        %4239 = vmatpush1.bf16.msra.mxu0 0
        %4240 = vmatprep.subr.bf16.mxu0 0
        %4241 = vmatpush1.bf16.msra.mxu0 0
        %4242 = vmatprep.subr.bf16.mxu0 0
        %4243 = vmatpush1.bf16.msra.mxu0 0
        %4244 = vmatprep.subr.bf16.mxu0 0
        %4245 = vmatpush1.bf16.msra.mxu0 0
        %4246 = vmatprep.subr.bf16.mxu0 0
        %4247 = vmatpush1.bf16.msra.mxu0 0
        %4248 = vmatprep.subr.bf16.mxu0 0
        %4249 = vmatpush1.bf16.msra.mxu0 0
        %4250 = vmatprep.subr.bf16.mxu0 0
        %4251 = vmatpush1.bf16.msra.mxu0 0
        %4252 = vmatprep.subr.bf16.mxu0 0
        %4253 = vmatpush1.bf16.msra.mxu0 0
        %4254 = vmatprep.subr.bf16.mxu0 0
        %4255 = vmatpush1.bf16.msra.mxu0 0
        %4256 = vmatprep.subr.bf16.mxu0 0
        %4257 = vmatpush1.bf16.msra.mxu0 0
        %4258 = vmatprep.subr.bf16.mxu0 0
        %4259 = vmatpush1.bf16.msra.mxu0 0
        %4260 = vmatprep.subr.bf16.mxu0 0
        %4261 = vmatpush1.bf16.msra.mxu0 0
        %4262 = vmatprep.subr.bf16.mxu0 0
        %4263 = vmatpush1.bf16.msra.mxu0 0
        %4264 = vmatprep.subr.bf16.mxu0 0
        %4265 = vmatpush1.bf16.msra.mxu0 0
        %4266 = vmatprep.subr.bf16.mxu0 0
        %4267 = vmatpush1.bf16.msra.mxu0 0
        %4268 = vmatprep.mubr.bf16.mxu0 0
        %4269 = vmatmul.mubr.bf16.gmra.mrb[0].mxu0 %v4189
        %v4270 = vpop.f32.mrb[0].mxu0
        %v4271 = vadd.f32 0.0, %v4270
        %v4272 = vpop.f32.mrb[0].mxu0
        %v4273 = vpop.f32.mrb[0].mxu0
        %v4274 = vadd.f32 0.0, %v4273
        %v4275 = vpop.f32.mrb[0].mxu0
        %4276 = vmatprep.mubr.bf16.mxu0 0
        %4277 = vmatmul.mubr.bf16.gmra.mrb[0].mxu0 %v4192
        %v4278 = vpop.f32.mrb[0].mxu0
        %v4279 = vadd.f32 0.0, %v4278
        %v4280 = vpop.f32.mrb[0].mxu0
        %v4281 = vpop.f32.mrb[0].mxu0
        %v4282 = vadd.f32 0.0, %v4281
        %v4283 = vpop.f32.mrb[0].mxu0
        %4284 = vmatprep.mubr.bf16.mxu0 0
        %4285 = vmatmul.mubr.bf16.gmra.mrb[0].mxu0 %v4195
        %v4286 = vpop.f32.mrb[0].mxu0
        %v4287 = vadd.f32 0.0, %v4286
        %v4288 = vpop.f32.mrb[0].mxu0
        %v4289 = vpop.f32.mrb[0].mxu0
        %v4290 = vadd.f32 0.0, %v4289
        %v4291 = vpop.f32.mrb[0].mxu0
        %4292 = vmatprep.mubr.bf16.mxu0 0
        %4293 = vmatmul.mubr.bf16.gmra.mrb[0].mxu0 %v4198
        %v4294 = vpop.f32.mrb[0].mxu0
        %v4295 = vadd.f32 0.0, %v4294
        %v4296 = vpop.f32.mrb[0].mxu0
        %v4297 = vpop.f32.mrb[0].mxu0
        %v4298 = vadd.f32 0.0, %v4297
        %v4299 = vpop.f32.mrb[0].mxu0
        %4300 = vmatprep.mubr.bf16.mxu0 0
        %4301 = vmatmul.mubr.bf16.gmra.mrb[0].mxu0 %v4201
        %v4302 = vpop.f32.mrb[0].mxu0
        %v4303 = vadd.f32 0.0, %v4302
        %v4304 = vpop.f32.mrb[0].mxu0
        %v4305 = vpop.f32.mrb[0].mxu0
        %v4306 = vadd.f32 0.0, %v4305
        %v4307 = vpop.f32.mrb[0].mxu0
        %4308 = vmatprep.mubr.bf16.mxu0 0
        %4309 = vmatmul.mubr.bf16.gmra.mrb[0].mxu0 %v4204
        %v4310 = vpop.f32.mrb[0].mxu0
        %v4311 = vadd.f32 0.0, %v4310
        %v4312 = vpop.f32.mrb[0].mxu0
        %v4313 = vpop.f32.mrb[0].mxu0
        %v4314 = vadd.f32 0.0, %v4313
        %v4315 = vpop.f32.mrb[0].mxu0
        %4316 = vmatprep.mubr.bf16.mxu0 0
        %4317 = vmatmul.mubr.bf16.gmra.mrb[0].mxu0 %v4207
        %v4318 = vpop.f32.mrb[0].mxu0
        %v4319 = vadd.f32 0.0, %v4318
        %v4320 = vpop.f32.mrb[0].mxu0
        %v4321 = vpop.f32.mrb[0].mxu0
        %v4322 = vadd.f32 0.0, %v4321
        %v4323 = vpop.f32.mrb[0].mxu0
        %4324 = vmatprep.mubr.bf16.mxu0 0
        %4325 = vmatmul.mubr.bf16.gmra.mrb[0].mxu0 %v4210
        %v4326 = vpop.f32.mrb[0].mxu0
        %v4327 = vadd.f32 0.0, %v4326
        %v4328 = vpop.f32.mrb[0].mxu0
        %v4329 = vpop.f32.mrb[0].mxu0
        %v4330 = vadd.f32 0.0, %v4329
        %v4331 = vpop.f32.mrb[0].mxu0
        %4332 = vmatprep.mubr.bf16.mxu0 0
        %4333 = vmatmul.mubr.bf16.gmra.mrb[0].mxu0 %v4213
        %v4334 = vpop.f32.mrb[0].mxu0
        %v4335 = vadd.f32 0.0, %v4334
        %v4336 = vpop.f32.mrb[0].mxu0
        %v4337 = vpop.f32.mrb[0].mxu0
        %v4338 = vadd.f32 0.0, %v4337
        %v4339 = vpop.f32.mrb[0].mxu0
        %4340 = vmatprep.mubr.bf16.mxu0 0
        %4341 = vmatmul.mubr.bf16.gmra.mrb[0].mxu0 %v4216
        %v4342 = vpop.f32.mrb[0].mxu0
        %v4343 = vadd.f32 0.0, %v4342
        %v4344 = vpop.f32.mrb[0].mxu0
        %v4345 = vpop.f32.mrb[0].mxu0
        %v4346 = vadd.f32 0.0, %v4345
        %v4347 = vpop.f32.mrb[0].mxu0
        %4348 = vmatprep.mubr.bf16.mxu0 0
        %4349 = vmatmul.mubr.bf16.gmra.mrb[0].mxu0 %v4219
        %v4350 = vpop.f32.mrb[0].mxu0
        %v4351 = vadd.f32 0.0, %v4350
        %v4352 = vpop.f32.mrb[0].mxu0
        %v4353 = vpop.f32.mrb[0].mxu0
        %v4354 = vadd.f32 0.0, %v4353
        %v4355 = vpop.f32.mrb[0].mxu0
        %4356 = vmatprep.mubr.bf16.mxu0 0
        %4357 = vmatmul.mubr.bf16.gmra.mrb[0].mxu0 %v4222
        %v4358 = vpop.f32.mrb[0].mxu0
        %v4359 = vadd.f32 0.0, %v4358
        %v4360 = vpop.f32.mrb[0].mxu0
        %v4361 = vpop.f32.mrb[0].mxu0
        %v4362 = vadd.f32 0.0, %v4361
        %v4363 = vpop.f32.mrb[0].mxu0
        %4364 = vmatprep.mubr.bf16.mxu0 0
        %4365 = vmatmul.mubr.bf16.gmra.mrb[0].mxu0 %v4225
        %v4366 = vpop.f32.mrb[0].mxu0
        %v4367 = vadd.f32 0.0, %v4366
        %v4368 = vpop.f32.mrb[0].mxu0
        %v4369 = vpop.f32.mrb[0].mxu0
        %v4370 = vadd.f32 0.0, %v4369
        %v4371 = vpop.f32.mrb[0].mxu0
        %4372 = vmatprep.mubr.bf16.mxu0 0
        %4373 = vmatmul.mubr.bf16.gmra.mrb[0].mxu0 %v4228
        %v4374 = vpop.f32.mrb[0].mxu0
        %v4375 = vadd.f32 0.0, %v4374
        %v4376 = vpop.f32.mrb[0].mxu0
        %v4377 = vpop.f32.mrb[0].mxu0
        %v4378 = vadd.f32 0.0, %v4377
        %v4379 = vpop.f32.mrb[0].mxu0
        %4380 = vmatprep.mubr.bf16.mxu0 0
        %4381 = vmatmul.mubr.bf16.gmra.mrb[0].mxu0 %v4231
        %v4382 = vpop.f32.mrb[0].mxu0
        %v4383 = vadd.f32 0.0, %v4382
        %v4384 = vpop.f32.mrb[0].mxu0
        %v4385 = vpop.f32.mrb[0].mxu0
        %v4386 = vadd.f32 0.0, %v4385
        %v4387 = vpop.f32.mrb[0].mxu0
        %4388 = vmatprep.mubr.bf16.mxu0 0
        %4389 = vmatmul.mubr.bf16.gmra.mrb[0].mxu0 %v4234
        %v4390 = vpop.f32.mrb[0].mxu0
        %v4391 = vadd.f32 0.0, %v4390
        %v4392 = vpop.f32.mrb[0].mxu0
        %v4393 = vpop.f32.mrb[0].mxu0
        %v4394 = vadd.f32 0.0, %v4393
        %v4395 = vpop.f32.mrb[0].mxu0
        %4396 = vdwg.mxu0
        %v4397 = vadd.f32 %v4108, %v4271
        %v4398 = vadd.f32 %v4109, %v4274
        %v4399 = vadd.f32 %v4110, %v4279
        %v4400 = vadd.f32 %v4111, %v4282
        %v4401 = vadd.f32 %v4112, %v4287
        %v4402 = vadd.f32 %v4113, %v4290
        %v4403 = vadd.f32 %v4114, %v4295
        %v4404 = vadd.f32 %v4115, %v4298
        %v4405 = vadd.f32 %v4116, %v4303
        %v4406 = vadd.f32 %v4117, %v4306
        %v4407 = vadd.f32 %v4118, %v4311
        %v4408 = vadd.f32 %v4119, %v4314
        %v4409 = vadd.f32 %v4120, %v4319
        %v4410 = vadd.f32 %v4121, %v4322
        %v4411 = vadd.f32 %v4122, %v4327
        %v4412 = vadd.f32 %v4123, %v4330
        %v4413 = vadd.f32 %v4124, %v4335
        %v4414 = vadd.f32 %v4125, %v4338
        %v4415 = vadd.f32 %v4126, %v4343
        %v4416 = vadd.f32 %v4127, %v4346
        %v4417 = vadd.f32 %v4128, %v4351
        %v4418 = vadd.f32 %v4129, %v4354
        %v4419 = vadd.f32 %v4130, %v4359
        %v4420 = vadd.f32 %v4131, %v4362
        %v4421 = vadd.f32 %v4132, %v4367
        %v4422 = vadd.f32 %v4133, %v4370
        %v4423 = vadd.f32 %v4134, %v4375
        %v4424 = vadd.f32 %v4135, %v4378
        %v4425 = vadd.f32 %v4136, %v4383
        %v4426 = vadd.f32 %v4137, %v4386
        %v4427 = vadd.f32 %v4138, %v4391
        %v4428 = vadd.f32 %v4139, %v4394
        %v4429 = vld [vmem:[%s3850 + $0x2] sm:$0xff]
        %v4430 = vld [vmem:[%s3850 + $0xa] sm:$0xff]
        %v4431 = vld [vmem:[%s3850 + $0x1a] sm:$0xff]
        %v4432 = vld [vmem:[%s3850 + $0x22] sm:$0xff]
        %v4433 = vld [vmem:[%s3850 + $0x32] sm:$0xff]
        %v4434 = vld [vmem:[%s3850 + $0x3a] sm:$0xff]
        %v4435 = vld [vmem:[%s3850 + $0x4a] sm:$0xff]
        %v4436 = vld [vmem:[%s3850 + $0x52] sm:$0xff]
        %v4437 = vld [vmem:[%s3850 + $0x62] sm:$0xff]
        %v4438 = vld [vmem:[%s3850 + $0x6a] sm:$0xff]
        %v4439 = vld [vmem:[%s3850 + $0x7a] sm:$0xff]
        %v4440 = vld [vmem:[%s3850 + $0x82] sm:$0xff]
        %v4441 = vld [vmem:[%s3850 + $0x92] sm:$0xff]
        %v4442 = vld [vmem:[%s3850 + $0x9a] sm:$0xff]
        %v4443 = vld [vmem:[%s3850 + $0xaa] sm:$0xff]
        %v4444 = vld [vmem:[%s3850 + $0xb2] sm:$0xff]
        %v4445 = vld [vmem:[%s3850 + $0xc2] sm:$0xff]
        %v4446 = vld [vmem:[%s3850 + $0xca] sm:$0xff]
        %v4447 = vld [vmem:[%s3850 + $0xda] sm:$0xff]
        %v4448 = vld [vmem:[%s3850 + $0xe2] sm:$0xff]
        %v4449 = vld [vmem:[%s3850 + $0xf2] sm:$0xff]
        %v4450 = vld [vmem:[%s3850 + $0xfa] sm:$0xff]
        %v4451 = vld [vmem:[%s3850 + $0x10a] sm:$0xff]
        %v4452 = vld [vmem:[%s3850 + $0x112] sm:$0xff]
        %v4453 = vld [vmem:[%s3850 + $0x122] sm:$0xff]
        %v4454 = vld [vmem:[%s3850 + $0x12a] sm:$0xff]
        %v4455 = vld [vmem:[%s3850 + $0x13a] sm:$0xff]
        %v4456 = vld [vmem:[%s3850 + $0x142] sm:$0xff]
        %v4457 = vld [vmem:[%s3850 + $0x152] sm:$0xff]
        %v4458 = vld [vmem:[%s3850 + $0x15a] sm:$0xff]
        %v4459 = vld [vmem:[%s3850 + $0x16a] sm:$0xff]
        %v4460 = vld [vmem:[%s3850 + $0x172] sm:$0xff]
        %v4461 = vpack.c.bf16 %v4430, %v4429
        %v4462 = vpack.c.bf16 %v4432, %v4431
        %v4463 = vpack.c.bf16 %v4434, %v4433
        %v4464 = vpack.c.bf16 %v4436, %v4435
        %v4465 = vpack.c.bf16 %v4438, %v4437
        %v4466 = vpack.c.bf16 %v4440, %v4439
        %v4467 = vpack.c.bf16 %v4442, %v4441
        %v4468 = vpack.c.bf16 %v4444, %v4443
        %v4469 = vpack.c.bf16 %v4446, %v4445
        %v4470 = vpack.c.bf16 %v4448, %v4447
        %v4471 = vpack.c.bf16 %v4450, %v4449
        %v4472 = vpack.c.bf16 %v4452, %v4451
        %v4473 = vpack.c.bf16 %v4454, %v4453
        %v4474 = vpack.c.bf16 %v4456, %v4455
        %v4475 = vpack.c.bf16 %v4458, %v4457
        %v4476 = vpack.c.bf16 %v4460, %v4459
        %v4478 = vsel %vm279, %v4461, 0
        %v4481 = vsel %vm279, %v4462, 0
        %v4484 = vsel %vm279, %v4463, 0
        %v4487 = vsel %vm279, %v4464, 0
        %v4490 = vsel %vm279, %v4465, 0
        %v4493 = vsel %vm279, %v4466, 0
        %v4496 = vsel %vm279, %v4467, 0
        %v4499 = vsel %vm279, %v4468, 0
        %v4502 = vsel %vm279, %v4469, 0
        %v4505 = vsel %vm279, %v4470, 0
        %v4508 = vsel %vm279, %v4471, 0
        %v4511 = vsel %vm279, %v4472, 0
        %v4514 = vsel %vm279, %v4473, 0
        %v4517 = vsel %vm279, %v4474, 0
        %v4520 = vsel %vm279, %v4475, 0
        %v4523 = vsel %vm279, %v4476, 0
        %4525 = vmatprep.subr.bf16.mxu0 0
        %4526 = vmatpush1.bf16.msra.mxu0 %v1801
        %4527 = vmatprep.subr.bf16.mxu0 0
        %4528 = vmatpush1.bf16.msra.mxu0 0
        %4529 = vmatprep.subr.bf16.mxu0 0
        %4530 = vmatpush1.bf16.msra.mxu0 0
        %4531 = vmatprep.subr.bf16.mxu0 0
        %4532 = vmatpush1.bf16.msra.mxu0 0
        %4533 = vmatprep.subr.bf16.mxu0 0
        %4534 = vmatpush1.bf16.msra.mxu0 0
        %4535 = vmatprep.subr.bf16.mxu0 0
        %4536 = vmatpush1.bf16.msra.mxu0 0
        %4537 = vmatprep.subr.bf16.mxu0 0
        %4538 = vmatpush1.bf16.msra.mxu0 0
        %4539 = vmatprep.subr.bf16.mxu0 0
        %4540 = vmatpush1.bf16.msra.mxu0 0
        %4541 = vmatprep.subr.bf16.mxu0 0
        %4542 = vmatpush1.bf16.msra.mxu0 0
        %4543 = vmatprep.subr.bf16.mxu0 0
        %4544 = vmatpush1.bf16.msra.mxu0 0
        %4545 = vmatprep.subr.bf16.mxu0 0
        %4546 = vmatpush1.bf16.msra.mxu0 0
        %4547 = vmatprep.subr.bf16.mxu0 0
        %4548 = vmatpush1.bf16.msra.mxu0 0
        %4549 = vmatprep.subr.bf16.mxu0 0
        %4550 = vmatpush1.bf16.msra.mxu0 0
        %4551 = vmatprep.subr.bf16.mxu0 0
        %4552 = vmatpush1.bf16.msra.mxu0 0
        %4553 = vmatprep.subr.bf16.mxu0 0
        %4554 = vmatpush1.bf16.msra.mxu0 0
        %4555 = vmatprep.subr.bf16.mxu0 0
        %4556 = vmatpush1.bf16.msra.mxu0 0
        %4557 = vmatprep.mubr.bf16.mxu0 0
        %4558 = vmatmul.mubr.bf16.gmra.mrb[0].mxu0 %v4478
        %v4559 = vpop.f32.mrb[0].mxu0
        %v4560 = vadd.f32 0.0, %v4559
        %v4561 = vpop.f32.mrb[0].mxu0
        %v4562 = vpop.f32.mrb[0].mxu0
        %v4563 = vadd.f32 0.0, %v4562
        %v4564 = vpop.f32.mrb[0].mxu0
        %4565 = vmatprep.mubr.bf16.mxu0 0
        %4566 = vmatmul.mubr.bf16.gmra.mrb[0].mxu0 %v4481
        %v4567 = vpop.f32.mrb[0].mxu0
        %v4568 = vadd.f32 0.0, %v4567
        %v4569 = vpop.f32.mrb[0].mxu0
        %v4570 = vpop.f32.mrb[0].mxu0
        %v4571 = vadd.f32 0.0, %v4570
        %v4572 = vpop.f32.mrb[0].mxu0
        %4573 = vmatprep.mubr.bf16.mxu0 0
        %4574 = vmatmul.mubr.bf16.gmra.mrb[0].mxu0 %v4484
        %v4575 = vpop.f32.mrb[0].mxu0
        %v4576 = vadd.f32 0.0, %v4575
        %v4577 = vpop.f32.mrb[0].mxu0
        %v4578 = vpop.f32.mrb[0].mxu0
        %v4579 = vadd.f32 0.0, %v4578
        %v4580 = vpop.f32.mrb[0].mxu0
        %4581 = vmatprep.mubr.bf16.mxu0 0
        %4582 = vmatmul.mubr.bf16.gmra.mrb[0].mxu0 %v4487
        %v4583 = vpop.f32.mrb[0].mxu0
        %v4584 = vadd.f32 0.0, %v4583
        %v4585 = vpop.f32.mrb[0].mxu0
        %v4586 = vpop.f32.mrb[0].mxu0
        %v4587 = vadd.f32 0.0, %v4586
        %v4588 = vpop.f32.mrb[0].mxu0
        %4589 = vmatprep.mubr.bf16.mxu0 0
        %4590 = vmatmul.mubr.bf16.gmra.mrb[0].mxu0 %v4490
        %v4591 = vpop.f32.mrb[0].mxu0
        %v4592 = vadd.f32 0.0, %v4591
        %v4593 = vpop.f32.mrb[0].mxu0
        %v4594 = vpop.f32.mrb[0].mxu0
        %v4595 = vadd.f32 0.0, %v4594
        %v4596 = vpop.f32.mrb[0].mxu0
        %4597 = vmatprep.mubr.bf16.mxu0 0
        %4598 = vmatmul.mubr.bf16.gmra.mrb[0].mxu0 %v4493
        %v4599 = vpop.f32.mrb[0].mxu0
        %v4600 = vadd.f32 0.0, %v4599
        %v4601 = vpop.f32.mrb[0].mxu0
        %v4602 = vpop.f32.mrb[0].mxu0
        %v4603 = vadd.f32 0.0, %v4602
        %v4604 = vpop.f32.mrb[0].mxu0
        %4605 = vmatprep.mubr.bf16.mxu0 0
        %4606 = vmatmul.mubr.bf16.gmra.mrb[0].mxu0 %v4496
        %v4607 = vpop.f32.mrb[0].mxu0
        %v4608 = vadd.f32 0.0, %v4607
        %v4609 = vpop.f32.mrb[0].mxu0
        %v4610 = vpop.f32.mrb[0].mxu0
        %v4611 = vadd.f32 0.0, %v4610
        %v4612 = vpop.f32.mrb[0].mxu0
        %4613 = vmatprep.mubr.bf16.mxu0 0
        %4614 = vmatmul.mubr.bf16.gmra.mrb[0].mxu0 %v4499
        %v4615 = vpop.f32.mrb[0].mxu0
        %v4616 = vadd.f32 0.0, %v4615
        %v4617 = vpop.f32.mrb[0].mxu0
        %v4618 = vpop.f32.mrb[0].mxu0
        %v4619 = vadd.f32 0.0, %v4618
        %v4620 = vpop.f32.mrb[0].mxu0
        %4621 = vmatprep.mubr.bf16.mxu0 0
        %4622 = vmatmul.mubr.bf16.gmra.mrb[0].mxu0 %v4502
        %v4623 = vpop.f32.mrb[0].mxu0
        %v4624 = vadd.f32 0.0, %v4623
        %v4625 = vpop.f32.mrb[0].mxu0
        %v4626 = vpop.f32.mrb[0].mxu0
        %v4627 = vadd.f32 0.0, %v4626
        %v4628 = vpop.f32.mrb[0].mxu0
        %4629 = vmatprep.mubr.bf16.mxu0 0
        %4630 = vmatmul.mubr.bf16.gmra.mrb[0].mxu0 %v4505
        %v4631 = vpop.f32.mrb[0].mxu0
        %v4632 = vadd.f32 0.0, %v4631
        %v4633 = vpop.f32.mrb[0].mxu0
        %v4634 = vpop.f32.mrb[0].mxu0
        %v4635 = vadd.f32 0.0, %v4634
        %v4636 = vpop.f32.mrb[0].mxu0
        %4637 = vmatprep.mubr.bf16.mxu0 0
        %4638 = vmatmul.mubr.bf16.gmra.mrb[0].mxu0 %v4508
        %v4639 = vpop.f32.mrb[0].mxu0
        %v4640 = vadd.f32 0.0, %v4639
        %v4641 = vpop.f32.mrb[0].mxu0
        %v4642 = vpop.f32.mrb[0].mxu0
        %v4643 = vadd.f32 0.0, %v4642
        %v4644 = vpop.f32.mrb[0].mxu0
        %4645 = vmatprep.mubr.bf16.mxu0 0
        %4646 = vmatmul.mubr.bf16.gmra.mrb[0].mxu0 %v4511
        %v4647 = vpop.f32.mrb[0].mxu0
        %v4648 = vadd.f32 0.0, %v4647
        %v4649 = vpop.f32.mrb[0].mxu0
        %v4650 = vpop.f32.mrb[0].mxu0
        %v4651 = vadd.f32 0.0, %v4650
        %v4652 = vpop.f32.mrb[0].mxu0
        %4653 = vmatprep.mubr.bf16.mxu0 0
        %4654 = vmatmul.mubr.bf16.gmra.mrb[0].mxu0 %v4514
        %v4655 = vpop.f32.mrb[0].mxu0
        %v4656 = vadd.f32 0.0, %v4655
        %v4657 = vpop.f32.mrb[0].mxu0
        %v4658 = vpop.f32.mrb[0].mxu0
        %v4659 = vadd.f32 0.0, %v4658
        %v4660 = vpop.f32.mrb[0].mxu0
        %4661 = vmatprep.mubr.bf16.mxu0 0
        %4662 = vmatmul.mubr.bf16.gmra.mrb[0].mxu0 %v4517
        %v4663 = vpop.f32.mrb[0].mxu0
        %v4664 = vadd.f32 0.0, %v4663
        %v4665 = vpop.f32.mrb[0].mxu0
        %v4666 = vpop.f32.mrb[0].mxu0
        %v4667 = vadd.f32 0.0, %v4666
        %v4668 = vpop.f32.mrb[0].mxu0
        %4669 = vmatprep.mubr.bf16.mxu0 0
        %4670 = vmatmul.mubr.bf16.gmra.mrb[0].mxu0 %v4520
        %v4671 = vpop.f32.mrb[0].mxu0
        %v4672 = vadd.f32 0.0, %v4671
        %v4673 = vpop.f32.mrb[0].mxu0
        %v4674 = vpop.f32.mrb[0].mxu0
        %v4675 = vadd.f32 0.0, %v4674
        %v4676 = vpop.f32.mrb[0].mxu0
        %4677 = vmatprep.mubr.bf16.mxu0 0
        %4678 = vmatmul.mubr.bf16.gmra.mrb[0].mxu0 %v4523
        %v4679 = vpop.f32.mrb[0].mxu0
        %v4680 = vadd.f32 0.0, %v4679
        %v4681 = vpop.f32.mrb[0].mxu0
        %v4682 = vpop.f32.mrb[0].mxu0
        %v4683 = vadd.f32 0.0, %v4682
        %v4684 = vpop.f32.mrb[0].mxu0
        %4685 = vdwg.mxu0
        %v4686 = vadd.f32 %v4397, %v4560
        %v4687 = vadd.f32 %v4398, %v4563
        %v4688 = vadd.f32 %v4399, %v4568
        %v4689 = vadd.f32 %v4400, %v4571
        %v4690 = vadd.f32 %v4401, %v4576
        %v4691 = vadd.f32 %v4402, %v4579
        %v4692 = vadd.f32 %v4403, %v4584
        %v4693 = vadd.f32 %v4404, %v4587
        %v4694 = vadd.f32 %v4405, %v4592
        %v4695 = vadd.f32 %v4406, %v4595
        %v4696 = vadd.f32 %v4407, %v4600
        %v4697 = vadd.f32 %v4408, %v4603
        %v4698 = vadd.f32 %v4409, %v4608
        %v4699 = vadd.f32 %v4410, %v4611
        %v4700 = vadd.f32 %v4411, %v4616
        %v4701 = vadd.f32 %v4412, %v4619
        %v4702 = vadd.f32 %v4413, %v4624
        %v4703 = vadd.f32 %v4414, %v4627
        %v4704 = vadd.f32 %v4415, %v4632
        %v4705 = vadd.f32 %v4416, %v4635
        %v4706 = vadd.f32 %v4417, %v4640
        %v4707 = vadd.f32 %v4418, %v4643
        %v4708 = vadd.f32 %v4419, %v4648
        %v4709 = vadd.f32 %v4420, %v4651
        %v4710 = vadd.f32 %v4421, %v4656
        %v4711 = vadd.f32 %v4422, %v4659
        %v4712 = vadd.f32 %v4423, %v4664
        %v4713 = vadd.f32 %v4424, %v4667
        %v4714 = vadd.f32 %v4425, %v4672
        %v4715 = vadd.f32 %v4426, %v4675
        %v4716 = vadd.f32 %v4427, %v4680
        %v4717 = vadd.f32 %v4428, %v4683
        %s4718 = scalar_lea.vmem %s221, 480
        %v4719 = vld [vmem:[%s4718] sm:$0xff]
        %v4720 = vld [vmem:[%s4718 + $0x8] sm:$0xff]
        %v4721 = vld [vmem:[%s4718 + $0x18] sm:$0xff]
        %v4722 = vld [vmem:[%s4718 + $0x20] sm:$0xff]
        %v4723 = vld [vmem:[%s4718 + $0x30] sm:$0xff]
        %v4724 = vld [vmem:[%s4718 + $0x38] sm:$0xff]
        %v4725 = vld [vmem:[%s4718 + $0x48] sm:$0xff]
        %v4726 = vld [vmem:[%s4718 + $0x50] sm:$0xff]
        %v4727 = vld [vmem:[%s4718 + $0x60] sm:$0xff]
        %v4728 = vld [vmem:[%s4718 + $0x68] sm:$0xff]
        %v4729 = vld [vmem:[%s4718 + $0x78] sm:$0xff]
        %v4730 = vld [vmem:[%s4718 + $0x80] sm:$0xff]
        %v4731 = vld [vmem:[%s4718 + $0x90] sm:$0xff]
        %v4732 = vld [vmem:[%s4718 + $0x98] sm:$0xff]
        %v4733 = vld [vmem:[%s4718 + $0xa8] sm:$0xff]
        %v4734 = vld [vmem:[%s4718 + $0xb0] sm:$0xff]
        %v4735 = vld [vmem:[%s4718 + $0xc0] sm:$0xff]
        %v4736 = vld [vmem:[%s4718 + $0xc8] sm:$0xff]
        %v4737 = vld [vmem:[%s4718 + $0xd8] sm:$0xff]
        %v4738 = vld [vmem:[%s4718 + $0xe0] sm:$0xff]
        %v4739 = vld [vmem:[%s4718 + $0xf0] sm:$0xff]
        %v4740 = vld [vmem:[%s4718 + $0xf8] sm:$0xff]
        %v4741 = vld [vmem:[%s4718 + $0x108] sm:$0xff]
        %v4742 = vld [vmem:[%s4718 + $0x110] sm:$0xff]
        %v4743 = vld [vmem:[%s4718 + $0x120] sm:$0xff]
        %v4744 = vld [vmem:[%s4718 + $0x128] sm:$0xff]
        %v4745 = vld [vmem:[%s4718 + $0x138] sm:$0xff]
        %v4746 = vld [vmem:[%s4718 + $0x140] sm:$0xff]
        %v4747 = vld [vmem:[%s4718 + $0x150] sm:$0xff]
        %v4748 = vld [vmem:[%s4718 + $0x158] sm:$0xff]
        %v4749 = vld [vmem:[%s4718 + $0x168] sm:$0xff]
        %v4750 = vld [vmem:[%s4718 + $0x170] sm:$0xff]
        %v4751 = vpack.c.bf16 %v4720, %v4719
        %v4752 = vpack.c.bf16 %v4722, %v4721
        %v4753 = vpack.c.bf16 %v4724, %v4723
        %v4754 = vpack.c.bf16 %v4726, %v4725
        %v4755 = vpack.c.bf16 %v4728, %v4727
        %v4756 = vpack.c.bf16 %v4730, %v4729
        %v4757 = vpack.c.bf16 %v4732, %v4731
        %v4758 = vpack.c.bf16 %v4734, %v4733
        %v4759 = vpack.c.bf16 %v4736, %v4735
        %v4760 = vpack.c.bf16 %v4738, %v4737
        %v4761 = vpack.c.bf16 %v4740, %v4739
        %v4762 = vpack.c.bf16 %v4742, %v4741
        %v4763 = vpack.c.bf16 %v4744, %v4743
        %v4764 = vpack.c.bf16 %v4746, %v4745
        %v4765 = vpack.c.bf16 %v4748, %v4747
        %v4766 = vpack.c.bf16 %v4750, %v4749
        %v4768 = vsel %vm279, %v4751, 0
        %v4771 = vsel %vm279, %v4752, 0
        %v4774 = vsel %vm279, %v4753, 0
        %v4777 = vsel %vm279, %v4754, 0
        %v4780 = vsel %vm279, %v4755, 0
        %v4783 = vsel %vm279, %v4756, 0
        %v4786 = vsel %vm279, %v4757, 0
        %v4789 = vsel %vm279, %v4758, 0
        %v4792 = vsel %vm279, %v4759, 0
        %v4795 = vsel %vm279, %v4760, 0
        %v4798 = vsel %vm279, %v4761, 0
        %v4801 = vsel %vm279, %v4762, 0
        %v4804 = vsel %vm279, %v4763, 0
        %v4807 = vsel %vm279, %v4764, 0
        %v4810 = vsel %vm279, %v4765, 0
        %v4813 = vsel %vm279, %v4766, 0
        %4815 = vmatprep.subr.bf16.mxu0 0
        %4816 = vmatpush1.bf16.msra.mxu0 %v2096
        %4817 = vmatprep.subr.bf16.mxu0 0
        %4818 = vmatpush1.bf16.msra.mxu0 0
        %4819 = vmatprep.subr.bf16.mxu0 0
        %4820 = vmatpush1.bf16.msra.mxu0 0
        %4821 = vmatprep.subr.bf16.mxu0 0
        %4822 = vmatpush1.bf16.msra.mxu0 0
        %4823 = vmatprep.subr.bf16.mxu0 0
        %4824 = vmatpush1.bf16.msra.mxu0 0
        %4825 = vmatprep.subr.bf16.mxu0 0
        %4826 = vmatpush1.bf16.msra.mxu0 0
        %4827 = vmatprep.subr.bf16.mxu0 0
        %4828 = vmatpush1.bf16.msra.mxu0 0
        %4829 = vmatprep.subr.bf16.mxu0 0
        %4830 = vmatpush1.bf16.msra.mxu0 0
        %4831 = vmatprep.subr.bf16.mxu0 0
        %4832 = vmatpush1.bf16.msra.mxu0 0
        %4833 = vmatprep.subr.bf16.mxu0 0
        %4834 = vmatpush1.bf16.msra.mxu0 0
        %4835 = vmatprep.subr.bf16.mxu0 0
        %4836 = vmatpush1.bf16.msra.mxu0 0
        %4837 = vmatprep.subr.bf16.mxu0 0
        %4838 = vmatpush1.bf16.msra.mxu0 0
        %4839 = vmatprep.subr.bf16.mxu0 0
        %4840 = vmatpush1.bf16.msra.mxu0 0
        %4841 = vmatprep.subr.bf16.mxu0 0
        %4842 = vmatpush1.bf16.msra.mxu0 0
        %4843 = vmatprep.subr.bf16.mxu0 0
        %4844 = vmatpush1.bf16.msra.mxu0 0
        %4845 = vmatprep.subr.bf16.mxu0 0
        %4846 = vmatpush1.bf16.msra.mxu0 0
        %4847 = vmatprep.mubr.bf16.mxu0 0
        %4848 = vmatmul.mubr.bf16.gmra.mrb[0].mxu0 %v4768
        %v4849 = vpop.f32.mrb[0].mxu0
        %v4850 = vadd.f32 0.0, %v4849
        %v4851 = vpop.f32.mrb[0].mxu0
        %v4852 = vpop.f32.mrb[0].mxu0
        %v4853 = vadd.f32 0.0, %v4852
        %v4854 = vpop.f32.mrb[0].mxu0
        %4855 = vmatprep.mubr.bf16.mxu0 0
        %4856 = vmatmul.mubr.bf16.gmra.mrb[0].mxu0 %v4771
        %v4857 = vpop.f32.mrb[0].mxu0
        %v4858 = vadd.f32 0.0, %v4857
        %v4859 = vpop.f32.mrb[0].mxu0
        %v4860 = vpop.f32.mrb[0].mxu0
        %v4861 = vadd.f32 0.0, %v4860
        %v4862 = vpop.f32.mrb[0].mxu0
        %4863 = vmatprep.mubr.bf16.mxu0 0
        %4864 = vmatmul.mubr.bf16.gmra.mrb[0].mxu0 %v4774
        %v4865 = vpop.f32.mrb[0].mxu0
        %v4866 = vadd.f32 0.0, %v4865
        %v4867 = vpop.f32.mrb[0].mxu0
        %v4868 = vpop.f32.mrb[0].mxu0
        %v4869 = vadd.f32 0.0, %v4868
        %v4870 = vpop.f32.mrb[0].mxu0
        %4871 = vmatprep.mubr.bf16.mxu0 0
        %4872 = vmatmul.mubr.bf16.gmra.mrb[0].mxu0 %v4777
        %v4873 = vpop.f32.mrb[0].mxu0
        %v4874 = vadd.f32 0.0, %v4873
        %v4875 = vpop.f32.mrb[0].mxu0
        %v4876 = vpop.f32.mrb[0].mxu0
        %v4877 = vadd.f32 0.0, %v4876
        %v4878 = vpop.f32.mrb[0].mxu0
        %4879 = vmatprep.mubr.bf16.mxu0 0
        %4880 = vmatmul.mubr.bf16.gmra.mrb[0].mxu0 %v4780
        %v4881 = vpop.f32.mrb[0].mxu0
        %v4882 = vadd.f32 0.0, %v4881
        %v4883 = vpop.f32.mrb[0].mxu0
        %v4884 = vpop.f32.mrb[0].mxu0
        %v4885 = vadd.f32 0.0, %v4884
        %v4886 = vpop.f32.mrb[0].mxu0
        %4887 = vmatprep.mubr.bf16.mxu0 0
        %4888 = vmatmul.mubr.bf16.gmra.mrb[0].mxu0 %v4783
        %v4889 = vpop.f32.mrb[0].mxu0
        %v4890 = vadd.f32 0.0, %v4889
        %v4891 = vpop.f32.mrb[0].mxu0
        %v4892 = vpop.f32.mrb[0].mxu0
        %v4893 = vadd.f32 0.0, %v4892
        %v4894 = vpop.f32.mrb[0].mxu0
        %4895 = vmatprep.mubr.bf16.mxu0 0
        %4896 = vmatmul.mubr.bf16.gmra.mrb[0].mxu0 %v4786
        %v4897 = vpop.f32.mrb[0].mxu0
        %v4898 = vadd.f32 0.0, %v4897
        %v4899 = vpop.f32.mrb[0].mxu0
        %v4900 = vpop.f32.mrb[0].mxu0
        %v4901 = vadd.f32 0.0, %v4900
        %v4902 = vpop.f32.mrb[0].mxu0
        %4903 = vmatprep.mubr.bf16.mxu0 0
        %4904 = vmatmul.mubr.bf16.gmra.mrb[0].mxu0 %v4789
        %v4905 = vpop.f32.mrb[0].mxu0
        %v4906 = vadd.f32 0.0, %v4905
        %v4907 = vpop.f32.mrb[0].mxu0
        %v4908 = vpop.f32.mrb[0].mxu0
        %v4909 = vadd.f32 0.0, %v4908
        %v4910 = vpop.f32.mrb[0].mxu0
        %4911 = vmatprep.mubr.bf16.mxu0 0
        %4912 = vmatmul.mubr.bf16.gmra.mrb[0].mxu0 %v4792
        %v4913 = vpop.f32.mrb[0].mxu0
        %v4914 = vadd.f32 0.0, %v4913
        %v4915 = vpop.f32.mrb[0].mxu0
        %v4916 = vpop.f32.mrb[0].mxu0
        %v4917 = vadd.f32 0.0, %v4916
        %v4918 = vpop.f32.mrb[0].mxu0
        %4919 = vmatprep.mubr.bf16.mxu0 0
        %4920 = vmatmul.mubr.bf16.gmra.mrb[0].mxu0 %v4795
        %v4921 = vpop.f32.mrb[0].mxu0
        %v4922 = vadd.f32 0.0, %v4921
        %v4923 = vpop.f32.mrb[0].mxu0
        %v4924 = vpop.f32.mrb[0].mxu0
        %v4925 = vadd.f32 0.0, %v4924
        %v4926 = vpop.f32.mrb[0].mxu0
        %4927 = vmatprep.mubr.bf16.mxu0 0
        %4928 = vmatmul.mubr.bf16.gmra.mrb[0].mxu0 %v4798
        %v4929 = vpop.f32.mrb[0].mxu0
        %v4930 = vadd.f32 0.0, %v4929
        %v4931 = vpop.f32.mrb[0].mxu0
        %v4932 = vpop.f32.mrb[0].mxu0
        %v4933 = vadd.f32 0.0, %v4932
        %v4934 = vpop.f32.mrb[0].mxu0
        %4935 = vmatprep.mubr.bf16.mxu0 0
        %4936 = vmatmul.mubr.bf16.gmra.mrb[0].mxu0 %v4801
        %v4937 = vpop.f32.mrb[0].mxu0
        %v4938 = vadd.f32 0.0, %v4937
        %v4939 = vpop.f32.mrb[0].mxu0
        %v4940 = vpop.f32.mrb[0].mxu0
        %v4941 = vadd.f32 0.0, %v4940
        %v4942 = vpop.f32.mrb[0].mxu0
        %4943 = vmatprep.mubr.bf16.mxu0 0
        %4944 = vmatmul.mubr.bf16.gmra.mrb[0].mxu0 %v4804
        %v4945 = vpop.f32.mrb[0].mxu0
        %v4946 = vadd.f32 0.0, %v4945
        %v4947 = vpop.f32.mrb[0].mxu0
        %v4948 = vpop.f32.mrb[0].mxu0
        %v4949 = vadd.f32 0.0, %v4948
        %v4950 = vpop.f32.mrb[0].mxu0
        %4951 = vmatprep.mubr.bf16.mxu0 0
        %4952 = vmatmul.mubr.bf16.gmra.mrb[0].mxu0 %v4807
        %v4953 = vpop.f32.mrb[0].mxu0
        %v4954 = vadd.f32 0.0, %v4953
        %v4955 = vpop.f32.mrb[0].mxu0
        %v4956 = vpop.f32.mrb[0].mxu0
        %v4957 = vadd.f32 0.0, %v4956
        %v4958 = vpop.f32.mrb[0].mxu0
        %4959 = vmatprep.mubr.bf16.mxu0 0
        %4960 = vmatmul.mubr.bf16.gmra.mrb[0].mxu0 %v4810
        %v4961 = vpop.f32.mrb[0].mxu0
        %v4962 = vadd.f32 0.0, %v4961
        %v4963 = vpop.f32.mrb[0].mxu0
        %v4964 = vpop.f32.mrb[0].mxu0
        %v4965 = vadd.f32 0.0, %v4964
        %v4966 = vpop.f32.mrb[0].mxu0
        %4967 = vmatprep.mubr.bf16.mxu0 0
        %4968 = vmatmul.mubr.bf16.gmra.mrb[0].mxu0 %v4813
        %v4969 = vpop.f32.mrb[0].mxu0
        %v4970 = vadd.f32 0.0, %v4969
        %v4971 = vpop.f32.mrb[0].mxu0
        %v4972 = vpop.f32.mrb[0].mxu0
        %v4973 = vadd.f32 0.0, %v4972
        %v4974 = vpop.f32.mrb[0].mxu0
        %4975 = vdwg.mxu0
        %v4976 = vadd.f32 %v4686, %v4850
        %v4977 = vadd.f32 %v4687, %v4853
        %v4978 = vadd.f32 %v4688, %v4858
        %v4979 = vadd.f32 %v4689, %v4861
        %v4980 = vadd.f32 %v4690, %v4866
        %v4981 = vadd.f32 %v4691, %v4869
        %v4982 = vadd.f32 %v4692, %v4874
        %v4983 = vadd.f32 %v4693, %v4877
        %v4984 = vadd.f32 %v4694, %v4882
        %v4985 = vadd.f32 %v4695, %v4885
        %v4986 = vadd.f32 %v4696, %v4890
        %v4987 = vadd.f32 %v4697, %v4893
        %v4988 = vadd.f32 %v4698, %v4898
        %v4989 = vadd.f32 %v4699, %v4901
        %v4990 = vadd.f32 %v4700, %v4906
        %v4991 = vadd.f32 %v4701, %v4909
        %v4992 = vadd.f32 %v4702, %v4914
        %v4993 = vadd.f32 %v4703, %v4917
        %v4994 = vadd.f32 %v4704, %v4922
        %v4995 = vadd.f32 %v4705, %v4925
        %v4996 = vadd.f32 %v4706, %v4930
        %v4997 = vadd.f32 %v4707, %v4933
        %v4998 = vadd.f32 %v4708, %v4938
        %v4999 = vadd.f32 %v4709, %v4941
        %v5000 = vadd.f32 %v4710, %v4946
        %v5001 = vadd.f32 %v4711, %v4949
        %v5002 = vadd.f32 %v4712, %v4954
        %v5003 = vadd.f32 %v4713, %v4957
        %v5004 = vadd.f32 %v4714, %v4962
        %v5005 = vadd.f32 %v4715, %v4965
        %v5006 = vadd.f32 %v4716, %v4970
        %v5007 = vadd.f32 %v4717, %v4973
        %v5008 = vld [vmem:[%s4718 + $0x1] sm:$0xff]
        %v5009 = vld [vmem:[%s4718 + $0x9] sm:$0xff]
        %v5010 = vld [vmem:[%s4718 + $0x19] sm:$0xff]
        %v5011 = vld [vmem:[%s4718 + $0x21] sm:$0xff]
        %v5012 = vld [vmem:[%s4718 + $0x31] sm:$0xff]
        %v5013 = vld [vmem:[%s4718 + $0x39] sm:$0xff]
        %v5014 = vld [vmem:[%s4718 + $0x49] sm:$0xff]
        %v5015 = vld [vmem:[%s4718 + $0x51] sm:$0xff]
        %v5016 = vld [vmem:[%s4718 + $0x61] sm:$0xff]
        %v5017 = vld [vmem:[%s4718 + $0x69] sm:$0xff]
        %v5018 = vld [vmem:[%s4718 + $0x79] sm:$0xff]
        %v5019 = vld [vmem:[%s4718 + $0x81] sm:$0xff]
        %v5020 = vld [vmem:[%s4718 + $0x91] sm:$0xff]
        %v5021 = vld [vmem:[%s4718 + $0x99] sm:$0xff]
        %v5022 = vld [vmem:[%s4718 + $0xa9] sm:$0xff]
        %v5023 = vld [vmem:[%s4718 + $0xb1] sm:$0xff]
        %v5024 = vld [vmem:[%s4718 + $0xc1] sm:$0xff]
        %v5025 = vld [vmem:[%s4718 + $0xc9] sm:$0xff]
        %v5026 = vld [vmem:[%s4718 + $0xd9] sm:$0xff]
        %v5027 = vld [vmem:[%s4718 + $0xe1] sm:$0xff]
        %v5028 = vld [vmem:[%s4718 + $0xf1] sm:$0xff]
        %v5029 = vld [vmem:[%s4718 + $0xf9] sm:$0xff]
        %v5030 = vld [vmem:[%s4718 + $0x109] sm:$0xff]
        %v5031 = vld [vmem:[%s4718 + $0x111] sm:$0xff]
        %v5032 = vld [vmem:[%s4718 + $0x121] sm:$0xff]
        %v5033 = vld [vmem:[%s4718 + $0x129] sm:$0xff]
        %v5034 = vld [vmem:[%s4718 + $0x139] sm:$0xff]
        %v5035 = vld [vmem:[%s4718 + $0x141] sm:$0xff]
        %v5036 = vld [vmem:[%s4718 + $0x151] sm:$0xff]
        %v5037 = vld [vmem:[%s4718 + $0x159] sm:$0xff]
        %v5038 = vld [vmem:[%s4718 + $0x169] sm:$0xff]
        %v5039 = vld [vmem:[%s4718 + $0x171] sm:$0xff]
        %v5040 = vpack.c.bf16 %v5009, %v5008
        %v5041 = vpack.c.bf16 %v5011, %v5010
        %v5042 = vpack.c.bf16 %v5013, %v5012
        %v5043 = vpack.c.bf16 %v5015, %v5014
        %v5044 = vpack.c.bf16 %v5017, %v5016
        %v5045 = vpack.c.bf16 %v5019, %v5018
        %v5046 = vpack.c.bf16 %v5021, %v5020
        %v5047 = vpack.c.bf16 %v5023, %v5022
        %v5048 = vpack.c.bf16 %v5025, %v5024
        %v5049 = vpack.c.bf16 %v5027, %v5026
        %v5050 = vpack.c.bf16 %v5029, %v5028
        %v5051 = vpack.c.bf16 %v5031, %v5030
        %v5052 = vpack.c.bf16 %v5033, %v5032
        %v5053 = vpack.c.bf16 %v5035, %v5034
        %v5054 = vpack.c.bf16 %v5037, %v5036
        %v5055 = vpack.c.bf16 %v5039, %v5038
        %v5057 = vsel %vm279, %v5040, 0
        %v5060 = vsel %vm279, %v5041, 0
        %v5063 = vsel %vm279, %v5042, 0
        %v5066 = vsel %vm279, %v5043, 0
        %v5069 = vsel %vm279, %v5044, 0
        %v5072 = vsel %vm279, %v5045, 0
        %v5075 = vsel %vm279, %v5046, 0
        %v5078 = vsel %vm279, %v5047, 0
        %v5081 = vsel %vm279, %v5048, 0
        %v5084 = vsel %vm279, %v5049, 0
        %v5087 = vsel %vm279, %v5050, 0
        %v5090 = vsel %vm279, %v5051, 0
        %v5093 = vsel %vm279, %v5052, 0
        %v5096 = vsel %vm279, %v5053, 0
        %v5099 = vsel %vm279, %v5054, 0
        %v5102 = vsel %vm279, %v5055, 0
        %5104 = vmatprep.subr.bf16.mxu0 0
        %5105 = vmatpush1.bf16.msra.mxu0 %v2390
        %5106 = vmatprep.subr.bf16.mxu0 0
        %5107 = vmatpush1.bf16.msra.mxu0 0
        %5108 = vmatprep.subr.bf16.mxu0 0
        %5109 = vmatpush1.bf16.msra.mxu0 0
        %5110 = vmatprep.subr.bf16.mxu0 0
        %5111 = vmatpush1.bf16.msra.mxu0 0
        %5112 = vmatprep.subr.bf16.mxu0 0
        %5113 = vmatpush1.bf16.msra.mxu0 0
        %5114 = vmatprep.subr.bf16.mxu0 0
        %5115 = vmatpush1.bf16.msra.mxu0 0
        %5116 = vmatprep.subr.bf16.mxu0 0
        %5117 = vmatpush1.bf16.msra.mxu0 0
        %5118 = vmatprep.subr.bf16.mxu0 0
        %5119 = vmatpush1.bf16.msra.mxu0 0
        %5120 = vmatprep.subr.bf16.mxu0 0
        %5121 = vmatpush1.bf16.msra.mxu0 0
        %5122 = vmatprep.subr.bf16.mxu0 0
        %5123 = vmatpush1.bf16.msra.mxu0 0
        %5124 = vmatprep.subr.bf16.mxu0 0
        %5125 = vmatpush1.bf16.msra.mxu0 0
        %5126 = vmatprep.subr.bf16.mxu0 0
        %5127 = vmatpush1.bf16.msra.mxu0 0
        %5128 = vmatprep.subr.bf16.mxu0 0
        %5129 = vmatpush1.bf16.msra.mxu0 0
        %5130 = vmatprep.subr.bf16.mxu0 0
        %5131 = vmatpush1.bf16.msra.mxu0 0
        %5132 = vmatprep.subr.bf16.mxu0 0
        %5133 = vmatpush1.bf16.msra.mxu0 0
        %5134 = vmatprep.subr.bf16.mxu0 0
        %5135 = vmatpush1.bf16.msra.mxu0 0
        %5136 = vmatprep.mubr.bf16.mxu0 0
        %5137 = vmatmul.mubr.bf16.gmra.mrb[0].mxu0 %v5057
        %v5138 = vpop.f32.mrb[0].mxu0
        %v5139 = vadd.f32 0.0, %v5138
        %v5140 = vpop.f32.mrb[0].mxu0
        %v5141 = vpop.f32.mrb[0].mxu0
        %v5142 = vadd.f32 0.0, %v5141
        %v5143 = vpop.f32.mrb[0].mxu0
        %5144 = vmatprep.mubr.bf16.mxu0 0
        %5145 = vmatmul.mubr.bf16.gmra.mrb[0].mxu0 %v5060
        %v5146 = vpop.f32.mrb[0].mxu0
        %v5147 = vadd.f32 0.0, %v5146
        %v5148 = vpop.f32.mrb[0].mxu0
        %v5149 = vpop.f32.mrb[0].mxu0
        %v5150 = vadd.f32 0.0, %v5149
        %v5151 = vpop.f32.mrb[0].mxu0
        %5152 = vmatprep.mubr.bf16.mxu0 0
        %5153 = vmatmul.mubr.bf16.gmra.mrb[0].mxu0 %v5063
        %v5154 = vpop.f32.mrb[0].mxu0
        %v5155 = vadd.f32 0.0, %v5154
        %v5156 = vpop.f32.mrb[0].mxu0
        %v5157 = vpop.f32.mrb[0].mxu0
        %v5158 = vadd.f32 0.0, %v5157
        %v5159 = vpop.f32.mrb[0].mxu0
        %5160 = vmatprep.mubr.bf16.mxu0 0
        %5161 = vmatmul.mubr.bf16.gmra.mrb[0].mxu0 %v5066
        %v5162 = vpop.f32.mrb[0].mxu0
        %v5163 = vadd.f32 0.0, %v5162
        %v5164 = vpop.f32.mrb[0].mxu0
        %v5165 = vpop.f32.mrb[0].mxu0
        %v5166 = vadd.f32 0.0, %v5165
        %v5167 = vpop.f32.mrb[0].mxu0
        %5168 = vmatprep.mubr.bf16.mxu0 0
        %5169 = vmatmul.mubr.bf16.gmra.mrb[0].mxu0 %v5069
        %v5170 = vpop.f32.mrb[0].mxu0
        %v5171 = vadd.f32 0.0, %v5170
        %v5172 = vpop.f32.mrb[0].mxu0
        %v5173 = vpop.f32.mrb[0].mxu0
        %v5174 = vadd.f32 0.0, %v5173
        %v5175 = vpop.f32.mrb[0].mxu0
        %5176 = vmatprep.mubr.bf16.mxu0 0
        %5177 = vmatmul.mubr.bf16.gmra.mrb[0].mxu0 %v5072
        %v5178 = vpop.f32.mrb[0].mxu0
        %v5179 = vadd.f32 0.0, %v5178
        %v5180 = vpop.f32.mrb[0].mxu0
        %v5181 = vpop.f32.mrb[0].mxu0
        %v5182 = vadd.f32 0.0, %v5181
        %v5183 = vpop.f32.mrb[0].mxu0
        %5184 = vmatprep.mubr.bf16.mxu0 0
        %5185 = vmatmul.mubr.bf16.gmra.mrb[0].mxu0 %v5075
        %v5186 = vpop.f32.mrb[0].mxu0
        %v5187 = vadd.f32 0.0, %v5186
        %v5188 = vpop.f32.mrb[0].mxu0
        %v5189 = vpop.f32.mrb[0].mxu0
        %v5190 = vadd.f32 0.0, %v5189
        %v5191 = vpop.f32.mrb[0].mxu0
        %5192 = vmatprep.mubr.bf16.mxu0 0
        %5193 = vmatmul.mubr.bf16.gmra.mrb[0].mxu0 %v5078
        %v5194 = vpop.f32.mrb[0].mxu0
        %v5195 = vadd.f32 0.0, %v5194
        %v5196 = vpop.f32.mrb[0].mxu0
        %v5197 = vpop.f32.mrb[0].mxu0
        %v5198 = vadd.f32 0.0, %v5197
        %v5199 = vpop.f32.mrb[0].mxu0
        %5200 = vmatprep.mubr.bf16.mxu0 0
        %5201 = vmatmul.mubr.bf16.gmra.mrb[0].mxu0 %v5081
        %v5202 = vpop.f32.mrb[0].mxu0
        %v5203 = vadd.f32 0.0, %v5202
        %v5204 = vpop.f32.mrb[0].mxu0
        %v5205 = vpop.f32.mrb[0].mxu0
        %v5206 = vadd.f32 0.0, %v5205
        %v5207 = vpop.f32.mrb[0].mxu0
        %5208 = vmatprep.mubr.bf16.mxu0 0
        %5209 = vmatmul.mubr.bf16.gmra.mrb[0].mxu0 %v5084
        %v5210 = vpop.f32.mrb[0].mxu0
        %v5211 = vadd.f32 0.0, %v5210
        %v5212 = vpop.f32.mrb[0].mxu0
        %v5213 = vpop.f32.mrb[0].mxu0
        %v5214 = vadd.f32 0.0, %v5213
        %v5215 = vpop.f32.mrb[0].mxu0
        %5216 = vmatprep.mubr.bf16.mxu0 0
        %5217 = vmatmul.mubr.bf16.gmra.mrb[0].mxu0 %v5087
        %v5218 = vpop.f32.mrb[0].mxu0
        %v5219 = vadd.f32 0.0, %v5218
        %v5220 = vpop.f32.mrb[0].mxu0
        %v5221 = vpop.f32.mrb[0].mxu0
        %v5222 = vadd.f32 0.0, %v5221
        %v5223 = vpop.f32.mrb[0].mxu0
        %5224 = vmatprep.mubr.bf16.mxu0 0
        %5225 = vmatmul.mubr.bf16.gmra.mrb[0].mxu0 %v5090
        %v5226 = vpop.f32.mrb[0].mxu0
        %v5227 = vadd.f32 0.0, %v5226
        %v5228 = vpop.f32.mrb[0].mxu0
        %v5229 = vpop.f32.mrb[0].mxu0
        %v5230 = vadd.f32 0.0, %v5229
        %v5231 = vpop.f32.mrb[0].mxu0
        %5232 = vmatprep.mubr.bf16.mxu0 0
        %5233 = vmatmul.mubr.bf16.gmra.mrb[0].mxu0 %v5093
        %v5234 = vpop.f32.mrb[0].mxu0
        %v5235 = vadd.f32 0.0, %v5234
        %v5236 = vpop.f32.mrb[0].mxu0
        %v5237 = vpop.f32.mrb[0].mxu0
        %v5238 = vadd.f32 0.0, %v5237
        %v5239 = vpop.f32.mrb[0].mxu0
        %5240 = vmatprep.mubr.bf16.mxu0 0
        %5241 = vmatmul.mubr.bf16.gmra.mrb[0].mxu0 %v5096
        %v5242 = vpop.f32.mrb[0].mxu0
        %v5243 = vadd.f32 0.0, %v5242
        %v5244 = vpop.f32.mrb[0].mxu0
        %v5245 = vpop.f32.mrb[0].mxu0
        %v5246 = vadd.f32 0.0, %v5245
        %v5247 = vpop.f32.mrb[0].mxu0
        %5248 = vmatprep.mubr.bf16.mxu0 0
        %5249 = vmatmul.mubr.bf16.gmra.mrb[0].mxu0 %v5099
        %v5250 = vpop.f32.mrb[0].mxu0
        %v5251 = vadd.f32 0.0, %v5250
        %v5252 = vpop.f32.mrb[0].mxu0
        %v5253 = vpop.f32.mrb[0].mxu0
        %v5254 = vadd.f32 0.0, %v5253
        %v5255 = vpop.f32.mrb[0].mxu0
        %5256 = vmatprep.mubr.bf16.mxu0 0
        %5257 = vmatmul.mubr.bf16.gmra.mrb[0].mxu0 %v5102
        %v5258 = vpop.f32.mrb[0].mxu0
        %v5259 = vadd.f32 0.0, %v5258
        %v5260 = vpop.f32.mrb[0].mxu0
        %v5261 = vpop.f32.mrb[0].mxu0
        %v5262 = vadd.f32 0.0, %v5261
        %v5263 = vpop.f32.mrb[0].mxu0
        %5264 = vdwg.mxu0
        %v5265 = vadd.f32 %v4976, %v5139
        %v5266 = vadd.f32 %v4977, %v5142
        %v5267 = vadd.f32 %v4978, %v5147
        %v5268 = vadd.f32 %v4979, %v5150
        %v5269 = vadd.f32 %v4980, %v5155
        %v5270 = vadd.f32 %v4981, %v5158
        %v5271 = vadd.f32 %v4982, %v5163
        %v5272 = vadd.f32 %v4983, %v5166
        %v5273 = vadd.f32 %v4984, %v5171
        %v5274 = vadd.f32 %v4985, %v5174
        %v5275 = vadd.f32 %v4986, %v5179
        %v5276 = vadd.f32 %v4987, %v5182
        %v5277 = vadd.f32 %v4988, %v5187
        %v5278 = vadd.f32 %v4989, %v5190
        %v5279 = vadd.f32 %v4990, %v5195
        %v5280 = vadd.f32 %v4991, %v5198
        %v5281 = vadd.f32 %v4992, %v5203
        %v5282 = vadd.f32 %v4993, %v5206
        %v5283 = vadd.f32 %v4994, %v5211
        %v5284 = vadd.f32 %v4995, %v5214
        %v5285 = vadd.f32 %v4996, %v5219
        %v5286 = vadd.f32 %v4997, %v5222
        %v5287 = vadd.f32 %v4998, %v5227
        %v5288 = vadd.f32 %v4999, %v5230
        %v5289 = vadd.f32 %v5000, %v5235
        %v5290 = vadd.f32 %v5001, %v5238
        %v5291 = vadd.f32 %v5002, %v5243
        %v5292 = vadd.f32 %v5003, %v5246
        %v5293 = vadd.f32 %v5004, %v5251
        %v5294 = vadd.f32 %v5005, %v5254
        %v5295 = vadd.f32 %v5006, %v5259
        %v5296 = vadd.f32 %v5007, %v5262
        %v5297 = vld [vmem:[%s4718 + $0x2] sm:$0xff]
        %v5298 = vld [vmem:[%s4718 + $0xa] sm:$0xff]
        %v5299 = vld [vmem:[%s4718 + $0x1a] sm:$0xff]
        %v5300 = vld [vmem:[%s4718 + $0x22] sm:$0xff]
        %v5301 = vld [vmem:[%s4718 + $0x32] sm:$0xff]
        %v5302 = vld [vmem:[%s4718 + $0x3a] sm:$0xff]
        %v5303 = vld [vmem:[%s4718 + $0x4a] sm:$0xff]
        %v5304 = vld [vmem:[%s4718 + $0x52] sm:$0xff]
        %v5305 = vld [vmem:[%s4718 + $0x62] sm:$0xff]
        %v5306 = vld [vmem:[%s4718 + $0x6a] sm:$0xff]
        %v5307 = vld [vmem:[%s4718 + $0x7a] sm:$0xff]
        %v5308 = vld [vmem:[%s4718 + $0x82] sm:$0xff]
        %v5309 = vld [vmem:[%s4718 + $0x92] sm:$0xff]
        %v5310 = vld [vmem:[%s4718 + $0x9a] sm:$0xff]
        %v5311 = vld [vmem:[%s4718 + $0xaa] sm:$0xff]
        %v5312 = vld [vmem:[%s4718 + $0xb2] sm:$0xff]
        %v5313 = vld [vmem:[%s4718 + $0xc2] sm:$0xff]
        %v5314 = vld [vmem:[%s4718 + $0xca] sm:$0xff]
        %v5315 = vld [vmem:[%s4718 + $0xda] sm:$0xff]
        %v5316 = vld [vmem:[%s4718 + $0xe2] sm:$0xff]
        %v5317 = vld [vmem:[%s4718 + $0xf2] sm:$0xff]
        %v5318 = vld [vmem:[%s4718 + $0xfa] sm:$0xff]
        %v5319 = vld [vmem:[%s4718 + $0x10a] sm:$0xff]
        %v5320 = vld [vmem:[%s4718 + $0x112] sm:$0xff]
        %v5321 = vld [vmem:[%s4718 + $0x122] sm:$0xff]
        %v5322 = vld [vmem:[%s4718 + $0x12a] sm:$0xff]
        %v5323 = vld [vmem:[%s4718 + $0x13a] sm:$0xff]
        %v5324 = vld [vmem:[%s4718 + $0x142] sm:$0xff]
        %v5325 = vld [vmem:[%s4718 + $0x152] sm:$0xff]
        %v5326 = vld [vmem:[%s4718 + $0x15a] sm:$0xff]
        %v5327 = vld [vmem:[%s4718 + $0x16a] sm:$0xff]
        %v5328 = vld [vmem:[%s4718 + $0x172] sm:$0xff]
        %v5329 = vpack.c.bf16 %v5298, %v5297
        %v5330 = vpack.c.bf16 %v5300, %v5299
        %v5331 = vpack.c.bf16 %v5302, %v5301
        %v5332 = vpack.c.bf16 %v5304, %v5303
        %v5333 = vpack.c.bf16 %v5306, %v5305
        %v5334 = vpack.c.bf16 %v5308, %v5307
        %v5335 = vpack.c.bf16 %v5310, %v5309
        %v5336 = vpack.c.bf16 %v5312, %v5311
        %v5337 = vpack.c.bf16 %v5314, %v5313
        %v5338 = vpack.c.bf16 %v5316, %v5315
        %v5339 = vpack.c.bf16 %v5318, %v5317
        %v5340 = vpack.c.bf16 %v5320, %v5319
        %v5341 = vpack.c.bf16 %v5322, %v5321
        %v5342 = vpack.c.bf16 %v5324, %v5323
        %v5343 = vpack.c.bf16 %v5326, %v5325
        %v5344 = vpack.c.bf16 %v5328, %v5327
        %v5346 = vsel %vm279, %v5329, 0
        %v5349 = vsel %vm279, %v5330, 0
        %v5352 = vsel %vm279, %v5331, 0
        %v5355 = vsel %vm279, %v5332, 0
        %v5358 = vsel %vm279, %v5333, 0
        %v5361 = vsel %vm279, %v5334, 0
        %v5364 = vsel %vm279, %v5335, 0
        %v5367 = vsel %vm279, %v5336, 0
        %v5370 = vsel %vm279, %v5337, 0
        %v5373 = vsel %vm279, %v5338, 0
        %v5376 = vsel %vm279, %v5339, 0
        %v5379 = vsel %vm279, %v5340, 0
        %v5382 = vsel %vm279, %v5341, 0
        %v5385 = vsel %vm279, %v5342, 0
        %v5388 = vsel %vm279, %v5343, 0
        %v5391 = vsel %vm279, %v5344, 0
        %5393 = vmatprep.subr.bf16.mxu0 0
        %5394 = vmatpush1.bf16.msra.mxu0 %v2684
        %5395 = vmatprep.subr.bf16.mxu0 0
        %5396 = vmatpush1.bf16.msra.mxu0 0
        %5397 = vmatprep.subr.bf16.mxu0 0
        %5398 = vmatpush1.bf16.msra.mxu0 0
        %5399 = vmatprep.subr.bf16.mxu0 0
        %5400 = vmatpush1.bf16.msra.mxu0 0
        %5401 = vmatprep.subr.bf16.mxu0 0
        %5402 = vmatpush1.bf16.msra.mxu0 0
        %5403 = vmatprep.subr.bf16.mxu0 0
        %5404 = vmatpush1.bf16.msra.mxu0 0
        %5405 = vmatprep.subr.bf16.mxu0 0
        %5406 = vmatpush1.bf16.msra.mxu0 0
        %5407 = vmatprep.subr.bf16.mxu0 0
        %5408 = vmatpush1.bf16.msra.mxu0 0
        %5409 = vmatprep.subr.bf16.mxu0 0
        %5410 = vmatpush1.bf16.msra.mxu0 0
        %5411 = vmatprep.subr.bf16.mxu0 0
        %5412 = vmatpush1.bf16.msra.mxu0 0
        %5413 = vmatprep.subr.bf16.mxu0 0
        %5414 = vmatpush1.bf16.msra.mxu0 0
        %5415 = vmatprep.subr.bf16.mxu0 0
        %5416 = vmatpush1.bf16.msra.mxu0 0
        %5417 = vmatprep.subr.bf16.mxu0 0
        %5418 = vmatpush1.bf16.msra.mxu0 0
        %5419 = vmatprep.subr.bf16.mxu0 0
        %5420 = vmatpush1.bf16.msra.mxu0 0
        %5421 = vmatprep.subr.bf16.mxu0 0
        %5422 = vmatpush1.bf16.msra.mxu0 0
        %5423 = vmatprep.subr.bf16.mxu0 0
        %5424 = vmatpush1.bf16.msra.mxu0 0
        %5425 = vmatprep.mubr.bf16.mxu0 0
        %5426 = vmatmul.mubr.bf16.gmra.mrb[0].mxu0 %v5346
        %v5427 = vpop.f32.mrb[0].mxu0
        %v5428 = vadd.f32 0.0, %v5427
        %v5429 = vpop.f32.mrb[0].mxu0
        %v5430 = vpop.f32.mrb[0].mxu0
        %v5431 = vadd.f32 0.0, %v5430
        %v5432 = vpop.f32.mrb[0].mxu0
        %5433 = vmatprep.mubr.bf16.mxu0 0
        %5434 = vmatmul.mubr.bf16.gmra.mrb[0].mxu0 %v5349
        %v5435 = vpop.f32.mrb[0].mxu0
        %v5436 = vadd.f32 0.0, %v5435
        %v5437 = vpop.f32.mrb[0].mxu0
        %v5438 = vpop.f32.mrb[0].mxu0
        %v5439 = vadd.f32 0.0, %v5438
        %v5440 = vpop.f32.mrb[0].mxu0
        %5441 = vmatprep.mubr.bf16.mxu0 0
        %5442 = vmatmul.mubr.bf16.gmra.mrb[0].mxu0 %v5352
        %v5443 = vpop.f32.mrb[0].mxu0
        %v5444 = vadd.f32 0.0, %v5443
        %v5445 = vpop.f32.mrb[0].mxu0
        %v5446 = vpop.f32.mrb[0].mxu0
        %v5447 = vadd.f32 0.0, %v5446
        %v5448 = vpop.f32.mrb[0].mxu0
        %5449 = vmatprep.mubr.bf16.mxu0 0
        %5450 = vmatmul.mubr.bf16.gmra.mrb[0].mxu0 %v5355
        %v5451 = vpop.f32.mrb[0].mxu0
        %v5452 = vadd.f32 0.0, %v5451
        %v5453 = vpop.f32.mrb[0].mxu0
        %v5454 = vpop.f32.mrb[0].mxu0
        %v5455 = vadd.f32 0.0, %v5454
        %v5456 = vpop.f32.mrb[0].mxu0
        %5457 = vmatprep.mubr.bf16.mxu0 0
        %5458 = vmatmul.mubr.bf16.gmra.mrb[0].mxu0 %v5358
        %v5459 = vpop.f32.mrb[0].mxu0
        %v5460 = vadd.f32 0.0, %v5459
        %v5461 = vpop.f32.mrb[0].mxu0
        %v5462 = vpop.f32.mrb[0].mxu0
        %v5463 = vadd.f32 0.0, %v5462
        %v5464 = vpop.f32.mrb[0].mxu0
        %5465 = vmatprep.mubr.bf16.mxu0 0
        %5466 = vmatmul.mubr.bf16.gmra.mrb[0].mxu0 %v5361
        %v5467 = vpop.f32.mrb[0].mxu0
        %v5468 = vadd.f32 0.0, %v5467
        %v5469 = vpop.f32.mrb[0].mxu0
        %v5470 = vpop.f32.mrb[0].mxu0
        %v5471 = vadd.f32 0.0, %v5470
        %v5472 = vpop.f32.mrb[0].mxu0
        %5473 = vmatprep.mubr.bf16.mxu0 0
        %5474 = vmatmul.mubr.bf16.gmra.mrb[0].mxu0 %v5364
        %v5475 = vpop.f32.mrb[0].mxu0
        %v5476 = vadd.f32 0.0, %v5475
        %v5477 = vpop.f32.mrb[0].mxu0
        %v5478 = vpop.f32.mrb[0].mxu0
        %v5479 = vadd.f32 0.0, %v5478
        %v5480 = vpop.f32.mrb[0].mxu0
        %5481 = vmatprep.mubr.bf16.mxu0 0
        %5482 = vmatmul.mubr.bf16.gmra.mrb[0].mxu0 %v5367
        %v5483 = vpop.f32.mrb[0].mxu0
        %v5484 = vadd.f32 0.0, %v5483
        %v5485 = vpop.f32.mrb[0].mxu0
        %v5486 = vpop.f32.mrb[0].mxu0
        %v5487 = vadd.f32 0.0, %v5486
        %v5488 = vpop.f32.mrb[0].mxu0
        %5489 = vmatprep.mubr.bf16.mxu0 0
        %5490 = vmatmul.mubr.bf16.gmra.mrb[0].mxu0 %v5370
        %v5491 = vpop.f32.mrb[0].mxu0
        %v5492 = vadd.f32 0.0, %v5491
        %v5493 = vpop.f32.mrb[0].mxu0
        %v5494 = vpop.f32.mrb[0].mxu0
        %v5495 = vadd.f32 0.0, %v5494
        %v5496 = vpop.f32.mrb[0].mxu0
        %5497 = vmatprep.mubr.bf16.mxu0 0
        %5498 = vmatmul.mubr.bf16.gmra.mrb[0].mxu0 %v5373
        %v5499 = vpop.f32.mrb[0].mxu0
        %v5500 = vadd.f32 0.0, %v5499
        %v5501 = vpop.f32.mrb[0].mxu0
        %v5502 = vpop.f32.mrb[0].mxu0
        %v5503 = vadd.f32 0.0, %v5502
        %v5504 = vpop.f32.mrb[0].mxu0
        %5505 = vmatprep.mubr.bf16.mxu0 0
        %5506 = vmatmul.mubr.bf16.gmra.mrb[0].mxu0 %v5376
        %v5507 = vpop.f32.mrb[0].mxu0
        %v5508 = vadd.f32 0.0, %v5507
        %v5509 = vpop.f32.mrb[0].mxu0
        %v5510 = vpop.f32.mrb[0].mxu0
        %v5511 = vadd.f32 0.0, %v5510
        %v5512 = vpop.f32.mrb[0].mxu0
        %5513 = vmatprep.mubr.bf16.mxu0 0
        %5514 = vmatmul.mubr.bf16.gmra.mrb[0].mxu0 %v5379
        %v5515 = vpop.f32.mrb[0].mxu0
        %v5516 = vadd.f32 0.0, %v5515
        %v5517 = vpop.f32.mrb[0].mxu0
        %v5518 = vpop.f32.mrb[0].mxu0
        %v5519 = vadd.f32 0.0, %v5518
        %v5520 = vpop.f32.mrb[0].mxu0
        %5521 = vmatprep.mubr.bf16.mxu0 0
        %5522 = vmatmul.mubr.bf16.gmra.mrb[0].mxu0 %v5382
        %v5523 = vpop.f32.mrb[0].mxu0
        %v5524 = vadd.f32 0.0, %v5523
        %v5525 = vpop.f32.mrb[0].mxu0
        %v5526 = vpop.f32.mrb[0].mxu0
        %v5527 = vadd.f32 0.0, %v5526
        %v5528 = vpop.f32.mrb[0].mxu0
        %5529 = vmatprep.mubr.bf16.mxu0 0
        %5530 = vmatmul.mubr.bf16.gmra.mrb[0].mxu0 %v5385
        %v5531 = vpop.f32.mrb[0].mxu0
        %v5532 = vadd.f32 0.0, %v5531
        %v5533 = vpop.f32.mrb[0].mxu0
        %v5534 = vpop.f32.mrb[0].mxu0
        %v5535 = vadd.f32 0.0, %v5534
        %v5536 = vpop.f32.mrb[0].mxu0
        %5537 = vmatprep.mubr.bf16.mxu0 0
        %5538 = vmatmul.mubr.bf16.gmra.mrb[0].mxu0 %v5388
        %v5539 = vpop.f32.mrb[0].mxu0
        %v5540 = vadd.f32 0.0, %v5539
        %v5541 = vpop.f32.mrb[0].mxu0
        %v5542 = vpop.f32.mrb[0].mxu0
        %v5543 = vadd.f32 0.0, %v5542
        %v5544 = vpop.f32.mrb[0].mxu0
        %5545 = vmatprep.mubr.bf16.mxu0 0
        %5546 = vmatmul.mubr.bf16.gmra.mrb[0].mxu0 %v5391
        %v5547 = vpop.f32.mrb[0].mxu0
        %v5548 = vadd.f32 0.0, %v5547
        %v5549 = vpop.f32.mrb[0].mxu0
        %v5550 = vpop.f32.mrb[0].mxu0
        %v5551 = vadd.f32 0.0, %v5550
        %v5552 = vpop.f32.mrb[0].mxu0
        %5553 = vdwg.mxu0
        %v5554 = vadd.f32 %v5265, %v5428
        %v5555 = vadd.f32 %v5266, %v5431
        %v5556 = vadd.f32 %v5267, %v5436
        %v5557 = vadd.f32 %v5268, %v5439
        %v5558 = vadd.f32 %v5269, %v5444
        %v5559 = vadd.f32 %v5270, %v5447
        %v5560 = vadd.f32 %v5271, %v5452
        %v5561 = vadd.f32 %v5272, %v5455
        %v5562 = vadd.f32 %v5273, %v5460
        %v5563 = vadd.f32 %v5274, %v5463
        %v5564 = vadd.f32 %v5275, %v5468
        %v5565 = vadd.f32 %v5276, %v5471
        %v5566 = vadd.f32 %v5277, %v5476
        %v5567 = vadd.f32 %v5278, %v5479
        %v5568 = vadd.f32 %v5279, %v5484
        %v5569 = vadd.f32 %v5280, %v5487
        %v5570 = vadd.f32 %v5281, %v5492
        %v5571 = vadd.f32 %v5282, %v5495
        %v5572 = vadd.f32 %v5283, %v5500
        %v5573 = vadd.f32 %v5284, %v5503
        %v5574 = vadd.f32 %v5285, %v5508
        %v5575 = vadd.f32 %v5286, %v5511
        %v5576 = vadd.f32 %v5287, %v5516
        %v5577 = vadd.f32 %v5288, %v5519
        %v5578 = vadd.f32 %v5289, %v5524
        %v5579 = vadd.f32 %v5290, %v5527
        %v5580 = vadd.f32 %v5291, %v5532
        %v5581 = vadd.f32 %v5292, %v5535
        %v5582 = vadd.f32 %v5293, %v5540
        %v5583 = vadd.f32 %v5294, %v5543
        %v5584 = vadd.f32 %v5295, %v5548
        %v5585 = vadd.f32 %v5296, %v5551
        %v5586 = vmax.f32 %v5554, 0.0
        %v5587 = vmax.f32 %v5555, 0.0
        %v5588 = vmax.f32 %v5556, 0.0
        %v5589 = vmax.f32 %v5557, 0.0
        %v5590 = vmax.f32 %v5558, 0.0
        %v5591 = vmax.f32 %v5559, 0.0
        %v5592 = vmax.f32 %v5560, 0.0
        %v5593 = vmax.f32 %v5561, 0.0
        %v5594 = vmax.f32 %v5562, 0.0
        %v5595 = vmax.f32 %v5563, 0.0
        %v5596 = vmax.f32 %v5564, 0.0
        %v5597 = vmax.f32 %v5565, 0.0
        %v5598 = vmax.f32 %v5566, 0.0
        %v5599 = vmax.f32 %v5567, 0.0
        %v5600 = vmax.f32 %v5568, 0.0
        %v5601 = vmax.f32 %v5569, 0.0
        %v5602 = vmax.f32 %v5570, 0.0
        %v5603 = vmax.f32 %v5571, 0.0
        %v5604 = vmax.f32 %v5572, 0.0
        %v5605 = vmax.f32 %v5573, 0.0
        %v5606 = vmax.f32 %v5574, 0.0
        %v5607 = vmax.f32 %v5575, 0.0
        %v5608 = vmax.f32 %v5576, 0.0
        %v5609 = vmax.f32 %v5577, 0.0
        %v5610 = vmax.f32 %v5578, 0.0
        %v5611 = vmax.f32 %v5579, 0.0
        %v5612 = vmax.f32 %v5580, 0.0
        %v5613 = vmax.f32 %v5581, 0.0
        %v5614 = vmax.f32 %v5582, 0.0
        %v5615 = vmax.f32 %v5583, 0.0
        %v5616 = vmax.f32 %v5584, 0.0
        %v5617 = vmax.f32 %v5585, 0.0
        %v5618 = vsel %vm2911, %v5586, 0.0
        %v5619 = vsel %vm2911, %v5587, 0.0
        %v5620 = vadd.f32 %v5618, %v5619
        %v5621 = vsel %vm2911, %v5588, 0.0
        %v5622 = vadd.f32 %v5620, %v5621
        %v5623 = vsel %vm2911, %v5589, 0.0
        %v5624 = vadd.f32 %v5622, %v5623
        %v5625 = vsel %vm2911, %v5590, 0.0
        %v5626 = vadd.f32 %v5624, %v5625
        %v5627 = vsel %vm2911, %v5591, 0.0
        %v5628 = vadd.f32 %v5626, %v5627
        %v5629 = vsel %vm2911, %v5592, 0.0
        %v5630 = vadd.f32 %v5628, %v5629
        %v5631 = vsel %vm2911, %v5593, 0.0
        %v5632 = vadd.f32 %v5630, %v5631
        %v5633 = vsel %vm2911, %v5594, 0.0
        %v5634 = vadd.f32 %v5632, %v5633
        %v5635 = vsel %vm2911, %v5595, 0.0
        %v5636 = vadd.f32 %v5634, %v5635
        %v5637 = vsel %vm2911, %v5596, 0.0
        %v5638 = vadd.f32 %v5636, %v5637
        %v5639 = vsel %vm2911, %v5597, 0.0
        %v5640 = vadd.f32 %v5638, %v5639
        %v5641 = vsel %vm2911, %v5598, 0.0
        %v5642 = vadd.f32 %v5640, %v5641
        %v5643 = vsel %vm2911, %v5599, 0.0
        %v5644 = vadd.f32 %v5642, %v5643
        %v5645 = vsel %vm2911, %v5600, 0.0
        %v5646 = vadd.f32 %v5644, %v5645
        %v5647 = vsel %vm2911, %v5601, 0.0
        %v5648 = vadd.f32 %v5646, %v5647
        %v5649 = vsel %vm2911, %v5602, 0.0
        %v5650 = vadd.f32 %v5648, %v5649
        %v5651 = vsel %vm2911, %v5603, 0.0
        %v5652 = vadd.f32 %v5650, %v5651
        %v5653 = vsel %vm2911, %v5604, 0.0
        %v5654 = vadd.f32 %v5652, %v5653
        %v5655 = vsel %vm2911, %v5605, 0.0
        %v5656 = vadd.f32 %v5654, %v5655
        %v5657 = vsel %vm2911, %v5606, 0.0
        %v5658 = vadd.f32 %v5656, %v5657
        %v5659 = vsel %vm2911, %v5607, 0.0
        %v5660 = vadd.f32 %v5658, %v5659
        %v5661 = vsel %vm2911, %v5608, 0.0
        %v5662 = vadd.f32 %v5660, %v5661
        %v5663 = vsel %vm2911, %v5609, 0.0
        %v5664 = vadd.f32 %v5662, %v5663
        %v5665 = vsel %vm2911, %v5610, 0.0
        %v5666 = vadd.f32 %v5664, %v5665
        %v5667 = vsel %vm2911, %v5611, 0.0
        %v5668 = vadd.f32 %v5666, %v5667
        %v5669 = vsel %vm2911, %v5612, 0.0
        %v5670 = vadd.f32 %v5668, %v5669
        %v5671 = vsel %vm2911, %v5613, 0.0
        %v5672 = vadd.f32 %v5670, %v5671
        %v5673 = vsel %vm2911, %v5614, 0.0
        %v5674 = vadd.f32 %v5672, %v5673
        %v5675 = vsel %vm2911, %v5615, 0.0
        %v5676 = vadd.f32 %v5674, %v5675
        %v5677 = vsel %vm2911, %v5616, 0.0
        %v5678 = vadd.f32 %v5676, %v5677
        %v5679 = vsel %vm2911, %v5617, 0.0
        %v5680 = vadd.f32 %v5678, %v5679
        %v5681 = vrot.slane %v5680, 4
        %v5682 = vadd.f32 %v5680, %v5681
        %v5683 = vrot.slane %v5682, 2
        %v5684 = vadd.f32 %v5682, %v5683
        %v5685 = vrot.slane %v5684, 1
        %v5686 = vadd.f32 %v5684, %v5685
        %v5687 = vadd.f32 %v2981, %v5686
        %s5688 = scalar_lea.vmem %s221, 864
        %v5689 = vld [vmem:[%s5688] sm:$0xff]
        %v5690 = vld [vmem:[%s5688 + $0x8] sm:$0xff]
        %v5691 = vld [vmem:[%s5688 + $0x18] sm:$0xff]
        %v5692 = vld [vmem:[%s5688 + $0x20] sm:$0xff]
        %v5693 = vld [vmem:[%s5688 + $0x30] sm:$0xff]
        %v5694 = vld [vmem:[%s5688 + $0x38] sm:$0xff]
        %v5695 = vld [vmem:[%s5688 + $0x48] sm:$0xff]
        %v5696 = vld [vmem:[%s5688 + $0x50] sm:$0xff]
        %v5697 = vld [vmem:[%s5688 + $0x60] sm:$0xff]
        %v5698 = vld [vmem:[%s5688 + $0x68] sm:$0xff]
        %v5699 = vld [vmem:[%s5688 + $0x78] sm:$0xff]
        %v5700 = vld [vmem:[%s5688 + $0x80] sm:$0xff]
        %v5701 = vld [vmem:[%s5688 + $0x90] sm:$0xff]
        %v5702 = vld [vmem:[%s5688 + $0x98] sm:$0xff]
        %v5703 = vld [vmem:[%s5688 + $0xa8] sm:$0xff]
        %v5704 = vld [vmem:[%s5688 + $0xb0] sm:$0xff]
        %v5705 = vld [vmem:[%s5688 + $0xc0] sm:$0xff]
        %v5706 = vld [vmem:[%s5688 + $0xc8] sm:$0xff]
        %v5707 = vld [vmem:[%s5688 + $0xd8] sm:$0xff]
        %v5708 = vld [vmem:[%s5688 + $0xe0] sm:$0xff]
        %v5709 = vld [vmem:[%s5688 + $0xf0] sm:$0xff]
        %v5710 = vld [vmem:[%s5688 + $0xf8] sm:$0xff]
        %v5711 = vld [vmem:[%s5688 + $0x108] sm:$0xff]
        %v5712 = vld [vmem:[%s5688 + $0x110] sm:$0xff]
        %v5713 = vld [vmem:[%s5688 + $0x120] sm:$0xff]
        %v5714 = vld [vmem:[%s5688 + $0x128] sm:$0xff]
        %v5715 = vld [vmem:[%s5688 + $0x138] sm:$0xff]
        %v5716 = vld [vmem:[%s5688 + $0x140] sm:$0xff]
        %v5717 = vld [vmem:[%s5688 + $0x150] sm:$0xff]
        %v5718 = vld [vmem:[%s5688 + $0x158] sm:$0xff]
        %v5719 = vld [vmem:[%s5688 + $0x168] sm:$0xff]
        %v5720 = vld [vmem:[%s5688 + $0x170] sm:$0xff]
        %v5721 = vpack.c.bf16 %v5690, %v5689
        %v5722 = vpack.c.bf16 %v5692, %v5691
        %v5723 = vpack.c.bf16 %v5694, %v5693
        %v5724 = vpack.c.bf16 %v5696, %v5695
        %v5725 = vpack.c.bf16 %v5698, %v5697
        %v5726 = vpack.c.bf16 %v5700, %v5699
        %v5727 = vpack.c.bf16 %v5702, %v5701
        %v5728 = vpack.c.bf16 %v5704, %v5703
        %v5729 = vpack.c.bf16 %v5706, %v5705
        %v5730 = vpack.c.bf16 %v5708, %v5707
        %v5731 = vpack.c.bf16 %v5710, %v5709
        %v5732 = vpack.c.bf16 %v5712, %v5711
        %v5733 = vpack.c.bf16 %v5714, %v5713
        %v5734 = vpack.c.bf16 %v5716, %v5715
        %v5735 = vpack.c.bf16 %v5718, %v5717
        %v5736 = vpack.c.bf16 %v5720, %v5719
        %v5738 = vsel %vm279, %v5721, 0
        %v5741 = vsel %vm279, %v5722, 0
        %v5744 = vsel %vm279, %v5723, 0
        %v5747 = vsel %vm279, %v5724, 0
        %v5750 = vsel %vm279, %v5725, 0
        %v5753 = vsel %vm279, %v5726, 0
        %v5756 = vsel %vm279, %v5727, 0
        %v5759 = vsel %vm279, %v5728, 0
        %v5762 = vsel %vm279, %v5729, 0
        %v5765 = vsel %vm279, %v5730, 0
        %v5768 = vsel %vm279, %v5731, 0
        %v5771 = vsel %vm279, %v5732, 0
        %v5774 = vsel %vm279, %v5733, 0
        %v5777 = vsel %vm279, %v5734, 0
        %v5780 = vsel %vm279, %v5735, 0
        %v5783 = vsel %vm279, %v5736, 0
        %5785 = vmatprep.subr.bf16.mxu0 0
        %5786 = vmatpush1.bf16.msra.mxu0 %v330
        %5787 = vmatprep.subr.bf16.mxu0 0
        %5788 = vmatpush1.bf16.msra.mxu0 0
        %5789 = vmatprep.subr.bf16.mxu0 0
        %5790 = vmatpush1.bf16.msra.mxu0 0
        %5791 = vmatprep.subr.bf16.mxu0 0
        %5792 = vmatpush1.bf16.msra.mxu0 0
        %5793 = vmatprep.subr.bf16.mxu0 0
        %5794 = vmatpush1.bf16.msra.mxu0 0
        %5795 = vmatprep.subr.bf16.mxu0 0
        %5796 = vmatpush1.bf16.msra.mxu0 0
        %5797 = vmatprep.subr.bf16.mxu0 0
        %5798 = vmatpush1.bf16.msra.mxu0 0
        %5799 = vmatprep.subr.bf16.mxu0 0
        %5800 = vmatpush1.bf16.msra.mxu0 0
        %5801 = vmatprep.subr.bf16.mxu0 0
        %5802 = vmatpush1.bf16.msra.mxu0 0
        %5803 = vmatprep.subr.bf16.mxu0 0
        %5804 = vmatpush1.bf16.msra.mxu0 0
        %5805 = vmatprep.subr.bf16.mxu0 0
        %5806 = vmatpush1.bf16.msra.mxu0 0
        %5807 = vmatprep.subr.bf16.mxu0 0
        %5808 = vmatpush1.bf16.msra.mxu0 0
        %5809 = vmatprep.subr.bf16.mxu0 0
        %5810 = vmatpush1.bf16.msra.mxu0 0
        %5811 = vmatprep.subr.bf16.mxu0 0
        %5812 = vmatpush1.bf16.msra.mxu0 0
        %5813 = vmatprep.subr.bf16.mxu0 0
        %5814 = vmatpush1.bf16.msra.mxu0 0
        %5815 = vmatprep.subr.bf16.mxu0 0
        %5816 = vmatpush1.bf16.msra.mxu0 0
        %5817 = vmatprep.mubr.bf16.mxu0 0
        %5818 = vmatmul.mubr.bf16.gmra.mrb[0].mxu0 %v5738
        %v5819 = vpop.f32.mrb[0].mxu0
        %v5820 = vadd.f32 0.0, %v5819
        %v5821 = vpop.f32.mrb[0].mxu0
        %v5822 = vpop.f32.mrb[0].mxu0
        %v5823 = vadd.f32 0.0, %v5822
        %v5824 = vpop.f32.mrb[0].mxu0
        %5825 = vmatprep.mubr.bf16.mxu0 0
        %5826 = vmatmul.mubr.bf16.gmra.mrb[0].mxu0 %v5741
        %v5827 = vpop.f32.mrb[0].mxu0
        %v5828 = vadd.f32 0.0, %v5827
        %v5829 = vpop.f32.mrb[0].mxu0
        %v5830 = vpop.f32.mrb[0].mxu0
        %v5831 = vadd.f32 0.0, %v5830
        %v5832 = vpop.f32.mrb[0].mxu0
        %5833 = vmatprep.mubr.bf16.mxu0 0
        %5834 = vmatmul.mubr.bf16.gmra.mrb[0].mxu0 %v5744
        %v5835 = vpop.f32.mrb[0].mxu0
        %v5836 = vadd.f32 0.0, %v5835
        %v5837 = vpop.f32.mrb[0].mxu0
        %v5838 = vpop.f32.mrb[0].mxu0
        %v5839 = vadd.f32 0.0, %v5838
        %v5840 = vpop.f32.mrb[0].mxu0
        %5841 = vmatprep.mubr.bf16.mxu0 0
        %5842 = vmatmul.mubr.bf16.gmra.mrb[0].mxu0 %v5747
        %v5843 = vpop.f32.mrb[0].mxu0
        %v5844 = vadd.f32 0.0, %v5843
        %v5845 = vpop.f32.mrb[0].mxu0
        %v5846 = vpop.f32.mrb[0].mxu0
        %v5847 = vadd.f32 0.0, %v5846
        %v5848 = vpop.f32.mrb[0].mxu0
        %5849 = vmatprep.mubr.bf16.mxu0 0
        %5850 = vmatmul.mubr.bf16.gmra.mrb[0].mxu0 %v5750
        %v5851 = vpop.f32.mrb[0].mxu0
        %v5852 = vadd.f32 0.0, %v5851
        %v5853 = vpop.f32.mrb[0].mxu0
        %v5854 = vpop.f32.mrb[0].mxu0
        %v5855 = vadd.f32 0.0, %v5854
        %v5856 = vpop.f32.mrb[0].mxu0
        %5857 = vmatprep.mubr.bf16.mxu0 0
        %5858 = vmatmul.mubr.bf16.gmra.mrb[0].mxu0 %v5753
        %v5859 = vpop.f32.mrb[0].mxu0
        %v5860 = vadd.f32 0.0, %v5859
        %v5861 = vpop.f32.mrb[0].mxu0
        %v5862 = vpop.f32.mrb[0].mxu0
        %v5863 = vadd.f32 0.0, %v5862
        %v5864 = vpop.f32.mrb[0].mxu0
        %5865 = vmatprep.mubr.bf16.mxu0 0
        %5866 = vmatmul.mubr.bf16.gmra.mrb[0].mxu0 %v5756
        %v5867 = vpop.f32.mrb[0].mxu0
        %v5868 = vadd.f32 0.0, %v5867
        %v5869 = vpop.f32.mrb[0].mxu0
        %v5870 = vpop.f32.mrb[0].mxu0
        %v5871 = vadd.f32 0.0, %v5870
        %v5872 = vpop.f32.mrb[0].mxu0
        %5873 = vmatprep.mubr.bf16.mxu0 0
        %5874 = vmatmul.mubr.bf16.gmra.mrb[0].mxu0 %v5759
        %v5875 = vpop.f32.mrb[0].mxu0
        %v5876 = vadd.f32 0.0, %v5875
        %v5877 = vpop.f32.mrb[0].mxu0
        %v5878 = vpop.f32.mrb[0].mxu0
        %v5879 = vadd.f32 0.0, %v5878
        %v5880 = vpop.f32.mrb[0].mxu0
        %5881 = vmatprep.mubr.bf16.mxu0 0
        %5882 = vmatmul.mubr.bf16.gmra.mrb[0].mxu0 %v5762
        %v5883 = vpop.f32.mrb[0].mxu0
        %v5884 = vadd.f32 0.0, %v5883
        %v5885 = vpop.f32.mrb[0].mxu0
        %v5886 = vpop.f32.mrb[0].mxu0
        %v5887 = vadd.f32 0.0, %v5886
        %v5888 = vpop.f32.mrb[0].mxu0
        %5889 = vmatprep.mubr.bf16.mxu0 0
        %5890 = vmatmul.mubr.bf16.gmra.mrb[0].mxu0 %v5765
        %v5891 = vpop.f32.mrb[0].mxu0
        %v5892 = vadd.f32 0.0, %v5891
        %v5893 = vpop.f32.mrb[0].mxu0
        %v5894 = vpop.f32.mrb[0].mxu0
        %v5895 = vadd.f32 0.0, %v5894
        %v5896 = vpop.f32.mrb[0].mxu0
        %5897 = vmatprep.mubr.bf16.mxu0 0
        %5898 = vmatmul.mubr.bf16.gmra.mrb[0].mxu0 %v5768
        %v5899 = vpop.f32.mrb[0].mxu0
        %v5900 = vadd.f32 0.0, %v5899
        %v5901 = vpop.f32.mrb[0].mxu0
        %v5902 = vpop.f32.mrb[0].mxu0
        %v5903 = vadd.f32 0.0, %v5902
        %v5904 = vpop.f32.mrb[0].mxu0
        %5905 = vmatprep.mubr.bf16.mxu0 0
        %5906 = vmatmul.mubr.bf16.gmra.mrb[0].mxu0 %v5771
        %v5907 = vpop.f32.mrb[0].mxu0
        %v5908 = vadd.f32 0.0, %v5907
        %v5909 = vpop.f32.mrb[0].mxu0
        %v5910 = vpop.f32.mrb[0].mxu0
        %v5911 = vadd.f32 0.0, %v5910
        %v5912 = vpop.f32.mrb[0].mxu0
        %5913 = vmatprep.mubr.bf16.mxu0 0
        %5914 = vmatmul.mubr.bf16.gmra.mrb[0].mxu0 %v5774
        %v5915 = vpop.f32.mrb[0].mxu0
        %v5916 = vadd.f32 0.0, %v5915
        %v5917 = vpop.f32.mrb[0].mxu0
        %v5918 = vpop.f32.mrb[0].mxu0
        %v5919 = vadd.f32 0.0, %v5918
        %v5920 = vpop.f32.mrb[0].mxu0
        %5921 = vmatprep.mubr.bf16.mxu0 0
        %5922 = vmatmul.mubr.bf16.gmra.mrb[0].mxu0 %v5777
        %v5923 = vpop.f32.mrb[0].mxu0
        %v5924 = vadd.f32 0.0, %v5923
        %v5925 = vpop.f32.mrb[0].mxu0
        %v5926 = vpop.f32.mrb[0].mxu0
        %v5927 = vadd.f32 0.0, %v5926
        %v5928 = vpop.f32.mrb[0].mxu0
        %5929 = vmatprep.mubr.bf16.mxu0 0
        %5930 = vmatmul.mubr.bf16.gmra.mrb[0].mxu0 %v5780
        %v5931 = vpop.f32.mrb[0].mxu0
        %v5932 = vadd.f32 0.0, %v5931
        %v5933 = vpop.f32.mrb[0].mxu0
        %v5934 = vpop.f32.mrb[0].mxu0
        %v5935 = vadd.f32 0.0, %v5934
        %v5936 = vpop.f32.mrb[0].mxu0
        %5937 = vmatprep.mubr.bf16.mxu0 0
        %5938 = vmatmul.mubr.bf16.gmra.mrb[0].mxu0 %v5783
        %v5939 = vpop.f32.mrb[0].mxu0
        %v5940 = vadd.f32 0.0, %v5939
        %v5941 = vpop.f32.mrb[0].mxu0
        %v5942 = vpop.f32.mrb[0].mxu0
        %v5943 = vadd.f32 0.0, %v5942
        %v5944 = vpop.f32.mrb[0].mxu0
        %5945 = vdwg.mxu0
        %v5946 = vadd.f32 %v228, %v5820
        %v5947 = vadd.f32 %v228, %v5823
        %v5948 = vadd.f32 %v228, %v5828
        %v5949 = vadd.f32 %v228, %v5831
        %v5950 = vadd.f32 %v228, %v5836
        %v5951 = vadd.f32 %v228, %v5839
        %v5952 = vadd.f32 %v228, %v5844
        %v5953 = vadd.f32 %v228, %v5847
        %v5954 = vadd.f32 %v228, %v5852
        %v5955 = vadd.f32 %v228, %v5855
        %v5956 = vadd.f32 %v228, %v5860
        %v5957 = vadd.f32 %v228, %v5863
        %v5958 = vadd.f32 %v228, %v5868
        %v5959 = vadd.f32 %v228, %v5871
        %v5960 = vadd.f32 %v228, %v5876
        %v5961 = vadd.f32 %v228, %v5879
        %v5962 = vadd.f32 %v228, %v5884
        %v5963 = vadd.f32 %v228, %v5887
        %v5964 = vadd.f32 %v228, %v5892
        %v5965 = vadd.f32 %v228, %v5895
        %v5966 = vadd.f32 %v228, %v5900
        %v5967 = vadd.f32 %v228, %v5903
        %v5968 = vadd.f32 %v228, %v5908
        %v5969 = vadd.f32 %v228, %v5911
        %v5970 = vadd.f32 %v228, %v5916
        %v5971 = vadd.f32 %v228, %v5919
        %v5972 = vadd.f32 %v228, %v5924
        %v5973 = vadd.f32 %v228, %v5927
        %v5974 = vadd.f32 %v228, %v5932
        %v5975 = vadd.f32 %v228, %v5935
        %v5976 = vadd.f32 %v228, %v5940
        %v5977 = vadd.f32 %v228, %v5943
        %v5978 = vld [vmem:[%s5688 + $0x1] sm:$0xff]
        %v5979 = vld [vmem:[%s5688 + $0x9] sm:$0xff]
        %v5980 = vld [vmem:[%s5688 + $0x19] sm:$0xff]
        %v5981 = vld [vmem:[%s5688 + $0x21] sm:$0xff]
        %v5982 = vld [vmem:[%s5688 + $0x31] sm:$0xff]
        %v5983 = vld [vmem:[%s5688 + $0x39] sm:$0xff]
        %v5984 = vld [vmem:[%s5688 + $0x49] sm:$0xff]
        %v5985 = vld [vmem:[%s5688 + $0x51] sm:$0xff]
        %v5986 = vld [vmem:[%s5688 + $0x61] sm:$0xff]
        %v5987 = vld [vmem:[%s5688 + $0x69] sm:$0xff]
        %v5988 = vld [vmem:[%s5688 + $0x79] sm:$0xff]
        %v5989 = vld [vmem:[%s5688 + $0x81] sm:$0xff]
        %v5990 = vld [vmem:[%s5688 + $0x91] sm:$0xff]
        %v5991 = vld [vmem:[%s5688 + $0x99] sm:$0xff]
        %v5992 = vld [vmem:[%s5688 + $0xa9] sm:$0xff]
        %v5993 = vld [vmem:[%s5688 + $0xb1] sm:$0xff]
        %v5994 = vld [vmem:[%s5688 + $0xc1] sm:$0xff]
        %v5995 = vld [vmem:[%s5688 + $0xc9] sm:$0xff]
        %v5996 = vld [vmem:[%s5688 + $0xd9] sm:$0xff]
        %v5997 = vld [vmem:[%s5688 + $0xe1] sm:$0xff]
        %v5998 = vld [vmem:[%s5688 + $0xf1] sm:$0xff]
        %v5999 = vld [vmem:[%s5688 + $0xf9] sm:$0xff]
        %v6000 = vld [vmem:[%s5688 + $0x109] sm:$0xff]
        %v6001 = vld [vmem:[%s5688 + $0x111] sm:$0xff]
        %v6002 = vld [vmem:[%s5688 + $0x121] sm:$0xff]
        %v6003 = vld [vmem:[%s5688 + $0x129] sm:$0xff]
        %v6004 = vld [vmem:[%s5688 + $0x139] sm:$0xff]
        %v6005 = vld [vmem:[%s5688 + $0x141] sm:$0xff]
        %v6006 = vld [vmem:[%s5688 + $0x151] sm:$0xff]
        %v6007 = vld [vmem:[%s5688 + $0x159] sm:$0xff]
        %v6008 = vld [vmem:[%s5688 + $0x169] sm:$0xff]
        %v6009 = vld [vmem:[%s5688 + $0x171] sm:$0xff]
        %v6010 = vpack.c.bf16 %v5979, %v5978
        %v6011 = vpack.c.bf16 %v5981, %v5980
        %v6012 = vpack.c.bf16 %v5983, %v5982
        %v6013 = vpack.c.bf16 %v5985, %v5984
        %v6014 = vpack.c.bf16 %v5987, %v5986
        %v6015 = vpack.c.bf16 %v5989, %v5988
        %v6016 = vpack.c.bf16 %v5991, %v5990
        %v6017 = vpack.c.bf16 %v5993, %v5992
        %v6018 = vpack.c.bf16 %v5995, %v5994
        %v6019 = vpack.c.bf16 %v5997, %v5996
        %v6020 = vpack.c.bf16 %v5999, %v5998
        %v6021 = vpack.c.bf16 %v6001, %v6000
        %v6022 = vpack.c.bf16 %v6003, %v6002
        %v6023 = vpack.c.bf16 %v6005, %v6004
        %v6024 = vpack.c.bf16 %v6007, %v6006
        %v6025 = vpack.c.bf16 %v6009, %v6008
        %v6027 = vsel %vm279, %v6010, 0
        %v6030 = vsel %vm279, %v6011, 0
        %v6033 = vsel %vm279, %v6012, 0
        %v6036 = vsel %vm279, %v6013, 0
        %v6039 = vsel %vm279, %v6014, 0
        %v6042 = vsel %vm279, %v6015, 0
        %v6045 = vsel %vm279, %v6016, 0
        %v6048 = vsel %vm279, %v6017, 0
        %v6051 = vsel %vm279, %v6018, 0
        %v6054 = vsel %vm279, %v6019, 0
        %v6057 = vsel %vm279, %v6020, 0
        %v6060 = vsel %vm279, %v6021, 0
        %v6063 = vsel %vm279, %v6022, 0
        %v6066 = vsel %vm279, %v6023, 0
        %v6069 = vsel %vm279, %v6024, 0
        %v6072 = vsel %vm279, %v6025, 0
        %6074 = vmatprep.subr.bf16.mxu0 0
        %6075 = vmatpush1.bf16.msra.mxu0 %v624
        %6076 = vmatprep.subr.bf16.mxu0 0
        %6077 = vmatpush1.bf16.msra.mxu0 0
        %6078 = vmatprep.subr.bf16.mxu0 0
        %6079 = vmatpush1.bf16.msra.mxu0 0
        %6080 = vmatprep.subr.bf16.mxu0 0
        %6081 = vmatpush1.bf16.msra.mxu0 0
        %6082 = vmatprep.subr.bf16.mxu0 0
        %6083 = vmatpush1.bf16.msra.mxu0 0
        %6084 = vmatprep.subr.bf16.mxu0 0
        %6085 = vmatpush1.bf16.msra.mxu0 0
        %6086 = vmatprep.subr.bf16.mxu0 0
        %6087 = vmatpush1.bf16.msra.mxu0 0
        %6088 = vmatprep.subr.bf16.mxu0 0
        %6089 = vmatpush1.bf16.msra.mxu0 0
        %6090 = vmatprep.subr.bf16.mxu0 0
        %6091 = vmatpush1.bf16.msra.mxu0 0
        %6092 = vmatprep.subr.bf16.mxu0 0
        %6093 = vmatpush1.bf16.msra.mxu0 0
        %6094 = vmatprep.subr.bf16.mxu0 0
        %6095 = vmatpush1.bf16.msra.mxu0 0
        %6096 = vmatprep.subr.bf16.mxu0 0
        %6097 = vmatpush1.bf16.msra.mxu0 0
        %6098 = vmatprep.subr.bf16.mxu0 0
        %6099 = vmatpush1.bf16.msra.mxu0 0
        %6100 = vmatprep.subr.bf16.mxu0 0
        %6101 = vmatpush1.bf16.msra.mxu0 0
        %6102 = vmatprep.subr.bf16.mxu0 0
        %6103 = vmatpush1.bf16.msra.mxu0 0
        %6104 = vmatprep.subr.bf16.mxu0 0
        %6105 = vmatpush1.bf16.msra.mxu0 0
        %6106 = vmatprep.mubr.bf16.mxu0 0
        %6107 = vmatmul.mubr.bf16.gmra.mrb[0].mxu0 %v6027
        %v6108 = vpop.f32.mrb[0].mxu0
        %v6109 = vadd.f32 0.0, %v6108
        %v6110 = vpop.f32.mrb[0].mxu0
        %v6111 = vpop.f32.mrb[0].mxu0
        %v6112 = vadd.f32 0.0, %v6111
        %v6113 = vpop.f32.mrb[0].mxu0
        %6114 = vmatprep.mubr.bf16.mxu0 0
        %6115 = vmatmul.mubr.bf16.gmra.mrb[0].mxu0 %v6030
        %v6116 = vpop.f32.mrb[0].mxu0
        %v6117 = vadd.f32 0.0, %v6116
        %v6118 = vpop.f32.mrb[0].mxu0
        %v6119 = vpop.f32.mrb[0].mxu0
        %v6120 = vadd.f32 0.0, %v6119
        %v6121 = vpop.f32.mrb[0].mxu0
        %6122 = vmatprep.mubr.bf16.mxu0 0
        %6123 = vmatmul.mubr.bf16.gmra.mrb[0].mxu0 %v6033
        %v6124 = vpop.f32.mrb[0].mxu0
        %v6125 = vadd.f32 0.0, %v6124
        %v6126 = vpop.f32.mrb[0].mxu0
        %v6127 = vpop.f32.mrb[0].mxu0
        %v6128 = vadd.f32 0.0, %v6127
        %v6129 = vpop.f32.mrb[0].mxu0
        %6130 = vmatprep.mubr.bf16.mxu0 0
        %6131 = vmatmul.mubr.bf16.gmra.mrb[0].mxu0 %v6036
        %v6132 = vpop.f32.mrb[0].mxu0
        %v6133 = vadd.f32 0.0, %v6132
        %v6134 = vpop.f32.mrb[0].mxu0
        %v6135 = vpop.f32.mrb[0].mxu0
        %v6136 = vadd.f32 0.0, %v6135
        %v6137 = vpop.f32.mrb[0].mxu0
        %6138 = vmatprep.mubr.bf16.mxu0 0
        %6139 = vmatmul.mubr.bf16.gmra.mrb[0].mxu0 %v6039
        %v6140 = vpop.f32.mrb[0].mxu0
        %v6141 = vadd.f32 0.0, %v6140
        %v6142 = vpop.f32.mrb[0].mxu0
        %v6143 = vpop.f32.mrb[0].mxu0
        %v6144 = vadd.f32 0.0, %v6143
        %v6145 = vpop.f32.mrb[0].mxu0
        %6146 = vmatprep.mubr.bf16.mxu0 0
        %6147 = vmatmul.mubr.bf16.gmra.mrb[0].mxu0 %v6042
        %v6148 = vpop.f32.mrb[0].mxu0
        %v6149 = vadd.f32 0.0, %v6148
        %v6150 = vpop.f32.mrb[0].mxu0
        %v6151 = vpop.f32.mrb[0].mxu0
        %v6152 = vadd.f32 0.0, %v6151
        %v6153 = vpop.f32.mrb[0].mxu0
        %6154 = vmatprep.mubr.bf16.mxu0 0
        %6155 = vmatmul.mubr.bf16.gmra.mrb[0].mxu0 %v6045
        %v6156 = vpop.f32.mrb[0].mxu0
        %v6157 = vadd.f32 0.0, %v6156
        %v6158 = vpop.f32.mrb[0].mxu0
        %v6159 = vpop.f32.mrb[0].mxu0
        %v6160 = vadd.f32 0.0, %v6159
        %v6161 = vpop.f32.mrb[0].mxu0
        %6162 = vmatprep.mubr.bf16.mxu0 0
        %6163 = vmatmul.mubr.bf16.gmra.mrb[0].mxu0 %v6048
        %v6164 = vpop.f32.mrb[0].mxu0
        %v6165 = vadd.f32 0.0, %v6164
        %v6166 = vpop.f32.mrb[0].mxu0
        %v6167 = vpop.f32.mrb[0].mxu0
        %v6168 = vadd.f32 0.0, %v6167
        %v6169 = vpop.f32.mrb[0].mxu0
        %6170 = vmatprep.mubr.bf16.mxu0 0
        %6171 = vmatmul.mubr.bf16.gmra.mrb[0].mxu0 %v6051
        %v6172 = vpop.f32.mrb[0].mxu0
        %v6173 = vadd.f32 0.0, %v6172
        %v6174 = vpop.f32.mrb[0].mxu0
        %v6175 = vpop.f32.mrb[0].mxu0
        %v6176 = vadd.f32 0.0, %v6175
        %v6177 = vpop.f32.mrb[0].mxu0
        %6178 = vmatprep.mubr.bf16.mxu0 0
        %6179 = vmatmul.mubr.bf16.gmra.mrb[0].mxu0 %v6054
        %v6180 = vpop.f32.mrb[0].mxu0
        %v6181 = vadd.f32 0.0, %v6180
        %v6182 = vpop.f32.mrb[0].mxu0
        %v6183 = vpop.f32.mrb[0].mxu0
        %v6184 = vadd.f32 0.0, %v6183
        %v6185 = vpop.f32.mrb[0].mxu0
        %6186 = vmatprep.mubr.bf16.mxu0 0
        %6187 = vmatmul.mubr.bf16.gmra.mrb[0].mxu0 %v6057
        %v6188 = vpop.f32.mrb[0].mxu0
        %v6189 = vadd.f32 0.0, %v6188
        %v6190 = vpop.f32.mrb[0].mxu0
        %v6191 = vpop.f32.mrb[0].mxu0
        %v6192 = vadd.f32 0.0, %v6191
        %v6193 = vpop.f32.mrb[0].mxu0
        %6194 = vmatprep.mubr.bf16.mxu0 0
        %6195 = vmatmul.mubr.bf16.gmra.mrb[0].mxu0 %v6060
        %v6196 = vpop.f32.mrb[0].mxu0
        %v6197 = vadd.f32 0.0, %v6196
        %v6198 = vpop.f32.mrb[0].mxu0
        %v6199 = vpop.f32.mrb[0].mxu0
        %v6200 = vadd.f32 0.0, %v6199
        %v6201 = vpop.f32.mrb[0].mxu0
        %6202 = vmatprep.mubr.bf16.mxu0 0
        %6203 = vmatmul.mubr.bf16.gmra.mrb[0].mxu0 %v6063
        %v6204 = vpop.f32.mrb[0].mxu0
        %v6205 = vadd.f32 0.0, %v6204
        %v6206 = vpop.f32.mrb[0].mxu0
        %v6207 = vpop.f32.mrb[0].mxu0
        %v6208 = vadd.f32 0.0, %v6207
        %v6209 = vpop.f32.mrb[0].mxu0
        %6210 = vmatprep.mubr.bf16.mxu0 0
        %6211 = vmatmul.mubr.bf16.gmra.mrb[0].mxu0 %v6066
        %v6212 = vpop.f32.mrb[0].mxu0
        %v6213 = vadd.f32 0.0, %v6212
        %v6214 = vpop.f32.mrb[0].mxu0
        %v6215 = vpop.f32.mrb[0].mxu0
        %v6216 = vadd.f32 0.0, %v6215
        %v6217 = vpop.f32.mrb[0].mxu0
        %6218 = vmatprep.mubr.bf16.mxu0 0
        %6219 = vmatmul.mubr.bf16.gmra.mrb[0].mxu0 %v6069
        %v6220 = vpop.f32.mrb[0].mxu0
        %v6221 = vadd.f32 0.0, %v6220
        %v6222 = vpop.f32.mrb[0].mxu0
        %v6223 = vpop.f32.mrb[0].mxu0
        %v6224 = vadd.f32 0.0, %v6223
        %v6225 = vpop.f32.mrb[0].mxu0
        %6226 = vmatprep.mubr.bf16.mxu0 0
        %6227 = vmatmul.mubr.bf16.gmra.mrb[0].mxu0 %v6072
        %v6228 = vpop.f32.mrb[0].mxu0
        %v6229 = vadd.f32 0.0, %v6228
        %v6230 = vpop.f32.mrb[0].mxu0
        %v6231 = vpop.f32.mrb[0].mxu0
        %v6232 = vadd.f32 0.0, %v6231
        %v6233 = vpop.f32.mrb[0].mxu0
        %6234 = vdwg.mxu0
        %v6235 = vadd.f32 %v5946, %v6109
        %v6236 = vadd.f32 %v5947, %v6112
        %v6237 = vadd.f32 %v5948, %v6117
        %v6238 = vadd.f32 %v5949, %v6120
        %v6239 = vadd.f32 %v5950, %v6125
        %v6240 = vadd.f32 %v5951, %v6128
        %v6241 = vadd.f32 %v5952, %v6133
        %v6242 = vadd.f32 %v5953, %v6136
        %v6243 = vadd.f32 %v5954, %v6141
        %v6244 = vadd.f32 %v5955, %v6144
        %v6245 = vadd.f32 %v5956, %v6149
        %v6246 = vadd.f32 %v5957, %v6152
        %v6247 = vadd.f32 %v5958, %v6157
        %v6248 = vadd.f32 %v5959, %v6160
        %v6249 = vadd.f32 %v5960, %v6165
        %v6250 = vadd.f32 %v5961, %v6168
        %v6251 = vadd.f32 %v5962, %v6173
        %v6252 = vadd.f32 %v5963, %v6176
        %v6253 = vadd.f32 %v5964, %v6181
        %v6254 = vadd.f32 %v5965, %v6184
        %v6255 = vadd.f32 %v5966, %v6189
        %v6256 = vadd.f32 %v5967, %v6192
        %v6257 = vadd.f32 %v5968, %v6197
        %v6258 = vadd.f32 %v5969, %v6200
        %v6259 = vadd.f32 %v5970, %v6205
        %v6260 = vadd.f32 %v5971, %v6208
        %v6261 = vadd.f32 %v5972, %v6213
        %v6262 = vadd.f32 %v5973, %v6216
        %v6263 = vadd.f32 %v5974, %v6221
        %v6264 = vadd.f32 %v5975, %v6224
        %v6265 = vadd.f32 %v5976, %v6229
        %v6266 = vadd.f32 %v5977, %v6232
        %v6267 = vld [vmem:[%s5688 + $0x2] sm:$0xff]
        %v6268 = vld [vmem:[%s5688 + $0xa] sm:$0xff]
        %v6269 = vld [vmem:[%s5688 + $0x1a] sm:$0xff]
        %v6270 = vld [vmem:[%s5688 + $0x22] sm:$0xff]
        %v6271 = vld [vmem:[%s5688 + $0x32] sm:$0xff]
        %v6272 = vld [vmem:[%s5688 + $0x3a] sm:$0xff]
        %v6273 = vld [vmem:[%s5688 + $0x4a] sm:$0xff]
        %v6274 = vld [vmem:[%s5688 + $0x52] sm:$0xff]
        %v6275 = vld [vmem:[%s5688 + $0x62] sm:$0xff]
        %v6276 = vld [vmem:[%s5688 + $0x6a] sm:$0xff]
        %v6277 = vld [vmem:[%s5688 + $0x7a] sm:$0xff]
        %v6278 = vld [vmem:[%s5688 + $0x82] sm:$0xff]
        %v6279 = vld [vmem:[%s5688 + $0x92] sm:$0xff]
        %v6280 = vld [vmem:[%s5688 + $0x9a] sm:$0xff]
        %v6281 = vld [vmem:[%s5688 + $0xaa] sm:$0xff]
        %v6282 = vld [vmem:[%s5688 + $0xb2] sm:$0xff]
        %v6283 = vld [vmem:[%s5688 + $0xc2] sm:$0xff]
        %v6284 = vld [vmem:[%s5688 + $0xca] sm:$0xff]
        %v6285 = vld [vmem:[%s5688 + $0xda] sm:$0xff]
        %v6286 = vld [vmem:[%s5688 + $0xe2] sm:$0xff]
        %v6287 = vld [vmem:[%s5688 + $0xf2] sm:$0xff]
        %v6288 = vld [vmem:[%s5688 + $0xfa] sm:$0xff]
        %v6289 = vld [vmem:[%s5688 + $0x10a] sm:$0xff]
        %v6290 = vld [vmem:[%s5688 + $0x112] sm:$0xff]
        %v6291 = vld [vmem:[%s5688 + $0x122] sm:$0xff]
        %v6292 = vld [vmem:[%s5688 + $0x12a] sm:$0xff]
        %v6293 = vld [vmem:[%s5688 + $0x13a] sm:$0xff]
        %v6294 = vld [vmem:[%s5688 + $0x142] sm:$0xff]
        %v6295 = vld [vmem:[%s5688 + $0x152] sm:$0xff]
        %v6296 = vld [vmem:[%s5688 + $0x15a] sm:$0xff]
        %v6297 = vld [vmem:[%s5688 + $0x16a] sm:$0xff]
        %v6298 = vld [vmem:[%s5688 + $0x172] sm:$0xff]
        %v6299 = vpack.c.bf16 %v6268, %v6267
        %v6300 = vpack.c.bf16 %v6270, %v6269
        %v6301 = vpack.c.bf16 %v6272, %v6271
        %v6302 = vpack.c.bf16 %v6274, %v6273
        %v6303 = vpack.c.bf16 %v6276, %v6275
        %v6304 = vpack.c.bf16 %v6278, %v6277
        %v6305 = vpack.c.bf16 %v6280, %v6279
        %v6306 = vpack.c.bf16 %v6282, %v6281
        %v6307 = vpack.c.bf16 %v6284, %v6283
        %v6308 = vpack.c.bf16 %v6286, %v6285
        %v6309 = vpack.c.bf16 %v6288, %v6287
        %v6310 = vpack.c.bf16 %v6290, %v6289
        %v6311 = vpack.c.bf16 %v6292, %v6291
        %v6312 = vpack.c.bf16 %v6294, %v6293
        %v6313 = vpack.c.bf16 %v6296, %v6295
        %v6314 = vpack.c.bf16 %v6298, %v6297
        %v6316 = vsel %vm279, %v6299, 0
        %v6319 = vsel %vm279, %v6300, 0
        %v6322 = vsel %vm279, %v6301, 0
        %v6325 = vsel %vm279, %v6302, 0
        %v6328 = vsel %vm279, %v6303, 0
        %v6331 = vsel %vm279, %v6304, 0
        %v6334 = vsel %vm279, %v6305, 0
        %v6337 = vsel %vm279, %v6306, 0
        %v6340 = vsel %vm279, %v6307, 0
        %v6343 = vsel %vm279, %v6308, 0
        %v6346 = vsel %vm279, %v6309, 0
        %v6349 = vsel %vm279, %v6310, 0
        %v6352 = vsel %vm279, %v6311, 0
        %v6355 = vsel %vm279, %v6312, 0
        %v6358 = vsel %vm279, %v6313, 0
        %v6361 = vsel %vm279, %v6314, 0
        %6363 = vmatprep.subr.bf16.mxu0 0
        %6364 = vmatpush1.bf16.msra.mxu0 %v918
        %6365 = vmatprep.subr.bf16.mxu0 0
        %6366 = vmatpush1.bf16.msra.mxu0 0
        %6367 = vmatprep.subr.bf16.mxu0 0
        %6368 = vmatpush1.bf16.msra.mxu0 0
        %6369 = vmatprep.subr.bf16.mxu0 0
        %6370 = vmatpush1.bf16.msra.mxu0 0
        %6371 = vmatprep.subr.bf16.mxu0 0
        %6372 = vmatpush1.bf16.msra.mxu0 0
        %6373 = vmatprep.subr.bf16.mxu0 0
        %6374 = vmatpush1.bf16.msra.mxu0 0
        %6375 = vmatprep.subr.bf16.mxu0 0
        %6376 = vmatpush1.bf16.msra.mxu0 0
        %6377 = vmatprep.subr.bf16.mxu0 0
        %6378 = vmatpush1.bf16.msra.mxu0 0
        %6379 = vmatprep.subr.bf16.mxu0 0
        %6380 = vmatpush1.bf16.msra.mxu0 0
        %6381 = vmatprep.subr.bf16.mxu0 0
        %6382 = vmatpush1.bf16.msra.mxu0 0
        %6383 = vmatprep.subr.bf16.mxu0 0
        %6384 = vmatpush1.bf16.msra.mxu0 0
        %6385 = vmatprep.subr.bf16.mxu0 0
        %6386 = vmatpush1.bf16.msra.mxu0 0
        %6387 = vmatprep.subr.bf16.mxu0 0
        %6388 = vmatpush1.bf16.msra.mxu0 0
        %6389 = vmatprep.subr.bf16.mxu0 0
        %6390 = vmatpush1.bf16.msra.mxu0 0
        %6391 = vmatprep.subr.bf16.mxu0 0
        %6392 = vmatpush1.bf16.msra.mxu0 0
        %6393 = vmatprep.subr.bf16.mxu0 0
        %6394 = vmatpush1.bf16.msra.mxu0 0
        %6395 = vmatprep.mubr.bf16.mxu0 0
        %6396 = vmatmul.mubr.bf16.gmra.mrb[0].mxu0 %v6316
        %v6397 = vpop.f32.mrb[0].mxu0
        %v6398 = vadd.f32 0.0, %v6397
        %v6399 = vpop.f32.mrb[0].mxu0
        %v6400 = vpop.f32.mrb[0].mxu0
        %v6401 = vadd.f32 0.0, %v6400
        %v6402 = vpop.f32.mrb[0].mxu0
        %6403 = vmatprep.mubr.bf16.mxu0 0
        %6404 = vmatmul.mubr.bf16.gmra.mrb[0].mxu0 %v6319
        %v6405 = vpop.f32.mrb[0].mxu0
        %v6406 = vadd.f32 0.0, %v6405
        %v6407 = vpop.f32.mrb[0].mxu0
        %v6408 = vpop.f32.mrb[0].mxu0
        %v6409 = vadd.f32 0.0, %v6408
        %v6410 = vpop.f32.mrb[0].mxu0
        %6411 = vmatprep.mubr.bf16.mxu0 0
        %6412 = vmatmul.mubr.bf16.gmra.mrb[0].mxu0 %v6322
        %v6413 = vpop.f32.mrb[0].mxu0
        %v6414 = vadd.f32 0.0, %v6413
        %v6415 = vpop.f32.mrb[0].mxu0
        %v6416 = vpop.f32.mrb[0].mxu0
        %v6417 = vadd.f32 0.0, %v6416
        %v6418 = vpop.f32.mrb[0].mxu0
        %6419 = vmatprep.mubr.bf16.mxu0 0
        %6420 = vmatmul.mubr.bf16.gmra.mrb[0].mxu0 %v6325
        %v6421 = vpop.f32.mrb[0].mxu0
        %v6422 = vadd.f32 0.0, %v6421
        %v6423 = vpop.f32.mrb[0].mxu0
        %v6424 = vpop.f32.mrb[0].mxu0
        %v6425 = vadd.f32 0.0, %v6424
        %v6426 = vpop.f32.mrb[0].mxu0
        %6427 = vmatprep.mubr.bf16.mxu0 0
        %6428 = vmatmul.mubr.bf16.gmra.mrb[0].mxu0 %v6328
        %v6429 = vpop.f32.mrb[0].mxu0
        %v6430 = vadd.f32 0.0, %v6429
        %v6431 = vpop.f32.mrb[0].mxu0
        %v6432 = vpop.f32.mrb[0].mxu0
        %v6433 = vadd.f32 0.0, %v6432
        %v6434 = vpop.f32.mrb[0].mxu0
        %6435 = vmatprep.mubr.bf16.mxu0 0
        %6436 = vmatmul.mubr.bf16.gmra.mrb[0].mxu0 %v6331
        %v6437 = vpop.f32.mrb[0].mxu0
        %v6438 = vadd.f32 0.0, %v6437
        %v6439 = vpop.f32.mrb[0].mxu0
        %v6440 = vpop.f32.mrb[0].mxu0
        %v6441 = vadd.f32 0.0, %v6440
        %v6442 = vpop.f32.mrb[0].mxu0
        %6443 = vmatprep.mubr.bf16.mxu0 0
        %6444 = vmatmul.mubr.bf16.gmra.mrb[0].mxu0 %v6334
        %v6445 = vpop.f32.mrb[0].mxu0
        %v6446 = vadd.f32 0.0, %v6445
        %v6447 = vpop.f32.mrb[0].mxu0
        %v6448 = vpop.f32.mrb[0].mxu0
        %v6449 = vadd.f32 0.0, %v6448
        %v6450 = vpop.f32.mrb[0].mxu0
        %6451 = vmatprep.mubr.bf16.mxu0 0
        %6452 = vmatmul.mubr.bf16.gmra.mrb[0].mxu0 %v6337
        %v6453 = vpop.f32.mrb[0].mxu0
        %v6454 = vadd.f32 0.0, %v6453
        %v6455 = vpop.f32.mrb[0].mxu0
        %v6456 = vpop.f32.mrb[0].mxu0
        %v6457 = vadd.f32 0.0, %v6456
        %v6458 = vpop.f32.mrb[0].mxu0
        %6459 = vmatprep.mubr.bf16.mxu0 0
        %6460 = vmatmul.mubr.bf16.gmra.mrb[0].mxu0 %v6340
        %v6461 = vpop.f32.mrb[0].mxu0
        %v6462 = vadd.f32 0.0, %v6461
        %v6463 = vpop.f32.mrb[0].mxu0
        %v6464 = vpop.f32.mrb[0].mxu0
        %v6465 = vadd.f32 0.0, %v6464
        %v6466 = vpop.f32.mrb[0].mxu0
        %6467 = vmatprep.mubr.bf16.mxu0 0
        %6468 = vmatmul.mubr.bf16.gmra.mrb[0].mxu0 %v6343
        %v6469 = vpop.f32.mrb[0].mxu0
        %v6470 = vadd.f32 0.0, %v6469
        %v6471 = vpop.f32.mrb[0].mxu0
        %v6472 = vpop.f32.mrb[0].mxu0
        %v6473 = vadd.f32 0.0, %v6472
        %v6474 = vpop.f32.mrb[0].mxu0
        %6475 = vmatprep.mubr.bf16.mxu0 0
        %6476 = vmatmul.mubr.bf16.gmra.mrb[0].mxu0 %v6346
        %v6477 = vpop.f32.mrb[0].mxu0
        %v6478 = vadd.f32 0.0, %v6477
        %v6479 = vpop.f32.mrb[0].mxu0
        %v6480 = vpop.f32.mrb[0].mxu0
        %v6481 = vadd.f32 0.0, %v6480
        %v6482 = vpop.f32.mrb[0].mxu0
        %6483 = vmatprep.mubr.bf16.mxu0 0
        %6484 = vmatmul.mubr.bf16.gmra.mrb[0].mxu0 %v6349
        %v6485 = vpop.f32.mrb[0].mxu0
        %v6486 = vadd.f32 0.0, %v6485
        %v6487 = vpop.f32.mrb[0].mxu0
        %v6488 = vpop.f32.mrb[0].mxu0
        %v6489 = vadd.f32 0.0, %v6488
        %v6490 = vpop.f32.mrb[0].mxu0
        %6491 = vmatprep.mubr.bf16.mxu0 0
        %6492 = vmatmul.mubr.bf16.gmra.mrb[0].mxu0 %v6352
        %v6493 = vpop.f32.mrb[0].mxu0
        %v6494 = vadd.f32 0.0, %v6493
        %v6495 = vpop.f32.mrb[0].mxu0
        %v6496 = vpop.f32.mrb[0].mxu0
        %v6497 = vadd.f32 0.0, %v6496
        %v6498 = vpop.f32.mrb[0].mxu0
        %6499 = vmatprep.mubr.bf16.mxu0 0
        %6500 = vmatmul.mubr.bf16.gmra.mrb[0].mxu0 %v6355
        %v6501 = vpop.f32.mrb[0].mxu0
        %v6502 = vadd.f32 0.0, %v6501
        %v6503 = vpop.f32.mrb[0].mxu0
        %v6504 = vpop.f32.mrb[0].mxu0
        %v6505 = vadd.f32 0.0, %v6504
        %v6506 = vpop.f32.mrb[0].mxu0
        %6507 = vmatprep.mubr.bf16.mxu0 0
        %6508 = vmatmul.mubr.bf16.gmra.mrb[0].mxu0 %v6358
        %v6509 = vpop.f32.mrb[0].mxu0
        %v6510 = vadd.f32 0.0, %v6509
        %v6511 = vpop.f32.mrb[0].mxu0
        %v6512 = vpop.f32.mrb[0].mxu0
        %v6513 = vadd.f32 0.0, %v6512
        %v6514 = vpop.f32.mrb[0].mxu0
        %6515 = vmatprep.mubr.bf16.mxu0 0
        %6516 = vmatmul.mubr.bf16.gmra.mrb[0].mxu0 %v6361
        %v6517 = vpop.f32.mrb[0].mxu0
        %v6518 = vadd.f32 0.0, %v6517
        %v6519 = vpop.f32.mrb[0].mxu0
        %v6520 = vpop.f32.mrb[0].mxu0
        %v6521 = vadd.f32 0.0, %v6520
        %v6522 = vpop.f32.mrb[0].mxu0
        %6523 = vdwg.mxu0
        %v6524 = vadd.f32 %v6235, %v6398
        %v6525 = vadd.f32 %v6236, %v6401
        %v6526 = vadd.f32 %v6237, %v6406
        %v6527 = vadd.f32 %v6238, %v6409
        %v6528 = vadd.f32 %v6239, %v6414
        %v6529 = vadd.f32 %v6240, %v6417
        %v6530 = vadd.f32 %v6241, %v6422
        %v6531 = vadd.f32 %v6242, %v6425
        %v6532 = vadd.f32 %v6243, %v6430
        %v6533 = vadd.f32 %v6244, %v6433
        %v6534 = vadd.f32 %v6245, %v6438
        %v6535 = vadd.f32 %v6246, %v6441
        %v6536 = vadd.f32 %v6247, %v6446
        %v6537 = vadd.f32 %v6248, %v6449
        %v6538 = vadd.f32 %v6249, %v6454
        %v6539 = vadd.f32 %v6250, %v6457
        %v6540 = vadd.f32 %v6251, %v6462
        %v6541 = vadd.f32 %v6252, %v6465
        %v6542 = vadd.f32 %v6253, %v6470
        %v6543 = vadd.f32 %v6254, %v6473
        %v6544 = vadd.f32 %v6255, %v6478
        %v6545 = vadd.f32 %v6256, %v6481
        %v6546 = vadd.f32 %v6257, %v6486
        %v6547 = vadd.f32 %v6258, %v6489
        %v6548 = vadd.f32 %v6259, %v6494
        %v6549 = vadd.f32 %v6260, %v6497
        %v6550 = vadd.f32 %v6261, %v6502
        %v6551 = vadd.f32 %v6262, %v6505
        %v6552 = vadd.f32 %v6263, %v6510
        %v6553 = vadd.f32 %v6264, %v6513
        %v6554 = vadd.f32 %v6265, %v6518
        %v6555 = vadd.f32 %v6266, %v6521
        %s6556 = scalar_lea.vmem %s221, 888
        %v6557 = vld [vmem:[%s6556] sm:$0xff]
        %v6558 = vld [vmem:[%s6556 + $0x8] sm:$0xff]
        %v6559 = vld [vmem:[%s6556 + $0x18] sm:$0xff]
        %v6560 = vld [vmem:[%s6556 + $0x20] sm:$0xff]
        %v6561 = vld [vmem:[%s6556 + $0x30] sm:$0xff]
        %v6562 = vld [vmem:[%s6556 + $0x38] sm:$0xff]
        %v6563 = vld [vmem:[%s6556 + $0x48] sm:$0xff]
        %v6564 = vld [vmem:[%s6556 + $0x50] sm:$0xff]
        %v6565 = vld [vmem:[%s6556 + $0x60] sm:$0xff]
        %v6566 = vld [vmem:[%s6556 + $0x68] sm:$0xff]
        %v6567 = vld [vmem:[%s6556 + $0x78] sm:$0xff]
        %v6568 = vld [vmem:[%s6556 + $0x80] sm:$0xff]
        %v6569 = vld [vmem:[%s6556 + $0x90] sm:$0xff]
        %v6570 = vld [vmem:[%s6556 + $0x98] sm:$0xff]
        %v6571 = vld [vmem:[%s6556 + $0xa8] sm:$0xff]
        %v6572 = vld [vmem:[%s6556 + $0xb0] sm:$0xff]
        %v6573 = vld [vmem:[%s6556 + $0xc0] sm:$0xff]
        %v6574 = vld [vmem:[%s6556 + $0xc8] sm:$0xff]
        %v6575 = vld [vmem:[%s6556 + $0xd8] sm:$0xff]
        %v6576 = vld [vmem:[%s6556 + $0xe0] sm:$0xff]
        %v6577 = vld [vmem:[%s6556 + $0xf0] sm:$0xff]
        %v6578 = vld [vmem:[%s6556 + $0xf8] sm:$0xff]
        %v6579 = vld [vmem:[%s6556 + $0x108] sm:$0xff]
        %v6580 = vld [vmem:[%s6556 + $0x110] sm:$0xff]
        %v6581 = vld [vmem:[%s6556 + $0x120] sm:$0xff]
        %v6582 = vld [vmem:[%s6556 + $0x128] sm:$0xff]
        %v6583 = vld [vmem:[%s6556 + $0x138] sm:$0xff]
        %v6584 = vld [vmem:[%s6556 + $0x140] sm:$0xff]
        %v6585 = vld [vmem:[%s6556 + $0x150] sm:$0xff]
        %v6586 = vld [vmem:[%s6556 + $0x158] sm:$0xff]
        %v6587 = vld [vmem:[%s6556 + $0x168] sm:$0xff]
        %v6588 = vld [vmem:[%s6556 + $0x170] sm:$0xff]
        %v6589 = vpack.c.bf16 %v6558, %v6557
        %v6590 = vpack.c.bf16 %v6560, %v6559
        %v6591 = vpack.c.bf16 %v6562, %v6561
        %v6592 = vpack.c.bf16 %v6564, %v6563
        %v6593 = vpack.c.bf16 %v6566, %v6565
        %v6594 = vpack.c.bf16 %v6568, %v6567
        %v6595 = vpack.c.bf16 %v6570, %v6569
        %v6596 = vpack.c.bf16 %v6572, %v6571
        %v6597 = vpack.c.bf16 %v6574, %v6573
        %v6598 = vpack.c.bf16 %v6576, %v6575
        %v6599 = vpack.c.bf16 %v6578, %v6577
        %v6600 = vpack.c.bf16 %v6580, %v6579
        %v6601 = vpack.c.bf16 %v6582, %v6581
        %v6602 = vpack.c.bf16 %v6584, %v6583
        %v6603 = vpack.c.bf16 %v6586, %v6585
        %v6604 = vpack.c.bf16 %v6588, %v6587
        %v6606 = vsel %vm279, %v6589, 0
        %v6609 = vsel %vm279, %v6590, 0
        %v6612 = vsel %vm279, %v6591, 0
        %v6615 = vsel %vm279, %v6592, 0
        %v6618 = vsel %vm279, %v6593, 0
        %v6621 = vsel %vm279, %v6594, 0
        %v6624 = vsel %vm279, %v6595, 0
        %v6627 = vsel %vm279, %v6596, 0
        %v6630 = vsel %vm279, %v6597, 0
        %v6633 = vsel %vm279, %v6598, 0
        %v6636 = vsel %vm279, %v6599, 0
        %v6639 = vsel %vm279, %v6600, 0
        %v6642 = vsel %vm279, %v6601, 0
        %v6645 = vsel %vm279, %v6602, 0
        %v6648 = vsel %vm279, %v6603, 0
        %v6651 = vsel %vm279, %v6604, 0
        %6653 = vmatprep.subr.bf16.mxu0 0
        %6654 = vmatpush1.bf16.msra.mxu0 %v1213
        %6655 = vmatprep.subr.bf16.mxu0 0
        %6656 = vmatpush1.bf16.msra.mxu0 0
        %6657 = vmatprep.subr.bf16.mxu0 0
        %6658 = vmatpush1.bf16.msra.mxu0 0
        %6659 = vmatprep.subr.bf16.mxu0 0
        %6660 = vmatpush1.bf16.msra.mxu0 0
        %6661 = vmatprep.subr.bf16.mxu0 0
        %6662 = vmatpush1.bf16.msra.mxu0 0
        %6663 = vmatprep.subr.bf16.mxu0 0
        %6664 = vmatpush1.bf16.msra.mxu0 0
        %6665 = vmatprep.subr.bf16.mxu0 0
        %6666 = vmatpush1.bf16.msra.mxu0 0
        %6667 = vmatprep.subr.bf16.mxu0 0
        %6668 = vmatpush1.bf16.msra.mxu0 0
        %6669 = vmatprep.subr.bf16.mxu0 0
        %6670 = vmatpush1.bf16.msra.mxu0 0
        %6671 = vmatprep.subr.bf16.mxu0 0
        %6672 = vmatpush1.bf16.msra.mxu0 0
        %6673 = vmatprep.subr.bf16.mxu0 0
        %6674 = vmatpush1.bf16.msra.mxu0 0
        %6675 = vmatprep.subr.bf16.mxu0 0
        %6676 = vmatpush1.bf16.msra.mxu0 0
        %6677 = vmatprep.subr.bf16.mxu0 0
        %6678 = vmatpush1.bf16.msra.mxu0 0
        %6679 = vmatprep.subr.bf16.mxu0 0
        %6680 = vmatpush1.bf16.msra.mxu0 0
        %6681 = vmatprep.subr.bf16.mxu0 0
        %6682 = vmatpush1.bf16.msra.mxu0 0
        %6683 = vmatprep.subr.bf16.mxu0 0
        %6684 = vmatpush1.bf16.msra.mxu0 0
        %6685 = vmatprep.mubr.bf16.mxu0 0
        %6686 = vmatmul.mubr.bf16.gmra.mrb[0].mxu0 %v6606
        %v6687 = vpop.f32.mrb[0].mxu0
        %v6688 = vadd.f32 0.0, %v6687
        %v6689 = vpop.f32.mrb[0].mxu0
        %v6690 = vpop.f32.mrb[0].mxu0
        %v6691 = vadd.f32 0.0, %v6690
        %v6692 = vpop.f32.mrb[0].mxu0
        %6693 = vmatprep.mubr.bf16.mxu0 0
        %6694 = vmatmul.mubr.bf16.gmra.mrb[0].mxu0 %v6609
        %v6695 = vpop.f32.mrb[0].mxu0
        %v6696 = vadd.f32 0.0, %v6695
        %v6697 = vpop.f32.mrb[0].mxu0
        %v6698 = vpop.f32.mrb[0].mxu0
        %v6699 = vadd.f32 0.0, %v6698
        %v6700 = vpop.f32.mrb[0].mxu0
        %6701 = vmatprep.mubr.bf16.mxu0 0
        %6702 = vmatmul.mubr.bf16.gmra.mrb[0].mxu0 %v6612
        %v6703 = vpop.f32.mrb[0].mxu0
        %v6704 = vadd.f32 0.0, %v6703
        %v6705 = vpop.f32.mrb[0].mxu0
        %v6706 = vpop.f32.mrb[0].mxu0
        %v6707 = vadd.f32 0.0, %v6706
        %v6708 = vpop.f32.mrb[0].mxu0
        %6709 = vmatprep.mubr.bf16.mxu0 0
        %6710 = vmatmul.mubr.bf16.gmra.mrb[0].mxu0 %v6615
        %v6711 = vpop.f32.mrb[0].mxu0
        %v6712 = vadd.f32 0.0, %v6711
        %v6713 = vpop.f32.mrb[0].mxu0
        %v6714 = vpop.f32.mrb[0].mxu0
        %v6715 = vadd.f32 0.0, %v6714
        %v6716 = vpop.f32.mrb[0].mxu0
        %6717 = vmatprep.mubr.bf16.mxu0 0
        %6718 = vmatmul.mubr.bf16.gmra.mrb[0].mxu0 %v6618
        %v6719 = vpop.f32.mrb[0].mxu0
        %v6720 = vadd.f32 0.0, %v6719
        %v6721 = vpop.f32.mrb[0].mxu0
        %v6722 = vpop.f32.mrb[0].mxu0
        %v6723 = vadd.f32 0.0, %v6722
        %v6724 = vpop.f32.mrb[0].mxu0
        %6725 = vmatprep.mubr.bf16.mxu0 0
        %6726 = vmatmul.mubr.bf16.gmra.mrb[0].mxu0 %v6621
        %v6727 = vpop.f32.mrb[0].mxu0
        %v6728 = vadd.f32 0.0, %v6727
        %v6729 = vpop.f32.mrb[0].mxu0
        %v6730 = vpop.f32.mrb[0].mxu0
        %v6731 = vadd.f32 0.0, %v6730
        %v6732 = vpop.f32.mrb[0].mxu0
        %6733 = vmatprep.mubr.bf16.mxu0 0
        %6734 = vmatmul.mubr.bf16.gmra.mrb[0].mxu0 %v6624
        %v6735 = vpop.f32.mrb[0].mxu0
        %v6736 = vadd.f32 0.0, %v6735
        %v6737 = vpop.f32.mrb[0].mxu0
        %v6738 = vpop.f32.mrb[0].mxu0
        %v6739 = vadd.f32 0.0, %v6738
        %v6740 = vpop.f32.mrb[0].mxu0
        %6741 = vmatprep.mubr.bf16.mxu0 0
        %6742 = vmatmul.mubr.bf16.gmra.mrb[0].mxu0 %v6627
        %v6743 = vpop.f32.mrb[0].mxu0
        %v6744 = vadd.f32 0.0, %v6743
        %v6745 = vpop.f32.mrb[0].mxu0
        %v6746 = vpop.f32.mrb[0].mxu0
        %v6747 = vadd.f32 0.0, %v6746
        %v6748 = vpop.f32.mrb[0].mxu0
        %6749 = vmatprep.mubr.bf16.mxu0 0
        %6750 = vmatmul.mubr.bf16.gmra.mrb[0].mxu0 %v6630
        %v6751 = vpop.f32.mrb[0].mxu0
        %v6752 = vadd.f32 0.0, %v6751
        %v6753 = vpop.f32.mrb[0].mxu0
        %v6754 = vpop.f32.mrb[0].mxu0
        %v6755 = vadd.f32 0.0, %v6754
        %v6756 = vpop.f32.mrb[0].mxu0
        %6757 = vmatprep.mubr.bf16.mxu0 0
        %6758 = vmatmul.mubr.bf16.gmra.mrb[0].mxu0 %v6633
        %v6759 = vpop.f32.mrb[0].mxu0
        %v6760 = vadd.f32 0.0, %v6759
        %v6761 = vpop.f32.mrb[0].mxu0
        %v6762 = vpop.f32.mrb[0].mxu0
        %v6763 = vadd.f32 0.0, %v6762
        %v6764 = vpop.f32.mrb[0].mxu0
        %6765 = vmatprep.mubr.bf16.mxu0 0
        %6766 = vmatmul.mubr.bf16.gmra.mrb[0].mxu0 %v6636
        %v6767 = vpop.f32.mrb[0].mxu0
        %v6768 = vadd.f32 0.0, %v6767
        %v6769 = vpop.f32.mrb[0].mxu0
        %v6770 = vpop.f32.mrb[0].mxu0
        %v6771 = vadd.f32 0.0, %v6770
        %v6772 = vpop.f32.mrb[0].mxu0
        %6773 = vmatprep.mubr.bf16.mxu0 0
        %6774 = vmatmul.mubr.bf16.gmra.mrb[0].mxu0 %v6639
        %v6775 = vpop.f32.mrb[0].mxu0
        %v6776 = vadd.f32 0.0, %v6775
        %v6777 = vpop.f32.mrb[0].mxu0
        %v6778 = vpop.f32.mrb[0].mxu0
        %v6779 = vadd.f32 0.0, %v6778
        %v6780 = vpop.f32.mrb[0].mxu0
        %6781 = vmatprep.mubr.bf16.mxu0 0
        %6782 = vmatmul.mubr.bf16.gmra.mrb[0].mxu0 %v6642
        %v6783 = vpop.f32.mrb[0].mxu0
        %v6784 = vadd.f32 0.0, %v6783
        %v6785 = vpop.f32.mrb[0].mxu0
        %v6786 = vpop.f32.mrb[0].mxu0
        %v6787 = vadd.f32 0.0, %v6786
        %v6788 = vpop.f32.mrb[0].mxu0
        %6789 = vmatprep.mubr.bf16.mxu0 0
        %6790 = vmatmul.mubr.bf16.gmra.mrb[0].mxu0 %v6645
        %v6791 = vpop.f32.mrb[0].mxu0
        %v6792 = vadd.f32 0.0, %v6791
        %v6793 = vpop.f32.mrb[0].mxu0
        %v6794 = vpop.f32.mrb[0].mxu0
        %v6795 = vadd.f32 0.0, %v6794
        %v6796 = vpop.f32.mrb[0].mxu0
        %6797 = vmatprep.mubr.bf16.mxu0 0
        %6798 = vmatmul.mubr.bf16.gmra.mrb[0].mxu0 %v6648
        %v6799 = vpop.f32.mrb[0].mxu0
        %v6800 = vadd.f32 0.0, %v6799
        %v6801 = vpop.f32.mrb[0].mxu0
        %v6802 = vpop.f32.mrb[0].mxu0
        %v6803 = vadd.f32 0.0, %v6802
        %v6804 = vpop.f32.mrb[0].mxu0
        %6805 = vmatprep.mubr.bf16.mxu0 0
        %6806 = vmatmul.mubr.bf16.gmra.mrb[0].mxu0 %v6651
        %v6807 = vpop.f32.mrb[0].mxu0
        %v6808 = vadd.f32 0.0, %v6807
        %v6809 = vpop.f32.mrb[0].mxu0
        %v6810 = vpop.f32.mrb[0].mxu0
        %v6811 = vadd.f32 0.0, %v6810
        %v6812 = vpop.f32.mrb[0].mxu0
        %6813 = vdwg.mxu0
        %v6814 = vadd.f32 %v6524, %v6688
        %v6815 = vadd.f32 %v6525, %v6691
        %v6816 = vadd.f32 %v6526, %v6696
        %v6817 = vadd.f32 %v6527, %v6699
        %v6818 = vadd.f32 %v6528, %v6704
        %v6819 = vadd.f32 %v6529, %v6707
        %v6820 = vadd.f32 %v6530, %v6712
        %v6821 = vadd.f32 %v6531, %v6715
        %v6822 = vadd.f32 %v6532, %v6720
        %v6823 = vadd.f32 %v6533, %v6723
        %v6824 = vadd.f32 %v6534, %v6728
        %v6825 = vadd.f32 %v6535, %v6731
        %v6826 = vadd.f32 %v6536, %v6736
        %v6827 = vadd.f32 %v6537, %v6739
        %v6828 = vadd.f32 %v6538, %v6744
        %v6829 = vadd.f32 %v6539, %v6747
        %v6830 = vadd.f32 %v6540, %v6752
        %v6831 = vadd.f32 %v6541, %v6755
        %v6832 = vadd.f32 %v6542, %v6760
        %v6833 = vadd.f32 %v6543, %v6763
        %v6834 = vadd.f32 %v6544, %v6768
        %v6835 = vadd.f32 %v6545, %v6771
        %v6836 = vadd.f32 %v6546, %v6776
        %v6837 = vadd.f32 %v6547, %v6779
        %v6838 = vadd.f32 %v6548, %v6784
        %v6839 = vadd.f32 %v6549, %v6787
        %v6840 = vadd.f32 %v6550, %v6792
        %v6841 = vadd.f32 %v6551, %v6795
        %v6842 = vadd.f32 %v6552, %v6800
        %v6843 = vadd.f32 %v6553, %v6803
        %v6844 = vadd.f32 %v6554, %v6808
        %v6845 = vadd.f32 %v6555, %v6811
        %v6846 = vld [vmem:[%s6556 + $0x1] sm:$0xff]
        %v6847 = vld [vmem:[%s6556 + $0x9] sm:$0xff]
        %v6848 = vld [vmem:[%s6556 + $0x19] sm:$0xff]
        %v6849 = vld [vmem:[%s6556 + $0x21] sm:$0xff]
        %v6850 = vld [vmem:[%s6556 + $0x31] sm:$0xff]
        %v6851 = vld [vmem:[%s6556 + $0x39] sm:$0xff]
        %v6852 = vld [vmem:[%s6556 + $0x49] sm:$0xff]
        %v6853 = vld [vmem:[%s6556 + $0x51] sm:$0xff]
        %v6854 = vld [vmem:[%s6556 + $0x61] sm:$0xff]
        %v6855 = vld [vmem:[%s6556 + $0x69] sm:$0xff]
        %v6856 = vld [vmem:[%s6556 + $0x79] sm:$0xff]
        %v6857 = vld [vmem:[%s6556 + $0x81] sm:$0xff]
        %v6858 = vld [vmem:[%s6556 + $0x91] sm:$0xff]
        %v6859 = vld [vmem:[%s6556 + $0x99] sm:$0xff]
        %v6860 = vld [vmem:[%s6556 + $0xa9] sm:$0xff]
        %v6861 = vld [vmem:[%s6556 + $0xb1] sm:$0xff]
        %v6862 = vld [vmem:[%s6556 + $0xc1] sm:$0xff]
        %v6863 = vld [vmem:[%s6556 + $0xc9] sm:$0xff]
        %v6864 = vld [vmem:[%s6556 + $0xd9] sm:$0xff]
        %v6865 = vld [vmem:[%s6556 + $0xe1] sm:$0xff]
        %v6866 = vld [vmem:[%s6556 + $0xf1] sm:$0xff]
        %v6867 = vld [vmem:[%s6556 + $0xf9] sm:$0xff]
        %v6868 = vld [vmem:[%s6556 + $0x109] sm:$0xff]
        %v6869 = vld [vmem:[%s6556 + $0x111] sm:$0xff]
        %v6870 = vld [vmem:[%s6556 + $0x121] sm:$0xff]
        %v6871 = vld [vmem:[%s6556 + $0x129] sm:$0xff]
        %v6872 = vld [vmem:[%s6556 + $0x139] sm:$0xff]
        %v6873 = vld [vmem:[%s6556 + $0x141] sm:$0xff]
        %v6874 = vld [vmem:[%s6556 + $0x151] sm:$0xff]
        %v6875 = vld [vmem:[%s6556 + $0x159] sm:$0xff]
        %v6876 = vld [vmem:[%s6556 + $0x169] sm:$0xff]
        %v6877 = vld [vmem:[%s6556 + $0x171] sm:$0xff]
        %v6878 = vpack.c.bf16 %v6847, %v6846
        %v6879 = vpack.c.bf16 %v6849, %v6848
        %v6880 = vpack.c.bf16 %v6851, %v6850
        %v6881 = vpack.c.bf16 %v6853, %v6852
        %v6882 = vpack.c.bf16 %v6855, %v6854
        %v6883 = vpack.c.bf16 %v6857, %v6856
        %v6884 = vpack.c.bf16 %v6859, %v6858
        %v6885 = vpack.c.bf16 %v6861, %v6860
        %v6886 = vpack.c.bf16 %v6863, %v6862
        %v6887 = vpack.c.bf16 %v6865, %v6864
        %v6888 = vpack.c.bf16 %v6867, %v6866
        %v6889 = vpack.c.bf16 %v6869, %v6868
        %v6890 = vpack.c.bf16 %v6871, %v6870
        %v6891 = vpack.c.bf16 %v6873, %v6872
        %v6892 = vpack.c.bf16 %v6875, %v6874
        %v6893 = vpack.c.bf16 %v6877, %v6876
        %v6895 = vsel %vm279, %v6878, 0
        %v6898 = vsel %vm279, %v6879, 0
        %v6901 = vsel %vm279, %v6880, 0
        %v6904 = vsel %vm279, %v6881, 0
        %v6907 = vsel %vm279, %v6882, 0
        %v6910 = vsel %vm279, %v6883, 0
        %v6913 = vsel %vm279, %v6884, 0
        %v6916 = vsel %vm279, %v6885, 0
        %v6919 = vsel %vm279, %v6886, 0
        %v6922 = vsel %vm279, %v6887, 0
        %v6925 = vsel %vm279, %v6888, 0
        %v6928 = vsel %vm279, %v6889, 0
        %v6931 = vsel %vm279, %v6890, 0
        %v6934 = vsel %vm279, %v6891, 0
        %v6937 = vsel %vm279, %v6892, 0
        %v6940 = vsel %vm279, %v6893, 0
        %6942 = vmatprep.subr.bf16.mxu0 0
        %6943 = vmatpush1.bf16.msra.mxu0 %v1507
        %6944 = vmatprep.subr.bf16.mxu0 0
        %6945 = vmatpush1.bf16.msra.mxu0 0
        %6946 = vmatprep.subr.bf16.mxu0 0
        %6947 = vmatpush1.bf16.msra.mxu0 0
        %6948 = vmatprep.subr.bf16.mxu0 0
        %6949 = vmatpush1.bf16.msra.mxu0 0
        %6950 = vmatprep.subr.bf16.mxu0 0
        %6951 = vmatpush1.bf16.msra.mxu0 0
        %6952 = vmatprep.subr.bf16.mxu0 0
        %6953 = vmatpush1.bf16.msra.mxu0 0
        %6954 = vmatprep.subr.bf16.mxu0 0
        %6955 = vmatpush1.bf16.msra.mxu0 0
        %6956 = vmatprep.subr.bf16.mxu0 0
        %6957 = vmatpush1.bf16.msra.mxu0 0
        %6958 = vmatprep.subr.bf16.mxu0 0
        %6959 = vmatpush1.bf16.msra.mxu0 0
        %6960 = vmatprep.subr.bf16.mxu0 0
        %6961 = vmatpush1.bf16.msra.mxu0 0
        %6962 = vmatprep.subr.bf16.mxu0 0
        %6963 = vmatpush1.bf16.msra.mxu0 0
        %6964 = vmatprep.subr.bf16.mxu0 0
        %6965 = vmatpush1.bf16.msra.mxu0 0
        %6966 = vmatprep.subr.bf16.mxu0 0
        %6967 = vmatpush1.bf16.msra.mxu0 0
        %6968 = vmatprep.subr.bf16.mxu0 0
        %6969 = vmatpush1.bf16.msra.mxu0 0
        %6970 = vmatprep.subr.bf16.mxu0 0
        %6971 = vmatpush1.bf16.msra.mxu0 0
        %6972 = vmatprep.subr.bf16.mxu0 0
        %6973 = vmatpush1.bf16.msra.mxu0 0
        %6974 = vmatprep.mubr.bf16.mxu0 0
        %6975 = vmatmul.mubr.bf16.gmra.mrb[0].mxu0 %v6895
        %v6976 = vpop.f32.mrb[0].mxu0
        %v6977 = vadd.f32 0.0, %v6976
        %v6978 = vpop.f32.mrb[0].mxu0
        %v6979 = vpop.f32.mrb[0].mxu0
        %v6980 = vadd.f32 0.0, %v6979
        %v6981 = vpop.f32.mrb[0].mxu0
        %6982 = vmatprep.mubr.bf16.mxu0 0
        %6983 = vmatmul.mubr.bf16.gmra.mrb[0].mxu0 %v6898
        %v6984 = vpop.f32.mrb[0].mxu0
        %v6985 = vadd.f32 0.0, %v6984
        %v6986 = vpop.f32.mrb[0].mxu0
        %v6987 = vpop.f32.mrb[0].mxu0
        %v6988 = vadd.f32 0.0, %v6987
        %v6989 = vpop.f32.mrb[0].mxu0
        %6990 = vmatprep.mubr.bf16.mxu0 0
        %6991 = vmatmul.mubr.bf16.gmra.mrb[0].mxu0 %v6901
        %v6992 = vpop.f32.mrb[0].mxu0
        %v6993 = vadd.f32 0.0, %v6992
        %v6994 = vpop.f32.mrb[0].mxu0
        %v6995 = vpop.f32.mrb[0].mxu0
        %v6996 = vadd.f32 0.0, %v6995
        %v6997 = vpop.f32.mrb[0].mxu0
        %6998 = vmatprep.mubr.bf16.mxu0 0
        %6999 = vmatmul.mubr.bf16.gmra.mrb[0].mxu0 %v6904
        %v7000 = vpop.f32.mrb[0].mxu0
        %v7001 = vadd.f32 0.0, %v7000
        %v7002 = vpop.f32.mrb[0].mxu0
        %v7003 = vpop.f32.mrb[0].mxu0
        %v7004 = vadd.f32 0.0, %v7003
        %v7005 = vpop.f32.mrb[0].mxu0
        %7006 = vmatprep.mubr.bf16.mxu0 0
        %7007 = vmatmul.mubr.bf16.gmra.mrb[0].mxu0 %v6907
        %v7008 = vpop.f32.mrb[0].mxu0
        %v7009 = vadd.f32 0.0, %v7008
        %v7010 = vpop.f32.mrb[0].mxu0
        %v7011 = vpop.f32.mrb[0].mxu0
        %v7012 = vadd.f32 0.0, %v7011
        %v7013 = vpop.f32.mrb[0].mxu0
        %7014 = vmatprep.mubr.bf16.mxu0 0
        %7015 = vmatmul.mubr.bf16.gmra.mrb[0].mxu0 %v6910
        %v7016 = vpop.f32.mrb[0].mxu0
        %v7017 = vadd.f32 0.0, %v7016
        %v7018 = vpop.f32.mrb[0].mxu0
        %v7019 = vpop.f32.mrb[0].mxu0
        %v7020 = vadd.f32 0.0, %v7019
        %v7021 = vpop.f32.mrb[0].mxu0
        %7022 = vmatprep.mubr.bf16.mxu0 0
        %7023 = vmatmul.mubr.bf16.gmra.mrb[0].mxu0 %v6913
        %v7024 = vpop.f32.mrb[0].mxu0
        %v7025 = vadd.f32 0.0, %v7024
        %v7026 = vpop.f32.mrb[0].mxu0
        %v7027 = vpop.f32.mrb[0].mxu0
        %v7028 = vadd.f32 0.0, %v7027
        %v7029 = vpop.f32.mrb[0].mxu0
        %7030 = vmatprep.mubr.bf16.mxu0 0
        %7031 = vmatmul.mubr.bf16.gmra.mrb[0].mxu0 %v6916
        %v7032 = vpop.f32.mrb[0].mxu0
        %v7033 = vadd.f32 0.0, %v7032
        %v7034 = vpop.f32.mrb[0].mxu0
        %v7035 = vpop.f32.mrb[0].mxu0
        %v7036 = vadd.f32 0.0, %v7035
        %v7037 = vpop.f32.mrb[0].mxu0
        %7038 = vmatprep.mubr.bf16.mxu0 0
        %7039 = vmatmul.mubr.bf16.gmra.mrb[0].mxu0 %v6919
        %v7040 = vpop.f32.mrb[0].mxu0
        %v7041 = vadd.f32 0.0, %v7040
        %v7042 = vpop.f32.mrb[0].mxu0
        %v7043 = vpop.f32.mrb[0].mxu0
        %v7044 = vadd.f32 0.0, %v7043
        %v7045 = vpop.f32.mrb[0].mxu0
        %7046 = vmatprep.mubr.bf16.mxu0 0
        %7047 = vmatmul.mubr.bf16.gmra.mrb[0].mxu0 %v6922
        %v7048 = vpop.f32.mrb[0].mxu0
        %v7049 = vadd.f32 0.0, %v7048
        %v7050 = vpop.f32.mrb[0].mxu0
        %v7051 = vpop.f32.mrb[0].mxu0
        %v7052 = vadd.f32 0.0, %v7051
        %v7053 = vpop.f32.mrb[0].mxu0
        %7054 = vmatprep.mubr.bf16.mxu0 0
        %7055 = vmatmul.mubr.bf16.gmra.mrb[0].mxu0 %v6925
        %v7056 = vpop.f32.mrb[0].mxu0
        %v7057 = vadd.f32 0.0, %v7056
        %v7058 = vpop.f32.mrb[0].mxu0
        %v7059 = vpop.f32.mrb[0].mxu0
        %v7060 = vadd.f32 0.0, %v7059
        %v7061 = vpop.f32.mrb[0].mxu0
        %7062 = vmatprep.mubr.bf16.mxu0 0
        %7063 = vmatmul.mubr.bf16.gmra.mrb[0].mxu0 %v6928
        %v7064 = vpop.f32.mrb[0].mxu0
        %v7065 = vadd.f32 0.0, %v7064
        %v7066 = vpop.f32.mrb[0].mxu0
        %v7067 = vpop.f32.mrb[0].mxu0
        %v7068 = vadd.f32 0.0, %v7067
        %v7069 = vpop.f32.mrb[0].mxu0
        %7070 = vmatprep.mubr.bf16.mxu0 0
        %7071 = vmatmul.mubr.bf16.gmra.mrb[0].mxu0 %v6931
        %v7072 = vpop.f32.mrb[0].mxu0
        %v7073 = vadd.f32 0.0, %v7072
        %v7074 = vpop.f32.mrb[0].mxu0
        %v7075 = vpop.f32.mrb[0].mxu0
        %v7076 = vadd.f32 0.0, %v7075
        %v7077 = vpop.f32.mrb[0].mxu0
        %7078 = vmatprep.mubr.bf16.mxu0 0
        %7079 = vmatmul.mubr.bf16.gmra.mrb[0].mxu0 %v6934
        %v7080 = vpop.f32.mrb[0].mxu0
        %v7081 = vadd.f32 0.0, %v7080
        %v7082 = vpop.f32.mrb[0].mxu0
        %v7083 = vpop.f32.mrb[0].mxu0
        %v7084 = vadd.f32 0.0, %v7083
        %v7085 = vpop.f32.mrb[0].mxu0
        %7086 = vmatprep.mubr.bf16.mxu0 0
        %7087 = vmatmul.mubr.bf16.gmra.mrb[0].mxu0 %v6937
        %v7088 = vpop.f32.mrb[0].mxu0
        %v7089 = vadd.f32 0.0, %v7088
        %v7090 = vpop.f32.mrb[0].mxu0
        %v7091 = vpop.f32.mrb[0].mxu0
        %v7092 = vadd.f32 0.0, %v7091
        %v7093 = vpop.f32.mrb[0].mxu0
        %7094 = vmatprep.mubr.bf16.mxu0 0
        %7095 = vmatmul.mubr.bf16.gmra.mrb[0].mxu0 %v6940
        %v7096 = vpop.f32.mrb[0].mxu0
        %v7097 = vadd.f32 0.0, %v7096
        %v7098 = vpop.f32.mrb[0].mxu0
        %v7099 = vpop.f32.mrb[0].mxu0
        %v7100 = vadd.f32 0.0, %v7099
        %v7101 = vpop.f32.mrb[0].mxu0
        %7102 = vdwg.mxu0
        %v7103 = vadd.f32 %v6814, %v6977
        %v7104 = vadd.f32 %v6815, %v6980
        %v7105 = vadd.f32 %v6816, %v6985
        %v7106 = vadd.f32 %v6817, %v6988
        %v7107 = vadd.f32 %v6818, %v6993
        %v7108 = vadd.f32 %v6819, %v6996
        %v7109 = vadd.f32 %v6820, %v7001
        %v7110 = vadd.f32 %v6821, %v7004
        %v7111 = vadd.f32 %v6822, %v7009
        %v7112 = vadd.f32 %v6823, %v7012
        %v7113 = vadd.f32 %v6824, %v7017
        %v7114 = vadd.f32 %v6825, %v7020
        %v7115 = vadd.f32 %v6826, %v7025
        %v7116 = vadd.f32 %v6827, %v7028
        %v7117 = vadd.f32 %v6828, %v7033
        %v7118 = vadd.f32 %v6829, %v7036
        %v7119 = vadd.f32 %v6830, %v7041
        %v7120 = vadd.f32 %v6831, %v7044
        %v7121 = vadd.f32 %v6832, %v7049
        %v7122 = vadd.f32 %v6833, %v7052
        %v7123 = vadd.f32 %v6834, %v7057
        %v7124 = vadd.f32 %v6835, %v7060
        %v7125 = vadd.f32 %v6836, %v7065
        %v7126 = vadd.f32 %v6837, %v7068
        %v7127 = vadd.f32 %v6838, %v7073
        %v7128 = vadd.f32 %v6839, %v7076
        %v7129 = vadd.f32 %v6840, %v7081
        %v7130 = vadd.f32 %v6841, %v7084
        %v7131 = vadd.f32 %v6842, %v7089
        %v7132 = vadd.f32 %v6843, %v7092
        %v7133 = vadd.f32 %v6844, %v7097
        %v7134 = vadd.f32 %v6845, %v7100
        %v7135 = vld [vmem:[%s6556 + $0x2] sm:$0xff]
        %v7136 = vld [vmem:[%s6556 + $0xa] sm:$0xff]
        %v7137 = vld [vmem:[%s6556 + $0x1a] sm:$0xff]
        %v7138 = vld [vmem:[%s6556 + $0x22] sm:$0xff]
        %v7139 = vld [vmem:[%s6556 + $0x32] sm:$0xff]
        %v7140 = vld [vmem:[%s6556 + $0x3a] sm:$0xff]
        %v7141 = vld [vmem:[%s6556 + $0x4a] sm:$0xff]
        %v7142 = vld [vmem:[%s6556 + $0x52] sm:$0xff]
        %v7143 = vld [vmem:[%s6556 + $0x62] sm:$0xff]
        %v7144 = vld [vmem:[%s6556 + $0x6a] sm:$0xff]
        %v7145 = vld [vmem:[%s6556 + $0x7a] sm:$0xff]
        %v7146 = vld [vmem:[%s6556 + $0x82] sm:$0xff]
        %v7147 = vld [vmem:[%s6556 + $0x92] sm:$0xff]
        %v7148 = vld [vmem:[%s6556 + $0x9a] sm:$0xff]
        %v7149 = vld [vmem:[%s6556 + $0xaa] sm:$0xff]
        %v7150 = vld [vmem:[%s6556 + $0xb2] sm:$0xff]
        %v7151 = vld [vmem:[%s6556 + $0xc2] sm:$0xff]
        %v7152 = vld [vmem:[%s6556 + $0xca] sm:$0xff]
        %v7153 = vld [vmem:[%s6556 + $0xda] sm:$0xff]
        %v7154 = vld [vmem:[%s6556 + $0xe2] sm:$0xff]
        %v7155 = vld [vmem:[%s6556 + $0xf2] sm:$0xff]
        %v7156 = vld [vmem:[%s6556 + $0xfa] sm:$0xff]
        %v7157 = vld [vmem:[%s6556 + $0x10a] sm:$0xff]
        %v7158 = vld [vmem:[%s6556 + $0x112] sm:$0xff]
        %v7159 = vld [vmem:[%s6556 + $0x122] sm:$0xff]
        %v7160 = vld [vmem:[%s6556 + $0x12a] sm:$0xff]
        %v7161 = vld [vmem:[%s6556 + $0x13a] sm:$0xff]
        %v7162 = vld [vmem:[%s6556 + $0x142] sm:$0xff]
        %v7163 = vld [vmem:[%s6556 + $0x152] sm:$0xff]
        %v7164 = vld [vmem:[%s6556 + $0x15a] sm:$0xff]
        %v7165 = vld [vmem:[%s6556 + $0x16a] sm:$0xff]
        %v7166 = vld [vmem:[%s6556 + $0x172] sm:$0xff]
        %v7167 = vpack.c.bf16 %v7136, %v7135
        %v7168 = vpack.c.bf16 %v7138, %v7137
        %v7169 = vpack.c.bf16 %v7140, %v7139
        %v7170 = vpack.c.bf16 %v7142, %v7141
        %v7171 = vpack.c.bf16 %v7144, %v7143
        %v7172 = vpack.c.bf16 %v7146, %v7145
        %v7173 = vpack.c.bf16 %v7148, %v7147
        %v7174 = vpack.c.bf16 %v7150, %v7149
        %v7175 = vpack.c.bf16 %v7152, %v7151
        %v7176 = vpack.c.bf16 %v7154, %v7153
        %v7177 = vpack.c.bf16 %v7156, %v7155
        %v7178 = vpack.c.bf16 %v7158, %v7157
        %v7179 = vpack.c.bf16 %v7160, %v7159
        %v7180 = vpack.c.bf16 %v7162, %v7161
        %v7181 = vpack.c.bf16 %v7164, %v7163
        %v7182 = vpack.c.bf16 %v7166, %v7165
        %v7184 = vsel %vm279, %v7167, 0
        %v7187 = vsel %vm279, %v7168, 0
        %v7190 = vsel %vm279, %v7169, 0
        %v7193 = vsel %vm279, %v7170, 0
        %v7196 = vsel %vm279, %v7171, 0
        %v7199 = vsel %vm279, %v7172, 0
        %v7202 = vsel %vm279, %v7173, 0
        %v7205 = vsel %vm279, %v7174, 0
        %v7208 = vsel %vm279, %v7175, 0
        %v7211 = vsel %vm279, %v7176, 0
        %v7214 = vsel %vm279, %v7177, 0
        %v7217 = vsel %vm279, %v7178, 0
        %v7220 = vsel %vm279, %v7179, 0
        %v7223 = vsel %vm279, %v7180, 0
        %v7226 = vsel %vm279, %v7181, 0
        %v7229 = vsel %vm279, %v7182, 0
        %7231 = vmatprep.subr.bf16.mxu0 0
        %7232 = vmatpush1.bf16.msra.mxu0 %v1801
        %7233 = vmatprep.subr.bf16.mxu0 0
        %7234 = vmatpush1.bf16.msra.mxu0 0
        %7235 = vmatprep.subr.bf16.mxu0 0
        %7236 = vmatpush1.bf16.msra.mxu0 0
        %7237 = vmatprep.subr.bf16.mxu0 0
        %7238 = vmatpush1.bf16.msra.mxu0 0
        %7239 = vmatprep.subr.bf16.mxu0 0
        %7240 = vmatpush1.bf16.msra.mxu0 0
        %7241 = vmatprep.subr.bf16.mxu0 0
        %7242 = vmatpush1.bf16.msra.mxu0 0
        %7243 = vmatprep.subr.bf16.mxu0 0
        %7244 = vmatpush1.bf16.msra.mxu0 0
        %7245 = vmatprep.subr.bf16.mxu0 0
        %7246 = vmatpush1.bf16.msra.mxu0 0
        %7247 = vmatprep.subr.bf16.mxu0 0
        %7248 = vmatpush1.bf16.msra.mxu0 0
        %7249 = vmatprep.subr.bf16.mxu0 0
        %7250 = vmatpush1.bf16.msra.mxu0 0
        %7251 = vmatprep.subr.bf16.mxu0 0
        %7252 = vmatpush1.bf16.msra.mxu0 0
        %7253 = vmatprep.subr.bf16.mxu0 0
        %7254 = vmatpush1.bf16.msra.mxu0 0
        %7255 = vmatprep.subr.bf16.mxu0 0
        %7256 = vmatpush1.bf16.msra.mxu0 0
        %7257 = vmatprep.subr.bf16.mxu0 0
        %7258 = vmatpush1.bf16.msra.mxu0 0
        %7259 = vmatprep.subr.bf16.mxu0 0
        %7260 = vmatpush1.bf16.msra.mxu0 0
        %7261 = vmatprep.subr.bf16.mxu0 0
        %7262 = vmatpush1.bf16.msra.mxu0 0
        %7263 = vmatprep.mubr.bf16.mxu0 0
        %7264 = vmatmul.mubr.bf16.gmra.mrb[0].mxu0 %v7184
        %v7265 = vpop.f32.mrb[0].mxu0
        %v7266 = vadd.f32 0.0, %v7265
        %v7267 = vpop.f32.mrb[0].mxu0
        %v7268 = vpop.f32.mrb[0].mxu0
        %v7269 = vadd.f32 0.0, %v7268
        %v7270 = vpop.f32.mrb[0].mxu0
        %7271 = vmatprep.mubr.bf16.mxu0 0
        %7272 = vmatmul.mubr.bf16.gmra.mrb[0].mxu0 %v7187
        %v7273 = vpop.f32.mrb[0].mxu0
        %v7274 = vadd.f32 0.0, %v7273
        %v7275 = vpop.f32.mrb[0].mxu0
        %v7276 = vpop.f32.mrb[0].mxu0
        %v7277 = vadd.f32 0.0, %v7276
        %v7278 = vpop.f32.mrb[0].mxu0
        %7279 = vmatprep.mubr.bf16.mxu0 0
        %7280 = vmatmul.mubr.bf16.gmra.mrb[0].mxu0 %v7190
        %v7281 = vpop.f32.mrb[0].mxu0
        %v7282 = vadd.f32 0.0, %v7281
        %v7283 = vpop.f32.mrb[0].mxu0
        %v7284 = vpop.f32.mrb[0].mxu0
        %v7285 = vadd.f32 0.0, %v7284
        %v7286 = vpop.f32.mrb[0].mxu0
        %7287 = vmatprep.mubr.bf16.mxu0 0
        %7288 = vmatmul.mubr.bf16.gmra.mrb[0].mxu0 %v7193
        %v7289 = vpop.f32.mrb[0].mxu0
        %v7290 = vadd.f32 0.0, %v7289
        %v7291 = vpop.f32.mrb[0].mxu0
        %v7292 = vpop.f32.mrb[0].mxu0
        %v7293 = vadd.f32 0.0, %v7292
        %v7294 = vpop.f32.mrb[0].mxu0
        %7295 = vmatprep.mubr.bf16.mxu0 0
        %7296 = vmatmul.mubr.bf16.gmra.mrb[0].mxu0 %v7196
        %v7297 = vpop.f32.mrb[0].mxu0
        %v7298 = vadd.f32 0.0, %v7297
        %v7299 = vpop.f32.mrb[0].mxu0
        %v7300 = vpop.f32.mrb[0].mxu0
        %v7301 = vadd.f32 0.0, %v7300
        %v7302 = vpop.f32.mrb[0].mxu0
        %7303 = vmatprep.mubr.bf16.mxu0 0
        %7304 = vmatmul.mubr.bf16.gmra.mrb[0].mxu0 %v7199
        %v7305 = vpop.f32.mrb[0].mxu0
        %v7306 = vadd.f32 0.0, %v7305
        %v7307 = vpop.f32.mrb[0].mxu0
        %v7308 = vpop.f32.mrb[0].mxu0
        %v7309 = vadd.f32 0.0, %v7308
        %v7310 = vpop.f32.mrb[0].mxu0
        %7311 = vmatprep.mubr.bf16.mxu0 0
        %7312 = vmatmul.mubr.bf16.gmra.mrb[0].mxu0 %v7202
        %v7313 = vpop.f32.mrb[0].mxu0
        %v7314 = vadd.f32 0.0, %v7313
        %v7315 = vpop.f32.mrb[0].mxu0
        %v7316 = vpop.f32.mrb[0].mxu0
        %v7317 = vadd.f32 0.0, %v7316
        %v7318 = vpop.f32.mrb[0].mxu0
        %7319 = vmatprep.mubr.bf16.mxu0 0
        %7320 = vmatmul.mubr.bf16.gmra.mrb[0].mxu0 %v7205
        %v7321 = vpop.f32.mrb[0].mxu0
        %v7322 = vadd.f32 0.0, %v7321
        %v7323 = vpop.f32.mrb[0].mxu0
        %v7324 = vpop.f32.mrb[0].mxu0
        %v7325 = vadd.f32 0.0, %v7324
        %v7326 = vpop.f32.mrb[0].mxu0
        %7327 = vmatprep.mubr.bf16.mxu0 0
        %7328 = vmatmul.mubr.bf16.gmra.mrb[0].mxu0 %v7208
        %v7329 = vpop.f32.mrb[0].mxu0
        %v7330 = vadd.f32 0.0, %v7329
        %v7331 = vpop.f32.mrb[0].mxu0
        %v7332 = vpop.f32.mrb[0].mxu0
        %v7333 = vadd.f32 0.0, %v7332
        %v7334 = vpop.f32.mrb[0].mxu0
        %7335 = vmatprep.mubr.bf16.mxu0 0
        %7336 = vmatmul.mubr.bf16.gmra.mrb[0].mxu0 %v7211
        %v7337 = vpop.f32.mrb[0].mxu0
        %v7338 = vadd.f32 0.0, %v7337
        %v7339 = vpop.f32.mrb[0].mxu0
        %v7340 = vpop.f32.mrb[0].mxu0
        %v7341 = vadd.f32 0.0, %v7340
        %v7342 = vpop.f32.mrb[0].mxu0
        %7343 = vmatprep.mubr.bf16.mxu0 0
        %7344 = vmatmul.mubr.bf16.gmra.mrb[0].mxu0 %v7214
        %v7345 = vpop.f32.mrb[0].mxu0
        %v7346 = vadd.f32 0.0, %v7345
        %v7347 = vpop.f32.mrb[0].mxu0
        %v7348 = vpop.f32.mrb[0].mxu0
        %v7349 = vadd.f32 0.0, %v7348
        %v7350 = vpop.f32.mrb[0].mxu0
        %7351 = vmatprep.mubr.bf16.mxu0 0
        %7352 = vmatmul.mubr.bf16.gmra.mrb[0].mxu0 %v7217
        %v7353 = vpop.f32.mrb[0].mxu0
        %v7354 = vadd.f32 0.0, %v7353
        %v7355 = vpop.f32.mrb[0].mxu0
        %v7356 = vpop.f32.mrb[0].mxu0
        %v7357 = vadd.f32 0.0, %v7356
        %v7358 = vpop.f32.mrb[0].mxu0
        %7359 = vmatprep.mubr.bf16.mxu0 0
        %7360 = vmatmul.mubr.bf16.gmra.mrb[0].mxu0 %v7220
        %v7361 = vpop.f32.mrb[0].mxu0
        %v7362 = vadd.f32 0.0, %v7361
        %v7363 = vpop.f32.mrb[0].mxu0
        %v7364 = vpop.f32.mrb[0].mxu0
        %v7365 = vadd.f32 0.0, %v7364
        %v7366 = vpop.f32.mrb[0].mxu0
        %7367 = vmatprep.mubr.bf16.mxu0 0
        %7368 = vmatmul.mubr.bf16.gmra.mrb[0].mxu0 %v7223
        %v7369 = vpop.f32.mrb[0].mxu0
        %v7370 = vadd.f32 0.0, %v7369
        %v7371 = vpop.f32.mrb[0].mxu0
        %v7372 = vpop.f32.mrb[0].mxu0
        %v7373 = vadd.f32 0.0, %v7372
        %v7374 = vpop.f32.mrb[0].mxu0
        %7375 = vmatprep.mubr.bf16.mxu0 0
        %7376 = vmatmul.mubr.bf16.gmra.mrb[0].mxu0 %v7226
        %v7377 = vpop.f32.mrb[0].mxu0
        %v7378 = vadd.f32 0.0, %v7377
        %v7379 = vpop.f32.mrb[0].mxu0
        %v7380 = vpop.f32.mrb[0].mxu0
        %v7381 = vadd.f32 0.0, %v7380
        %v7382 = vpop.f32.mrb[0].mxu0
        %7383 = vmatprep.mubr.bf16.mxu0 0
        %7384 = vmatmul.mubr.bf16.gmra.mrb[0].mxu0 %v7229
        %v7385 = vpop.f32.mrb[0].mxu0
        %v7386 = vadd.f32 0.0, %v7385
        %v7387 = vpop.f32.mrb[0].mxu0
        %v7388 = vpop.f32.mrb[0].mxu0
        %v7389 = vadd.f32 0.0, %v7388
        %v7390 = vpop.f32.mrb[0].mxu0
        %7391 = vdwg.mxu0
        %v7392 = vadd.f32 %v7103, %v7266
        %v7393 = vadd.f32 %v7104, %v7269
        %v7394 = vadd.f32 %v7105, %v7274
        %v7395 = vadd.f32 %v7106, %v7277
        %v7396 = vadd.f32 %v7107, %v7282
        %v7397 = vadd.f32 %v7108, %v7285
        %v7398 = vadd.f32 %v7109, %v7290
        %v7399 = vadd.f32 %v7110, %v7293
        %v7400 = vadd.f32 %v7111, %v7298
        %v7401 = vadd.f32 %v7112, %v7301
        %v7402 = vadd.f32 %v7113, %v7306
        %v7403 = vadd.f32 %v7114, %v7309
        %v7404 = vadd.f32 %v7115, %v7314
        %v7405 = vadd.f32 %v7116, %v7317
        %v7406 = vadd.f32 %v7117, %v7322
        %v7407 = vadd.f32 %v7118, %v7325
        %v7408 = vadd.f32 %v7119, %v7330
        %v7409 = vadd.f32 %v7120, %v7333
        %v7410 = vadd.f32 %v7121, %v7338
        %v7411 = vadd.f32 %v7122, %v7341
        %v7412 = vadd.f32 %v7123, %v7346
        %v7413 = vadd.f32 %v7124, %v7349
        %v7414 = vadd.f32 %v7125, %v7354
        %v7415 = vadd.f32 %v7126, %v7357
        %v7416 = vadd.f32 %v7127, %v7362
        %v7417 = vadd.f32 %v7128, %v7365
        %v7418 = vadd.f32 %v7129, %v7370
        %v7419 = vadd.f32 %v7130, %v7373
        %v7420 = vadd.f32 %v7131, %v7378
        %v7421 = vadd.f32 %v7132, %v7381
        %v7422 = vadd.f32 %v7133, %v7386
        %v7423 = vadd.f32 %v7134, %v7389
        %s7424 = scalar_lea.vmem %s221, 912
        %v7425 = vld [vmem:[%s7424] sm:$0xff]
        %v7426 = vld [vmem:[%s7424 + $0x8] sm:$0xff]
        %v7427 = vld [vmem:[%s7424 + $0x18] sm:$0xff]
        %v7428 = vld [vmem:[%s7424 + $0x20] sm:$0xff]
        %v7429 = vld [vmem:[%s7424 + $0x30] sm:$0xff]
        %v7430 = vld [vmem:[%s7424 + $0x38] sm:$0xff]
        %v7431 = vld [vmem:[%s7424 + $0x48] sm:$0xff]
        %v7432 = vld [vmem:[%s7424 + $0x50] sm:$0xff]
        %v7433 = vld [vmem:[%s7424 + $0x60] sm:$0xff]
        %v7434 = vld [vmem:[%s7424 + $0x68] sm:$0xff]
        %v7435 = vld [vmem:[%s7424 + $0x78] sm:$0xff]
        %v7436 = vld [vmem:[%s7424 + $0x80] sm:$0xff]
        %v7437 = vld [vmem:[%s7424 + $0x90] sm:$0xff]
        %v7438 = vld [vmem:[%s7424 + $0x98] sm:$0xff]
        %v7439 = vld [vmem:[%s7424 + $0xa8] sm:$0xff]
        %v7440 = vld [vmem:[%s7424 + $0xb0] sm:$0xff]
        %v7441 = vld [vmem:[%s7424 + $0xc0] sm:$0xff]
        %v7442 = vld [vmem:[%s7424 + $0xc8] sm:$0xff]
        %v7443 = vld [vmem:[%s7424 + $0xd8] sm:$0xff]
        %v7444 = vld [vmem:[%s7424 + $0xe0] sm:$0xff]
        %v7445 = vld [vmem:[%s7424 + $0xf0] sm:$0xff]
        %v7446 = vld [vmem:[%s7424 + $0xf8] sm:$0xff]
        %v7447 = vld [vmem:[%s7424 + $0x108] sm:$0xff]
        %v7448 = vld [vmem:[%s7424 + $0x110] sm:$0xff]
        %v7449 = vld [vmem:[%s7424 + $0x120] sm:$0xff]
        %v7450 = vld [vmem:[%s7424 + $0x128] sm:$0xff]
        %v7451 = vld [vmem:[%s7424 + $0x138] sm:$0xff]
        %v7452 = vld [vmem:[%s7424 + $0x140] sm:$0xff]
        %v7453 = vld [vmem:[%s7424 + $0x150] sm:$0xff]
        %v7454 = vld [vmem:[%s7424 + $0x158] sm:$0xff]
        %v7455 = vld [vmem:[%s7424 + $0x168] sm:$0xff]
        %v7456 = vld [vmem:[%s7424 + $0x170] sm:$0xff]
        %v7457 = vpack.c.bf16 %v7426, %v7425
        %v7458 = vpack.c.bf16 %v7428, %v7427
        %v7459 = vpack.c.bf16 %v7430, %v7429
        %v7460 = vpack.c.bf16 %v7432, %v7431
        %v7461 = vpack.c.bf16 %v7434, %v7433
        %v7462 = vpack.c.bf16 %v7436, %v7435
        %v7463 = vpack.c.bf16 %v7438, %v7437
        %v7464 = vpack.c.bf16 %v7440, %v7439
        %v7465 = vpack.c.bf16 %v7442, %v7441
        %v7466 = vpack.c.bf16 %v7444, %v7443
        %v7467 = vpack.c.bf16 %v7446, %v7445
        %v7468 = vpack.c.bf16 %v7448, %v7447
        %v7469 = vpack.c.bf16 %v7450, %v7449
        %v7470 = vpack.c.bf16 %v7452, %v7451
        %v7471 = vpack.c.bf16 %v7454, %v7453
        %v7472 = vpack.c.bf16 %v7456, %v7455
        %v7474 = vsel %vm279, %v7457, 0
        %v7477 = vsel %vm279, %v7458, 0
        %v7480 = vsel %vm279, %v7459, 0
        %v7483 = vsel %vm279, %v7460, 0
        %v7486 = vsel %vm279, %v7461, 0
        %v7489 = vsel %vm279, %v7462, 0
        %v7492 = vsel %vm279, %v7463, 0
        %v7495 = vsel %vm279, %v7464, 0
        %v7498 = vsel %vm279, %v7465, 0
        %v7501 = vsel %vm279, %v7466, 0
        %v7504 = vsel %vm279, %v7467, 0
        %v7507 = vsel %vm279, %v7468, 0
        %v7510 = vsel %vm279, %v7469, 0
        %v7513 = vsel %vm279, %v7470, 0
        %v7516 = vsel %vm279, %v7471, 0
        %v7519 = vsel %vm279, %v7472, 0
        %7521 = vmatprep.subr.bf16.mxu0 0
        %7522 = vmatpush1.bf16.msra.mxu0 %v2096
        %7523 = vmatprep.subr.bf16.mxu0 0
        %7524 = vmatpush1.bf16.msra.mxu0 0
        %7525 = vmatprep.subr.bf16.mxu0 0
        %7526 = vmatpush1.bf16.msra.mxu0 0
        %7527 = vmatprep.subr.bf16.mxu0 0
        %7528 = vmatpush1.bf16.msra.mxu0 0
        %7529 = vmatprep.subr.bf16.mxu0 0
        %7530 = vmatpush1.bf16.msra.mxu0 0
        %7531 = vmatprep.subr.bf16.mxu0 0
        %7532 = vmatpush1.bf16.msra.mxu0 0
        %7533 = vmatprep.subr.bf16.mxu0 0
        %7534 = vmatpush1.bf16.msra.mxu0 0
        %7535 = vmatprep.subr.bf16.mxu0 0
        %7536 = vmatpush1.bf16.msra.mxu0 0
        %7537 = vmatprep.subr.bf16.mxu0 0
        %7538 = vmatpush1.bf16.msra.mxu0 0
        %7539 = vmatprep.subr.bf16.mxu0 0
        %7540 = vmatpush1.bf16.msra.mxu0 0
        %7541 = vmatprep.subr.bf16.mxu0 0
        %7542 = vmatpush1.bf16.msra.mxu0 0
        %7543 = vmatprep.subr.bf16.mxu0 0
        %7544 = vmatpush1.bf16.msra.mxu0 0
        %7545 = vmatprep.subr.bf16.mxu0 0
        %7546 = vmatpush1.bf16.msra.mxu0 0
        %7547 = vmatprep.subr.bf16.mxu0 0
        %7548 = vmatpush1.bf16.msra.mxu0 0
        %7549 = vmatprep.subr.bf16.mxu0 0
        %7550 = vmatpush1.bf16.msra.mxu0 0
        %7551 = vmatprep.subr.bf16.mxu0 0
        %7552 = vmatpush1.bf16.msra.mxu0 0
        %7553 = vmatprep.mubr.bf16.mxu0 0
        %7554 = vmatmul.mubr.bf16.gmra.mrb[0].mxu0 %v7474
        %v7555 = vpop.f32.mrb[0].mxu0
        %v7556 = vadd.f32 0.0, %v7555
        %v7557 = vpop.f32.mrb[0].mxu0
        %v7558 = vpop.f32.mrb[0].mxu0
        %v7559 = vadd.f32 0.0, %v7558
        %v7560 = vpop.f32.mrb[0].mxu0
        %7561 = vmatprep.mubr.bf16.mxu0 0
        %7562 = vmatmul.mubr.bf16.gmra.mrb[0].mxu0 %v7477
        %v7563 = vpop.f32.mrb[0].mxu0
        %v7564 = vadd.f32 0.0, %v7563
        %v7565 = vpop.f32.mrb[0].mxu0
        %v7566 = vpop.f32.mrb[0].mxu0
        %v7567 = vadd.f32 0.0, %v7566
        %v7568 = vpop.f32.mrb[0].mxu0
        %7569 = vmatprep.mubr.bf16.mxu0 0
        %7570 = vmatmul.mubr.bf16.gmra.mrb[0].mxu0 %v7480
        %v7571 = vpop.f32.mrb[0].mxu0
        %v7572 = vadd.f32 0.0, %v7571
        %v7573 = vpop.f32.mrb[0].mxu0
        %v7574 = vpop.f32.mrb[0].mxu0
        %v7575 = vadd.f32 0.0, %v7574
        %v7576 = vpop.f32.mrb[0].mxu0
        %7577 = vmatprep.mubr.bf16.mxu0 0
        %7578 = vmatmul.mubr.bf16.gmra.mrb[0].mxu0 %v7483
        %v7579 = vpop.f32.mrb[0].mxu0
        %v7580 = vadd.f32 0.0, %v7579
        %v7581 = vpop.f32.mrb[0].mxu0
        %v7582 = vpop.f32.mrb[0].mxu0
        %v7583 = vadd.f32 0.0, %v7582
        %v7584 = vpop.f32.mrb[0].mxu0
        %7585 = vmatprep.mubr.bf16.mxu0 0
        %7586 = vmatmul.mubr.bf16.gmra.mrb[0].mxu0 %v7486
        %v7587 = vpop.f32.mrb[0].mxu0
        %v7588 = vadd.f32 0.0, %v7587
        %v7589 = vpop.f32.mrb[0].mxu0
        %v7590 = vpop.f32.mrb[0].mxu0
        %v7591 = vadd.f32 0.0, %v7590
        %v7592 = vpop.f32.mrb[0].mxu0
        %7593 = vmatprep.mubr.bf16.mxu0 0
        %7594 = vmatmul.mubr.bf16.gmra.mrb[0].mxu0 %v7489
        %v7595 = vpop.f32.mrb[0].mxu0
        %v7596 = vadd.f32 0.0, %v7595
        %v7597 = vpop.f32.mrb[0].mxu0
        %v7598 = vpop.f32.mrb[0].mxu0
        %v7599 = vadd.f32 0.0, %v7598
        %v7600 = vpop.f32.mrb[0].mxu0
        %7601 = vmatprep.mubr.bf16.mxu0 0
        %7602 = vmatmul.mubr.bf16.gmra.mrb[0].mxu0 %v7492
        %v7603 = vpop.f32.mrb[0].mxu0
        %v7604 = vadd.f32 0.0, %v7603
        %v7605 = vpop.f32.mrb[0].mxu0
        %v7606 = vpop.f32.mrb[0].mxu0
        %v7607 = vadd.f32 0.0, %v7606
        %v7608 = vpop.f32.mrb[0].mxu0
        %7609 = vmatprep.mubr.bf16.mxu0 0
        %7610 = vmatmul.mubr.bf16.gmra.mrb[0].mxu0 %v7495
        %v7611 = vpop.f32.mrb[0].mxu0
        %v7612 = vadd.f32 0.0, %v7611
        %v7613 = vpop.f32.mrb[0].mxu0
        %v7614 = vpop.f32.mrb[0].mxu0
        %v7615 = vadd.f32 0.0, %v7614
        %v7616 = vpop.f32.mrb[0].mxu0
        %7617 = vmatprep.mubr.bf16.mxu0 0
        %7618 = vmatmul.mubr.bf16.gmra.mrb[0].mxu0 %v7498
        %v7619 = vpop.f32.mrb[0].mxu0
        %v7620 = vadd.f32 0.0, %v7619
        %v7621 = vpop.f32.mrb[0].mxu0
        %v7622 = vpop.f32.mrb[0].mxu0
        %v7623 = vadd.f32 0.0, %v7622
        %v7624 = vpop.f32.mrb[0].mxu0
        %7625 = vmatprep.mubr.bf16.mxu0 0
        %7626 = vmatmul.mubr.bf16.gmra.mrb[0].mxu0 %v7501
        %v7627 = vpop.f32.mrb[0].mxu0
        %v7628 = vadd.f32 0.0, %v7627
        %v7629 = vpop.f32.mrb[0].mxu0
        %v7630 = vpop.f32.mrb[0].mxu0
        %v7631 = vadd.f32 0.0, %v7630
        %v7632 = vpop.f32.mrb[0].mxu0
        %7633 = vmatprep.mubr.bf16.mxu0 0
        %7634 = vmatmul.mubr.bf16.gmra.mrb[0].mxu0 %v7504
        %v7635 = vpop.f32.mrb[0].mxu0
        %v7636 = vadd.f32 0.0, %v7635
        %v7637 = vpop.f32.mrb[0].mxu0
        %v7638 = vpop.f32.mrb[0].mxu0
        %v7639 = vadd.f32 0.0, %v7638
        %v7640 = vpop.f32.mrb[0].mxu0
        %7641 = vmatprep.mubr.bf16.mxu0 0
        %7642 = vmatmul.mubr.bf16.gmra.mrb[0].mxu0 %v7507
        %v7643 = vpop.f32.mrb[0].mxu0
        %v7644 = vadd.f32 0.0, %v7643
        %v7645 = vpop.f32.mrb[0].mxu0
        %v7646 = vpop.f32.mrb[0].mxu0
        %v7647 = vadd.f32 0.0, %v7646
        %v7648 = vpop.f32.mrb[0].mxu0
        %7649 = vmatprep.mubr.bf16.mxu0 0
        %7650 = vmatmul.mubr.bf16.gmra.mrb[0].mxu0 %v7510
        %v7651 = vpop.f32.mrb[0].mxu0
        %v7652 = vadd.f32 0.0, %v7651
        %v7653 = vpop.f32.mrb[0].mxu0
        %v7654 = vpop.f32.mrb[0].mxu0
        %v7655 = vadd.f32 0.0, %v7654
        %v7656 = vpop.f32.mrb[0].mxu0
        %7657 = vmatprep.mubr.bf16.mxu0 0
        %7658 = vmatmul.mubr.bf16.gmra.mrb[0].mxu0 %v7513
        %v7659 = vpop.f32.mrb[0].mxu0
        %v7660 = vadd.f32 0.0, %v7659
        %v7661 = vpop.f32.mrb[0].mxu0
        %v7662 = vpop.f32.mrb[0].mxu0
        %v7663 = vadd.f32 0.0, %v7662
        %v7664 = vpop.f32.mrb[0].mxu0
        %7665 = vmatprep.mubr.bf16.mxu0 0
        %7666 = vmatmul.mubr.bf16.gmra.mrb[0].mxu0 %v7516
        %v7667 = vpop.f32.mrb[0].mxu0
        %v7668 = vadd.f32 0.0, %v7667
        %v7669 = vpop.f32.mrb[0].mxu0
        %v7670 = vpop.f32.mrb[0].mxu0
        %v7671 = vadd.f32 0.0, %v7670
        %v7672 = vpop.f32.mrb[0].mxu0
        %7673 = vmatprep.mubr.bf16.mxu0 0
        %7674 = vmatmul.mubr.bf16.gmra.mrb[0].mxu0 %v7519
        %v7675 = vpop.f32.mrb[0].mxu0
        %v7676 = vadd.f32 0.0, %v7675
        %v7677 = vpop.f32.mrb[0].mxu0
        %v7678 = vpop.f32.mrb[0].mxu0
        %v7679 = vadd.f32 0.0, %v7678
        %v7680 = vpop.f32.mrb[0].mxu0
        %7681 = vdwg.mxu0
        %v7682 = vadd.f32 %v7392, %v7556
        %v7683 = vadd.f32 %v7393, %v7559
        %v7684 = vadd.f32 %v7394, %v7564
        %v7685 = vadd.f32 %v7395, %v7567
        %v7686 = vadd.f32 %v7396, %v7572
        %v7687 = vadd.f32 %v7397, %v7575
        %v7688 = vadd.f32 %v7398, %v7580
        %v7689 = vadd.f32 %v7399, %v7583
        %v7690 = vadd.f32 %v7400, %v7588
        %v7691 = vadd.f32 %v7401, %v7591
        %v7692 = vadd.f32 %v7402, %v7596
        %v7693 = vadd.f32 %v7403, %v7599
        %v7694 = vadd.f32 %v7404, %v7604
        %v7695 = vadd.f32 %v7405, %v7607
        %v7696 = vadd.f32 %v7406, %v7612
        %v7697 = vadd.f32 %v7407, %v7615
        %v7698 = vadd.f32 %v7408, %v7620
        %v7699 = vadd.f32 %v7409, %v7623
        %v7700 = vadd.f32 %v7410, %v7628
        %v7701 = vadd.f32 %v7411, %v7631
        %v7702 = vadd.f32 %v7412, %v7636
        %v7703 = vadd.f32 %v7413, %v7639
        %v7704 = vadd.f32 %v7414, %v7644
        %v7705 = vadd.f32 %v7415, %v7647
        %v7706 = vadd.f32 %v7416, %v7652
        %v7707 = vadd.f32 %v7417, %v7655
        %v7708 = vadd.f32 %v7418, %v7660
        %v7709 = vadd.f32 %v7419, %v7663
        %v7710 = vadd.f32 %v7420, %v7668
        %v7711 = vadd.f32 %v7421, %v7671
        %v7712 = vadd.f32 %v7422, %v7676
        %v7713 = vadd.f32 %v7423, %v7679
        %v7714 = vld [vmem:[%s7424 + $0x1] sm:$0xff]
        %v7715 = vld [vmem:[%s7424 + $0x9] sm:$0xff]
        %v7716 = vld [vmem:[%s7424 + $0x19] sm:$0xff]
        %v7717 = vld [vmem:[%s7424 + $0x21] sm:$0xff]
        %v7718 = vld [vmem:[%s7424 + $0x31] sm:$0xff]
        %v7719 = vld [vmem:[%s7424 + $0x39] sm:$0xff]
        %v7720 = vld [vmem:[%s7424 + $0x49] sm:$0xff]
        %v7721 = vld [vmem:[%s7424 + $0x51] sm:$0xff]
        %v7722 = vld [vmem:[%s7424 + $0x61] sm:$0xff]
        %v7723 = vld [vmem:[%s7424 + $0x69] sm:$0xff]
        %v7724 = vld [vmem:[%s7424 + $0x79] sm:$0xff]
        %v7725 = vld [vmem:[%s7424 + $0x81] sm:$0xff]
        %v7726 = vld [vmem:[%s7424 + $0x91] sm:$0xff]
        %v7727 = vld [vmem:[%s7424 + $0x99] sm:$0xff]
        %v7728 = vld [vmem:[%s7424 + $0xa9] sm:$0xff]
        %v7729 = vld [vmem:[%s7424 + $0xb1] sm:$0xff]
        %v7730 = vld [vmem:[%s7424 + $0xc1] sm:$0xff]
        %v7731 = vld [vmem:[%s7424 + $0xc9] sm:$0xff]
        %v7732 = vld [vmem:[%s7424 + $0xd9] sm:$0xff]
        %v7733 = vld [vmem:[%s7424 + $0xe1] sm:$0xff]
        %v7734 = vld [vmem:[%s7424 + $0xf1] sm:$0xff]
        %v7735 = vld [vmem:[%s7424 + $0xf9] sm:$0xff]
        %v7736 = vld [vmem:[%s7424 + $0x109] sm:$0xff]
        %v7737 = vld [vmem:[%s7424 + $0x111] sm:$0xff]
        %v7738 = vld [vmem:[%s7424 + $0x121] sm:$0xff]
        %v7739 = vld [vmem:[%s7424 + $0x129] sm:$0xff]
        %v7740 = vld [vmem:[%s7424 + $0x139] sm:$0xff]
        %v7741 = vld [vmem:[%s7424 + $0x141] sm:$0xff]
        %v7742 = vld [vmem:[%s7424 + $0x151] sm:$0xff]
        %v7743 = vld [vmem:[%s7424 + $0x159] sm:$0xff]
        %v7744 = vld [vmem:[%s7424 + $0x169] sm:$0xff]
        %v7745 = vld [vmem:[%s7424 + $0x171] sm:$0xff]
        %v7746 = vpack.c.bf16 %v7715, %v7714
        %v7747 = vpack.c.bf16 %v7717, %v7716
        %v7748 = vpack.c.bf16 %v7719, %v7718
        %v7749 = vpack.c.bf16 %v7721, %v7720
        %v7750 = vpack.c.bf16 %v7723, %v7722
        %v7751 = vpack.c.bf16 %v7725, %v7724
        %v7752 = vpack.c.bf16 %v7727, %v7726
        %v7753 = vpack.c.bf16 %v7729, %v7728
        %v7754 = vpack.c.bf16 %v7731, %v7730
        %v7755 = vpack.c.bf16 %v7733, %v7732
        %v7756 = vpack.c.bf16 %v7735, %v7734
        %v7757 = vpack.c.bf16 %v7737, %v7736
        %v7758 = vpack.c.bf16 %v7739, %v7738
        %v7759 = vpack.c.bf16 %v7741, %v7740
        %v7760 = vpack.c.bf16 %v7743, %v7742
        %v7761 = vpack.c.bf16 %v7745, %v7744
        %v7763 = vsel %vm279, %v7746, 0
        %v7766 = vsel %vm279, %v7747, 0
        %v7769 = vsel %vm279, %v7748, 0
        %v7772 = vsel %vm279, %v7749, 0
        %v7775 = vsel %vm279, %v7750, 0
        %v7778 = vsel %vm279, %v7751, 0
        %v7781 = vsel %vm279, %v7752, 0
        %v7784 = vsel %vm279, %v7753, 0
        %v7787 = vsel %vm279, %v7754, 0
        %v7790 = vsel %vm279, %v7755, 0
        %v7793 = vsel %vm279, %v7756, 0
        %v7796 = vsel %vm279, %v7757, 0
        %v7799 = vsel %vm279, %v7758, 0
        %v7802 = vsel %vm279, %v7759, 0
        %v7805 = vsel %vm279, %v7760, 0
        %v7808 = vsel %vm279, %v7761, 0
        %7810 = vmatprep.subr.bf16.mxu0 0
        %7811 = vmatpush1.bf16.msra.mxu0 %v2390
        %7812 = vmatprep.subr.bf16.mxu0 0
        %7813 = vmatpush1.bf16.msra.mxu0 0
        %7814 = vmatprep.subr.bf16.mxu0 0
        %7815 = vmatpush1.bf16.msra.mxu0 0
        %7816 = vmatprep.subr.bf16.mxu0 0
        %7817 = vmatpush1.bf16.msra.mxu0 0
        %7818 = vmatprep.subr.bf16.mxu0 0
        %7819 = vmatpush1.bf16.msra.mxu0 0
        %7820 = vmatprep.subr.bf16.mxu0 0
        %7821 = vmatpush1.bf16.msra.mxu0 0
        %7822 = vmatprep.subr.bf16.mxu0 0
        %7823 = vmatpush1.bf16.msra.mxu0 0
        %7824 = vmatprep.subr.bf16.mxu0 0
        %7825 = vmatpush1.bf16.msra.mxu0 0
        %7826 = vmatprep.subr.bf16.mxu0 0
        %7827 = vmatpush1.bf16.msra.mxu0 0
        %7828 = vmatprep.subr.bf16.mxu0 0
        %7829 = vmatpush1.bf16.msra.mxu0 0
        %7830 = vmatprep.subr.bf16.mxu0 0
        %7831 = vmatpush1.bf16.msra.mxu0 0
        %7832 = vmatprep.subr.bf16.mxu0 0
        %7833 = vmatpush1.bf16.msra.mxu0 0
        %7834 = vmatprep.subr.bf16.mxu0 0
        %7835 = vmatpush1.bf16.msra.mxu0 0
        %7836 = vmatprep.subr.bf16.mxu0 0
        %7837 = vmatpush1.bf16.msra.mxu0 0
        %7838 = vmatprep.subr.bf16.mxu0 0
        %7839 = vmatpush1.bf16.msra.mxu0 0
        %7840 = vmatprep.subr.bf16.mxu0 0
        %7841 = vmatpush1.bf16.msra.mxu0 0
        %7842 = vmatprep.mubr.bf16.mxu0 0
        %7843 = vmatmul.mubr.bf16.gmra.mrb[0].mxu0 %v7763
        %v7844 = vpop.f32.mrb[0].mxu0
        %v7845 = vadd.f32 0.0, %v7844
        %v7846 = vpop.f32.mrb[0].mxu0
        %v7847 = vpop.f32.mrb[0].mxu0
        %v7848 = vadd.f32 0.0, %v7847
        %v7849 = vpop.f32.mrb[0].mxu0
        %7850 = vmatprep.mubr.bf16.mxu0 0
        %7851 = vmatmul.mubr.bf16.gmra.mrb[0].mxu0 %v7766
        %v7852 = vpop.f32.mrb[0].mxu0
        %v7853 = vadd.f32 0.0, %v7852
        %v7854 = vpop.f32.mrb[0].mxu0
        %v7855 = vpop.f32.mrb[0].mxu0
        %v7856 = vadd.f32 0.0, %v7855
        %v7857 = vpop.f32.mrb[0].mxu0
        %7858 = vmatprep.mubr.bf16.mxu0 0
        %7859 = vmatmul.mubr.bf16.gmra.mrb[0].mxu0 %v7769
        %v7860 = vpop.f32.mrb[0].mxu0
        %v7861 = vadd.f32 0.0, %v7860
        %v7862 = vpop.f32.mrb[0].mxu0
        %v7863 = vpop.f32.mrb[0].mxu0
        %v7864 = vadd.f32 0.0, %v7863
        %v7865 = vpop.f32.mrb[0].mxu0
        %7866 = vmatprep.mubr.bf16.mxu0 0
        %7867 = vmatmul.mubr.bf16.gmra.mrb[0].mxu0 %v7772
        %v7868 = vpop.f32.mrb[0].mxu0
        %v7869 = vadd.f32 0.0, %v7868
        %v7870 = vpop.f32.mrb[0].mxu0
        %v7871 = vpop.f32.mrb[0].mxu0
        %v7872 = vadd.f32 0.0, %v7871
        %v7873 = vpop.f32.mrb[0].mxu0
        %7874 = vmatprep.mubr.bf16.mxu0 0
        %7875 = vmatmul.mubr.bf16.gmra.mrb[0].mxu0 %v7775
        %v7876 = vpop.f32.mrb[0].mxu0
        %v7877 = vadd.f32 0.0, %v7876
        %v7878 = vpop.f32.mrb[0].mxu0
        %v7879 = vpop.f32.mrb[0].mxu0
        %v7880 = vadd.f32 0.0, %v7879
        %v7881 = vpop.f32.mrb[0].mxu0
        %7882 = vmatprep.mubr.bf16.mxu0 0
        %7883 = vmatmul.mubr.bf16.gmra.mrb[0].mxu0 %v7778
        %v7884 = vpop.f32.mrb[0].mxu0
        %v7885 = vadd.f32 0.0, %v7884
        %v7886 = vpop.f32.mrb[0].mxu0
        %v7887 = vpop.f32.mrb[0].mxu0
        %v7888 = vadd.f32 0.0, %v7887
        %v7889 = vpop.f32.mrb[0].mxu0
        %7890 = vmatprep.mubr.bf16.mxu0 0
        %7891 = vmatmul.mubr.bf16.gmra.mrb[0].mxu0 %v7781
        %v7892 = vpop.f32.mrb[0].mxu0
        %v7893 = vadd.f32 0.0, %v7892
        %v7894 = vpop.f32.mrb[0].mxu0
        %v7895 = vpop.f32.mrb[0].mxu0
        %v7896 = vadd.f32 0.0, %v7895
        %v7897 = vpop.f32.mrb[0].mxu0
        %7898 = vmatprep.mubr.bf16.mxu0 0
        %7899 = vmatmul.mubr.bf16.gmra.mrb[0].mxu0 %v7784
        %v7900 = vpop.f32.mrb[0].mxu0
        %v7901 = vadd.f32 0.0, %v7900
        %v7902 = vpop.f32.mrb[0].mxu0
        %v7903 = vpop.f32.mrb[0].mxu0
        %v7904 = vadd.f32 0.0, %v7903
        %v7905 = vpop.f32.mrb[0].mxu0
        %7906 = vmatprep.mubr.bf16.mxu0 0
        %7907 = vmatmul.mubr.bf16.gmra.mrb[0].mxu0 %v7787
        %v7908 = vpop.f32.mrb[0].mxu0
        %v7909 = vadd.f32 0.0, %v7908
        %v7910 = vpop.f32.mrb[0].mxu0
        %v7911 = vpop.f32.mrb[0].mxu0
        %v7912 = vadd.f32 0.0, %v7911
        %v7913 = vpop.f32.mrb[0].mxu0
        %7914 = vmatprep.mubr.bf16.mxu0 0
        %7915 = vmatmul.mubr.bf16.gmra.mrb[0].mxu0 %v7790
        %v7916 = vpop.f32.mrb[0].mxu0
        %v7917 = vadd.f32 0.0, %v7916
        %v7918 = vpop.f32.mrb[0].mxu0
        %v7919 = vpop.f32.mrb[0].mxu0
        %v7920 = vadd.f32 0.0, %v7919
        %v7921 = vpop.f32.mrb[0].mxu0
        %7922 = vmatprep.mubr.bf16.mxu0 0
        %7923 = vmatmul.mubr.bf16.gmra.mrb[0].mxu0 %v7793
        %v7924 = vpop.f32.mrb[0].mxu0
        %v7925 = vadd.f32 0.0, %v7924
        %v7926 = vpop.f32.mrb[0].mxu0
        %v7927 = vpop.f32.mrb[0].mxu0
        %v7928 = vadd.f32 0.0, %v7927
        %v7929 = vpop.f32.mrb[0].mxu0
        %7930 = vmatprep.mubr.bf16.mxu0 0
        %7931 = vmatmul.mubr.bf16.gmra.mrb[0].mxu0 %v7796
        %v7932 = vpop.f32.mrb[0].mxu0
        %v7933 = vadd.f32 0.0, %v7932
        %v7934 = vpop.f32.mrb[0].mxu0
        %v7935 = vpop.f32.mrb[0].mxu0
        %v7936 = vadd.f32 0.0, %v7935
        %v7937 = vpop.f32.mrb[0].mxu0
        %7938 = vmatprep.mubr.bf16.mxu0 0
        %7939 = vmatmul.mubr.bf16.gmra.mrb[0].mxu0 %v7799
        %v7940 = vpop.f32.mrb[0].mxu0
        %v7941 = vadd.f32 0.0, %v7940
        %v7942 = vpop.f32.mrb[0].mxu0
        %v7943 = vpop.f32.mrb[0].mxu0
        %v7944 = vadd.f32 0.0, %v7943
        %v7945 = vpop.f32.mrb[0].mxu0
        %7946 = vmatprep.mubr.bf16.mxu0 0
        %7947 = vmatmul.mubr.bf16.gmra.mrb[0].mxu0 %v7802
        %v7948 = vpop.f32.mrb[0].mxu0
        %v7949 = vadd.f32 0.0, %v7948
        %v7950 = vpop.f32.mrb[0].mxu0
        %v7951 = vpop.f32.mrb[0].mxu0
        %v7952 = vadd.f32 0.0, %v7951
        %v7953 = vpop.f32.mrb[0].mxu0
        %7954 = vmatprep.mubr.bf16.mxu0 0
        %7955 = vmatmul.mubr.bf16.gmra.mrb[0].mxu0 %v7805
        %v7956 = vpop.f32.mrb[0].mxu0
        %v7957 = vadd.f32 0.0, %v7956
        %v7958 = vpop.f32.mrb[0].mxu0
        %v7959 = vpop.f32.mrb[0].mxu0
        %v7960 = vadd.f32 0.0, %v7959
        %v7961 = vpop.f32.mrb[0].mxu0
        %7962 = vmatprep.mubr.bf16.mxu0 0
        %7963 = vmatmul.mubr.bf16.gmra.mrb[0].mxu0 %v7808
        %v7964 = vpop.f32.mrb[0].mxu0
        %v7965 = vadd.f32 0.0, %v7964
        %v7966 = vpop.f32.mrb[0].mxu0
        %v7967 = vpop.f32.mrb[0].mxu0
        %v7968 = vadd.f32 0.0, %v7967
        %v7969 = vpop.f32.mrb[0].mxu0
        %7970 = vdwg.mxu0
        %v7971 = vadd.f32 %v7682, %v7845
        %v7972 = vadd.f32 %v7683, %v7848
        %v7973 = vadd.f32 %v7684, %v7853
        %v7974 = vadd.f32 %v7685, %v7856
        %v7975 = vadd.f32 %v7686, %v7861
        %v7976 = vadd.f32 %v7687, %v7864
        %v7977 = vadd.f32 %v7688, %v7869
        %v7978 = vadd.f32 %v7689, %v7872
        %v7979 = vadd.f32 %v7690, %v7877
        %v7980 = vadd.f32 %v7691, %v7880
        %v7981 = vadd.f32 %v7692, %v7885
        %v7982 = vadd.f32 %v7693, %v7888
        %v7983 = vadd.f32 %v7694, %v7893
        %v7984 = vadd.f32 %v7695, %v7896
        %v7985 = vadd.f32 %v7696, %v7901
        %v7986 = vadd.f32 %v7697, %v7904
        %v7987 = vadd.f32 %v7698, %v7909
        %v7988 = vadd.f32 %v7699, %v7912
        %v7989 = vadd.f32 %v7700, %v7917
        %v7990 = vadd.f32 %v7701, %v7920
        %v7991 = vadd.f32 %v7702, %v7925
        %v7992 = vadd.f32 %v7703, %v7928
        %v7993 = vadd.f32 %v7704, %v7933
        %v7994 = vadd.f32 %v7705, %v7936
        %v7995 = vadd.f32 %v7706, %v7941
        %v7996 = vadd.f32 %v7707, %v7944
        %v7997 = vadd.f32 %v7708, %v7949
        %v7998 = vadd.f32 %v7709, %v7952
        %v7999 = vadd.f32 %v7710, %v7957
        %v8000 = vadd.f32 %v7711, %v7960
        %v8001 = vadd.f32 %v7712, %v7965
        %v8002 = vadd.f32 %v7713, %v7968
        %v8003 = vld [vmem:[%s7424 + $0x2] sm:$0xff]
        %v8004 = vld [vmem:[%s7424 + $0xa] sm:$0xff]
        %v8005 = vld [vmem:[%s7424 + $0x1a] sm:$0xff]
        %v8006 = vld [vmem:[%s7424 + $0x22] sm:$0xff]
        %v8007 = vld [vmem:[%s7424 + $0x32] sm:$0xff]
        %v8008 = vld [vmem:[%s7424 + $0x3a] sm:$0xff]
        %v8009 = vld [vmem:[%s7424 + $0x4a] sm:$0xff]
        %v8010 = vld [vmem:[%s7424 + $0x52] sm:$0xff]
        %v8011 = vld [vmem:[%s7424 + $0x62] sm:$0xff]
        %v8012 = vld [vmem:[%s7424 + $0x6a] sm:$0xff]
        %v8013 = vld [vmem:[%s7424 + $0x7a] sm:$0xff]
        %v8014 = vld [vmem:[%s7424 + $0x82] sm:$0xff]
        %v8015 = vld [vmem:[%s7424 + $0x92] sm:$0xff]
        %v8016 = vld [vmem:[%s7424 + $0x9a] sm:$0xff]
        %v8017 = vld [vmem:[%s7424 + $0xaa] sm:$0xff]
        %v8018 = vld [vmem:[%s7424 + $0xb2] sm:$0xff]
        %v8019 = vld [vmem:[%s7424 + $0xc2] sm:$0xff]
        %v8020 = vld [vmem:[%s7424 + $0xca] sm:$0xff]
        %v8021 = vld [vmem:[%s7424 + $0xda] sm:$0xff]
        %v8022 = vld [vmem:[%s7424 + $0xe2] sm:$0xff]
        %v8023 = vld [vmem:[%s7424 + $0xf2] sm:$0xff]
        %v8024 = vld [vmem:[%s7424 + $0xfa] sm:$0xff]
        %v8025 = vld [vmem:[%s7424 + $0x10a] sm:$0xff]
        %v8026 = vld [vmem:[%s7424 + $0x112] sm:$0xff]
        %v8027 = vld [vmem:[%s7424 + $0x122] sm:$0xff]
        %v8028 = vld [vmem:[%s7424 + $0x12a] sm:$0xff]
        %v8029 = vld [vmem:[%s7424 + $0x13a] sm:$0xff]
        %v8030 = vld [vmem:[%s7424 + $0x142] sm:$0xff]
        %v8031 = vld [vmem:[%s7424 + $0x152] sm:$0xff]
        %v8032 = vld [vmem:[%s7424 + $0x15a] sm:$0xff]
        %v8033 = vld [vmem:[%s7424 + $0x16a] sm:$0xff]
        %v8034 = vld [vmem:[%s7424 + $0x172] sm:$0xff]
        %v8035 = vpack.c.bf16 %v8004, %v8003
        %v8036 = vpack.c.bf16 %v8006, %v8005
        %v8037 = vpack.c.bf16 %v8008, %v8007
        %v8038 = vpack.c.bf16 %v8010, %v8009
        %v8039 = vpack.c.bf16 %v8012, %v8011
        %v8040 = vpack.c.bf16 %v8014, %v8013
        %v8041 = vpack.c.bf16 %v8016, %v8015
        %v8042 = vpack.c.bf16 %v8018, %v8017
        %v8043 = vpack.c.bf16 %v8020, %v8019
        %v8044 = vpack.c.bf16 %v8022, %v8021
        %v8045 = vpack.c.bf16 %v8024, %v8023
        %v8046 = vpack.c.bf16 %v8026, %v8025
        %v8047 = vpack.c.bf16 %v8028, %v8027
        %v8048 = vpack.c.bf16 %v8030, %v8029
        %v8049 = vpack.c.bf16 %v8032, %v8031
        %v8050 = vpack.c.bf16 %v8034, %v8033
        %v8052 = vsel %vm279, %v8035, 0
        %v8055 = vsel %vm279, %v8036, 0
        %v8058 = vsel %vm279, %v8037, 0
        %v8061 = vsel %vm279, %v8038, 0
        %v8064 = vsel %vm279, %v8039, 0
        %v8067 = vsel %vm279, %v8040, 0
        %v8070 = vsel %vm279, %v8041, 0
        %v8073 = vsel %vm279, %v8042, 0
        %v8076 = vsel %vm279, %v8043, 0
        %v8079 = vsel %vm279, %v8044, 0
        %v8082 = vsel %vm279, %v8045, 0
        %v8085 = vsel %vm279, %v8046, 0
        %v8088 = vsel %vm279, %v8047, 0
        %v8091 = vsel %vm279, %v8048, 0
        %v8094 = vsel %vm279, %v8049, 0
        %v8097 = vsel %vm279, %v8050, 0
        %8099 = vmatprep.subr.bf16.mxu0 0
        %8100 = vmatpush1.bf16.msra.mxu0 %v2684
        %8101 = vmatprep.subr.bf16.mxu0 0
        %8102 = vmatpush1.bf16.msra.mxu0 0
        %8103 = vmatprep.subr.bf16.mxu0 0
        %8104 = vmatpush1.bf16.msra.mxu0 0
        %8105 = vmatprep.subr.bf16.mxu0 0
        %8106 = vmatpush1.bf16.msra.mxu0 0
        %8107 = vmatprep.subr.bf16.mxu0 0
        %8108 = vmatpush1.bf16.msra.mxu0 0
        %8109 = vmatprep.subr.bf16.mxu0 0
        %8110 = vmatpush1.bf16.msra.mxu0 0
        %8111 = vmatprep.subr.bf16.mxu0 0
        %8112 = vmatpush1.bf16.msra.mxu0 0
        %8113 = vmatprep.subr.bf16.mxu0 0
        %8114 = vmatpush1.bf16.msra.mxu0 0
        %8115 = vmatprep.subr.bf16.mxu0 0
        %8116 = vmatpush1.bf16.msra.mxu0 0
        %8117 = vmatprep.subr.bf16.mxu0 0
        %8118 = vmatpush1.bf16.msra.mxu0 0
        %8119 = vmatprep.subr.bf16.mxu0 0
        %8120 = vmatpush1.bf16.msra.mxu0 0
        %8121 = vmatprep.subr.bf16.mxu0 0
        %8122 = vmatpush1.bf16.msra.mxu0 0
        %8123 = vmatprep.subr.bf16.mxu0 0
        %8124 = vmatpush1.bf16.msra.mxu0 0
        %8125 = vmatprep.subr.bf16.mxu0 0
        %8126 = vmatpush1.bf16.msra.mxu0 0
        %8127 = vmatprep.subr.bf16.mxu0 0
        %8128 = vmatpush1.bf16.msra.mxu0 0
        %8129 = vmatprep.subr.bf16.mxu0 0
        %8130 = vmatpush1.bf16.msra.mxu0 0
        %8131 = vmatprep.mubr.bf16.mxu0 0
        %8132 = vmatmul.mubr.bf16.gmra.mrb[0].mxu0 %v8052
        %v8133 = vpop.f32.mrb[0].mxu0
        %v8134 = vadd.f32 0.0, %v8133
        %v8135 = vpop.f32.mrb[0].mxu0
        %v8136 = vpop.f32.mrb[0].mxu0
        %v8137 = vadd.f32 0.0, %v8136
        %v8138 = vpop.f32.mrb[0].mxu0
        %8139 = vmatprep.mubr.bf16.mxu0 0
        %8140 = vmatmul.mubr.bf16.gmra.mrb[0].mxu0 %v8055
        %v8141 = vpop.f32.mrb[0].mxu0
        %v8142 = vadd.f32 0.0, %v8141
        %v8143 = vpop.f32.mrb[0].mxu0
        %v8144 = vpop.f32.mrb[0].mxu0
        %v8145 = vadd.f32 0.0, %v8144
        %v8146 = vpop.f32.mrb[0].mxu0
        %8147 = vmatprep.mubr.bf16.mxu0 0
        %8148 = vmatmul.mubr.bf16.gmra.mrb[0].mxu0 %v8058
        %v8149 = vpop.f32.mrb[0].mxu0
        %v8150 = vadd.f32 0.0, %v8149
        %v8151 = vpop.f32.mrb[0].mxu0
        %v8152 = vpop.f32.mrb[0].mxu0
        %v8153 = vadd.f32 0.0, %v8152
        %v8154 = vpop.f32.mrb[0].mxu0
        %8155 = vmatprep.mubr.bf16.mxu0 0
        %8156 = vmatmul.mubr.bf16.gmra.mrb[0].mxu0 %v8061
        %v8157 = vpop.f32.mrb[0].mxu0
        %v8158 = vadd.f32 0.0, %v8157
        %v8159 = vpop.f32.mrb[0].mxu0
        %v8160 = vpop.f32.mrb[0].mxu0
        %v8161 = vadd.f32 0.0, %v8160
        %v8162 = vpop.f32.mrb[0].mxu0
        %8163 = vmatprep.mubr.bf16.mxu0 0
        %8164 = vmatmul.mubr.bf16.gmra.mrb[0].mxu0 %v8064
        %v8165 = vpop.f32.mrb[0].mxu0
        %v8166 = vadd.f32 0.0, %v8165
        %v8167 = vpop.f32.mrb[0].mxu0
        %v8168 = vpop.f32.mrb[0].mxu0
        %v8169 = vadd.f32 0.0, %v8168
        %v8170 = vpop.f32.mrb[0].mxu0
        %8171 = vmatprep.mubr.bf16.mxu0 0
        %8172 = vmatmul.mubr.bf16.gmra.mrb[0].mxu0 %v8067
        %v8173 = vpop.f32.mrb[0].mxu0
        %v8174 = vadd.f32 0.0, %v8173
        %v8175 = vpop.f32.mrb[0].mxu0
        %v8176 = vpop.f32.mrb[0].mxu0
        %v8177 = vadd.f32 0.0, %v8176
        %v8178 = vpop.f32.mrb[0].mxu0
        %8179 = vmatprep.mubr.bf16.mxu0 0
        %8180 = vmatmul.mubr.bf16.gmra.mrb[0].mxu0 %v8070
        %v8181 = vpop.f32.mrb[0].mxu0
        %v8182 = vadd.f32 0.0, %v8181
        %v8183 = vpop.f32.mrb[0].mxu0
        %v8184 = vpop.f32.mrb[0].mxu0
        %v8185 = vadd.f32 0.0, %v8184
        %v8186 = vpop.f32.mrb[0].mxu0
        %8187 = vmatprep.mubr.bf16.mxu0 0
        %8188 = vmatmul.mubr.bf16.gmra.mrb[0].mxu0 %v8073
        %v8189 = vpop.f32.mrb[0].mxu0
        %v8190 = vadd.f32 0.0, %v8189
        %v8191 = vpop.f32.mrb[0].mxu0
        %v8192 = vpop.f32.mrb[0].mxu0
        %v8193 = vadd.f32 0.0, %v8192
        %v8194 = vpop.f32.mrb[0].mxu0
        %8195 = vmatprep.mubr.bf16.mxu0 0
        %8196 = vmatmul.mubr.bf16.gmra.mrb[0].mxu0 %v8076
        %v8197 = vpop.f32.mrb[0].mxu0
        %v8198 = vadd.f32 0.0, %v8197
        %v8199 = vpop.f32.mrb[0].mxu0
        %v8200 = vpop.f32.mrb[0].mxu0
        %v8201 = vadd.f32 0.0, %v8200
        %v8202 = vpop.f32.mrb[0].mxu0
        %8203 = vmatprep.mubr.bf16.mxu0 0
        %8204 = vmatmul.mubr.bf16.gmra.mrb[0].mxu0 %v8079
        %v8205 = vpop.f32.mrb[0].mxu0
        %v8206 = vadd.f32 0.0, %v8205
        %v8207 = vpop.f32.mrb[0].mxu0
        %v8208 = vpop.f32.mrb[0].mxu0
        %v8209 = vadd.f32 0.0, %v8208
        %v8210 = vpop.f32.mrb[0].mxu0
        %8211 = vmatprep.mubr.bf16.mxu0 0
        %8212 = vmatmul.mubr.bf16.gmra.mrb[0].mxu0 %v8082
        %v8213 = vpop.f32.mrb[0].mxu0
        %v8214 = vadd.f32 0.0, %v8213
        %v8215 = vpop.f32.mrb[0].mxu0
        %v8216 = vpop.f32.mrb[0].mxu0
        %v8217 = vadd.f32 0.0, %v8216
        %v8218 = vpop.f32.mrb[0].mxu0
        %8219 = vmatprep.mubr.bf16.mxu0 0
        %8220 = vmatmul.mubr.bf16.gmra.mrb[0].mxu0 %v8085
        %v8221 = vpop.f32.mrb[0].mxu0
        %v8222 = vadd.f32 0.0, %v8221
        %v8223 = vpop.f32.mrb[0].mxu0
        %v8224 = vpop.f32.mrb[0].mxu0
        %v8225 = vadd.f32 0.0, %v8224
        %v8226 = vpop.f32.mrb[0].mxu0
        %8227 = vmatprep.mubr.bf16.mxu0 0
        %8228 = vmatmul.mubr.bf16.gmra.mrb[0].mxu0 %v8088
        %v8229 = vpop.f32.mrb[0].mxu0
        %v8230 = vadd.f32 0.0, %v8229
        %v8231 = vpop.f32.mrb[0].mxu0
        %v8232 = vpop.f32.mrb[0].mxu0
        %v8233 = vadd.f32 0.0, %v8232
        %v8234 = vpop.f32.mrb[0].mxu0
        %8235 = vmatprep.mubr.bf16.mxu0 0
        %8236 = vmatmul.mubr.bf16.gmra.mrb[0].mxu0 %v8091
        %v8237 = vpop.f32.mrb[0].mxu0
        %v8238 = vadd.f32 0.0, %v8237
        %v8239 = vpop.f32.mrb[0].mxu0
        %v8240 = vpop.f32.mrb[0].mxu0
        %v8241 = vadd.f32 0.0, %v8240
        %v8242 = vpop.f32.mrb[0].mxu0
        %8243 = vmatprep.mubr.bf16.mxu0 0
        %8244 = vmatmul.mubr.bf16.gmra.mrb[0].mxu0 %v8094
        %v8245 = vpop.f32.mrb[0].mxu0
        %v8246 = vadd.f32 0.0, %v8245
        %v8247 = vpop.f32.mrb[0].mxu0
        %v8248 = vpop.f32.mrb[0].mxu0
        %v8249 = vadd.f32 0.0, %v8248
        %v8250 = vpop.f32.mrb[0].mxu0
        %8251 = vmatprep.mubr.bf16.mxu0 0
        %8252 = vmatmul.mubr.bf16.gmra.mrb[0].mxu0 %v8097
        %v8253 = vpop.f32.mrb[0].mxu0
        %v8254 = vadd.f32 0.0, %v8253
        %v8255 = vpop.f32.mrb[0].mxu0
        %v8256 = vpop.f32.mrb[0].mxu0
        %v8257 = vadd.f32 0.0, %v8256
        %v8258 = vpop.f32.mrb[0].mxu0
        %8259 = vdwg.mxu0
        %v8260 = vadd.f32 %v7971, %v8134
        %v8261 = vadd.f32 %v7972, %v8137
        %v8262 = vadd.f32 %v7973, %v8142
        %v8263 = vadd.f32 %v7974, %v8145
        %v8264 = vadd.f32 %v7975, %v8150
        %v8265 = vadd.f32 %v7976, %v8153
        %v8266 = vadd.f32 %v7977, %v8158
        %v8267 = vadd.f32 %v7978, %v8161
        %v8268 = vadd.f32 %v7979, %v8166
        %v8269 = vadd.f32 %v7980, %v8169
        %v8270 = vadd.f32 %v7981, %v8174
        %v8271 = vadd.f32 %v7982, %v8177
        %v8272 = vadd.f32 %v7983, %v8182
        %v8273 = vadd.f32 %v7984, %v8185
        %v8274 = vadd.f32 %v7985, %v8190
        %v8275 = vadd.f32 %v7986, %v8193
        %v8276 = vadd.f32 %v7987, %v8198
        %v8277 = vadd.f32 %v7988, %v8201
        %v8278 = vadd.f32 %v7989, %v8206
        %v8279 = vadd.f32 %v7990, %v8209
        %v8280 = vadd.f32 %v7991, %v8214
        %v8281 = vadd.f32 %v7992, %v8217
        %v8282 = vadd.f32 %v7993, %v8222
        %v8283 = vadd.f32 %v7994, %v8225
        %v8284 = vadd.f32 %v7995, %v8230
        %v8285 = vadd.f32 %v7996, %v8233
        %v8286 = vadd.f32 %v7997, %v8238
        %v8287 = vadd.f32 %v7998, %v8241
        %v8288 = vadd.f32 %v7999, %v8246
        %v8289 = vadd.f32 %v8000, %v8249
        %v8290 = vadd.f32 %v8001, %v8254
        %v8291 = vadd.f32 %v8002, %v8257
        %v8292 = vmax.f32 %v8260, 0.0
        %v8293 = vmax.f32 %v8261, 0.0
        %v8294 = vmax.f32 %v8262, 0.0
        %v8295 = vmax.f32 %v8263, 0.0
        %v8296 = vmax.f32 %v8264, 0.0
        %v8297 = vmax.f32 %v8265, 0.0
        %v8298 = vmax.f32 %v8266, 0.0
        %v8299 = vmax.f32 %v8267, 0.0
        %v8300 = vmax.f32 %v8268, 0.0
        %v8301 = vmax.f32 %v8269, 0.0
        %v8302 = vmax.f32 %v8270, 0.0
        %v8303 = vmax.f32 %v8271, 0.0
        %v8304 = vmax.f32 %v8272, 0.0
        %v8305 = vmax.f32 %v8273, 0.0
        %v8306 = vmax.f32 %v8274, 0.0
        %v8307 = vmax.f32 %v8275, 0.0
        %v8308 = vmax.f32 %v8276, 0.0
        %v8309 = vmax.f32 %v8277, 0.0
        %v8310 = vmax.f32 %v8278, 0.0
        %v8311 = vmax.f32 %v8279, 0.0
        %v8312 = vmax.f32 %v8280, 0.0
        %v8313 = vmax.f32 %v8281, 0.0
        %v8314 = vmax.f32 %v8282, 0.0
        %v8315 = vmax.f32 %v8283, 0.0
        %v8316 = vmax.f32 %v8284, 0.0
        %v8317 = vmax.f32 %v8285, 0.0
        %v8318 = vmax.f32 %v8286, 0.0
        %v8319 = vmax.f32 %v8287, 0.0
        %v8320 = vmax.f32 %v8288, 0.0
        %v8321 = vmax.f32 %v8289, 0.0
        %v8322 = vmax.f32 %v8290, 0.0
        %v8323 = vmax.f32 %v8291, 0.0
        %v8324 = vsel %vm2911, %v8292, 0.0
        %v8325 = vsel %vm2911, %v8293, 0.0
        %v8326 = vadd.f32 %v8324, %v8325
        %v8327 = vsel %vm2911, %v8294, 0.0
        %v8328 = vadd.f32 %v8326, %v8327
        %v8329 = vsel %vm2911, %v8295, 0.0
        %v8330 = vadd.f32 %v8328, %v8329
        %v8331 = vsel %vm2911, %v8296, 0.0
        %v8332 = vadd.f32 %v8330, %v8331
        %v8333 = vsel %vm2911, %v8297, 0.0
        %v8334 = vadd.f32 %v8332, %v8333
        %v8335 = vsel %vm2911, %v8298, 0.0
        %v8336 = vadd.f32 %v8334, %v8335
        %v8337 = vsel %vm2911, %v8299, 0.0
        %v8338 = vadd.f32 %v8336, %v8337
        %v8339 = vsel %vm2911, %v8300, 0.0
        %v8340 = vadd.f32 %v8338, %v8339
        %v8341 = vsel %vm2911, %v8301, 0.0
        %v8342 = vadd.f32 %v8340, %v8341
        %v8343 = vsel %vm2911, %v8302, 0.0
        %v8344 = vadd.f32 %v8342, %v8343
        %v8345 = vsel %vm2911, %v8303, 0.0
        %v8346 = vadd.f32 %v8344, %v8345
        %v8347 = vsel %vm2911, %v8304, 0.0
        %v8348 = vadd.f32 %v8346, %v8347
        %v8349 = vsel %vm2911, %v8305, 0.0
        %v8350 = vadd.f32 %v8348, %v8349
        %v8351 = vsel %vm2911, %v8306, 0.0
        %v8352 = vadd.f32 %v8350, %v8351
        %v8353 = vsel %vm2911, %v8307, 0.0
        %v8354 = vadd.f32 %v8352, %v8353
        %v8355 = vsel %vm2911, %v8308, 0.0
        %v8356 = vadd.f32 %v8354, %v8355
        %v8357 = vsel %vm2911, %v8309, 0.0
        %v8358 = vadd.f32 %v8356, %v8357
        %v8359 = vsel %vm2911, %v8310, 0.0
        %v8360 = vadd.f32 %v8358, %v8359
        %v8361 = vsel %vm2911, %v8311, 0.0
        %v8362 = vadd.f32 %v8360, %v8361
        %v8363 = vsel %vm2911, %v8312, 0.0
        %v8364 = vadd.f32 %v8362, %v8363
        %v8365 = vsel %vm2911, %v8313, 0.0
        %v8366 = vadd.f32 %v8364, %v8365
        %v8367 = vsel %vm2911, %v8314, 0.0
        %v8368 = vadd.f32 %v8366, %v8367
        %v8369 = vsel %vm2911, %v8315, 0.0
        %v8370 = vadd.f32 %v8368, %v8369
        %v8371 = vsel %vm2911, %v8316, 0.0
        %v8372 = vadd.f32 %v8370, %v8371
        %v8373 = vsel %vm2911, %v8317, 0.0
        %v8374 = vadd.f32 %v8372, %v8373
        %v8375 = vsel %vm2911, %v8318, 0.0
        %v8376 = vadd.f32 %v8374, %v8375
        %v8377 = vsel %vm2911, %v8319, 0.0
        %v8378 = vadd.f32 %v8376, %v8377
        %v8379 = vsel %vm2911, %v8320, 0.0
        %v8380 = vadd.f32 %v8378, %v8379
        %v8381 = vsel %vm2911, %v8321, 0.0
        %v8382 = vadd.f32 %v8380, %v8381
        %v8383 = vsel %vm2911, %v8322, 0.0
        %v8384 = vadd.f32 %v8382, %v8383
        %v8385 = vsel %vm2911, %v8323, 0.0
        %v8386 = vadd.f32 %v8384, %v8385
        %v8387 = vrot.slane %v8386, 4
        %v8388 = vadd.f32 %v8386, %v8387
        %v8389 = vrot.slane %v8388, 2
        %v8390 = vadd.f32 %v8388, %v8389
        %v8391 = vrot.slane %v8390, 1
        %v8392 = vadd.f32 %v8390, %v8391
        %v8393 = vadd.f32 %v5687, %v8392
        %s8394 = scalar_lea.vmem %s221, 1296
        %v8395 = vld [vmem:[%s8394] sm:$0xff]
        %v8396 = vld [vmem:[%s8394 + $0x8] sm:$0xff]
        %v8397 = vld [vmem:[%s8394 + $0x18] sm:$0xff]
        %v8398 = vld [vmem:[%s8394 + $0x20] sm:$0xff]
        %v8399 = vld [vmem:[%s8394 + $0x30] sm:$0xff]
        %v8400 = vld [vmem:[%s8394 + $0x38] sm:$0xff]
        %v8401 = vld [vmem:[%s8394 + $0x48] sm:$0xff]
        %v8402 = vld [vmem:[%s8394 + $0x50] sm:$0xff]
        %v8403 = vld [vmem:[%s8394 + $0x60] sm:$0xff]
        %v8404 = vld [vmem:[%s8394 + $0x68] sm:$0xff]
        %v8405 = vld [vmem:[%s8394 + $0x78] sm:$0xff]
        %v8406 = vld [vmem:[%s8394 + $0x80] sm:$0xff]
        %v8407 = vld [vmem:[%s8394 + $0x90] sm:$0xff]
        %v8408 = vld [vmem:[%s8394 + $0x98] sm:$0xff]
        %v8409 = vld [vmem:[%s8394 + $0xa8] sm:$0xff]
        %v8410 = vld [vmem:[%s8394 + $0xb0] sm:$0xff]
        %v8411 = vld [vmem:[%s8394 + $0xc0] sm:$0xff]
        %v8412 = vld [vmem:[%s8394 + $0xc8] sm:$0xff]
        %v8413 = vld [vmem:[%s8394 + $0xd8] sm:$0xff]
        %v8414 = vld [vmem:[%s8394 + $0xe0] sm:$0xff]
        %v8415 = vld [vmem:[%s8394 + $0xf0] sm:$0xff]
        %v8416 = vld [vmem:[%s8394 + $0xf8] sm:$0xff]
        %v8417 = vld [vmem:[%s8394 + $0x108] sm:$0xff]
        %v8418 = vld [vmem:[%s8394 + $0x110] sm:$0xff]
        %v8419 = vld [vmem:[%s8394 + $0x120] sm:$0xff]
        %v8420 = vld [vmem:[%s8394 + $0x128] sm:$0xff]
        %v8421 = vld [vmem:[%s8394 + $0x138] sm:$0xff]
        %v8422 = vld [vmem:[%s8394 + $0x140] sm:$0xff]
        %v8423 = vld [vmem:[%s8394 + $0x150] sm:$0xff]
        %v8424 = vld [vmem:[%s8394 + $0x158] sm:$0xff]
        %v8425 = vld [vmem:[%s8394 + $0x168] sm:$0xff]
        %v8426 = vld [vmem:[%s8394 + $0x170] sm:$0xff]
        %v8427 = vpack.c.bf16 %v8396, %v8395
        %v8428 = vpack.c.bf16 %v8398, %v8397
        %v8429 = vpack.c.bf16 %v8400, %v8399
        %v8430 = vpack.c.bf16 %v8402, %v8401
        %v8431 = vpack.c.bf16 %v8404, %v8403
        %v8432 = vpack.c.bf16 %v8406, %v8405
        %v8433 = vpack.c.bf16 %v8408, %v8407
        %v8434 = vpack.c.bf16 %v8410, %v8409
        %v8435 = vpack.c.bf16 %v8412, %v8411
        %v8436 = vpack.c.bf16 %v8414, %v8413
        %v8437 = vpack.c.bf16 %v8416, %v8415
        %v8438 = vpack.c.bf16 %v8418, %v8417
        %v8439 = vpack.c.bf16 %v8420, %v8419
        %v8440 = vpack.c.bf16 %v8422, %v8421
        %v8441 = vpack.c.bf16 %v8424, %v8423
        %v8442 = vpack.c.bf16 %v8426, %v8425
        %v8444 = vsel %vm279, %v8427, 0
        %v8447 = vsel %vm279, %v8428, 0
        %v8450 = vsel %vm279, %v8429, 0
        %v8453 = vsel %vm279, %v8430, 0
        %v8456 = vsel %vm279, %v8431, 0
        %v8459 = vsel %vm279, %v8432, 0
        %v8462 = vsel %vm279, %v8433, 0
        %v8465 = vsel %vm279, %v8434, 0
        %v8468 = vsel %vm279, %v8435, 0
        %v8471 = vsel %vm279, %v8436, 0
        %v8474 = vsel %vm279, %v8437, 0
        %v8477 = vsel %vm279, %v8438, 0
        %v8480 = vsel %vm279, %v8439, 0
        %v8483 = vsel %vm279, %v8440, 0
        %v8486 = vsel %vm279, %v8441, 0
        %v8489 = vsel %vm279, %v8442, 0
        %8491 = vmatprep.subr.bf16.mxu0 0
        %8492 = vmatpush1.bf16.msra.mxu0 %v330
        %8493 = vmatprep.subr.bf16.mxu0 0
        %8494 = vmatpush1.bf16.msra.mxu0 0
        %8495 = vmatprep.subr.bf16.mxu0 0
        %8496 = vmatpush1.bf16.msra.mxu0 0
        %8497 = vmatprep.subr.bf16.mxu0 0
        %8498 = vmatpush1.bf16.msra.mxu0 0
        %8499 = vmatprep.subr.bf16.mxu0 0
        %8500 = vmatpush1.bf16.msra.mxu0 0
        %8501 = vmatprep.subr.bf16.mxu0 0
        %8502 = vmatpush1.bf16.msra.mxu0 0
        %8503 = vmatprep.subr.bf16.mxu0 0
        %8504 = vmatpush1.bf16.msra.mxu0 0
        %8505 = vmatprep.subr.bf16.mxu0 0
        %8506 = vmatpush1.bf16.msra.mxu0 0
        %8507 = vmatprep.subr.bf16.mxu0 0
        %8508 = vmatpush1.bf16.msra.mxu0 0
        %8509 = vmatprep.subr.bf16.mxu0 0
        %8510 = vmatpush1.bf16.msra.mxu0 0
        %8511 = vmatprep.subr.bf16.mxu0 0
        %8512 = vmatpush1.bf16.msra.mxu0 0
        %8513 = vmatprep.subr.bf16.mxu0 0
        %8514 = vmatpush1.bf16.msra.mxu0 0
        %8515 = vmatprep.subr.bf16.mxu0 0
        %8516 = vmatpush1.bf16.msra.mxu0 0
        %8517 = vmatprep.subr.bf16.mxu0 0
        %8518 = vmatpush1.bf16.msra.mxu0 0
        %8519 = vmatprep.subr.bf16.mxu0 0
        %8520 = vmatpush1.bf16.msra.mxu0 0
        %8521 = vmatprep.subr.bf16.mxu0 0
        %8522 = vmatpush1.bf16.msra.mxu0 0
        %8523 = vmatprep.mubr.bf16.mxu0 0
        %8524 = vmatmul.mubr.bf16.gmra.mrb[0].mxu0 %v8444
        %v8525 = vpop.f32.mrb[0].mxu0
        %v8526 = vadd.f32 0.0, %v8525
        %v8527 = vpop.f32.mrb[0].mxu0
        %v8528 = vpop.f32.mrb[0].mxu0
        %v8529 = vadd.f32 0.0, %v8528
        %v8530 = vpop.f32.mrb[0].mxu0
        %8531 = vmatprep.mubr.bf16.mxu0 0
        %8532 = vmatmul.mubr.bf16.gmra.mrb[0].mxu0 %v8447
        %v8533 = vpop.f32.mrb[0].mxu0
        %v8534 = vadd.f32 0.0, %v8533
        %v8535 = vpop.f32.mrb[0].mxu0
        %v8536 = vpop.f32.mrb[0].mxu0
        %v8537 = vadd.f32 0.0, %v8536
        %v8538 = vpop.f32.mrb[0].mxu0
        %8539 = vmatprep.mubr.bf16.mxu0 0
        %8540 = vmatmul.mubr.bf16.gmra.mrb[0].mxu0 %v8450
        %v8541 = vpop.f32.mrb[0].mxu0
        %v8542 = vadd.f32 0.0, %v8541
        %v8543 = vpop.f32.mrb[0].mxu0
        %v8544 = vpop.f32.mrb[0].mxu0
        %v8545 = vadd.f32 0.0, %v8544
        %v8546 = vpop.f32.mrb[0].mxu0
        %8547 = vmatprep.mubr.bf16.mxu0 0
        %8548 = vmatmul.mubr.bf16.gmra.mrb[0].mxu0 %v8453
        %v8549 = vpop.f32.mrb[0].mxu0
        %v8550 = vadd.f32 0.0, %v8549
        %v8551 = vpop.f32.mrb[0].mxu0
        %v8552 = vpop.f32.mrb[0].mxu0
        %v8553 = vadd.f32 0.0, %v8552
        %v8554 = vpop.f32.mrb[0].mxu0
        %8555 = vmatprep.mubr.bf16.mxu0 0
        %8556 = vmatmul.mubr.bf16.gmra.mrb[0].mxu0 %v8456
        %v8557 = vpop.f32.mrb[0].mxu0
        %v8558 = vadd.f32 0.0, %v8557
        %v8559 = vpop.f32.mrb[0].mxu0
        %v8560 = vpop.f32.mrb[0].mxu0
        %v8561 = vadd.f32 0.0, %v8560
        %v8562 = vpop.f32.mrb[0].mxu0
        %8563 = vmatprep.mubr.bf16.mxu0 0
        %8564 = vmatmul.mubr.bf16.gmra.mrb[0].mxu0 %v8459
        %v8565 = vpop.f32.mrb[0].mxu0
        %v8566 = vadd.f32 0.0, %v8565
        %v8567 = vpop.f32.mrb[0].mxu0
        %v8568 = vpop.f32.mrb[0].mxu0
        %v8569 = vadd.f32 0.0, %v8568
        %v8570 = vpop.f32.mrb[0].mxu0
        %8571 = vmatprep.mubr.bf16.mxu0 0
        %8572 = vmatmul.mubr.bf16.gmra.mrb[0].mxu0 %v8462
        %v8573 = vpop.f32.mrb[0].mxu0
        %v8574 = vadd.f32 0.0, %v8573
        %v8575 = vpop.f32.mrb[0].mxu0
        %v8576 = vpop.f32.mrb[0].mxu0
        %v8577 = vadd.f32 0.0, %v8576
        %v8578 = vpop.f32.mrb[0].mxu0
        %8579 = vmatprep.mubr.bf16.mxu0 0
        %8580 = vmatmul.mubr.bf16.gmra.mrb[0].mxu0 %v8465
        %v8581 = vpop.f32.mrb[0].mxu0
        %v8582 = vadd.f32 0.0, %v8581
        %v8583 = vpop.f32.mrb[0].mxu0
        %v8584 = vpop.f32.mrb[0].mxu0
        %v8585 = vadd.f32 0.0, %v8584
        %v8586 = vpop.f32.mrb[0].mxu0
        %8587 = vmatprep.mubr.bf16.mxu0 0
        %8588 = vmatmul.mubr.bf16.gmra.mrb[0].mxu0 %v8468
        %v8589 = vpop.f32.mrb[0].mxu0
        %v8590 = vadd.f32 0.0, %v8589
        %v8591 = vpop.f32.mrb[0].mxu0
        %v8592 = vpop.f32.mrb[0].mxu0
        %v8593 = vadd.f32 0.0, %v8592
        %v8594 = vpop.f32.mrb[0].mxu0
        %8595 = vmatprep.mubr.bf16.mxu0 0
        %8596 = vmatmul.mubr.bf16.gmra.mrb[0].mxu0 %v8471
        %v8597 = vpop.f32.mrb[0].mxu0
        %v8598 = vadd.f32 0.0, %v8597
        %v8599 = vpop.f32.mrb[0].mxu0
        %v8600 = vpop.f32.mrb[0].mxu0
        %v8601 = vadd.f32 0.0, %v8600
        %v8602 = vpop.f32.mrb[0].mxu0
        %8603 = vmatprep.mubr.bf16.mxu0 0
        %8604 = vmatmul.mubr.bf16.gmra.mrb[0].mxu0 %v8474
        %v8605 = vpop.f32.mrb[0].mxu0
        %v8606 = vadd.f32 0.0, %v8605
        %v8607 = vpop.f32.mrb[0].mxu0
        %v8608 = vpop.f32.mrb[0].mxu0
        %v8609 = vadd.f32 0.0, %v8608
        %v8610 = vpop.f32.mrb[0].mxu0
        %8611 = vmatprep.mubr.bf16.mxu0 0
        %8612 = vmatmul.mubr.bf16.gmra.mrb[0].mxu0 %v8477
        %v8613 = vpop.f32.mrb[0].mxu0
        %v8614 = vadd.f32 0.0, %v8613
        %v8615 = vpop.f32.mrb[0].mxu0
        %v8616 = vpop.f32.mrb[0].mxu0
        %v8617 = vadd.f32 0.0, %v8616
        %v8618 = vpop.f32.mrb[0].mxu0
        %8619 = vmatprep.mubr.bf16.mxu0 0
        %8620 = vmatmul.mubr.bf16.gmra.mrb[0].mxu0 %v8480
        %v8621 = vpop.f32.mrb[0].mxu0
        %v8622 = vadd.f32 0.0, %v8621
        %v8623 = vpop.f32.mrb[0].mxu0
        %v8624 = vpop.f32.mrb[0].mxu0
        %v8625 = vadd.f32 0.0, %v8624
        %v8626 = vpop.f32.mrb[0].mxu0
        %8627 = vmatprep.mubr.bf16.mxu0 0
        %8628 = vmatmul.mubr.bf16.gmra.mrb[0].mxu0 %v8483
        %v8629 = vpop.f32.mrb[0].mxu0
        %v8630 = vadd.f32 0.0, %v8629
        %v8631 = vpop.f32.mrb[0].mxu0
        %v8632 = vpop.f32.mrb[0].mxu0
        %v8633 = vadd.f32 0.0, %v8632
        %v8634 = vpop.f32.mrb[0].mxu0
        %8635 = vmatprep.mubr.bf16.mxu0 0
        %8636 = vmatmul.mubr.bf16.gmra.mrb[0].mxu0 %v8486
        %v8637 = vpop.f32.mrb[0].mxu0
        %v8638 = vadd.f32 0.0, %v8637
        %v8639 = vpop.f32.mrb[0].mxu0
        %v8640 = vpop.f32.mrb[0].mxu0
        %v8641 = vadd.f32 0.0, %v8640
        %v8642 = vpop.f32.mrb[0].mxu0
        %8643 = vmatprep.mubr.bf16.mxu0 0
        %8644 = vmatmul.mubr.bf16.gmra.mrb[0].mxu0 %v8489
        %v8645 = vpop.f32.mrb[0].mxu0
        %v8646 = vadd.f32 0.0, %v8645
        %v8647 = vpop.f32.mrb[0].mxu0
        %v8648 = vpop.f32.mrb[0].mxu0
        %v8649 = vadd.f32 0.0, %v8648
        %v8650 = vpop.f32.mrb[0].mxu0
        %8651 = vdwg.mxu0
        %v8652 = vadd.f32 %v228, %v8526
        %v8653 = vadd.f32 %v228, %v8529
        %v8654 = vadd.f32 %v228, %v8534
        %v8655 = vadd.f32 %v228, %v8537
        %v8656 = vadd.f32 %v228, %v8542
        %v8657 = vadd.f32 %v228, %v8545
        %v8658 = vadd.f32 %v228, %v8550
        %v8659 = vadd.f32 %v228, %v8553
        %v8660 = vadd.f32 %v228, %v8558
        %v8661 = vadd.f32 %v228, %v8561
        %v8662 = vadd.f32 %v228, %v8566
        %v8663 = vadd.f32 %v228, %v8569
        %v8664 = vadd.f32 %v228, %v8574
        %v8665 = vadd.f32 %v228, %v8577
        %v8666 = vadd.f32 %v228, %v8582
        %v8667 = vadd.f32 %v228, %v8585
        %v8668 = vadd.f32 %v228, %v8590
        %v8669 = vadd.f32 %v228, %v8593
        %v8670 = vadd.f32 %v228, %v8598
        %v8671 = vadd.f32 %v228, %v8601
        %v8672 = vadd.f32 %v228, %v8606
        %v8673 = vadd.f32 %v228, %v8609
        %v8674 = vadd.f32 %v228, %v8614
        %v8675 = vadd.f32 %v228, %v8617
        %v8676 = vadd.f32 %v228, %v8622
        %v8677 = vadd.f32 %v228, %v8625
        %v8678 = vadd.f32 %v228, %v8630
        %v8679 = vadd.f32 %v228, %v8633
        %v8680 = vadd.f32 %v228, %v8638
        %v8681 = vadd.f32 %v228, %v8641
        %v8682 = vadd.f32 %v228, %v8646
        %v8683 = vadd.f32 %v228, %v8649
        %v8684 = vld [vmem:[%s8394 + $0x1] sm:$0xff]
        %v8685 = vld [vmem:[%s8394 + $0x9] sm:$0xff]
        %v8686 = vld [vmem:[%s8394 + $0x19] sm:$0xff]
        %v8687 = vld [vmem:[%s8394 + $0x21] sm:$0xff]
        %v8688 = vld [vmem:[%s8394 + $0x31] sm:$0xff]
        %v8689 = vld [vmem:[%s8394 + $0x39] sm:$0xff]
        %v8690 = vld [vmem:[%s8394 + $0x49] sm:$0xff]
        %v8691 = vld [vmem:[%s8394 + $0x51] sm:$0xff]
        %v8692 = vld [vmem:[%s8394 + $0x61] sm:$0xff]
        %v8693 = vld [vmem:[%s8394 + $0x69] sm:$0xff]
        %v8694 = vld [vmem:[%s8394 + $0x79] sm:$0xff]
        %v8695 = vld [vmem:[%s8394 + $0x81] sm:$0xff]
        %v8696 = vld [vmem:[%s8394 + $0x91] sm:$0xff]
        %v8697 = vld [vmem:[%s8394 + $0x99] sm:$0xff]
        %v8698 = vld [vmem:[%s8394 + $0xa9] sm:$0xff]
        %v8699 = vld [vmem:[%s8394 + $0xb1] sm:$0xff]
        %v8700 = vld [vmem:[%s8394 + $0xc1] sm:$0xff]
        %v8701 = vld [vmem:[%s8394 + $0xc9] sm:$0xff]
        %v8702 = vld [vmem:[%s8394 + $0xd9] sm:$0xff]
        %v8703 = vld [vmem:[%s8394 + $0xe1] sm:$0xff]
        %v8704 = vld [vmem:[%s8394 + $0xf1] sm:$0xff]
        %v8705 = vld [vmem:[%s8394 + $0xf9] sm:$0xff]
        %v8706 = vld [vmem:[%s8394 + $0x109] sm:$0xff]
        %v8707 = vld [vmem:[%s8394 + $0x111] sm:$0xff]
        %v8708 = vld [vmem:[%s8394 + $0x121] sm:$0xff]
        %v8709 = vld [vmem:[%s8394 + $0x129] sm:$0xff]
        %v8710 = vld [vmem:[%s8394 + $0x139] sm:$0xff]
        %v8711 = vld [vmem:[%s8394 + $0x141] sm:$0xff]
        %v8712 = vld [vmem:[%s8394 + $0x151] sm:$0xff]
        %v8713 = vld [vmem:[%s8394 + $0x159] sm:$0xff]
        %v8714 = vld [vmem:[%s8394 + $0x169] sm:$0xff]
        %v8715 = vld [vmem:[%s8394 + $0x171] sm:$0xff]
        %v8716 = vpack.c.bf16 %v8685, %v8684
        %v8717 = vpack.c.bf16 %v8687, %v8686
        %v8718 = vpack.c.bf16 %v8689, %v8688
        %v8719 = vpack.c.bf16 %v8691, %v8690
        %v8720 = vpack.c.bf16 %v8693, %v8692
        %v8721 = vpack.c.bf16 %v8695, %v8694
        %v8722 = vpack.c.bf16 %v8697, %v8696
        %v8723 = vpack.c.bf16 %v8699, %v8698
        %v8724 = vpack.c.bf16 %v8701, %v8700
        %v8725 = vpack.c.bf16 %v8703, %v8702
        %v8726 = vpack.c.bf16 %v8705, %v8704
        %v8727 = vpack.c.bf16 %v8707, %v8706
        %v8728 = vpack.c.bf16 %v8709, %v8708
        %v8729 = vpack.c.bf16 %v8711, %v8710
        %v8730 = vpack.c.bf16 %v8713, %v8712
        %v8731 = vpack.c.bf16 %v8715, %v8714
        %v8733 = vsel %vm279, %v8716, 0
        %v8736 = vsel %vm279, %v8717, 0
        %v8739 = vsel %vm279, %v8718, 0
        %v8742 = vsel %vm279, %v8719, 0
        %v8745 = vsel %vm279, %v8720, 0
        %v8748 = vsel %vm279, %v8721, 0
        %v8751 = vsel %vm279, %v8722, 0
        %v8754 = vsel %vm279, %v8723, 0
        %v8757 = vsel %vm279, %v8724, 0
        %v8760 = vsel %vm279, %v8725, 0
        %v8763 = vsel %vm279, %v8726, 0
        %v8766 = vsel %vm279, %v8727, 0
        %v8769 = vsel %vm279, %v8728, 0
        %v8772 = vsel %vm279, %v8729, 0
        %v8775 = vsel %vm279, %v8730, 0
        %v8778 = vsel %vm279, %v8731, 0
        %8780 = vmatprep.subr.bf16.mxu0 0
        %8781 = vmatpush1.bf16.msra.mxu0 %v624
        %8782 = vmatprep.subr.bf16.mxu0 0
        %8783 = vmatpush1.bf16.msra.mxu0 0
        %8784 = vmatprep.subr.bf16.mxu0 0
        %8785 = vmatpush1.bf16.msra.mxu0 0
        %8786 = vmatprep.subr.bf16.mxu0 0
        %8787 = vmatpush1.bf16.msra.mxu0 0
        %8788 = vmatprep.subr.bf16.mxu0 0
        %8789 = vmatpush1.bf16.msra.mxu0 0
        %8790 = vmatprep.subr.bf16.mxu0 0
        %8791 = vmatpush1.bf16.msra.mxu0 0
        %8792 = vmatprep.subr.bf16.mxu0 0
        %8793 = vmatpush1.bf16.msra.mxu0 0
        %8794 = vmatprep.subr.bf16.mxu0 0
        %8795 = vmatpush1.bf16.msra.mxu0 0
        %8796 = vmatprep.subr.bf16.mxu0 0
        %8797 = vmatpush1.bf16.msra.mxu0 0
        %8798 = vmatprep.subr.bf16.mxu0 0
        %8799 = vmatpush1.bf16.msra.mxu0 0
        %8800 = vmatprep.subr.bf16.mxu0 0
        %8801 = vmatpush1.bf16.msra.mxu0 0
        %8802 = vmatprep.subr.bf16.mxu0 0
        %8803 = vmatpush1.bf16.msra.mxu0 0
        %8804 = vmatprep.subr.bf16.mxu0 0
        %8805 = vmatpush1.bf16.msra.mxu0 0
        %8806 = vmatprep.subr.bf16.mxu0 0
        %8807 = vmatpush1.bf16.msra.mxu0 0
        %8808 = vmatprep.subr.bf16.mxu0 0
        %8809 = vmatpush1.bf16.msra.mxu0 0
        %8810 = vmatprep.subr.bf16.mxu0 0
        %8811 = vmatpush1.bf16.msra.mxu0 0
        %8812 = vmatprep.mubr.bf16.mxu0 0
        %8813 = vmatmul.mubr.bf16.gmra.mrb[0].mxu0 %v8733
        %v8814 = vpop.f32.mrb[0].mxu0
        %v8815 = vadd.f32 0.0, %v8814
        %v8816 = vpop.f32.mrb[0].mxu0
        %v8817 = vpop.f32.mrb[0].mxu0
        %v8818 = vadd.f32 0.0, %v8817
        %v8819 = vpop.f32.mrb[0].mxu0
        %8820 = vmatprep.mubr.bf16.mxu0 0
        %8821 = vmatmul.mubr.bf16.gmra.mrb[0].mxu0 %v8736
        %v8822 = vpop.f32.mrb[0].mxu0
        %v8823 = vadd.f32 0.0, %v8822
        %v8824 = vpop.f32.mrb[0].mxu0
        %v8825 = vpop.f32.mrb[0].mxu0
        %v8826 = vadd.f32 0.0, %v8825
        %v8827 = vpop.f32.mrb[0].mxu0
        %8828 = vmatprep.mubr.bf16.mxu0 0
        %8829 = vmatmul.mubr.bf16.gmra.mrb[0].mxu0 %v8739
        %v8830 = vpop.f32.mrb[0].mxu0
        %v8831 = vadd.f32 0.0, %v8830
        %v8832 = vpop.f32.mrb[0].mxu0
        %v8833 = vpop.f32.mrb[0].mxu0
        %v8834 = vadd.f32 0.0, %v8833
        %v8835 = vpop.f32.mrb[0].mxu0
        %8836 = vmatprep.mubr.bf16.mxu0 0
        %8837 = vmatmul.mubr.bf16.gmra.mrb[0].mxu0 %v8742
        %v8838 = vpop.f32.mrb[0].mxu0
        %v8839 = vadd.f32 0.0, %v8838
        %v8840 = vpop.f32.mrb[0].mxu0
        %v8841 = vpop.f32.mrb[0].mxu0
        %v8842 = vadd.f32 0.0, %v8841
        %v8843 = vpop.f32.mrb[0].mxu0
        %8844 = vmatprep.mubr.bf16.mxu0 0
        %8845 = vmatmul.mubr.bf16.gmra.mrb[0].mxu0 %v8745
        %v8846 = vpop.f32.mrb[0].mxu0
        %v8847 = vadd.f32 0.0, %v8846
        %v8848 = vpop.f32.mrb[0].mxu0
        %v8849 = vpop.f32.mrb[0].mxu0
        %v8850 = vadd.f32 0.0, %v8849
        %v8851 = vpop.f32.mrb[0].mxu0
        %8852 = vmatprep.mubr.bf16.mxu0 0
        %8853 = vmatmul.mubr.bf16.gmra.mrb[0].mxu0 %v8748
        %v8854 = vpop.f32.mrb[0].mxu0
        %v8855 = vadd.f32 0.0, %v8854
        %v8856 = vpop.f32.mrb[0].mxu0
        %v8857 = vpop.f32.mrb[0].mxu0
        %v8858 = vadd.f32 0.0, %v8857
        %v8859 = vpop.f32.mrb[0].mxu0
        %8860 = vmatprep.mubr.bf16.mxu0 0
        %8861 = vmatmul.mubr.bf16.gmra.mrb[0].mxu0 %v8751
        %v8862 = vpop.f32.mrb[0].mxu0
        %v8863 = vadd.f32 0.0, %v8862
        %v8864 = vpop.f32.mrb[0].mxu0
        %v8865 = vpop.f32.mrb[0].mxu0
        %v8866 = vadd.f32 0.0, %v8865
        %v8867 = vpop.f32.mrb[0].mxu0
        %8868 = vmatprep.mubr.bf16.mxu0 0
        %8869 = vmatmul.mubr.bf16.gmra.mrb[0].mxu0 %v8754
        %v8870 = vpop.f32.mrb[0].mxu0
        %v8871 = vadd.f32 0.0, %v8870
        %v8872 = vpop.f32.mrb[0].mxu0
        %v8873 = vpop.f32.mrb[0].mxu0
        %v8874 = vadd.f32 0.0, %v8873
        %v8875 = vpop.f32.mrb[0].mxu0
        %8876 = vmatprep.mubr.bf16.mxu0 0
        %8877 = vmatmul.mubr.bf16.gmra.mrb[0].mxu0 %v8757
        %v8878 = vpop.f32.mrb[0].mxu0
        %v8879 = vadd.f32 0.0, %v8878
        %v8880 = vpop.f32.mrb[0].mxu0
        %v8881 = vpop.f32.mrb[0].mxu0
        %v8882 = vadd.f32 0.0, %v8881
        %v8883 = vpop.f32.mrb[0].mxu0
        %8884 = vmatprep.mubr.bf16.mxu0 0
        %8885 = vmatmul.mubr.bf16.gmra.mrb[0].mxu0 %v8760
        %v8886 = vpop.f32.mrb[0].mxu0
        %v8887 = vadd.f32 0.0, %v8886
        %v8888 = vpop.f32.mrb[0].mxu0
        %v8889 = vpop.f32.mrb[0].mxu0
        %v8890 = vadd.f32 0.0, %v8889
        %v8891 = vpop.f32.mrb[0].mxu0
        %8892 = vmatprep.mubr.bf16.mxu0 0
        %8893 = vmatmul.mubr.bf16.gmra.mrb[0].mxu0 %v8763
        %v8894 = vpop.f32.mrb[0].mxu0
        %v8895 = vadd.f32 0.0, %v8894
        %v8896 = vpop.f32.mrb[0].mxu0
        %v8897 = vpop.f32.mrb[0].mxu0
        %v8898 = vadd.f32 0.0, %v8897
        %v8899 = vpop.f32.mrb[0].mxu0
        %8900 = vmatprep.mubr.bf16.mxu0 0
        %8901 = vmatmul.mubr.bf16.gmra.mrb[0].mxu0 %v8766
        %v8902 = vpop.f32.mrb[0].mxu0
        %v8903 = vadd.f32 0.0, %v8902
        %v8904 = vpop.f32.mrb[0].mxu0
        %v8905 = vpop.f32.mrb[0].mxu0
        %v8906 = vadd.f32 0.0, %v8905
        %v8907 = vpop.f32.mrb[0].mxu0
        %8908 = vmatprep.mubr.bf16.mxu0 0
        %8909 = vmatmul.mubr.bf16.gmra.mrb[0].mxu0 %v8769
        %v8910 = vpop.f32.mrb[0].mxu0
        %v8911 = vadd.f32 0.0, %v8910
        %v8912 = vpop.f32.mrb[0].mxu0
        %v8913 = vpop.f32.mrb[0].mxu0
        %v8914 = vadd.f32 0.0, %v8913
        %v8915 = vpop.f32.mrb[0].mxu0
        %8916 = vmatprep.mubr.bf16.mxu0 0
        %8917 = vmatmul.mubr.bf16.gmra.mrb[0].mxu0 %v8772
        %v8918 = vpop.f32.mrb[0].mxu0
        %v8919 = vadd.f32 0.0, %v8918
        %v8920 = vpop.f32.mrb[0].mxu0
        %v8921 = vpop.f32.mrb[0].mxu0
        %v8922 = vadd.f32 0.0, %v8921
        %v8923 = vpop.f32.mrb[0].mxu0
        %8924 = vmatprep.mubr.bf16.mxu0 0
        %8925 = vmatmul.mubr.bf16.gmra.mrb[0].mxu0 %v8775
        %v8926 = vpop.f32.mrb[0].mxu0
        %v8927 = vadd.f32 0.0, %v8926
        %v8928 = vpop.f32.mrb[0].mxu0
        %v8929 = vpop.f32.mrb[0].mxu0
        %v8930 = vadd.f32 0.0, %v8929
        %v8931 = vpop.f32.mrb[0].mxu0
        %8932 = vmatprep.mubr.bf16.mxu0 0
        %8933 = vmatmul.mubr.bf16.gmra.mrb[0].mxu0 %v8778
        %v8934 = vpop.f32.mrb[0].mxu0
        %v8935 = vadd.f32 0.0, %v8934
        %v8936 = vpop.f32.mrb[0].mxu0
        %v8937 = vpop.f32.mrb[0].mxu0
        %v8938 = vadd.f32 0.0, %v8937
        %v8939 = vpop.f32.mrb[0].mxu0
        %8940 = vdwg.mxu0
        %v8941 = vadd.f32 %v8652, %v8815
        %v8942 = vadd.f32 %v8653, %v8818
        %v8943 = vadd.f32 %v8654, %v8823
        %v8944 = vadd.f32 %v8655, %v8826
        %v8945 = vadd.f32 %v8656, %v8831
        %v8946 = vadd.f32 %v8657, %v8834
        %v8947 = vadd.f32 %v8658, %v8839
        %v8948 = vadd.f32 %v8659, %v8842
        %v8949 = vadd.f32 %v8660, %v8847
        %v8950 = vadd.f32 %v8661, %v8850
        %v8951 = vadd.f32 %v8662, %v8855
        %v8952 = vadd.f32 %v8663, %v8858
        %v8953 = vadd.f32 %v8664, %v8863
        %v8954 = vadd.f32 %v8665, %v8866
        %v8955 = vadd.f32 %v8666, %v8871
        %v8956 = vadd.f32 %v8667, %v8874
        %v8957 = vadd.f32 %v8668, %v8879
        %v8958 = vadd.f32 %v8669, %v8882
        %v8959 = vadd.f32 %v8670, %v8887
        %v8960 = vadd.f32 %v8671, %v8890
        %v8961 = vadd.f32 %v8672, %v8895
        %v8962 = vadd.f32 %v8673, %v8898
        %v8963 = vadd.f32 %v8674, %v8903
        %v8964 = vadd.f32 %v8675, %v8906
        %v8965 = vadd.f32 %v8676, %v8911
        %v8966 = vadd.f32 %v8677, %v8914
        %v8967 = vadd.f32 %v8678, %v8919
        %v8968 = vadd.f32 %v8679, %v8922
        %v8969 = vadd.f32 %v8680, %v8927
        %v8970 = vadd.f32 %v8681, %v8930
        %v8971 = vadd.f32 %v8682, %v8935
        %v8972 = vadd.f32 %v8683, %v8938
        %v8973 = vld [vmem:[%s8394 + $0x2] sm:$0xff]
        %v8974 = vld [vmem:[%s8394 + $0xa] sm:$0xff]
        %v8975 = vld [vmem:[%s8394 + $0x1a] sm:$0xff]
        %v8976 = vld [vmem:[%s8394 + $0x22] sm:$0xff]
        %v8977 = vld [vmem:[%s8394 + $0x32] sm:$0xff]
        %v8978 = vld [vmem:[%s8394 + $0x3a] sm:$0xff]
        %v8979 = vld [vmem:[%s8394 + $0x4a] sm:$0xff]
        %v8980 = vld [vmem:[%s8394 + $0x52] sm:$0xff]
        %v8981 = vld [vmem:[%s8394 + $0x62] sm:$0xff]
        %v8982 = vld [vmem:[%s8394 + $0x6a] sm:$0xff]
        %v8983 = vld [vmem:[%s8394 + $0x7a] sm:$0xff]
        %v8984 = vld [vmem:[%s8394 + $0x82] sm:$0xff]
        %v8985 = vld [vmem:[%s8394 + $0x92] sm:$0xff]
        %v8986 = vld [vmem:[%s8394 + $0x9a] sm:$0xff]
        %v8987 = vld [vmem:[%s8394 + $0xaa] sm:$0xff]
        %v8988 = vld [vmem:[%s8394 + $0xb2] sm:$0xff]
        %v8989 = vld [vmem:[%s8394 + $0xc2] sm:$0xff]
        %v8990 = vld [vmem:[%s8394 + $0xca] sm:$0xff]
        %v8991 = vld [vmem:[%s8394 + $0xda] sm:$0xff]
        %v8992 = vld [vmem:[%s8394 + $0xe2] sm:$0xff]
        %v8993 = vld [vmem:[%s8394 + $0xf2] sm:$0xff]
        %v8994 = vld [vmem:[%s8394 + $0xfa] sm:$0xff]
        %v8995 = vld [vmem:[%s8394 + $0x10a] sm:$0xff]
        %v8996 = vld [vmem:[%s8394 + $0x112] sm:$0xff]
        %v8997 = vld [vmem:[%s8394 + $0x122] sm:$0xff]
        %v8998 = vld [vmem:[%s8394 + $0x12a] sm:$0xff]
        %v8999 = vld [vmem:[%s8394 + $0x13a] sm:$0xff]
        %v9000 = vld [vmem:[%s8394 + $0x142] sm:$0xff]
        %v9001 = vld [vmem:[%s8394 + $0x152] sm:$0xff]
        %v9002 = vld [vmem:[%s8394 + $0x15a] sm:$0xff]
        %v9003 = vld [vmem:[%s8394 + $0x16a] sm:$0xff]
        %v9004 = vld [vmem:[%s8394 + $0x172] sm:$0xff]
        %v9005 = vpack.c.bf16 %v8974, %v8973
        %v9006 = vpack.c.bf16 %v8976, %v8975
        %v9007 = vpack.c.bf16 %v8978, %v8977
        %v9008 = vpack.c.bf16 %v8980, %v8979
        %v9009 = vpack.c.bf16 %v8982, %v8981
        %v9010 = vpack.c.bf16 %v8984, %v8983
        %v9011 = vpack.c.bf16 %v8986, %v8985
        %v9012 = vpack.c.bf16 %v8988, %v8987
        %v9013 = vpack.c.bf16 %v8990, %v8989
        %v9014 = vpack.c.bf16 %v8992, %v8991
        %v9015 = vpack.c.bf16 %v8994, %v8993
        %v9016 = vpack.c.bf16 %v8996, %v8995
        %v9017 = vpack.c.bf16 %v8998, %v8997
        %v9018 = vpack.c.bf16 %v9000, %v8999
        %v9019 = vpack.c.bf16 %v9002, %v9001
        %v9020 = vpack.c.bf16 %v9004, %v9003
        %v9022 = vsel %vm279, %v9005, 0
        %v9025 = vsel %vm279, %v9006, 0
        %v9028 = vsel %vm279, %v9007, 0
        %v9031 = vsel %vm279, %v9008, 0
        %v9034 = vsel %vm279, %v9009, 0
        %v9037 = vsel %vm279, %v9010, 0
        %v9040 = vsel %vm279, %v9011, 0
        %v9043 = vsel %vm279, %v9012, 0
        %v9046 = vsel %vm279, %v9013, 0
        %v9049 = vsel %vm279, %v9014, 0
        %v9052 = vsel %vm279, %v9015, 0
        %v9055 = vsel %vm279, %v9016, 0
        %v9058 = vsel %vm279, %v9017, 0
        %v9061 = vsel %vm279, %v9018, 0
        %v9064 = vsel %vm279, %v9019, 0
        %v9067 = vsel %vm279, %v9020, 0
        %9069 = vmatprep.subr.bf16.mxu0 0
        %9070 = vmatpush1.bf16.msra.mxu0 %v918
        %9071 = vmatprep.subr.bf16.mxu0 0
        %9072 = vmatpush1.bf16.msra.mxu0 0
        %9073 = vmatprep.subr.bf16.mxu0 0
        %9074 = vmatpush1.bf16.msra.mxu0 0
        %9075 = vmatprep.subr.bf16.mxu0 0
        %9076 = vmatpush1.bf16.msra.mxu0 0
        %9077 = vmatprep.subr.bf16.mxu0 0
        %9078 = vmatpush1.bf16.msra.mxu0 0
        %9079 = vmatprep.subr.bf16.mxu0 0
        %9080 = vmatpush1.bf16.msra.mxu0 0
        %9081 = vmatprep.subr.bf16.mxu0 0
        %9082 = vmatpush1.bf16.msra.mxu0 0
        %9083 = vmatprep.subr.bf16.mxu0 0
        %9084 = vmatpush1.bf16.msra.mxu0 0
        %9085 = vmatprep.subr.bf16.mxu0 0
        %9086 = vmatpush1.bf16.msra.mxu0 0
        %9087 = vmatprep.subr.bf16.mxu0 0
        %9088 = vmatpush1.bf16.msra.mxu0 0
        %9089 = vmatprep.subr.bf16.mxu0 0
        %9090 = vmatpush1.bf16.msra.mxu0 0
        %9091 = vmatprep.subr.bf16.mxu0 0
        %9092 = vmatpush1.bf16.msra.mxu0 0
        %9093 = vmatprep.subr.bf16.mxu0 0
        %9094 = vmatpush1.bf16.msra.mxu0 0
        %9095 = vmatprep.subr.bf16.mxu0 0
        %9096 = vmatpush1.bf16.msra.mxu0 0
        %9097 = vmatprep.subr.bf16.mxu0 0
        %9098 = vmatpush1.bf16.msra.mxu0 0
        %9099 = vmatprep.subr.bf16.mxu0 0
        %9100 = vmatpush1.bf16.msra.mxu0 0
        %9101 = vmatprep.mubr.bf16.mxu0 0
        %9102 = vmatmul.mubr.bf16.gmra.mrb[0].mxu0 %v9022
        %v9103 = vpop.f32.mrb[0].mxu0
        %v9104 = vadd.f32 0.0, %v9103
        %v9105 = vpop.f32.mrb[0].mxu0
        %v9106 = vpop.f32.mrb[0].mxu0
        %v9107 = vadd.f32 0.0, %v9106
        %v9108 = vpop.f32.mrb[0].mxu0
        %9109 = vmatprep.mubr.bf16.mxu0 0
        %9110 = vmatmul.mubr.bf16.gmra.mrb[0].mxu0 %v9025
        %v9111 = vpop.f32.mrb[0].mxu0
        %v9112 = vadd.f32 0.0, %v9111
        %v9113 = vpop.f32.mrb[0].mxu0
        %v9114 = vpop.f32.mrb[0].mxu0
        %v9115 = vadd.f32 0.0, %v9114
        %v9116 = vpop.f32.mrb[0].mxu0
        %9117 = vmatprep.mubr.bf16.mxu0 0
        %9118 = vmatmul.mubr.bf16.gmra.mrb[0].mxu0 %v9028
        %v9119 = vpop.f32.mrb[0].mxu0
        %v9120 = vadd.f32 0.0, %v9119
        %v9121 = vpop.f32.mrb[0].mxu0
        %v9122 = vpop.f32.mrb[0].mxu0
        %v9123 = vadd.f32 0.0, %v9122
        %v9124 = vpop.f32.mrb[0].mxu0
        %9125 = vmatprep.mubr.bf16.mxu0 0
        %9126 = vmatmul.mubr.bf16.gmra.mrb[0].mxu0 %v9031
        %v9127 = vpop.f32.mrb[0].mxu0
        %v9128 = vadd.f32 0.0, %v9127
        %v9129 = vpop.f32.mrb[0].mxu0
        %v9130 = vpop.f32.mrb[0].mxu0
        %v9131 = vadd.f32 0.0, %v9130
        %v9132 = vpop.f32.mrb[0].mxu0
        %9133 = vmatprep.mubr.bf16.mxu0 0
        %9134 = vmatmul.mubr.bf16.gmra.mrb[0].mxu0 %v9034
        %v9135 = vpop.f32.mrb[0].mxu0
        %v9136 = vadd.f32 0.0, %v9135
        %v9137 = vpop.f32.mrb[0].mxu0
        %v9138 = vpop.f32.mrb[0].mxu0
        %v9139 = vadd.f32 0.0, %v9138
        %v9140 = vpop.f32.mrb[0].mxu0
        %9141 = vmatprep.mubr.bf16.mxu0 0
        %9142 = vmatmul.mubr.bf16.gmra.mrb[0].mxu0 %v9037
        %v9143 = vpop.f32.mrb[0].mxu0
        %v9144 = vadd.f32 0.0, %v9143
        %v9145 = vpop.f32.mrb[0].mxu0
        %v9146 = vpop.f32.mrb[0].mxu0
        %v9147 = vadd.f32 0.0, %v9146
        %v9148 = vpop.f32.mrb[0].mxu0
        %9149 = vmatprep.mubr.bf16.mxu0 0
        %9150 = vmatmul.mubr.bf16.gmra.mrb[0].mxu0 %v9040
        %v9151 = vpop.f32.mrb[0].mxu0
        %v9152 = vadd.f32 0.0, %v9151
        %v9153 = vpop.f32.mrb[0].mxu0
        %v9154 = vpop.f32.mrb[0].mxu0
        %v9155 = vadd.f32 0.0, %v9154
        %v9156 = vpop.f32.mrb[0].mxu0
        %9157 = vmatprep.mubr.bf16.mxu0 0
        %9158 = vmatmul.mubr.bf16.gmra.mrb[0].mxu0 %v9043
        %v9159 = vpop.f32.mrb[0].mxu0
        %v9160 = vadd.f32 0.0, %v9159
        %v9161 = vpop.f32.mrb[0].mxu0
        %v9162 = vpop.f32.mrb[0].mxu0
        %v9163 = vadd.f32 0.0, %v9162
        %v9164 = vpop.f32.mrb[0].mxu0
        %9165 = vmatprep.mubr.bf16.mxu0 0
        %9166 = vmatmul.mubr.bf16.gmra.mrb[0].mxu0 %v9046
        %v9167 = vpop.f32.mrb[0].mxu0
        %v9168 = vadd.f32 0.0, %v9167
        %v9169 = vpop.f32.mrb[0].mxu0
        %v9170 = vpop.f32.mrb[0].mxu0
        %v9171 = vadd.f32 0.0, %v9170
        %v9172 = vpop.f32.mrb[0].mxu0
        %9173 = vmatprep.mubr.bf16.mxu0 0
        %9174 = vmatmul.mubr.bf16.gmra.mrb[0].mxu0 %v9049
        %v9175 = vpop.f32.mrb[0].mxu0
        %v9176 = vadd.f32 0.0, %v9175
        %v9177 = vpop.f32.mrb[0].mxu0
        %v9178 = vpop.f32.mrb[0].mxu0
        %v9179 = vadd.f32 0.0, %v9178
        %v9180 = vpop.f32.mrb[0].mxu0
        %9181 = vmatprep.mubr.bf16.mxu0 0
        %9182 = vmatmul.mubr.bf16.gmra.mrb[0].mxu0 %v9052
        %v9183 = vpop.f32.mrb[0].mxu0
        %v9184 = vadd.f32 0.0, %v9183
        %v9185 = vpop.f32.mrb[0].mxu0
        %v9186 = vpop.f32.mrb[0].mxu0
        %v9187 = vadd.f32 0.0, %v9186
        %v9188 = vpop.f32.mrb[0].mxu0
        %9189 = vmatprep.mubr.bf16.mxu0 0
        %9190 = vmatmul.mubr.bf16.gmra.mrb[0].mxu0 %v9055
        %v9191 = vpop.f32.mrb[0].mxu0
        %v9192 = vadd.f32 0.0, %v9191
        %v9193 = vpop.f32.mrb[0].mxu0
        %v9194 = vpop.f32.mrb[0].mxu0
        %v9195 = vadd.f32 0.0, %v9194
        %v9196 = vpop.f32.mrb[0].mxu0
        %9197 = vmatprep.mubr.bf16.mxu0 0
        %9198 = vmatmul.mubr.bf16.gmra.mrb[0].mxu0 %v9058
        %v9199 = vpop.f32.mrb[0].mxu0
        %v9200 = vadd.f32 0.0, %v9199
        %v9201 = vpop.f32.mrb[0].mxu0
        %v9202 = vpop.f32.mrb[0].mxu0
        %v9203 = vadd.f32 0.0, %v9202
        %v9204 = vpop.f32.mrb[0].mxu0
        %9205 = vmatprep.mubr.bf16.mxu0 0
        %9206 = vmatmul.mubr.bf16.gmra.mrb[0].mxu0 %v9061
        %v9207 = vpop.f32.mrb[0].mxu0
        %v9208 = vadd.f32 0.0, %v9207
        %v9209 = vpop.f32.mrb[0].mxu0
        %v9210 = vpop.f32.mrb[0].mxu0
        %v9211 = vadd.f32 0.0, %v9210
        %v9212 = vpop.f32.mrb[0].mxu0
        %9213 = vmatprep.mubr.bf16.mxu0 0
        %9214 = vmatmul.mubr.bf16.gmra.mrb[0].mxu0 %v9064
        %v9215 = vpop.f32.mrb[0].mxu0
        %v9216 = vadd.f32 0.0, %v9215
        %v9217 = vpop.f32.mrb[0].mxu0
        %v9218 = vpop.f32.mrb[0].mxu0
        %v9219 = vadd.f32 0.0, %v9218
        %v9220 = vpop.f32.mrb[0].mxu0
        %9221 = vmatprep.mubr.bf16.mxu0 0
        %9222 = vmatmul.mubr.bf16.gmra.mrb[0].mxu0 %v9067
        %v9223 = vpop.f32.mrb[0].mxu0
        %v9224 = vadd.f32 0.0, %v9223
        %v9225 = vpop.f32.mrb[0].mxu0
        %v9226 = vpop.f32.mrb[0].mxu0
        %v9227 = vadd.f32 0.0, %v9226
        %v9228 = vpop.f32.mrb[0].mxu0
        %9229 = vdwg.mxu0
        %v9230 = vadd.f32 %v8941, %v9104
        %v9231 = vadd.f32 %v8942, %v9107
        %v9232 = vadd.f32 %v8943, %v9112
        %v9233 = vadd.f32 %v8944, %v9115
        %v9234 = vadd.f32 %v8945, %v9120
        %v9235 = vadd.f32 %v8946, %v9123
        %v9236 = vadd.f32 %v8947, %v9128
        %v9237 = vadd.f32 %v8948, %v9131
        %v9238 = vadd.f32 %v8949, %v9136
        %v9239 = vadd.f32 %v8950, %v9139
        %v9240 = vadd.f32 %v8951, %v9144
        %v9241 = vadd.f32 %v8952, %v9147
        %v9242 = vadd.f32 %v8953, %v9152
        %v9243 = vadd.f32 %v8954, %v9155
        %v9244 = vadd.f32 %v8955, %v9160
        %v9245 = vadd.f32 %v8956, %v9163
        %v9246 = vadd.f32 %v8957, %v9168
        %v9247 = vadd.f32 %v8958, %v9171
        %v9248 = vadd.f32 %v8959, %v9176
        %v9249 = vadd.f32 %v8960, %v9179
        %v9250 = vadd.f32 %v8961, %v9184
        %v9251 = vadd.f32 %v8962, %v9187
        %v9252 = vadd.f32 %v8963, %v9192
        %v9253 = vadd.f32 %v8964, %v9195
        %v9254 = vadd.f32 %v8965, %v9200
        %v9255 = vadd.f32 %v8966, %v9203
        %v9256 = vadd.f32 %v8967, %v9208
        %v9257 = vadd.f32 %v8968, %v9211
        %v9258 = vadd.f32 %v8969, %v9216
        %v9259 = vadd.f32 %v8970, %v9219
        %v9260 = vadd.f32 %v8971, %v9224
        %v9261 = vadd.f32 %v8972, %v9227
        %s9262 = scalar_lea.vmem %s221, 1320
        %v9263 = vld [vmem:[%s9262] sm:$0xff]
        %v9264 = vld [vmem:[%s9262 + $0x8] sm:$0xff]
        %v9265 = vld [vmem:[%s9262 + $0x18] sm:$0xff]
        %v9266 = vld [vmem:[%s9262 + $0x20] sm:$0xff]
        %v9267 = vld [vmem:[%s9262 + $0x30] sm:$0xff]
        %v9268 = vld [vmem:[%s9262 + $0x38] sm:$0xff]
        %v9269 = vld [vmem:[%s9262 + $0x48] sm:$0xff]
        %v9270 = vld [vmem:[%s9262 + $0x50] sm:$0xff]
        %v9271 = vld [vmem:[%s9262 + $0x60] sm:$0xff]
        %v9272 = vld [vmem:[%s9262 + $0x68] sm:$0xff]
        %v9273 = vld [vmem:[%s9262 + $0x78] sm:$0xff]
        %v9274 = vld [vmem:[%s9262 + $0x80] sm:$0xff]
        %v9275 = vld [vmem:[%s9262 + $0x90] sm:$0xff]
        %v9276 = vld [vmem:[%s9262 + $0x98] sm:$0xff]
        %v9277 = vld [vmem:[%s9262 + $0xa8] sm:$0xff]
        %v9278 = vld [vmem:[%s9262 + $0xb0] sm:$0xff]
        %v9279 = vld [vmem:[%s9262 + $0xc0] sm:$0xff]
        %v9280 = vld [vmem:[%s9262 + $0xc8] sm:$0xff]
        %v9281 = vld [vmem:[%s9262 + $0xd8] sm:$0xff]
        %v9282 = vld [vmem:[%s9262 + $0xe0] sm:$0xff]
        %v9283 = vld [vmem:[%s9262 + $0xf0] sm:$0xff]
        %v9284 = vld [vmem:[%s9262 + $0xf8] sm:$0xff]
        %v9285 = vld [vmem:[%s9262 + $0x108] sm:$0xff]
        %v9286 = vld [vmem:[%s9262 + $0x110] sm:$0xff]
        %v9287 = vld [vmem:[%s9262 + $0x120] sm:$0xff]
        %v9288 = vld [vmem:[%s9262 + $0x128] sm:$0xff]
        %v9289 = vld [vmem:[%s9262 + $0x138] sm:$0xff]
        %v9290 = vld [vmem:[%s9262 + $0x140] sm:$0xff]
        %v9291 = vld [vmem:[%s9262 + $0x150] sm:$0xff]
        %v9292 = vld [vmem:[%s9262 + $0x158] sm:$0xff]
        %v9293 = vld [vmem:[%s9262 + $0x168] sm:$0xff]
        %v9294 = vld [vmem:[%s9262 + $0x170] sm:$0xff]
        %v9295 = vpack.c.bf16 %v9264, %v9263
        %v9296 = vpack.c.bf16 %v9266, %v9265
        %v9297 = vpack.c.bf16 %v9268, %v9267
        %v9298 = vpack.c.bf16 %v9270, %v9269
        %v9299 = vpack.c.bf16 %v9272, %v9271
        %v9300 = vpack.c.bf16 %v9274, %v9273
        %v9301 = vpack.c.bf16 %v9276, %v9275
        %v9302 = vpack.c.bf16 %v9278, %v9277
        %v9303 = vpack.c.bf16 %v9280, %v9279
        %v9304 = vpack.c.bf16 %v9282, %v9281
        %v9305 = vpack.c.bf16 %v9284, %v9283
        %v9306 = vpack.c.bf16 %v9286, %v9285
        %v9307 = vpack.c.bf16 %v9288, %v9287
        %v9308 = vpack.c.bf16 %v9290, %v9289
        %v9309 = vpack.c.bf16 %v9292, %v9291
        %v9310 = vpack.c.bf16 %v9294, %v9293
        %v9312 = vsel %vm279, %v9295, 0
        %v9315 = vsel %vm279, %v9296, 0
        %v9318 = vsel %vm279, %v9297, 0
        %v9321 = vsel %vm279, %v9298, 0
        %v9324 = vsel %vm279, %v9299, 0
        %v9327 = vsel %vm279, %v9300, 0
        %v9330 = vsel %vm279, %v9301, 0
        %v9333 = vsel %vm279, %v9302, 0
        %v9336 = vsel %vm279, %v9303, 0
        %v9339 = vsel %vm279, %v9304, 0
        %v9342 = vsel %vm279, %v9305, 0
        %v9345 = vsel %vm279, %v9306, 0
        %v9348 = vsel %vm279, %v9307, 0
        %v9351 = vsel %vm279, %v9308, 0
        %v9354 = vsel %vm279, %v9309, 0
        %v9357 = vsel %vm279, %v9310, 0
        %9359 = vmatprep.subr.bf16.mxu0 0
        %9360 = vmatpush1.bf16.msra.mxu0 %v1213
        %9361 = vmatprep.subr.bf16.mxu0 0
        %9362 = vmatpush1.bf16.msra.mxu0 0
        %9363 = vmatprep.subr.bf16.mxu0 0
        %9364 = vmatpush1.bf16.msra.mxu0 0
        %9365 = vmatprep.subr.bf16.mxu0 0
        %9366 = vmatpush1.bf16.msra.mxu0 0
        %9367 = vmatprep.subr.bf16.mxu0 0
        %9368 = vmatpush1.bf16.msra.mxu0 0
        %9369 = vmatprep.subr.bf16.mxu0 0
        %9370 = vmatpush1.bf16.msra.mxu0 0
        %9371 = vmatprep.subr.bf16.mxu0 0
        %9372 = vmatpush1.bf16.msra.mxu0 0
        %9373 = vmatprep.subr.bf16.mxu0 0
        %9374 = vmatpush1.bf16.msra.mxu0 0
        %9375 = vmatprep.subr.bf16.mxu0 0
        %9376 = vmatpush1.bf16.msra.mxu0 0
        %9377 = vmatprep.subr.bf16.mxu0 0
        %9378 = vmatpush1.bf16.msra.mxu0 0
        %9379 = vmatprep.subr.bf16.mxu0 0
        %9380 = vmatpush1.bf16.msra.mxu0 0
        %9381 = vmatprep.subr.bf16.mxu0 0
        %9382 = vmatpush1.bf16.msra.mxu0 0
        %9383 = vmatprep.subr.bf16.mxu0 0
        %9384 = vmatpush1.bf16.msra.mxu0 0
        %9385 = vmatprep.subr.bf16.mxu0 0
        %9386 = vmatpush1.bf16.msra.mxu0 0
        %9387 = vmatprep.subr.bf16.mxu0 0
        %9388 = vmatpush1.bf16.msra.mxu0 0
        %9389 = vmatprep.subr.bf16.mxu0 0
        %9390 = vmatpush1.bf16.msra.mxu0 0
        %9391 = vmatprep.mubr.bf16.mxu0 0
        %9392 = vmatmul.mubr.bf16.gmra.mrb[0].mxu0 %v9312
        %v9393 = vpop.f32.mrb[0].mxu0
        %v9394 = vadd.f32 0.0, %v9393
        %v9395 = vpop.f32.mrb[0].mxu0
        %v9396 = vpop.f32.mrb[0].mxu0
        %v9397 = vadd.f32 0.0, %v9396
        %v9398 = vpop.f32.mrb[0].mxu0
        %9399 = vmatprep.mubr.bf16.mxu0 0
        %9400 = vmatmul.mubr.bf16.gmra.mrb[0].mxu0 %v9315
        %v9401 = vpop.f32.mrb[0].mxu0
        %v9402 = vadd.f32 0.0, %v9401
        %v9403 = vpop.f32.mrb[0].mxu0
        %v9404 = vpop.f32.mrb[0].mxu0
        %v9405 = vadd.f32 0.0, %v9404
        %v9406 = vpop.f32.mrb[0].mxu0
        %9407 = vmatprep.mubr.bf16.mxu0 0
        %9408 = vmatmul.mubr.bf16.gmra.mrb[0].mxu0 %v9318
        %v9409 = vpop.f32.mrb[0].mxu0
        %v9410 = vadd.f32 0.0, %v9409
        %v9411 = vpop.f32.mrb[0].mxu0
        %v9412 = vpop.f32.mrb[0].mxu0
        %v9413 = vadd.f32 0.0, %v9412
        %v9414 = vpop.f32.mrb[0].mxu0
        %9415 = vmatprep.mubr.bf16.mxu0 0
        %9416 = vmatmul.mubr.bf16.gmra.mrb[0].mxu0 %v9321
        %v9417 = vpop.f32.mrb[0].mxu0
        %v9418 = vadd.f32 0.0, %v9417
        %v9419 = vpop.f32.mrb[0].mxu0
        %v9420 = vpop.f32.mrb[0].mxu0
        %v9421 = vadd.f32 0.0, %v9420
        %v9422 = vpop.f32.mrb[0].mxu0
        %9423 = vmatprep.mubr.bf16.mxu0 0
        %9424 = vmatmul.mubr.bf16.gmra.mrb[0].mxu0 %v9324
        %v9425 = vpop.f32.mrb[0].mxu0
        %v9426 = vadd.f32 0.0, %v9425
        %v9427 = vpop.f32.mrb[0].mxu0
        %v9428 = vpop.f32.mrb[0].mxu0
        %v9429 = vadd.f32 0.0, %v9428
        %v9430 = vpop.f32.mrb[0].mxu0
        %9431 = vmatprep.mubr.bf16.mxu0 0
        %9432 = vmatmul.mubr.bf16.gmra.mrb[0].mxu0 %v9327
        %v9433 = vpop.f32.mrb[0].mxu0
        %v9434 = vadd.f32 0.0, %v9433
        %v9435 = vpop.f32.mrb[0].mxu0
        %v9436 = vpop.f32.mrb[0].mxu0
        %v9437 = vadd.f32 0.0, %v9436
        %v9438 = vpop.f32.mrb[0].mxu0
        %9439 = vmatprep.mubr.bf16.mxu0 0
        %9440 = vmatmul.mubr.bf16.gmra.mrb[0].mxu0 %v9330
        %v9441 = vpop.f32.mrb[0].mxu0
        %v9442 = vadd.f32 0.0, %v9441
        %v9443 = vpop.f32.mrb[0].mxu0
        %v9444 = vpop.f32.mrb[0].mxu0
        %v9445 = vadd.f32 0.0, %v9444
        %v9446 = vpop.f32.mrb[0].mxu0
        %9447 = vmatprep.mubr.bf16.mxu0 0
        %9448 = vmatmul.mubr.bf16.gmra.mrb[0].mxu0 %v9333
        %v9449 = vpop.f32.mrb[0].mxu0
        %v9450 = vadd.f32 0.0, %v9449
        %v9451 = vpop.f32.mrb[0].mxu0
        %v9452 = vpop.f32.mrb[0].mxu0
        %v9453 = vadd.f32 0.0, %v9452
        %v9454 = vpop.f32.mrb[0].mxu0
        %9455 = vmatprep.mubr.bf16.mxu0 0
        %9456 = vmatmul.mubr.bf16.gmra.mrb[0].mxu0 %v9336
        %v9457 = vpop.f32.mrb[0].mxu0
        %v9458 = vadd.f32 0.0, %v9457
        %v9459 = vpop.f32.mrb[0].mxu0
        %v9460 = vpop.f32.mrb[0].mxu0
        %v9461 = vadd.f32 0.0, %v9460
        %v9462 = vpop.f32.mrb[0].mxu0
        %9463 = vmatprep.mubr.bf16.mxu0 0
        %9464 = vmatmul.mubr.bf16.gmra.mrb[0].mxu0 %v9339
        %v9465 = vpop.f32.mrb[0].mxu0
        %v9466 = vadd.f32 0.0, %v9465
        %v9467 = vpop.f32.mrb[0].mxu0
        %v9468 = vpop.f32.mrb[0].mxu0
        %v9469 = vadd.f32 0.0, %v9468
        %v9470 = vpop.f32.mrb[0].mxu0
        %9471 = vmatprep.mubr.bf16.mxu0 0
        %9472 = vmatmul.mubr.bf16.gmra.mrb[0].mxu0 %v9342
        %v9473 = vpop.f32.mrb[0].mxu0
        %v9474 = vadd.f32 0.0, %v9473
        %v9475 = vpop.f32.mrb[0].mxu0
        %v9476 = vpop.f32.mrb[0].mxu0
        %v9477 = vadd.f32 0.0, %v9476
        %v9478 = vpop.f32.mrb[0].mxu0
        %9479 = vmatprep.mubr.bf16.mxu0 0
        %9480 = vmatmul.mubr.bf16.gmra.mrb[0].mxu0 %v9345
        %v9481 = vpop.f32.mrb[0].mxu0
        %v9482 = vadd.f32 0.0, %v9481
        %v9483 = vpop.f32.mrb[0].mxu0
        %v9484 = vpop.f32.mrb[0].mxu0
        %v9485 = vadd.f32 0.0, %v9484
        %v9486 = vpop.f32.mrb[0].mxu0
        %9487 = vmatprep.mubr.bf16.mxu0 0
        %9488 = vmatmul.mubr.bf16.gmra.mrb[0].mxu0 %v9348
        %v9489 = vpop.f32.mrb[0].mxu0
        %v9490 = vadd.f32 0.0, %v9489
        %v9491 = vpop.f32.mrb[0].mxu0
        %v9492 = vpop.f32.mrb[0].mxu0
        %v9493 = vadd.f32 0.0, %v9492
        %v9494 = vpop.f32.mrb[0].mxu0
        %9495 = vmatprep.mubr.bf16.mxu0 0
        %9496 = vmatmul.mubr.bf16.gmra.mrb[0].mxu0 %v9351
        %v9497 = vpop.f32.mrb[0].mxu0
        %v9498 = vadd.f32 0.0, %v9497
        %v9499 = vpop.f32.mrb[0].mxu0
        %v9500 = vpop.f32.mrb[0].mxu0
        %v9501 = vadd.f32 0.0, %v9500
        %v9502 = vpop.f32.mrb[0].mxu0
        %9503 = vmatprep.mubr.bf16.mxu0 0
        %9504 = vmatmul.mubr.bf16.gmra.mrb[0].mxu0 %v9354
        %v9505 = vpop.f32.mrb[0].mxu0
        %v9506 = vadd.f32 0.0, %v9505
        %v9507 = vpop.f32.mrb[0].mxu0
        %v9508 = vpop.f32.mrb[0].mxu0
        %v9509 = vadd.f32 0.0, %v9508
        %v9510 = vpop.f32.mrb[0].mxu0
        %9511 = vmatprep.mubr.bf16.mxu0 0
        %9512 = vmatmul.mubr.bf16.gmra.mrb[0].mxu0 %v9357
        %v9513 = vpop.f32.mrb[0].mxu0
        %v9514 = vadd.f32 0.0, %v9513
        %v9515 = vpop.f32.mrb[0].mxu0
        %v9516 = vpop.f32.mrb[0].mxu0
        %v9517 = vadd.f32 0.0, %v9516
        %v9518 = vpop.f32.mrb[0].mxu0
        %9519 = vdwg.mxu0
        %v9520 = vadd.f32 %v9230, %v9394
        %v9521 = vadd.f32 %v9231, %v9397
        %v9522 = vadd.f32 %v9232, %v9402
        %v9523 = vadd.f32 %v9233, %v9405
        %v9524 = vadd.f32 %v9234, %v9410
        %v9525 = vadd.f32 %v9235, %v9413
        %v9526 = vadd.f32 %v9236, %v9418
        %v9527 = vadd.f32 %v9237, %v9421
        %v9528 = vadd.f32 %v9238, %v9426
        %v9529 = vadd.f32 %v9239, %v9429
        %v9530 = vadd.f32 %v9240, %v9434
        %v9531 = vadd.f32 %v9241, %v9437
        %v9532 = vadd.f32 %v9242, %v9442
        %v9533 = vadd.f32 %v9243, %v9445
        %v9534 = vadd.f32 %v9244, %v9450
        %v9535 = vadd.f32 %v9245, %v9453
        %v9536 = vadd.f32 %v9246, %v9458
        %v9537 = vadd.f32 %v9247, %v9461
        %v9538 = vadd.f32 %v9248, %v9466
        %v9539 = vadd.f32 %v9249, %v9469
        %v9540 = vadd.f32 %v9250, %v9474
        %v9541 = vadd.f32 %v9251, %v9477
        %v9542 = vadd.f32 %v9252, %v9482
        %v9543 = vadd.f32 %v9253, %v9485
        %v9544 = vadd.f32 %v9254, %v9490
        %v9545 = vadd.f32 %v9255, %v9493
        %v9546 = vadd.f32 %v9256, %v9498
        %v9547 = vadd.f32 %v9257, %v9501
        %v9548 = vadd.f32 %v9258, %v9506
        %v9549 = vadd.f32 %v9259, %v9509
        %v9550 = vadd.f32 %v9260, %v9514
        %v9551 = vadd.f32 %v9261, %v9517
        %v9552 = vld [vmem:[%s9262 + $0x1] sm:$0xff]
        %v9553 = vld [vmem:[%s9262 + $0x9] sm:$0xff]
        %v9554 = vld [vmem:[%s9262 + $0x19] sm:$0xff]
        %v9555 = vld [vmem:[%s9262 + $0x21] sm:$0xff]
        %v9556 = vld [vmem:[%s9262 + $0x31] sm:$0xff]
        %v9557 = vld [vmem:[%s9262 + $0x39] sm:$0xff]
        %v9558 = vld [vmem:[%s9262 + $0x49] sm:$0xff]
        %v9559 = vld [vmem:[%s9262 + $0x51] sm:$0xff]
        %v9560 = vld [vmem:[%s9262 + $0x61] sm:$0xff]
        %v9561 = vld [vmem:[%s9262 + $0x69] sm:$0xff]
        %v9562 = vld [vmem:[%s9262 + $0x79] sm:$0xff]
        %v9563 = vld [vmem:[%s9262 + $0x81] sm:$0xff]
        %v9564 = vld [vmem:[%s9262 + $0x91] sm:$0xff]
        %v9565 = vld [vmem:[%s9262 + $0x99] sm:$0xff]
        %v9566 = vld [vmem:[%s9262 + $0xa9] sm:$0xff]
        %v9567 = vld [vmem:[%s9262 + $0xb1] sm:$0xff]
        %v9568 = vld [vmem:[%s9262 + $0xc1] sm:$0xff]
        %v9569 = vld [vmem:[%s9262 + $0xc9] sm:$0xff]
        %v9570 = vld [vmem:[%s9262 + $0xd9] sm:$0xff]
        %v9571 = vld [vmem:[%s9262 + $0xe1] sm:$0xff]
        %v9572 = vld [vmem:[%s9262 + $0xf1] sm:$0xff]
        %v9573 = vld [vmem:[%s9262 + $0xf9] sm:$0xff]
        %v9574 = vld [vmem:[%s9262 + $0x109] sm:$0xff]
        %v9575 = vld [vmem:[%s9262 + $0x111] sm:$0xff]
        %v9576 = vld [vmem:[%s9262 + $0x121] sm:$0xff]
        %v9577 = vld [vmem:[%s9262 + $0x129] sm:$0xff]
        %v9578 = vld [vmem:[%s9262 + $0x139] sm:$0xff]
        %v9579 = vld [vmem:[%s9262 + $0x141] sm:$0xff]
        %v9580 = vld [vmem:[%s9262 + $0x151] sm:$0xff]
        %v9581 = vld [vmem:[%s9262 + $0x159] sm:$0xff]
        %v9582 = vld [vmem:[%s9262 + $0x169] sm:$0xff]
        %v9583 = vld [vmem:[%s9262 + $0x171] sm:$0xff]
        %v9584 = vpack.c.bf16 %v9553, %v9552
        %v9585 = vpack.c.bf16 %v9555, %v9554
        %v9586 = vpack.c.bf16 %v9557, %v9556
        %v9587 = vpack.c.bf16 %v9559, %v9558
        %v9588 = vpack.c.bf16 %v9561, %v9560
        %v9589 = vpack.c.bf16 %v9563, %v9562
        %v9590 = vpack.c.bf16 %v9565, %v9564
        %v9591 = vpack.c.bf16 %v9567, %v9566
        %v9592 = vpack.c.bf16 %v9569, %v9568
        %v9593 = vpack.c.bf16 %v9571, %v9570
        %v9594 = vpack.c.bf16 %v9573, %v9572
        %v9595 = vpack.c.bf16 %v9575, %v9574
        %v9596 = vpack.c.bf16 %v9577, %v9576
        %v9597 = vpack.c.bf16 %v9579, %v9578
        %v9598 = vpack.c.bf16 %v9581, %v9580
        %v9599 = vpack.c.bf16 %v9583, %v9582
        %v9601 = vsel %vm279, %v9584, 0
        %v9604 = vsel %vm279, %v9585, 0
        %v9607 = vsel %vm279, %v9586, 0
        %v9610 = vsel %vm279, %v9587, 0
        %v9613 = vsel %vm279, %v9588, 0
        %v9616 = vsel %vm279, %v9589, 0
        %v9619 = vsel %vm279, %v9590, 0
        %v9622 = vsel %vm279, %v9591, 0
        %v9625 = vsel %vm279, %v9592, 0
        %v9628 = vsel %vm279, %v9593, 0
        %v9631 = vsel %vm279, %v9594, 0
        %v9634 = vsel %vm279, %v9595, 0
        %v9637 = vsel %vm279, %v9596, 0
        %v9640 = vsel %vm279, %v9597, 0
        %v9643 = vsel %vm279, %v9598, 0
        %v9646 = vsel %vm279, %v9599, 0
        %9648 = vmatprep.subr.bf16.mxu0 0
        %9649 = vmatpush1.bf16.msra.mxu0 %v1507
        %9650 = vmatprep.subr.bf16.mxu0 0
        %9651 = vmatpush1.bf16.msra.mxu0 0
        %9652 = vmatprep.subr.bf16.mxu0 0
        %9653 = vmatpush1.bf16.msra.mxu0 0
        %9654 = vmatprep.subr.bf16.mxu0 0
        %9655 = vmatpush1.bf16.msra.mxu0 0
        %9656 = vmatprep.subr.bf16.mxu0 0
        %9657 = vmatpush1.bf16.msra.mxu0 0
        %9658 = vmatprep.subr.bf16.mxu0 0
        %9659 = vmatpush1.bf16.msra.mxu0 0
        %9660 = vmatprep.subr.bf16.mxu0 0
        %9661 = vmatpush1.bf16.msra.mxu0 0
        %9662 = vmatprep.subr.bf16.mxu0 0
        %9663 = vmatpush1.bf16.msra.mxu0 0
        %9664 = vmatprep.subr.bf16.mxu0 0
        %9665 = vmatpush1.bf16.msra.mxu0 0
        %9666 = vmatprep.subr.bf16.mxu0 0
        %9667 = vmatpush1.bf16.msra.mxu0 0
        %9668 = vmatprep.subr.bf16.mxu0 0
        %9669 = vmatpush1.bf16.msra.mxu0 0
        %9670 = vmatprep.subr.bf16.mxu0 0
        %9671 = vmatpush1.bf16.msra.mxu0 0
        %9672 = vmatprep.subr.bf16.mxu0 0
        %9673 = vmatpush1.bf16.msra.mxu0 0
        %9674 = vmatprep.subr.bf16.mxu0 0
        %9675 = vmatpush1.bf16.msra.mxu0 0
        %9676 = vmatprep.subr.bf16.mxu0 0
        %9677 = vmatpush1.bf16.msra.mxu0 0
        %9678 = vmatprep.subr.bf16.mxu0 0
        %9679 = vmatpush1.bf16.msra.mxu0 0
        %9680 = vmatprep.mubr.bf16.mxu0 0
        %9681 = vmatmul.mubr.bf16.gmra.mrb[0].mxu0 %v9601
        %v9682 = vpop.f32.mrb[0].mxu0
        %v9683 = vadd.f32 0.0, %v9682
        %v9684 = vpop.f32.mrb[0].mxu0
        %v9685 = vpop.f32.mrb[0].mxu0
        %v9686 = vadd.f32 0.0, %v9685
        %v9687 = vpop.f32.mrb[0].mxu0
        %9688 = vmatprep.mubr.bf16.mxu0 0
        %9689 = vmatmul.mubr.bf16.gmra.mrb[0].mxu0 %v9604
        %v9690 = vpop.f32.mrb[0].mxu0
        %v9691 = vadd.f32 0.0, %v9690
        %v9692 = vpop.f32.mrb[0].mxu0
        %v9693 = vpop.f32.mrb[0].mxu0
        %v9694 = vadd.f32 0.0, %v9693
        %v9695 = vpop.f32.mrb[0].mxu0
        %9696 = vmatprep.mubr.bf16.mxu0 0
        %9697 = vmatmul.mubr.bf16.gmra.mrb[0].mxu0 %v9607
        %v9698 = vpop.f32.mrb[0].mxu0
        %v9699 = vadd.f32 0.0, %v9698
        %v9700 = vpop.f32.mrb[0].mxu0
        %v9701 = vpop.f32.mrb[0].mxu0
        %v9702 = vadd.f32 0.0, %v9701
        %v9703 = vpop.f32.mrb[0].mxu0
        %9704 = vmatprep.mubr.bf16.mxu0 0
        %9705 = vmatmul.mubr.bf16.gmra.mrb[0].mxu0 %v9610
        %v9706 = vpop.f32.mrb[0].mxu0
        %v9707 = vadd.f32 0.0, %v9706
        %v9708 = vpop.f32.mrb[0].mxu0
        %v9709 = vpop.f32.mrb[0].mxu0
        %v9710 = vadd.f32 0.0, %v9709
        %v9711 = vpop.f32.mrb[0].mxu0
        %9712 = vmatprep.mubr.bf16.mxu0 0
        %9713 = vmatmul.mubr.bf16.gmra.mrb[0].mxu0 %v9613
        %v9714 = vpop.f32.mrb[0].mxu0
        %v9715 = vadd.f32 0.0, %v9714
        %v9716 = vpop.f32.mrb[0].mxu0
        %v9717 = vpop.f32.mrb[0].mxu0
        %v9718 = vadd.f32 0.0, %v9717
        %v9719 = vpop.f32.mrb[0].mxu0
        %9720 = vmatprep.mubr.bf16.mxu0 0
        %9721 = vmatmul.mubr.bf16.gmra.mrb[0].mxu0 %v9616
        %v9722 = vpop.f32.mrb[0].mxu0
        %v9723 = vadd.f32 0.0, %v9722
        %v9724 = vpop.f32.mrb[0].mxu0
        %v9725 = vpop.f32.mrb[0].mxu0
        %v9726 = vadd.f32 0.0, %v9725
        %v9727 = vpop.f32.mrb[0].mxu0
        %9728 = vmatprep.mubr.bf16.mxu0 0
        %9729 = vmatmul.mubr.bf16.gmra.mrb[0].mxu0 %v9619
        %v9730 = vpop.f32.mrb[0].mxu0
        %v9731 = vadd.f32 0.0, %v9730
        %v9732 = vpop.f32.mrb[0].mxu0
        %v9733 = vpop.f32.mrb[0].mxu0
        %v9734 = vadd.f32 0.0, %v9733
        %v9735 = vpop.f32.mrb[0].mxu0
        %9736 = vmatprep.mubr.bf16.mxu0 0
        %9737 = vmatmul.mubr.bf16.gmra.mrb[0].mxu0 %v9622
        %v9738 = vpop.f32.mrb[0].mxu0
        %v9739 = vadd.f32 0.0, %v9738
        %v9740 = vpop.f32.mrb[0].mxu0
        %v9741 = vpop.f32.mrb[0].mxu0
        %v9742 = vadd.f32 0.0, %v9741
        %v9743 = vpop.f32.mrb[0].mxu0
        %9744 = vmatprep.mubr.bf16.mxu0 0
        %9745 = vmatmul.mubr.bf16.gmra.mrb[0].mxu0 %v9625
        %v9746 = vpop.f32.mrb[0].mxu0
        %v9747 = vadd.f32 0.0, %v9746
        %v9748 = vpop.f32.mrb[0].mxu0
        %v9749 = vpop.f32.mrb[0].mxu0
        %v9750 = vadd.f32 0.0, %v9749
        %v9751 = vpop.f32.mrb[0].mxu0
        %9752 = vmatprep.mubr.bf16.mxu0 0
        %9753 = vmatmul.mubr.bf16.gmra.mrb[0].mxu0 %v9628
        %v9754 = vpop.f32.mrb[0].mxu0
        %v9755 = vadd.f32 0.0, %v9754
        %v9756 = vpop.f32.mrb[0].mxu0
        %v9757 = vpop.f32.mrb[0].mxu0
        %v9758 = vadd.f32 0.0, %v9757
        %v9759 = vpop.f32.mrb[0].mxu0
        %9760 = vmatprep.mubr.bf16.mxu0 0
        %9761 = vmatmul.mubr.bf16.gmra.mrb[0].mxu0 %v9631
        %v9762 = vpop.f32.mrb[0].mxu0
        %v9763 = vadd.f32 0.0, %v9762
        %v9764 = vpop.f32.mrb[0].mxu0
        %v9765 = vpop.f32.mrb[0].mxu0
        %v9766 = vadd.f32 0.0, %v9765
        %v9767 = vpop.f32.mrb[0].mxu0
        %9768 = vmatprep.mubr.bf16.mxu0 0
        %9769 = vmatmul.mubr.bf16.gmra.mrb[0].mxu0 %v9634
        %v9770 = vpop.f32.mrb[0].mxu0
        %v9771 = vadd.f32 0.0, %v9770
        %v9772 = vpop.f32.mrb[0].mxu0
        %v9773 = vpop.f32.mrb[0].mxu0
        %v9774 = vadd.f32 0.0, %v9773
        %v9775 = vpop.f32.mrb[0].mxu0
        %9776 = vmatprep.mubr.bf16.mxu0 0
        %9777 = vmatmul.mubr.bf16.gmra.mrb[0].mxu0 %v9637
        %v9778 = vpop.f32.mrb[0].mxu0
        %v9779 = vadd.f32 0.0, %v9778
        %v9780 = vpop.f32.mrb[0].mxu0
        %v9781 = vpop.f32.mrb[0].mxu0
        %v9782 = vadd.f32 0.0, %v9781
        %v9783 = vpop.f32.mrb[0].mxu0
        %9784 = vmatprep.mubr.bf16.mxu0 0
        %9785 = vmatmul.mubr.bf16.gmra.mrb[0].mxu0 %v9640
        %v9786 = vpop.f32.mrb[0].mxu0
        %v9787 = vadd.f32 0.0, %v9786
        %v9788 = vpop.f32.mrb[0].mxu0
        %v9789 = vpop.f32.mrb[0].mxu0
        %v9790 = vadd.f32 0.0, %v9789
        %v9791 = vpop.f32.mrb[0].mxu0
        %9792 = vmatprep.mubr.bf16.mxu0 0
        %9793 = vmatmul.mubr.bf16.gmra.mrb[0].mxu0 %v9643
        %v9794 = vpop.f32.mrb[0].mxu0
        %v9795 = vadd.f32 0.0, %v9794
        %v9796 = vpop.f32.mrb[0].mxu0
        %v9797 = vpop.f32.mrb[0].mxu0
        %v9798 = vadd.f32 0.0, %v9797
        %v9799 = vpop.f32.mrb[0].mxu0
        %9800 = vmatprep.mubr.bf16.mxu0 0
        %9801 = vmatmul.mubr.bf16.gmra.mrb[0].mxu0 %v9646
        %v9802 = vpop.f32.mrb[0].mxu0
        %v9803 = vadd.f32 0.0, %v9802
        %v9804 = vpop.f32.mrb[0].mxu0
        %v9805 = vpop.f32.mrb[0].mxu0
        %v9806 = vadd.f32 0.0, %v9805
        %v9807 = vpop.f32.mrb[0].mxu0
        %9808 = vdwg.mxu0
        %v9809 = vadd.f32 %v9520, %v9683
        %v9810 = vadd.f32 %v9521, %v9686
        %v9811 = vadd.f32 %v9522, %v9691
        %v9812 = vadd.f32 %v9523, %v9694
        %v9813 = vadd.f32 %v9524, %v9699
        %v9814 = vadd.f32 %v9525, %v9702
        %v9815 = vadd.f32 %v9526, %v9707
        %v9816 = vadd.f32 %v9527, %v9710
        %v9817 = vadd.f32 %v9528, %v9715
        %v9818 = vadd.f32 %v9529, %v9718
        %v9819 = vadd.f32 %v9530, %v9723
        %v9820 = vadd.f32 %v9531, %v9726
        %v9821 = vadd.f32 %v9532, %v9731
        %v9822 = vadd.f32 %v9533, %v9734
        %v9823 = vadd.f32 %v9534, %v9739
        %v9824 = vadd.f32 %v9535, %v9742
        %v9825 = vadd.f32 %v9536, %v9747
        %v9826 = vadd.f32 %v9537, %v9750
        %v9827 = vadd.f32 %v9538, %v9755
        %v9828 = vadd.f32 %v9539, %v9758
        %v9829 = vadd.f32 %v9540, %v9763
        %v9830 = vadd.f32 %v9541, %v9766
        %v9831 = vadd.f32 %v9542, %v9771
        %v9832 = vadd.f32 %v9543, %v9774
        %v9833 = vadd.f32 %v9544, %v9779
        %v9834 = vadd.f32 %v9545, %v9782
        %v9835 = vadd.f32 %v9546, %v9787
        %v9836 = vadd.f32 %v9547, %v9790
        %v9837 = vadd.f32 %v9548, %v9795
        %v9838 = vadd.f32 %v9549, %v9798
        %v9839 = vadd.f32 %v9550, %v9803
        %v9840 = vadd.f32 %v9551, %v9806
        %v9841 = vld [vmem:[%s9262 + $0x2] sm:$0xff]
        %v9842 = vld [vmem:[%s9262 + $0xa] sm:$0xff]
        %v9843 = vld [vmem:[%s9262 + $0x1a] sm:$0xff]
        %v9844 = vld [vmem:[%s9262 + $0x22] sm:$0xff]
        %v9845 = vld [vmem:[%s9262 + $0x32] sm:$0xff]
        %v9846 = vld [vmem:[%s9262 + $0x3a] sm:$0xff]
        %v9847 = vld [vmem:[%s9262 + $0x4a] sm:$0xff]
        %v9848 = vld [vmem:[%s9262 + $0x52] sm:$0xff]
        %v9849 = vld [vmem:[%s9262 + $0x62] sm:$0xff]
        %v9850 = vld [vmem:[%s9262 + $0x6a] sm:$0xff]
        %v9851 = vld [vmem:[%s9262 + $0x7a] sm:$0xff]
        %v9852 = vld [vmem:[%s9262 + $0x82] sm:$0xff]
        %v9853 = vld [vmem:[%s9262 + $0x92] sm:$0xff]
        %v9854 = vld [vmem:[%s9262 + $0x9a] sm:$0xff]
        %v9855 = vld [vmem:[%s9262 + $0xaa] sm:$0xff]
        %v9856 = vld [vmem:[%s9262 + $0xb2] sm:$0xff]
        %v9857 = vld [vmem:[%s9262 + $0xc2] sm:$0xff]
        %v9858 = vld [vmem:[%s9262 + $0xca] sm:$0xff]
        %v9859 = vld [vmem:[%s9262 + $0xda] sm:$0xff]
        %v9860 = vld [vmem:[%s9262 + $0xe2] sm:$0xff]
        %v9861 = vld [vmem:[%s9262 + $0xf2] sm:$0xff]
        %v9862 = vld [vmem:[%s9262 + $0xfa] sm:$0xff]
        %v9863 = vld [vmem:[%s9262 + $0x10a] sm:$0xff]
        %v9864 = vld [vmem:[%s9262 + $0x112] sm:$0xff]
        %v9865 = vld [vmem:[%s9262 + $0x122] sm:$0xff]
        %v9866 = vld [vmem:[%s9262 + $0x12a] sm:$0xff]
        %v9867 = vld [vmem:[%s9262 + $0x13a] sm:$0xff]
        %v9868 = vld [vmem:[%s9262 + $0x142] sm:$0xff]
        %v9869 = vld [vmem:[%s9262 + $0x152] sm:$0xff]
        %v9870 = vld [vmem:[%s9262 + $0x15a] sm:$0xff]
        %v9871 = vld [vmem:[%s9262 + $0x16a] sm:$0xff]
        %v9872 = vld [vmem:[%s9262 + $0x172] sm:$0xff]
        %v9873 = vpack.c.bf16 %v9842, %v9841
        %v9874 = vpack.c.bf16 %v9844, %v9843
        %v9875 = vpack.c.bf16 %v9846, %v9845
        %v9876 = vpack.c.bf16 %v9848, %v9847
        %v9877 = vpack.c.bf16 %v9850, %v9849
        %v9878 = vpack.c.bf16 %v9852, %v9851
        %v9879 = vpack.c.bf16 %v9854, %v9853
        %v9880 = vpack.c.bf16 %v9856, %v9855
        %v9881 = vpack.c.bf16 %v9858, %v9857
        %v9882 = vpack.c.bf16 %v9860, %v9859
        %v9883 = vpack.c.bf16 %v9862, %v9861
        %v9884 = vpack.c.bf16 %v9864, %v9863
        %v9885 = vpack.c.bf16 %v9866, %v9865
        %v9886 = vpack.c.bf16 %v9868, %v9867
        %v9887 = vpack.c.bf16 %v9870, %v9869
        %v9888 = vpack.c.bf16 %v9872, %v9871
        %v9890 = vsel %vm279, %v9873, 0
        %v9893 = vsel %vm279, %v9874, 0
        %v9896 = vsel %vm279, %v9875, 0
        %v9899 = vsel %vm279, %v9876, 0
        %v9902 = vsel %vm279, %v9877, 0
        %v9905 = vsel %vm279, %v9878, 0
        %v9908 = vsel %vm279, %v9879, 0
        %v9911 = vsel %vm279, %v9880, 0
        %v9914 = vsel %vm279, %v9881, 0
        %v9917 = vsel %vm279, %v9882, 0
        %v9920 = vsel %vm279, %v9883, 0
        %v9923 = vsel %vm279, %v9884, 0
        %v9926 = vsel %vm279, %v9885, 0
        %v9929 = vsel %vm279, %v9886, 0
        %v9932 = vsel %vm279, %v9887, 0
        %v9935 = vsel %vm279, %v9888, 0
        %9937 = vmatprep.subr.bf16.mxu0 0
        %9938 = vmatpush1.bf16.msra.mxu0 %v1801
        %9939 = vmatprep.subr.bf16.mxu0 0
        %9940 = vmatpush1.bf16.msra.mxu0 0
        %9941 = vmatprep.subr.bf16.mxu0 0
        %9942 = vmatpush1.bf16.msra.mxu0 0
        %9943 = vmatprep.subr.bf16.mxu0 0
        %9944 = vmatpush1.bf16.msra.mxu0 0
        %9945 = vmatprep.subr.bf16.mxu0 0
        %9946 = vmatpush1.bf16.msra.mxu0 0
        %9947 = vmatprep.subr.bf16.mxu0 0
        %9948 = vmatpush1.bf16.msra.mxu0 0
        %9949 = vmatprep.subr.bf16.mxu0 0
        %9950 = vmatpush1.bf16.msra.mxu0 0
        %9951 = vmatprep.subr.bf16.mxu0 0
        %9952 = vmatpush1.bf16.msra.mxu0 0
        %9953 = vmatprep.subr.bf16.mxu0 0
        %9954 = vmatpush1.bf16.msra.mxu0 0
        %9955 = vmatprep.subr.bf16.mxu0 0
        %9956 = vmatpush1.bf16.msra.mxu0 0
        %9957 = vmatprep.subr.bf16.mxu0 0
        %9958 = vmatpush1.bf16.msra.mxu0 0
        %9959 = vmatprep.subr.bf16.mxu0 0
        %9960 = vmatpush1.bf16.msra.mxu0 0
        %9961 = vmatprep.subr.bf16.mxu0 0
        %9962 = vmatpush1.bf16.msra.mxu0 0
        %9963 = vmatprep.subr.bf16.mxu0 0
        %9964 = vmatpush1.bf16.msra.mxu0 0
        %9965 = vmatprep.subr.bf16.mxu0 0
        %9966 = vmatpush1.bf16.msra.mxu0 0
        %9967 = vmatprep.subr.bf16.mxu0 0
        %9968 = vmatpush1.bf16.msra.mxu0 0
        %9969 = vmatprep.mubr.bf16.mxu0 0
        %9970 = vmatmul.mubr.bf16.gmra.mrb[0].mxu0 %v9890
        %v9971 = vpop.f32.mrb[0].mxu0
        %v9972 = vadd.f32 0.0, %v9971
        %v9973 = vpop.f32.mrb[0].mxu0
        %v9974 = vpop.f32.mrb[0].mxu0
        %v9975 = vadd.f32 0.0, %v9974
        %v9976 = vpop.f32.mrb[0].mxu0
        %9977 = vmatprep.mubr.bf16.mxu0 0
        %9978 = vmatmul.mubr.bf16.gmra.mrb[0].mxu0 %v9893
        %v9979 = vpop.f32.mrb[0].mxu0
        %v9980 = vadd.f32 0.0, %v9979
        %v9981 = vpop.f32.mrb[0].mxu0
        %v9982 = vpop.f32.mrb[0].mxu0
        %v9983 = vadd.f32 0.0, %v9982
        %v9984 = vpop.f32.mrb[0].mxu0
        %9985 = vmatprep.mubr.bf16.mxu0 0
        %9986 = vmatmul.mubr.bf16.gmra.mrb[0].mxu0 %v9896
        %v9987 = vpop.f32.mrb[0].mxu0
        %v9988 = vadd.f32 0.0, %v9987
        %v9989 = vpop.f32.mrb[0].mxu0
        %v9990 = vpop.f32.mrb[0].mxu0
        %v9991 = vadd.f32 0.0, %v9990
        %v9992 = vpop.f32.mrb[0].mxu0
        %9993 = vmatprep.mubr.bf16.mxu0 0
        %9994 = vmatmul.mubr.bf16.gmra.mrb[0].mxu0 %v9899
        %v9995 = vpop.f32.mrb[0].mxu0
        %v9996 = vadd.f32 0.0, %v9995
        %v9997 = vpop.f32.mrb[0].mxu0
        %v9998 = vpop.f32.mrb[0].mxu0
        %v9999 = vadd.f32 0.0, %v9998
        %v10000 = vpop.f32.mrb[0].mxu0
        %10001 = vmatprep.mubr.bf16.mxu0 0
        %10002 = vmatmul.mubr.bf16.gmra.mrb[0].mxu0 %v9902
        %v10003 = vpop.f32.mrb[0].mxu0
        %v10004 = vadd.f32 0.0, %v10003
        %v10005 = vpop.f32.mrb[0].mxu0
        %v10006 = vpop.f32.mrb[0].mxu0
        %v10007 = vadd.f32 0.0, %v10006
        %v10008 = vpop.f32.mrb[0].mxu0
        %10009 = vmatprep.mubr.bf16.mxu0 0
        %10010 = vmatmul.mubr.bf16.gmra.mrb[0].mxu0 %v9905
        %v10011 = vpop.f32.mrb[0].mxu0
        %v10012 = vadd.f32 0.0, %v10011
        %v10013 = vpop.f32.mrb[0].mxu0
        %v10014 = vpop.f32.mrb[0].mxu0
        %v10015 = vadd.f32 0.0, %v10014
        %v10016 = vpop.f32.mrb[0].mxu0
        %10017 = vmatprep.mubr.bf16.mxu0 0
        %10018 = vmatmul.mubr.bf16.gmra.mrb[0].mxu0 %v9908
        %v10019 = vpop.f32.mrb[0].mxu0
        %v10020 = vadd.f32 0.0, %v10019
        %v10021 = vpop.f32.mrb[0].mxu0
        %v10022 = vpop.f32.mrb[0].mxu0
        %v10023 = vadd.f32 0.0, %v10022
        %v10024 = vpop.f32.mrb[0].mxu0
        %10025 = vmatprep.mubr.bf16.mxu0 0
        %10026 = vmatmul.mubr.bf16.gmra.mrb[0].mxu0 %v9911
        %v10027 = vpop.f32.mrb[0].mxu0
        %v10028 = vadd.f32 0.0, %v10027
        %v10029 = vpop.f32.mrb[0].mxu0
        %v10030 = vpop.f32.mrb[0].mxu0
        %v10031 = vadd.f32 0.0, %v10030
        %v10032 = vpop.f32.mrb[0].mxu0
        %10033 = vmatprep.mubr.bf16.mxu0 0
        %10034 = vmatmul.mubr.bf16.gmra.mrb[0].mxu0 %v9914
        %v10035 = vpop.f32.mrb[0].mxu0
        %v10036 = vadd.f32 0.0, %v10035
        %v10037 = vpop.f32.mrb[0].mxu0
        %v10038 = vpop.f32.mrb[0].mxu0
        %v10039 = vadd.f32 0.0, %v10038
        %v10040 = vpop.f32.mrb[0].mxu0
        %10041 = vmatprep.mubr.bf16.mxu0 0
        %10042 = vmatmul.mubr.bf16.gmra.mrb[0].mxu0 %v9917
        %v10043 = vpop.f32.mrb[0].mxu0
        %v10044 = vadd.f32 0.0, %v10043
        %v10045 = vpop.f32.mrb[0].mxu0
        %v10046 = vpop.f32.mrb[0].mxu0
        %v10047 = vadd.f32 0.0, %v10046
        %v10048 = vpop.f32.mrb[0].mxu0
        %10049 = vmatprep.mubr.bf16.mxu0 0
        %10050 = vmatmul.mubr.bf16.gmra.mrb[0].mxu0 %v9920
        %v10051 = vpop.f32.mrb[0].mxu0
        %v10052 = vadd.f32 0.0, %v10051
        %v10053 = vpop.f32.mrb[0].mxu0
        %v10054 = vpop.f32.mrb[0].mxu0
        %v10055 = vadd.f32 0.0, %v10054
        %v10056 = vpop.f32.mrb[0].mxu0
        %10057 = vmatprep.mubr.bf16.mxu0 0
        %10058 = vmatmul.mubr.bf16.gmra.mrb[0].mxu0 %v9923
        %v10059 = vpop.f32.mrb[0].mxu0
        %v10060 = vadd.f32 0.0, %v10059
        %v10061 = vpop.f32.mrb[0].mxu0
        %v10062 = vpop.f32.mrb[0].mxu0
        %v10063 = vadd.f32 0.0, %v10062
        %v10064 = vpop.f32.mrb[0].mxu0
        %10065 = vmatprep.mubr.bf16.mxu0 0
        %10066 = vmatmul.mubr.bf16.gmra.mrb[0].mxu0 %v9926
        %v10067 = vpop.f32.mrb[0].mxu0
        %v10068 = vadd.f32 0.0, %v10067
        %v10069 = vpop.f32.mrb[0].mxu0
        %v10070 = vpop.f32.mrb[0].mxu0
        %v10071 = vadd.f32 0.0, %v10070
        %v10072 = vpop.f32.mrb[0].mxu0
        %10073 = vmatprep.mubr.bf16.mxu0 0
        %10074 = vmatmul.mubr.bf16.gmra.mrb[0].mxu0 %v9929
        %v10075 = vpop.f32.mrb[0].mxu0
        %v10076 = vadd.f32 0.0, %v10075
        %v10077 = vpop.f32.mrb[0].mxu0
        %v10078 = vpop.f32.mrb[0].mxu0
        %v10079 = vadd.f32 0.0, %v10078
        %v10080 = vpop.f32.mrb[0].mxu0
        %10081 = vmatprep.mubr.bf16.mxu0 0
        %10082 = vmatmul.mubr.bf16.gmra.mrb[0].mxu0 %v9932
        %v10083 = vpop.f32.mrb[0].mxu0
        %v10084 = vadd.f32 0.0, %v10083
        %v10085 = vpop.f32.mrb[0].mxu0
        %v10086 = vpop.f32.mrb[0].mxu0
        %v10087 = vadd.f32 0.0, %v10086
        %v10088 = vpop.f32.mrb[0].mxu0
        %10089 = vmatprep.mubr.bf16.mxu0 0
        %10090 = vmatmul.mubr.bf16.gmra.mrb[0].mxu0 %v9935
        %v10091 = vpop.f32.mrb[0].mxu0
        %v10092 = vadd.f32 0.0, %v10091
        %v10093 = vpop.f32.mrb[0].mxu0
        %v10094 = vpop.f32.mrb[0].mxu0
        %v10095 = vadd.f32 0.0, %v10094
        %v10096 = vpop.f32.mrb[0].mxu0
        %10097 = vdwg.mxu0
        %v10098 = vadd.f32 %v9809, %v9972
        %v10099 = vadd.f32 %v9810, %v9975
        %v10100 = vadd.f32 %v9811, %v9980
        %v10101 = vadd.f32 %v9812, %v9983
        %v10102 = vadd.f32 %v9813, %v9988
        %v10103 = vadd.f32 %v9814, %v9991
        %v10104 = vadd.f32 %v9815, %v9996
        %v10105 = vadd.f32 %v9816, %v9999
        %v10106 = vadd.f32 %v9817, %v10004
        %v10107 = vadd.f32 %v9818, %v10007
        %v10108 = vadd.f32 %v9819, %v10012
        %v10109 = vadd.f32 %v9820, %v10015
        %v10110 = vadd.f32 %v9821, %v10020
        %v10111 = vadd.f32 %v9822, %v10023
        %v10112 = vadd.f32 %v9823, %v10028
        %v10113 = vadd.f32 %v9824, %v10031
        %v10114 = vadd.f32 %v9825, %v10036
        %v10115 = vadd.f32 %v9826, %v10039
        %v10116 = vadd.f32 %v9827, %v10044
        %v10117 = vadd.f32 %v9828, %v10047
        %v10118 = vadd.f32 %v9829, %v10052
        %v10119 = vadd.f32 %v9830, %v10055
        %v10120 = vadd.f32 %v9831, %v10060
        %v10121 = vadd.f32 %v9832, %v10063
        %v10122 = vadd.f32 %v9833, %v10068
        %v10123 = vadd.f32 %v9834, %v10071
        %v10124 = vadd.f32 %v9835, %v10076
        %v10125 = vadd.f32 %v9836, %v10079
        %v10126 = vadd.f32 %v9837, %v10084
        %v10127 = vadd.f32 %v9838, %v10087
        %v10128 = vadd.f32 %v9839, %v10092
        %v10129 = vadd.f32 %v9840, %v10095
        %s10130 = scalar_lea.vmem %s221, 1344
        %v10131 = vld [vmem:[%s10130] sm:$0xff]
        %v10132 = vld [vmem:[%s10130 + $0x8] sm:$0xff]
        %v10133 = vld [vmem:[%s10130 + $0x18] sm:$0xff]
        %v10134 = vld [vmem:[%s10130 + $0x20] sm:$0xff]
        %v10135 = vld [vmem:[%s10130 + $0x30] sm:$0xff]
        %v10136 = vld [vmem:[%s10130 + $0x38] sm:$0xff]
        %v10137 = vld [vmem:[%s10130 + $0x48] sm:$0xff]
        %v10138 = vld [vmem:[%s10130 + $0x50] sm:$0xff]
        %v10139 = vld [vmem:[%s10130 + $0x60] sm:$0xff]
        %v10140 = vld [vmem:[%s10130 + $0x68] sm:$0xff]
        %v10141 = vld [vmem:[%s10130 + $0x78] sm:$0xff]
        %v10142 = vld [vmem:[%s10130 + $0x80] sm:$0xff]
        %v10143 = vld [vmem:[%s10130 + $0x90] sm:$0xff]
        %v10144 = vld [vmem:[%s10130 + $0x98] sm:$0xff]
        %v10145 = vld [vmem:[%s10130 + $0xa8] sm:$0xff]
        %v10146 = vld [vmem:[%s10130 + $0xb0] sm:$0xff]
        %v10147 = vld [vmem:[%s10130 + $0xc0] sm:$0xff]
        %v10148 = vld [vmem:[%s10130 + $0xc8] sm:$0xff]
        %v10149 = vld [vmem:[%s10130 + $0xd8] sm:$0xff]
        %v10150 = vld [vmem:[%s10130 + $0xe0] sm:$0xff]
        %v10151 = vld [vmem:[%s10130 + $0xf0] sm:$0xff]
        %v10152 = vld [vmem:[%s10130 + $0xf8] sm:$0xff]
        %v10153 = vld [vmem:[%s10130 + $0x108] sm:$0xff]
        %v10154 = vld [vmem:[%s10130 + $0x110] sm:$0xff]
        %v10155 = vld [vmem:[%s10130 + $0x120] sm:$0xff]
        %v10156 = vld [vmem:[%s10130 + $0x128] sm:$0xff]
        %v10157 = vld [vmem:[%s10130 + $0x138] sm:$0xff]
        %v10158 = vld [vmem:[%s10130 + $0x140] sm:$0xff]
        %v10159 = vld [vmem:[%s10130 + $0x150] sm:$0xff]
        %v10160 = vld [vmem:[%s10130 + $0x158] sm:$0xff]
        %v10161 = vld [vmem:[%s10130 + $0x168] sm:$0xff]
        %v10162 = vld [vmem:[%s10130 + $0x170] sm:$0xff]
        %v10163 = vpack.c.bf16 %v10132, %v10131
        %v10164 = vpack.c.bf16 %v10134, %v10133
        %v10165 = vpack.c.bf16 %v10136, %v10135
        %v10166 = vpack.c.bf16 %v10138, %v10137
        %v10167 = vpack.c.bf16 %v10140, %v10139
        %v10168 = vpack.c.bf16 %v10142, %v10141
        %v10169 = vpack.c.bf16 %v10144, %v10143
        %v10170 = vpack.c.bf16 %v10146, %v10145
        %v10171 = vpack.c.bf16 %v10148, %v10147
        %v10172 = vpack.c.bf16 %v10150, %v10149
        %v10173 = vpack.c.bf16 %v10152, %v10151
        %v10174 = vpack.c.bf16 %v10154, %v10153
        %v10175 = vpack.c.bf16 %v10156, %v10155
        %v10176 = vpack.c.bf16 %v10158, %v10157
        %v10177 = vpack.c.bf16 %v10160, %v10159
        %v10178 = vpack.c.bf16 %v10162, %v10161
        %v10180 = vsel %vm279, %v10163, 0
        %v10183 = vsel %vm279, %v10164, 0
        %v10186 = vsel %vm279, %v10165, 0
        %v10189 = vsel %vm279, %v10166, 0
        %v10192 = vsel %vm279, %v10167, 0
        %v10195 = vsel %vm279, %v10168, 0
        %v10198 = vsel %vm279, %v10169, 0
        %v10201 = vsel %vm279, %v10170, 0
        %v10204 = vsel %vm279, %v10171, 0
        %v10207 = vsel %vm279, %v10172, 0
        %v10210 = vsel %vm279, %v10173, 0
        %v10213 = vsel %vm279, %v10174, 0
        %v10216 = vsel %vm279, %v10175, 0
        %v10219 = vsel %vm279, %v10176, 0
        %v10222 = vsel %vm279, %v10177, 0
        %v10225 = vsel %vm279, %v10178, 0
        %10227 = vmatprep.subr.bf16.mxu0 0
        %10228 = vmatpush1.bf16.msra.mxu0 %v2096
        %10229 = vmatprep.subr.bf16.mxu0 0
        %10230 = vmatpush1.bf16.msra.mxu0 0
        %10231 = vmatprep.subr.bf16.mxu0 0
        %10232 = vmatpush1.bf16.msra.mxu0 0
        %10233 = vmatprep.subr.bf16.mxu0 0
        %10234 = vmatpush1.bf16.msra.mxu0 0
        %10235 = vmatprep.subr.bf16.mxu0 0
        %10236 = vmatpush1.bf16.msra.mxu0 0
        %10237 = vmatprep.subr.bf16.mxu0 0
        %10238 = vmatpush1.bf16.msra.mxu0 0
        %10239 = vmatprep.subr.bf16.mxu0 0
        %10240 = vmatpush1.bf16.msra.mxu0 0
        %10241 = vmatprep.subr.bf16.mxu0 0
        %10242 = vmatpush1.bf16.msra.mxu0 0
        %10243 = vmatprep.subr.bf16.mxu0 0
        %10244 = vmatpush1.bf16.msra.mxu0 0
        %10245 = vmatprep.subr.bf16.mxu0 0
        %10246 = vmatpush1.bf16.msra.mxu0 0
        %10247 = vmatprep.subr.bf16.mxu0 0
        %10248 = vmatpush1.bf16.msra.mxu0 0
        %10249 = vmatprep.subr.bf16.mxu0 0
        %10250 = vmatpush1.bf16.msra.mxu0 0
        %10251 = vmatprep.subr.bf16.mxu0 0
        %10252 = vmatpush1.bf16.msra.mxu0 0
        %10253 = vmatprep.subr.bf16.mxu0 0
        %10254 = vmatpush1.bf16.msra.mxu0 0
        %10255 = vmatprep.subr.bf16.mxu0 0
        %10256 = vmatpush1.bf16.msra.mxu0 0
        %10257 = vmatprep.subr.bf16.mxu0 0
        %10258 = vmatpush1.bf16.msra.mxu0 0
        %10259 = vmatprep.mubr.bf16.mxu0 0
        %10260 = vmatmul.mubr.bf16.gmra.mrb[0].mxu0 %v10180
        %v10261 = vpop.f32.mrb[0].mxu0
        %v10262 = vadd.f32 0.0, %v10261
        %v10263 = vpop.f32.mrb[0].mxu0
        %v10264 = vpop.f32.mrb[0].mxu0
        %v10265 = vadd.f32 0.0, %v10264
        %v10266 = vpop.f32.mrb[0].mxu0
        %10267 = vmatprep.mubr.bf16.mxu0 0
        %10268 = vmatmul.mubr.bf16.gmra.mrb[0].mxu0 %v10183
        %v10269 = vpop.f32.mrb[0].mxu0
        %v10270 = vadd.f32 0.0, %v10269
        %v10271 = vpop.f32.mrb[0].mxu0
        %v10272 = vpop.f32.mrb[0].mxu0
        %v10273 = vadd.f32 0.0, %v10272
        %v10274 = vpop.f32.mrb[0].mxu0
        %10275 = vmatprep.mubr.bf16.mxu0 0
        %10276 = vmatmul.mubr.bf16.gmra.mrb[0].mxu0 %v10186
        %v10277 = vpop.f32.mrb[0].mxu0
        %v10278 = vadd.f32 0.0, %v10277
        %v10279 = vpop.f32.mrb[0].mxu0
        %v10280 = vpop.f32.mrb[0].mxu0
        %v10281 = vadd.f32 0.0, %v10280
        %v10282 = vpop.f32.mrb[0].mxu0
        %10283 = vmatprep.mubr.bf16.mxu0 0
        %10284 = vmatmul.mubr.bf16.gmra.mrb[0].mxu0 %v10189
        %v10285 = vpop.f32.mrb[0].mxu0
        %v10286 = vadd.f32 0.0, %v10285
        %v10287 = vpop.f32.mrb[0].mxu0
        %v10288 = vpop.f32.mrb[0].mxu0
        %v10289 = vadd.f32 0.0, %v10288
        %v10290 = vpop.f32.mrb[0].mxu0
        %10291 = vmatprep.mubr.bf16.mxu0 0
        %10292 = vmatmul.mubr.bf16.gmra.mrb[0].mxu0 %v10192
        %v10293 = vpop.f32.mrb[0].mxu0
        %v10294 = vadd.f32 0.0, %v10293
        %v10295 = vpop.f32.mrb[0].mxu0
        %v10296 = vpop.f32.mrb[0].mxu0
        %v10297 = vadd.f32 0.0, %v10296
        %v10298 = vpop.f32.mrb[0].mxu0
        %10299 = vmatprep.mubr.bf16.mxu0 0
        %10300 = vmatmul.mubr.bf16.gmra.mrb[0].mxu0 %v10195
        %v10301 = vpop.f32.mrb[0].mxu0
        %v10302 = vadd.f32 0.0, %v10301
        %v10303 = vpop.f32.mrb[0].mxu0
        %v10304 = vpop.f32.mrb[0].mxu0
        %v10305 = vadd.f32 0.0, %v10304
        %v10306 = vpop.f32.mrb[0].mxu0
        %10307 = vmatprep.mubr.bf16.mxu0 0
        %10308 = vmatmul.mubr.bf16.gmra.mrb[0].mxu0 %v10198
        %v10309 = vpop.f32.mrb[0].mxu0
        %v10310 = vadd.f32 0.0, %v10309
        %v10311 = vpop.f32.mrb[0].mxu0
        %v10312 = vpop.f32.mrb[0].mxu0
        %v10313 = vadd.f32 0.0, %v10312
        %v10314 = vpop.f32.mrb[0].mxu0
        %10315 = vmatprep.mubr.bf16.mxu0 0
        %10316 = vmatmul.mubr.bf16.gmra.mrb[0].mxu0 %v10201
        %v10317 = vpop.f32.mrb[0].mxu0
        %v10318 = vadd.f32 0.0, %v10317
        %v10319 = vpop.f32.mrb[0].mxu0
        %v10320 = vpop.f32.mrb[0].mxu0
        %v10321 = vadd.f32 0.0, %v10320
        %v10322 = vpop.f32.mrb[0].mxu0
        %10323 = vmatprep.mubr.bf16.mxu0 0
        %10324 = vmatmul.mubr.bf16.gmra.mrb[0].mxu0 %v10204
        %v10325 = vpop.f32.mrb[0].mxu0
        %v10326 = vadd.f32 0.0, %v10325
        %v10327 = vpop.f32.mrb[0].mxu0
        %v10328 = vpop.f32.mrb[0].mxu0
        %v10329 = vadd.f32 0.0, %v10328
        %v10330 = vpop.f32.mrb[0].mxu0
        %10331 = vmatprep.mubr.bf16.mxu0 0
        %10332 = vmatmul.mubr.bf16.gmra.mrb[0].mxu0 %v10207
        %v10333 = vpop.f32.mrb[0].mxu0
        %v10334 = vadd.f32 0.0, %v10333
        %v10335 = vpop.f32.mrb[0].mxu0
        %v10336 = vpop.f32.mrb[0].mxu0
        %v10337 = vadd.f32 0.0, %v10336
        %v10338 = vpop.f32.mrb[0].mxu0
        %10339 = vmatprep.mubr.bf16.mxu0 0
        %10340 = vmatmul.mubr.bf16.gmra.mrb[0].mxu0 %v10210
        %v10341 = vpop.f32.mrb[0].mxu0
        %v10342 = vadd.f32 0.0, %v10341
        %v10343 = vpop.f32.mrb[0].mxu0
        %v10344 = vpop.f32.mrb[0].mxu0
        %v10345 = vadd.f32 0.0, %v10344
        %v10346 = vpop.f32.mrb[0].mxu0
        %10347 = vmatprep.mubr.bf16.mxu0 0
        %10348 = vmatmul.mubr.bf16.gmra.mrb[0].mxu0 %v10213
        %v10349 = vpop.f32.mrb[0].mxu0
        %v10350 = vadd.f32 0.0, %v10349
        %v10351 = vpop.f32.mrb[0].mxu0
        %v10352 = vpop.f32.mrb[0].mxu0
        %v10353 = vadd.f32 0.0, %v10352
        %v10354 = vpop.f32.mrb[0].mxu0
        %10355 = vmatprep.mubr.bf16.mxu0 0
        %10356 = vmatmul.mubr.bf16.gmra.mrb[0].mxu0 %v10216
        %v10357 = vpop.f32.mrb[0].mxu0
        %v10358 = vadd.f32 0.0, %v10357
        %v10359 = vpop.f32.mrb[0].mxu0
        %v10360 = vpop.f32.mrb[0].mxu0
        %v10361 = vadd.f32 0.0, %v10360
        %v10362 = vpop.f32.mrb[0].mxu0
        %10363 = vmatprep.mubr.bf16.mxu0 0
        %10364 = vmatmul.mubr.bf16.gmra.mrb[0].mxu0 %v10219
        %v10365 = vpop.f32.mrb[0].mxu0
        %v10366 = vadd.f32 0.0, %v10365
        %v10367 = vpop.f32.mrb[0].mxu0
        %v10368 = vpop.f32.mrb[0].mxu0
        %v10369 = vadd.f32 0.0, %v10368
        %v10370 = vpop.f32.mrb[0].mxu0
        %10371 = vmatprep.mubr.bf16.mxu0 0
        %10372 = vmatmul.mubr.bf16.gmra.mrb[0].mxu0 %v10222
        %v10373 = vpop.f32.mrb[0].mxu0
        %v10374 = vadd.f32 0.0, %v10373
        %v10375 = vpop.f32.mrb[0].mxu0
        %v10376 = vpop.f32.mrb[0].mxu0
        %v10377 = vadd.f32 0.0, %v10376
        %v10378 = vpop.f32.mrb[0].mxu0
        %10379 = vmatprep.mubr.bf16.mxu0 0
        %10380 = vmatmul.mubr.bf16.gmra.mrb[0].mxu0 %v10225
        %v10381 = vpop.f32.mrb[0].mxu0
        %v10382 = vadd.f32 0.0, %v10381
        %v10383 = vpop.f32.mrb[0].mxu0
        %v10384 = vpop.f32.mrb[0].mxu0
        %v10385 = vadd.f32 0.0, %v10384
        %v10386 = vpop.f32.mrb[0].mxu0
        %10387 = vdwg.mxu0
        %v10388 = vadd.f32 %v10098, %v10262
        %v10389 = vadd.f32 %v10099, %v10265
        %v10390 = vadd.f32 %v10100, %v10270
        %v10391 = vadd.f32 %v10101, %v10273
        %v10392 = vadd.f32 %v10102, %v10278
        %v10393 = vadd.f32 %v10103, %v10281
        %v10394 = vadd.f32 %v10104, %v10286
        %v10395 = vadd.f32 %v10105, %v10289
        %v10396 = vadd.f32 %v10106, %v10294
        %v10397 = vadd.f32 %v10107, %v10297
        %v10398 = vadd.f32 %v10108, %v10302
        %v10399 = vadd.f32 %v10109, %v10305
        %v10400 = vadd.f32 %v10110, %v10310
        %v10401 = vadd.f32 %v10111, %v10313
        %v10402 = vadd.f32 %v10112, %v10318
        %v10403 = vadd.f32 %v10113, %v10321
        %v10404 = vadd.f32 %v10114, %v10326
        %v10405 = vadd.f32 %v10115, %v10329
        %v10406 = vadd.f32 %v10116, %v10334
        %v10407 = vadd.f32 %v10117, %v10337
        %v10408 = vadd.f32 %v10118, %v10342
        %v10409 = vadd.f32 %v10119, %v10345
        %v10410 = vadd.f32 %v10120, %v10350
        %v10411 = vadd.f32 %v10121, %v10353
        %v10412 = vadd.f32 %v10122, %v10358
        %v10413 = vadd.f32 %v10123, %v10361
        %v10414 = vadd.f32 %v10124, %v10366
        %v10415 = vadd.f32 %v10125, %v10369
        %v10416 = vadd.f32 %v10126, %v10374
        %v10417 = vadd.f32 %v10127, %v10377
        %v10418 = vadd.f32 %v10128, %v10382
        %v10419 = vadd.f32 %v10129, %v10385
        %v10420 = vld [vmem:[%s10130 + $0x1] sm:$0xff]
        %v10421 = vld [vmem:[%s10130 + $0x9] sm:$0xff]
        %v10422 = vld [vmem:[%s10130 + $0x19] sm:$0xff]
        %v10423 = vld [vmem:[%s10130 + $0x21] sm:$0xff]
        %v10424 = vld [vmem:[%s10130 + $0x31] sm:$0xff]
        %v10425 = vld [vmem:[%s10130 + $0x39] sm:$0xff]
        %v10426 = vld [vmem:[%s10130 + $0x49] sm:$0xff]
        %v10427 = vld [vmem:[%s10130 + $0x51] sm:$0xff]
        %v10428 = vld [vmem:[%s10130 + $0x61] sm:$0xff]
        %v10429 = vld [vmem:[%s10130 + $0x69] sm:$0xff]
        %v10430 = vld [vmem:[%s10130 + $0x79] sm:$0xff]
        %v10431 = vld [vmem:[%s10130 + $0x81] sm:$0xff]
        %v10432 = vld [vmem:[%s10130 + $0x91] sm:$0xff]
        %v10433 = vld [vmem:[%s10130 + $0x99] sm:$0xff]
        %v10434 = vld [vmem:[%s10130 + $0xa9] sm:$0xff]
        %v10435 = vld [vmem:[%s10130 + $0xb1] sm:$0xff]
        %v10436 = vld [vmem:[%s10130 + $0xc1] sm:$0xff]
        %v10437 = vld [vmem:[%s10130 + $0xc9] sm:$0xff]
        %v10438 = vld [vmem:[%s10130 + $0xd9] sm:$0xff]
        %v10439 = vld [vmem:[%s10130 + $0xe1] sm:$0xff]
        %v10440 = vld [vmem:[%s10130 + $0xf1] sm:$0xff]
        %v10441 = vld [vmem:[%s10130 + $0xf9] sm:$0xff]
        %v10442 = vld [vmem:[%s10130 + $0x109] sm:$0xff]
        %v10443 = vld [vmem:[%s10130 + $0x111] sm:$0xff]
        %v10444 = vld [vmem:[%s10130 + $0x121] sm:$0xff]
        %v10445 = vld [vmem:[%s10130 + $0x129] sm:$0xff]
        %v10446 = vld [vmem:[%s10130 + $0x139] sm:$0xff]
        %v10447 = vld [vmem:[%s10130 + $0x141] sm:$0xff]
        %v10448 = vld [vmem:[%s10130 + $0x151] sm:$0xff]
        %v10449 = vld [vmem:[%s10130 + $0x159] sm:$0xff]
        %v10450 = vld [vmem:[%s10130 + $0x169] sm:$0xff]
        %v10451 = vld [vmem:[%s10130 + $0x171] sm:$0xff]
        %v10452 = vpack.c.bf16 %v10421, %v10420
        %v10453 = vpack.c.bf16 %v10423, %v10422
        %v10454 = vpack.c.bf16 %v10425, %v10424
        %v10455 = vpack.c.bf16 %v10427, %v10426
        %v10456 = vpack.c.bf16 %v10429, %v10428
        %v10457 = vpack.c.bf16 %v10431, %v10430
        %v10458 = vpack.c.bf16 %v10433, %v10432
        %v10459 = vpack.c.bf16 %v10435, %v10434
        %v10460 = vpack.c.bf16 %v10437, %v10436
        %v10461 = vpack.c.bf16 %v10439, %v10438
        %v10462 = vpack.c.bf16 %v10441, %v10440
        %v10463 = vpack.c.bf16 %v10443, %v10442
        %v10464 = vpack.c.bf16 %v10445, %v10444
        %v10465 = vpack.c.bf16 %v10447, %v10446
        %v10466 = vpack.c.bf16 %v10449, %v10448
        %v10467 = vpack.c.bf16 %v10451, %v10450
        %v10469 = vsel %vm279, %v10452, 0
        %v10472 = vsel %vm279, %v10453, 0
        %v10475 = vsel %vm279, %v10454, 0
        %v10478 = vsel %vm279, %v10455, 0
        %v10481 = vsel %vm279, %v10456, 0
        %v10484 = vsel %vm279, %v10457, 0
        %v10487 = vsel %vm279, %v10458, 0
        %v10490 = vsel %vm279, %v10459, 0
        %v10493 = vsel %vm279, %v10460, 0
        %v10496 = vsel %vm279, %v10461, 0
        %v10499 = vsel %vm279, %v10462, 0
        %v10502 = vsel %vm279, %v10463, 0
        %v10505 = vsel %vm279, %v10464, 0
        %v10508 = vsel %vm279, %v10465, 0
        %v10511 = vsel %vm279, %v10466, 0
        %v10514 = vsel %vm279, %v10467, 0
        %10516 = vmatprep.subr.bf16.mxu0 0
        %10517 = vmatpush1.bf16.msra.mxu0 %v2390
        %10518 = vmatprep.subr.bf16.mxu0 0
        %10519 = vmatpush1.bf16.msra.mxu0 0
        %10520 = vmatprep.subr.bf16.mxu0 0
        %10521 = vmatpush1.bf16.msra.mxu0 0
        %10522 = vmatprep.subr.bf16.mxu0 0
        %10523 = vmatpush1.bf16.msra.mxu0 0
        %10524 = vmatprep.subr.bf16.mxu0 0
        %10525 = vmatpush1.bf16.msra.mxu0 0
        %10526 = vmatprep.subr.bf16.mxu0 0
        %10527 = vmatpush1.bf16.msra.mxu0 0
        %10528 = vmatprep.subr.bf16.mxu0 0
        %10529 = vmatpush1.bf16.msra.mxu0 0
        %10530 = vmatprep.subr.bf16.mxu0 0
        %10531 = vmatpush1.bf16.msra.mxu0 0
        %10532 = vmatprep.subr.bf16.mxu0 0
        %10533 = vmatpush1.bf16.msra.mxu0 0
        %10534 = vmatprep.subr.bf16.mxu0 0
        %10535 = vmatpush1.bf16.msra.mxu0 0
        %10536 = vmatprep.subr.bf16.mxu0 0
        %10537 = vmatpush1.bf16.msra.mxu0 0
        %10538 = vmatprep.subr.bf16.mxu0 0
        %10539 = vmatpush1.bf16.msra.mxu0 0
        %10540 = vmatprep.subr.bf16.mxu0 0
        %10541 = vmatpush1.bf16.msra.mxu0 0
        %10542 = vmatprep.subr.bf16.mxu0 0
        %10543 = vmatpush1.bf16.msra.mxu0 0
        %10544 = vmatprep.subr.bf16.mxu0 0
        %10545 = vmatpush1.bf16.msra.mxu0 0
        %10546 = vmatprep.subr.bf16.mxu0 0
        %10547 = vmatpush1.bf16.msra.mxu0 0
        %10548 = vmatprep.mubr.bf16.mxu0 0
        %10549 = vmatmul.mubr.bf16.gmra.mrb[0].mxu0 %v10469
        %v10550 = vpop.f32.mrb[0].mxu0
        %v10551 = vadd.f32 0.0, %v10550
        %v10552 = vpop.f32.mrb[0].mxu0
        %v10553 = vpop.f32.mrb[0].mxu0
        %v10554 = vadd.f32 0.0, %v10553
        %v10555 = vpop.f32.mrb[0].mxu0
        %10556 = vmatprep.mubr.bf16.mxu0 0
        %10557 = vmatmul.mubr.bf16.gmra.mrb[0].mxu0 %v10472
        %v10558 = vpop.f32.mrb[0].mxu0
        %v10559 = vadd.f32 0.0, %v10558
        %v10560 = vpop.f32.mrb[0].mxu0
        %v10561 = vpop.f32.mrb[0].mxu0
        %v10562 = vadd.f32 0.0, %v10561
        %v10563 = vpop.f32.mrb[0].mxu0
        %10564 = vmatprep.mubr.bf16.mxu0 0
        %10565 = vmatmul.mubr.bf16.gmra.mrb[0].mxu0 %v10475
        %v10566 = vpop.f32.mrb[0].mxu0
        %v10567 = vadd.f32 0.0, %v10566
        %v10568 = vpop.f32.mrb[0].mxu0
        %v10569 = vpop.f32.mrb[0].mxu0
        %v10570 = vadd.f32 0.0, %v10569
        %v10571 = vpop.f32.mrb[0].mxu0
        %10572 = vmatprep.mubr.bf16.mxu0 0
        %10573 = vmatmul.mubr.bf16.gmra.mrb[0].mxu0 %v10478
        %v10574 = vpop.f32.mrb[0].mxu0
        %v10575 = vadd.f32 0.0, %v10574
        %v10576 = vpop.f32.mrb[0].mxu0
        %v10577 = vpop.f32.mrb[0].mxu0
        %v10578 = vadd.f32 0.0, %v10577
        %v10579 = vpop.f32.mrb[0].mxu0
        %10580 = vmatprep.mubr.bf16.mxu0 0
        %10581 = vmatmul.mubr.bf16.gmra.mrb[0].mxu0 %v10481
        %v10582 = vpop.f32.mrb[0].mxu0
        %v10583 = vadd.f32 0.0, %v10582
        %v10584 = vpop.f32.mrb[0].mxu0
        %v10585 = vpop.f32.mrb[0].mxu0
        %v10586 = vadd.f32 0.0, %v10585
        %v10587 = vpop.f32.mrb[0].mxu0
        %10588 = vmatprep.mubr.bf16.mxu0 0
        %10589 = vmatmul.mubr.bf16.gmra.mrb[0].mxu0 %v10484
        %v10590 = vpop.f32.mrb[0].mxu0
        %v10591 = vadd.f32 0.0, %v10590
        %v10592 = vpop.f32.mrb[0].mxu0
        %v10593 = vpop.f32.mrb[0].mxu0
        %v10594 = vadd.f32 0.0, %v10593
        %v10595 = vpop.f32.mrb[0].mxu0
        %10596 = vmatprep.mubr.bf16.mxu0 0
        %10597 = vmatmul.mubr.bf16.gmra.mrb[0].mxu0 %v10487
        %v10598 = vpop.f32.mrb[0].mxu0
        %v10599 = vadd.f32 0.0, %v10598
        %v10600 = vpop.f32.mrb[0].mxu0
        %v10601 = vpop.f32.mrb[0].mxu0
        %v10602 = vadd.f32 0.0, %v10601
        %v10603 = vpop.f32.mrb[0].mxu0
        %10604 = vmatprep.mubr.bf16.mxu0 0
        %10605 = vmatmul.mubr.bf16.gmra.mrb[0].mxu0 %v10490
        %v10606 = vpop.f32.mrb[0].mxu0
        %v10607 = vadd.f32 0.0, %v10606
        %v10608 = vpop.f32.mrb[0].mxu0
        %v10609 = vpop.f32.mrb[0].mxu0
        %v10610 = vadd.f32 0.0, %v10609
        %v10611 = vpop.f32.mrb[0].mxu0
        %10612 = vmatprep.mubr.bf16.mxu0 0
        %10613 = vmatmul.mubr.bf16.gmra.mrb[0].mxu0 %v10493
        %v10614 = vpop.f32.mrb[0].mxu0
        %v10615 = vadd.f32 0.0, %v10614
        %v10616 = vpop.f32.mrb[0].mxu0
        %v10617 = vpop.f32.mrb[0].mxu0
        %v10618 = vadd.f32 0.0, %v10617
        %v10619 = vpop.f32.mrb[0].mxu0
        %10620 = vmatprep.mubr.bf16.mxu0 0
        %10621 = vmatmul.mubr.bf16.gmra.mrb[0].mxu0 %v10496
        %v10622 = vpop.f32.mrb[0].mxu0
        %v10623 = vadd.f32 0.0, %v10622
        %v10624 = vpop.f32.mrb[0].mxu0
        %v10625 = vpop.f32.mrb[0].mxu0
        %v10626 = vadd.f32 0.0, %v10625
        %v10627 = vpop.f32.mrb[0].mxu0
        %10628 = vmatprep.mubr.bf16.mxu0 0
        %10629 = vmatmul.mubr.bf16.gmra.mrb[0].mxu0 %v10499
        %v10630 = vpop.f32.mrb[0].mxu0
        %v10631 = vadd.f32 0.0, %v10630
        %v10632 = vpop.f32.mrb[0].mxu0
        %v10633 = vpop.f32.mrb[0].mxu0
        %v10634 = vadd.f32 0.0, %v10633
        %v10635 = vpop.f32.mrb[0].mxu0
        %10636 = vmatprep.mubr.bf16.mxu0 0
        %10637 = vmatmul.mubr.bf16.gmra.mrb[0].mxu0 %v10502
        %v10638 = vpop.f32.mrb[0].mxu0
        %v10639 = vadd.f32 0.0, %v10638
        %v10640 = vpop.f32.mrb[0].mxu0
        %v10641 = vpop.f32.mrb[0].mxu0
        %v10642 = vadd.f32 0.0, %v10641
        %v10643 = vpop.f32.mrb[0].mxu0
        %10644 = vmatprep.mubr.bf16.mxu0 0
        %10645 = vmatmul.mubr.bf16.gmra.mrb[0].mxu0 %v10505
        %v10646 = vpop.f32.mrb[0].mxu0
        %v10647 = vadd.f32 0.0, %v10646
        %v10648 = vpop.f32.mrb[0].mxu0
        %v10649 = vpop.f32.mrb[0].mxu0
        %v10650 = vadd.f32 0.0, %v10649
        %v10651 = vpop.f32.mrb[0].mxu0
        %10652 = vmatprep.mubr.bf16.mxu0 0
        %10653 = vmatmul.mubr.bf16.gmra.mrb[0].mxu0 %v10508
        %v10654 = vpop.f32.mrb[0].mxu0
        %v10655 = vadd.f32 0.0, %v10654
        %v10656 = vpop.f32.mrb[0].mxu0
        %v10657 = vpop.f32.mrb[0].mxu0
        %v10658 = vadd.f32 0.0, %v10657
        %v10659 = vpop.f32.mrb[0].mxu0
        %10660 = vmatprep.mubr.bf16.mxu0 0
        %10661 = vmatmul.mubr.bf16.gmra.mrb[0].mxu0 %v10511
        %v10662 = vpop.f32.mrb[0].mxu0
        %v10663 = vadd.f32 0.0, %v10662
        %v10664 = vpop.f32.mrb[0].mxu0
        %v10665 = vpop.f32.mrb[0].mxu0
        %v10666 = vadd.f32 0.0, %v10665
        %v10667 = vpop.f32.mrb[0].mxu0
        %10668 = vmatprep.mubr.bf16.mxu0 0
        %10669 = vmatmul.mubr.bf16.gmra.mrb[0].mxu0 %v10514
        %v10670 = vpop.f32.mrb[0].mxu0
        %v10671 = vadd.f32 0.0, %v10670
        %v10672 = vpop.f32.mrb[0].mxu0
        %v10673 = vpop.f32.mrb[0].mxu0
        %v10674 = vadd.f32 0.0, %v10673
        %v10675 = vpop.f32.mrb[0].mxu0
        %10676 = vdwg.mxu0
        %v10677 = vadd.f32 %v10388, %v10551
        %v10678 = vadd.f32 %v10389, %v10554
        %v10679 = vadd.f32 %v10390, %v10559
        %v10680 = vadd.f32 %v10391, %v10562
        %v10681 = vadd.f32 %v10392, %v10567
        %v10682 = vadd.f32 %v10393, %v10570
        %v10683 = vadd.f32 %v10394, %v10575
        %v10684 = vadd.f32 %v10395, %v10578
        %v10685 = vadd.f32 %v10396, %v10583
        %v10686 = vadd.f32 %v10397, %v10586
        %v10687 = vadd.f32 %v10398, %v10591
        %v10688 = vadd.f32 %v10399, %v10594
        %v10689 = vadd.f32 %v10400, %v10599
        %v10690 = vadd.f32 %v10401, %v10602
        %v10691 = vadd.f32 %v10402, %v10607
        %v10692 = vadd.f32 %v10403, %v10610
        %v10693 = vadd.f32 %v10404, %v10615
        %v10694 = vadd.f32 %v10405, %v10618
        %v10695 = vadd.f32 %v10406, %v10623
        %v10696 = vadd.f32 %v10407, %v10626
        %v10697 = vadd.f32 %v10408, %v10631
        %v10698 = vadd.f32 %v10409, %v10634
        %v10699 = vadd.f32 %v10410, %v10639
        %v10700 = vadd.f32 %v10411, %v10642
        %v10701 = vadd.f32 %v10412, %v10647
        %v10702 = vadd.f32 %v10413, %v10650
        %v10703 = vadd.f32 %v10414, %v10655
        %v10704 = vadd.f32 %v10415, %v10658
        %v10705 = vadd.f32 %v10416, %v10663
        %v10706 = vadd.f32 %v10417, %v10666
        %v10707 = vadd.f32 %v10418, %v10671
        %v10708 = vadd.f32 %v10419, %v10674
        %v10709 = vld [vmem:[%s10130 + $0x2] sm:$0xff]
        %v10710 = vld [vmem:[%s10130 + $0xa] sm:$0xff]
        %v10711 = vld [vmem:[%s10130 + $0x1a] sm:$0xff]
        %v10712 = vld [vmem:[%s10130 + $0x22] sm:$0xff]
        %v10713 = vld [vmem:[%s10130 + $0x32] sm:$0xff]
        %v10714 = vld [vmem:[%s10130 + $0x3a] sm:$0xff]
        %v10715 = vld [vmem:[%s10130 + $0x4a] sm:$0xff]
        %v10716 = vld [vmem:[%s10130 + $0x52] sm:$0xff]
        %v10717 = vld [vmem:[%s10130 + $0x62] sm:$0xff]
        %v10718 = vld [vmem:[%s10130 + $0x6a] sm:$0xff]
        %v10719 = vld [vmem:[%s10130 + $0x7a] sm:$0xff]
        %v10720 = vld [vmem:[%s10130 + $0x82] sm:$0xff]
        %v10721 = vld [vmem:[%s10130 + $0x92] sm:$0xff]
        %v10722 = vld [vmem:[%s10130 + $0x9a] sm:$0xff]
        %v10723 = vld [vmem:[%s10130 + $0xaa] sm:$0xff]
        %v10724 = vld [vmem:[%s10130 + $0xb2] sm:$0xff]
        %v10725 = vld [vmem:[%s10130 + $0xc2] sm:$0xff]
        %v10726 = vld [vmem:[%s10130 + $0xca] sm:$0xff]
        %v10727 = vld [vmem:[%s10130 + $0xda] sm:$0xff]
        %v10728 = vld [vmem:[%s10130 + $0xe2] sm:$0xff]
        %v10729 = vld [vmem:[%s10130 + $0xf2] sm:$0xff]
        %v10730 = vld [vmem:[%s10130 + $0xfa] sm:$0xff]
        %v10731 = vld [vmem:[%s10130 + $0x10a] sm:$0xff]
        %v10732 = vld [vmem:[%s10130 + $0x112] sm:$0xff]
        %v10733 = vld [vmem:[%s10130 + $0x122] sm:$0xff]
        %v10734 = vld [vmem:[%s10130 + $0x12a] sm:$0xff]
        %v10735 = vld [vmem:[%s10130 + $0x13a] sm:$0xff]
        %v10736 = vld [vmem:[%s10130 + $0x142] sm:$0xff]
        %v10737 = vld [vmem:[%s10130 + $0x152] sm:$0xff]
        %v10738 = vld [vmem:[%s10130 + $0x15a] sm:$0xff]
        %v10739 = vld [vmem:[%s10130 + $0x16a] sm:$0xff]
        %v10740 = vld [vmem:[%s10130 + $0x172] sm:$0xff]
        %v10741 = vpack.c.bf16 %v10710, %v10709
        %v10742 = vpack.c.bf16 %v10712, %v10711
        %v10743 = vpack.c.bf16 %v10714, %v10713
        %v10744 = vpack.c.bf16 %v10716, %v10715
        %v10745 = vpack.c.bf16 %v10718, %v10717
        %v10746 = vpack.c.bf16 %v10720, %v10719
        %v10747 = vpack.c.bf16 %v10722, %v10721
        %v10748 = vpack.c.bf16 %v10724, %v10723
        %v10749 = vpack.c.bf16 %v10726, %v10725
        %v10750 = vpack.c.bf16 %v10728, %v10727
        %v10751 = vpack.c.bf16 %v10730, %v10729
        %v10752 = vpack.c.bf16 %v10732, %v10731
        %v10753 = vpack.c.bf16 %v10734, %v10733
        %v10754 = vpack.c.bf16 %v10736, %v10735
        %v10755 = vpack.c.bf16 %v10738, %v10737
        %v10756 = vpack.c.bf16 %v10740, %v10739
        %v10758 = vsel %vm279, %v10741, 0
        %v10761 = vsel %vm279, %v10742, 0
        %v10764 = vsel %vm279, %v10743, 0
        %v10767 = vsel %vm279, %v10744, 0
        %v10770 = vsel %vm279, %v10745, 0
        %v10773 = vsel %vm279, %v10746, 0
        %v10776 = vsel %vm279, %v10747, 0
        %v10779 = vsel %vm279, %v10748, 0
        %v10782 = vsel %vm279, %v10749, 0
        %v10785 = vsel %vm279, %v10750, 0
        %v10788 = vsel %vm279, %v10751, 0
        %v10791 = vsel %vm279, %v10752, 0
        %v10794 = vsel %vm279, %v10753, 0
        %v10797 = vsel %vm279, %v10754, 0
        %v10800 = vsel %vm279, %v10755, 0
        %v10803 = vsel %vm279, %v10756, 0
        %10805 = vmatprep.subr.bf16.mxu0 0
        %10806 = vmatpush1.bf16.msra.mxu0 %v2684
        %10807 = vmatprep.subr.bf16.mxu0 0
        %10808 = vmatpush1.bf16.msra.mxu0 0
        %10809 = vmatprep.subr.bf16.mxu0 0
        %10810 = vmatpush1.bf16.msra.mxu0 0
        %10811 = vmatprep.subr.bf16.mxu0 0
        %10812 = vmatpush1.bf16.msra.mxu0 0
        %10813 = vmatprep.subr.bf16.mxu0 0
        %10814 = vmatpush1.bf16.msra.mxu0 0
        %10815 = vmatprep.subr.bf16.mxu0 0
        %10816 = vmatpush1.bf16.msra.mxu0 0
        %10817 = vmatprep.subr.bf16.mxu0 0
        %10818 = vmatpush1.bf16.msra.mxu0 0
        %10819 = vmatprep.subr.bf16.mxu0 0
        %10820 = vmatpush1.bf16.msra.mxu0 0
        %10821 = vmatprep.subr.bf16.mxu0 0
        %10822 = vmatpush1.bf16.msra.mxu0 0
        %10823 = vmatprep.subr.bf16.mxu0 0
        %10824 = vmatpush1.bf16.msra.mxu0 0
        %10825 = vmatprep.subr.bf16.mxu0 0
        %10826 = vmatpush1.bf16.msra.mxu0 0
        %10827 = vmatprep.subr.bf16.mxu0 0
        %10828 = vmatpush1.bf16.msra.mxu0 0
        %10829 = vmatprep.subr.bf16.mxu0 0
        %10830 = vmatpush1.bf16.msra.mxu0 0
        %10831 = vmatprep.subr.bf16.mxu0 0
        %10832 = vmatpush1.bf16.msra.mxu0 0
        %10833 = vmatprep.subr.bf16.mxu0 0
        %10834 = vmatpush1.bf16.msra.mxu0 0
        %10835 = vmatprep.subr.bf16.mxu0 0
        %10836 = vmatpush1.bf16.msra.mxu0 0
        %10837 = vmatprep.mubr.bf16.mxu0 0
        %10838 = vmatmul.mubr.bf16.gmra.mrb[0].mxu0 %v10758
        %v10839 = vpop.f32.mrb[0].mxu0
        %v10840 = vadd.f32 0.0, %v10839
        %v10841 = vpop.f32.mrb[0].mxu0
        %v10842 = vpop.f32.mrb[0].mxu0
        %v10843 = vadd.f32 0.0, %v10842
        %v10844 = vpop.f32.mrb[0].mxu0
        %10845 = vmatprep.mubr.bf16.mxu0 0
        %10846 = vmatmul.mubr.bf16.gmra.mrb[0].mxu0 %v10761
        %v10847 = vpop.f32.mrb[0].mxu0
        %v10848 = vadd.f32 0.0, %v10847
        %v10849 = vpop.f32.mrb[0].mxu0
        %v10850 = vpop.f32.mrb[0].mxu0
        %v10851 = vadd.f32 0.0, %v10850
        %v10852 = vpop.f32.mrb[0].mxu0
        %10853 = vmatprep.mubr.bf16.mxu0 0
        %10854 = vmatmul.mubr.bf16.gmra.mrb[0].mxu0 %v10764
        %v10855 = vpop.f32.mrb[0].mxu0
        %v10856 = vadd.f32 0.0, %v10855
        %v10857 = vpop.f32.mrb[0].mxu0
        %v10858 = vpop.f32.mrb[0].mxu0
        %v10859 = vadd.f32 0.0, %v10858
        %v10860 = vpop.f32.mrb[0].mxu0
        %10861 = vmatprep.mubr.bf16.mxu0 0
        %10862 = vmatmul.mubr.bf16.gmra.mrb[0].mxu0 %v10767
        %v10863 = vpop.f32.mrb[0].mxu0
        %v10864 = vadd.f32 0.0, %v10863
        %v10865 = vpop.f32.mrb[0].mxu0
        %v10866 = vpop.f32.mrb[0].mxu0
        %v10867 = vadd.f32 0.0, %v10866
        %v10868 = vpop.f32.mrb[0].mxu0
        %10869 = vmatprep.mubr.bf16.mxu0 0
        %10870 = vmatmul.mubr.bf16.gmra.mrb[0].mxu0 %v10770
        %v10871 = vpop.f32.mrb[0].mxu0
        %v10872 = vadd.f32 0.0, %v10871
        %v10873 = vpop.f32.mrb[0].mxu0
        %v10874 = vpop.f32.mrb[0].mxu0
        %v10875 = vadd.f32 0.0, %v10874
        %v10876 = vpop.f32.mrb[0].mxu0
        %10877 = vmatprep.mubr.bf16.mxu0 0
        %10878 = vmatmul.mubr.bf16.gmra.mrb[0].mxu0 %v10773
        %v10879 = vpop.f32.mrb[0].mxu0
        %v10880 = vadd.f32 0.0, %v10879
        %v10881 = vpop.f32.mrb[0].mxu0
        %v10882 = vpop.f32.mrb[0].mxu0
        %v10883 = vadd.f32 0.0, %v10882
        %v10884 = vpop.f32.mrb[0].mxu0
        %10885 = vmatprep.mubr.bf16.mxu0 0
        %10886 = vmatmul.mubr.bf16.gmra.mrb[0].mxu0 %v10776
        %v10887 = vpop.f32.mrb[0].mxu0
        %v10888 = vadd.f32 0.0, %v10887
        %v10889 = vpop.f32.mrb[0].mxu0
        %v10890 = vpop.f32.mrb[0].mxu0
        %v10891 = vadd.f32 0.0, %v10890
        %v10892 = vpop.f32.mrb[0].mxu0
        %10893 = vmatprep.mubr.bf16.mxu0 0
        %10894 = vmatmul.mubr.bf16.gmra.mrb[0].mxu0 %v10779
        %v10895 = vpop.f32.mrb[0].mxu0
        %v10896 = vadd.f32 0.0, %v10895
        %v10897 = vpop.f32.mrb[0].mxu0
        %v10898 = vpop.f32.mrb[0].mxu0
        %v10899 = vadd.f32 0.0, %v10898
        %v10900 = vpop.f32.mrb[0].mxu0
        %10901 = vmatprep.mubr.bf16.mxu0 0
        %10902 = vmatmul.mubr.bf16.gmra.mrb[0].mxu0 %v10782
        %v10903 = vpop.f32.mrb[0].mxu0
        %v10904 = vadd.f32 0.0, %v10903
        %v10905 = vpop.f32.mrb[0].mxu0
        %v10906 = vpop.f32.mrb[0].mxu0
        %v10907 = vadd.f32 0.0, %v10906
        %v10908 = vpop.f32.mrb[0].mxu0
        %10909 = vmatprep.mubr.bf16.mxu0 0
        %10910 = vmatmul.mubr.bf16.gmra.mrb[0].mxu0 %v10785
        %v10911 = vpop.f32.mrb[0].mxu0
        %v10912 = vadd.f32 0.0, %v10911
        %v10913 = vpop.f32.mrb[0].mxu0
        %v10914 = vpop.f32.mrb[0].mxu0
        %v10915 = vadd.f32 0.0, %v10914
        %v10916 = vpop.f32.mrb[0].mxu0
        %10917 = vmatprep.mubr.bf16.mxu0 0
        %10918 = vmatmul.mubr.bf16.gmra.mrb[0].mxu0 %v10788
        %v10919 = vpop.f32.mrb[0].mxu0
        %v10920 = vadd.f32 0.0, %v10919
        %v10921 = vpop.f32.mrb[0].mxu0
        %v10922 = vpop.f32.mrb[0].mxu0
        %v10923 = vadd.f32 0.0, %v10922
        %v10924 = vpop.f32.mrb[0].mxu0
        %10925 = vmatprep.mubr.bf16.mxu0 0
        %10926 = vmatmul.mubr.bf16.gmra.mrb[0].mxu0 %v10791
        %v10927 = vpop.f32.mrb[0].mxu0
        %v10928 = vadd.f32 0.0, %v10927
        %v10929 = vpop.f32.mrb[0].mxu0
        %v10930 = vpop.f32.mrb[0].mxu0
        %v10931 = vadd.f32 0.0, %v10930
        %v10932 = vpop.f32.mrb[0].mxu0
        %10933 = vmatprep.mubr.bf16.mxu0 0
        %10934 = vmatmul.mubr.bf16.gmra.mrb[0].mxu0 %v10794
        %v10935 = vpop.f32.mrb[0].mxu0
        %v10936 = vadd.f32 0.0, %v10935
        %v10937 = vpop.f32.mrb[0].mxu0
        %v10938 = vpop.f32.mrb[0].mxu0
        %v10939 = vadd.f32 0.0, %v10938
        %v10940 = vpop.f32.mrb[0].mxu0
        %10941 = vmatprep.mubr.bf16.mxu0 0
        %10942 = vmatmul.mubr.bf16.gmra.mrb[0].mxu0 %v10797
        %v10943 = vpop.f32.mrb[0].mxu0
        %v10944 = vadd.f32 0.0, %v10943
        %v10945 = vpop.f32.mrb[0].mxu0
        %v10946 = vpop.f32.mrb[0].mxu0
        %v10947 = vadd.f32 0.0, %v10946
        %v10948 = vpop.f32.mrb[0].mxu0
        %10949 = vmatprep.mubr.bf16.mxu0 0
        %10950 = vmatmul.mubr.bf16.gmra.mrb[0].mxu0 %v10800
        %v10951 = vpop.f32.mrb[0].mxu0
        %v10952 = vadd.f32 0.0, %v10951
        %v10953 = vpop.f32.mrb[0].mxu0
        %v10954 = vpop.f32.mrb[0].mxu0
        %v10955 = vadd.f32 0.0, %v10954
        %v10956 = vpop.f32.mrb[0].mxu0
        %10957 = vmatprep.mubr.bf16.mxu0 0
        %10958 = vmatmul.mubr.bf16.gmra.mrb[0].mxu0 %v10803
        %v10959 = vpop.f32.mrb[0].mxu0
        %v10960 = vadd.f32 0.0, %v10959
        %v10961 = vpop.f32.mrb[0].mxu0
        %v10962 = vpop.f32.mrb[0].mxu0
        %v10963 = vadd.f32 0.0, %v10962
        %v10964 = vpop.f32.mrb[0].mxu0
        %10965 = vdwg.mxu0
        %v10966 = vadd.f32 %v10677, %v10840
        %v10967 = vadd.f32 %v10678, %v10843
        %v10968 = vadd.f32 %v10679, %v10848
        %v10969 = vadd.f32 %v10680, %v10851
        %v10970 = vadd.f32 %v10681, %v10856
        %v10971 = vadd.f32 %v10682, %v10859
        %v10972 = vadd.f32 %v10683, %v10864
        %v10973 = vadd.f32 %v10684, %v10867
        %v10974 = vadd.f32 %v10685, %v10872
        %v10975 = vadd.f32 %v10686, %v10875
        %v10976 = vadd.f32 %v10687, %v10880
        %v10977 = vadd.f32 %v10688, %v10883
        %v10978 = vadd.f32 %v10689, %v10888
        %v10979 = vadd.f32 %v10690, %v10891
        %v10980 = vadd.f32 %v10691, %v10896
        %v10981 = vadd.f32 %v10692, %v10899
        %v10982 = vadd.f32 %v10693, %v10904
        %v10983 = vadd.f32 %v10694, %v10907
        %v10984 = vadd.f32 %v10695, %v10912
        %v10985 = vadd.f32 %v10696, %v10915
        %v10986 = vadd.f32 %v10697, %v10920
        %v10987 = vadd.f32 %v10698, %v10923
        %v10988 = vadd.f32 %v10699, %v10928
        %v10989 = vadd.f32 %v10700, %v10931
        %v10990 = vadd.f32 %v10701, %v10936
        %v10991 = vadd.f32 %v10702, %v10939
        %v10992 = vadd.f32 %v10703, %v10944
        %v10993 = vadd.f32 %v10704, %v10947
        %v10994 = vadd.f32 %v10705, %v10952
        %v10995 = vadd.f32 %v10706, %v10955
        %v10996 = vadd.f32 %v10707, %v10960
        %v10997 = vadd.f32 %v10708, %v10963
        %v10998 = vmax.f32 %v10966, 0.0
        %v10999 = vmax.f32 %v10967, 0.0
        %v11000 = vmax.f32 %v10968, 0.0
        %v11001 = vmax.f32 %v10969, 0.0
        %v11002 = vmax.f32 %v10970, 0.0
        %v11003 = vmax.f32 %v10971, 0.0
        %v11004 = vmax.f32 %v10972, 0.0
        %v11005 = vmax.f32 %v10973, 0.0
        %v11006 = vmax.f32 %v10974, 0.0
        %v11007 = vmax.f32 %v10975, 0.0
        %v11008 = vmax.f32 %v10976, 0.0
        %v11009 = vmax.f32 %v10977, 0.0
        %v11010 = vmax.f32 %v10978, 0.0
        %v11011 = vmax.f32 %v10979, 0.0
        %v11012 = vmax.f32 %v10980, 0.0
        %v11013 = vmax.f32 %v10981, 0.0
        %v11014 = vmax.f32 %v10982, 0.0
        %v11015 = vmax.f32 %v10983, 0.0
        %v11016 = vmax.f32 %v10984, 0.0
        %v11017 = vmax.f32 %v10985, 0.0
        %v11018 = vmax.f32 %v10986, 0.0
        %v11019 = vmax.f32 %v10987, 0.0
        %v11020 = vmax.f32 %v10988, 0.0
        %v11021 = vmax.f32 %v10989, 0.0
        %v11022 = vmax.f32 %v10990, 0.0
        %v11023 = vmax.f32 %v10991, 0.0
        %v11024 = vmax.f32 %v10992, 0.0
        %v11025 = vmax.f32 %v10993, 0.0
        %v11026 = vmax.f32 %v10994, 0.0
        %v11027 = vmax.f32 %v10995, 0.0
        %v11028 = vmax.f32 %v10996, 0.0
        %v11029 = vmax.f32 %v10997, 0.0
        %v11030 = vsel %vm2911, %v10998, 0.0
        %v11031 = vsel %vm2911, %v10999, 0.0
        %v11032 = vadd.f32 %v11030, %v11031
        %v11033 = vsel %vm2911, %v11000, 0.0
        %v11034 = vadd.f32 %v11032, %v11033
        %v11035 = vsel %vm2911, %v11001, 0.0
        %v11036 = vadd.f32 %v11034, %v11035
        %v11037 = vsel %vm2911, %v11002, 0.0
        %v11038 = vadd.f32 %v11036, %v11037
        %v11039 = vsel %vm2911, %v11003, 0.0
        %v11040 = vadd.f32 %v11038, %v11039
        %v11041 = vsel %vm2911, %v11004, 0.0
        %v11042 = vadd.f32 %v11040, %v11041
        %v11043 = vsel %vm2911, %v11005, 0.0
        %v11044 = vadd.f32 %v11042, %v11043
        %v11045 = vsel %vm2911, %v11006, 0.0
        %v11046 = vadd.f32 %v11044, %v11045
        %v11047 = vsel %vm2911, %v11007, 0.0
        %v11048 = vadd.f32 %v11046, %v11047
        %v11049 = vsel %vm2911, %v11008, 0.0
        %v11050 = vadd.f32 %v11048, %v11049
        %v11051 = vsel %vm2911, %v11009, 0.0
        %v11052 = vadd.f32 %v11050, %v11051
        %v11053 = vsel %vm2911, %v11010, 0.0
        %v11054 = vadd.f32 %v11052, %v11053
        %v11055 = vsel %vm2911, %v11011, 0.0
        %v11056 = vadd.f32 %v11054, %v11055
        %v11057 = vsel %vm2911, %v11012, 0.0
        %v11058 = vadd.f32 %v11056, %v11057
        %v11059 = vsel %vm2911, %v11013, 0.0
        %v11060 = vadd.f32 %v11058, %v11059
        %v11061 = vsel %vm2911, %v11014, 0.0
        %v11062 = vadd.f32 %v11060, %v11061
        %v11063 = vsel %vm2911, %v11015, 0.0
        %v11064 = vadd.f32 %v11062, %v11063
        %v11065 = vsel %vm2911, %v11016, 0.0
        %v11066 = vadd.f32 %v11064, %v11065
        %v11067 = vsel %vm2911, %v11017, 0.0
        %v11068 = vadd.f32 %v11066, %v11067
        %v11069 = vsel %vm2911, %v11018, 0.0
        %v11070 = vadd.f32 %v11068, %v11069
        %v11071 = vsel %vm2911, %v11019, 0.0
        %v11072 = vadd.f32 %v11070, %v11071
        %v11073 = vsel %vm2911, %v11020, 0.0
        %v11074 = vadd.f32 %v11072, %v11073
        %v11075 = vsel %vm2911, %v11021, 0.0
        %v11076 = vadd.f32 %v11074, %v11075
        %v11077 = vsel %vm2911, %v11022, 0.0
        %v11078 = vadd.f32 %v11076, %v11077
        %v11079 = vsel %vm2911, %v11023, 0.0
        %v11080 = vadd.f32 %v11078, %v11079
        %v11081 = vsel %vm2911, %v11024, 0.0
        %v11082 = vadd.f32 %v11080, %v11081
        %v11083 = vsel %vm2911, %v11025, 0.0
        %v11084 = vadd.f32 %v11082, %v11083
        %v11085 = vsel %vm2911, %v11026, 0.0
        %v11086 = vadd.f32 %v11084, %v11085
        %v11087 = vsel %vm2911, %v11027, 0.0
        %v11088 = vadd.f32 %v11086, %v11087
        %v11089 = vsel %vm2911, %v11028, 0.0
        %v11090 = vadd.f32 %v11088, %v11089
        %v11091 = vsel %vm2911, %v11029, 0.0
        %v11092 = vadd.f32 %v11090, %v11091
        %v11093 = vrot.slane %v11092, 4
        %v11094 = vadd.f32 %v11092, %v11093
        %v11095 = vrot.slane %v11094, 2
        %v11096 = vadd.f32 %v11094, %v11095
        %v11097 = vrot.slane %v11096, 1
        %v11098 = vadd.f32 %v11096, %v11097
        %v11099 = vadd.f32 %v8393, %v11098
        %v11100 = vld [vmem:[%s3] sm:$0xff]
        %v11101 = vld [vmem:[%s3 + $0x8] sm:$0xff]
        %v11102 = vld [vmem:[%s3 + $0x10] sm:$0xff]
        %v11103 = vld [vmem:[%s3 + $0x18] sm:$0xff]
        %v11104 = vld [vmem:[%s4] sm:$0x1]
        %v11106 = vsel %vm2911, %v11099, 0
        %11108 = vmatprep.subr.mxu0 0.0
        %11109 = vmatpush1.msra.mxu0 %v11100
        %11110 = vmatprep.subr.mxu0 0.0
        %11111 = vmatpush1.msra.mxu0 %v11101
        %11112 = vmatprep.subr.mxu0 0.0
        %11113 = vmatpush1.msra.mxu0 %v11102
        %11114 = vmatprep.subr.mxu0 0.0
        %11115 = vmatpush1.msra.mxu0 %v11103
        %11116 = vmatprep.subr.mxu0 0.0
        %11117 = vmatpush1.msra.mxu0 0.0
        %11118 = vmatprep.subr.mxu0 0.0
        %11119 = vmatpush1.msra.mxu0 0.0
        %11120 = vmatprep.subr.mxu0 0.0
        %11121 = vmatpush1.msra.mxu0 0.0
        %11122 = vmatprep.subr.mxu0 0.0
        %11123 = vmatpush1.msra.mxu0 0.0
        %11124 = vmatprep.subr.mxu0 0.0
        %11125 = vmatpush1.msra.mxu0 0.0
        %11126 = vmatprep.subr.mxu0 0.0
        %11127 = vmatpush1.msra.mxu0 0.0
        %11128 = vmatprep.subr.mxu0 0.0
        %11129 = vmatpush1.msra.mxu0 0.0
        %11130 = vmatprep.subr.mxu0 0.0
        %11131 = vmatpush1.msra.mxu0 0.0
        %11132 = vmatprep.subr.mxu0 0.0
        %11133 = vmatpush1.msra.mxu0 0.0
        %11134 = vmatprep.subr.mxu0 0.0
        %11135 = vmatpush1.msra.mxu0 0.0
        %11136 = vmatprep.subr.mxu0 0.0
        %11137 = vmatpush1.msra.mxu0 0.0
        %11138 = vmatprep.subr.mxu0 0.0
        %11139 = vmatpush1.msra.mxu0 0.0
        %11140 = vmatprep.subr.mxu0 0.0
        %11141 = vmatpush1.msra.mxu0 0.0
        %11142 = vmatprep.subr.mxu0 0.0
        %11143 = vmatpush1.msra.mxu0 0.0
        %11144 = vmatprep.subr.mxu0 0.0
        %11145 = vmatpush1.msra.mxu0 0.0
        %11146 = vmatprep.subr.mxu0 0.0
        %11147 = vmatpush1.msra.mxu0 0.0
        %11148 = vmatprep.subr.mxu0 0.0
        %11149 = vmatpush1.msra.mxu0 0.0
        %11150 = vmatprep.subr.mxu0 0.0
        %11151 = vmatpush1.msra.mxu0 0.0
        %11152 = vmatprep.subr.mxu0 0.0
        %11153 = vmatpush1.msra.mxu0 0.0
        %11154 = vmatprep.subr.mxu0 0.0
        %11155 = vmatpush1.msra.mxu0 0.0
        %11156 = vmatprep.subr.mxu0 0.0
        %11157 = vmatpush1.msra.mxu0 0.0
        %11158 = vmatprep.subr.mxu0 0.0
        %11159 = vmatpush1.msra.mxu0 0.0
        %11160 = vmatprep.subr.mxu0 0.0
        %11161 = vmatpush1.msra.mxu0 0.0
        %11162 = vmatprep.subr.mxu0 0.0
        %11163 = vmatpush1.msra.mxu0 0.0
        %11164 = vmatprep.subr.mxu0 0.0
        %11165 = vmatpush1.msra.mxu0 0.0
        %11166 = vmatprep.subr.mxu0 0.0
        %11167 = vmatpush1.msra.mxu0 0.0
        %11168 = vmatprep.subr.mxu0 0.0
        %11169 = vmatpush1.msra.mxu0 0.0
        %11170 = vmatprep.subr.mxu0 0.0
        %11171 = vmatpush1.msra.mxu0 0.0
        %11172 = vmatprep.mubr.f32.mxu0 0.0
        %11173 = vmatmul.mubr.f32.gmra.mrb[0].mxu0 %v11106
        %v11174 = vpop.f32.mrb[0].mxu0
        %v11175 = vadd.f32 %v11104, %v11174
        %v11176 = vpop.f32.mrb[0].mxu0
        %11177 = vdwg.mxu0
        %vm11178 = vcmask 73728
        %11179 = vst.msk [vmem:[%s216] sm:$0x1] %vm11178, %v11175
        %s11180 = sand.u32 %s137, 1
        %s11181 = scalar_lea.sflag [#allocation3], %s11180
        %s11182 = sand.u32 %s137, 1
        %s11183 = scalar_lea.vmem [#allocation2], %s11182
        // Predicated region
        $region41: #{model_forward.1} parent=39 // pred_check
          %p11184 = pneg %p147
        $region42: #{model_forward.1} parent=39 // pred_check_branch
          %11186 = sbr.rel (%p11184) target = $region44
        $region43: #{model_forward.1} parent=39 // pred_region
          %s11188 = ssub.s32 16, 16
          %11189 = vsyncadd %s11181, %s11188
          %s11190 = smul.addr %s19, 16
          %s11191 = scalar_lea.hbm %s5, %s11190
          %s11193 = sshll.u32 %s11183, 4
          %s11194 = int_to_ptr.vmem [resolvable:$true] %s11193
          %11196 = dma.vmem_to_hbm [thread:$0]  %s11194, 16, %s11191, %s11181
        $region44: #{model_forward.1} parent=39 // pred_fallthru
          _
      $region40: #{model_forward.1} parent=5 // pred_fallthru
        _
      %p11197 = scmp.le.s32.totalorder 2, %s14
      // Predicated region
      $region45: #{model_forward.1} parent=5 // pred_check
        %p11198 = pneg %p11197
      $region46: #{model_forward.1} parent=5 // pred_check_branch
        %11200 = sbr.rel (%p11198) target = $region48
      $region47: #{model_forward.1} parent=5 // pred_region
        %s11201 = ssub.s32 %s14, 2
        // Predicated region
        $region49: #{model_forward.1} parent=47 // pred_check
          %p11202 = pneg %p153
        $region50: #{model_forward.1} parent=47 // pred_check_branch
          %11204 = sbr.rel (%p11202) target = $region52
        $region51: #{model_forward.1} parent=47 // pred_region
          %s11205 = sand.u32 %s138, 1
          %s11206 = scalar_lea.sflag [#allocation3], %s11205
          %s11207 = sand.u32 %s138, 1
          %s11208 = scalar_lea.vmem [#allocation2], %s11207
          %11209 = dma.done %s11206, 16
        $region52: #{model_forward.1} parent=47 // pred_fallthru
          _
      $region48: #{model_forward.1} parent=5 // pred_fallthru
        _
    $region6: #{model_forward.1} parent=1 // loop_footer
      %s18 = sadd.s32 1, %s14
    $region7: #{model_forward.1} parent=1 // loop_footer_branch
      %13 = sbr.rel target = $region3
    $region8: #{model_forward.1} parent=1 // loop_exit
      _
    %11210 = vsyncpa [#allocation3], 1
    %s11211 = scalar_lea.sflag [#allocation3], 1
    %11212 = vsyncpa %s11211, 1

</llo_original>
